<compile_context>
chip_gen: v7x
topology: tpu7x:2x2x1
jax: 0.10.0
libtpu: 0.0.40
codegen_flags: <defaults>
</compile_context>

<pallas_src>
import functools
import math

import jax
import jax.numpy as jnp
from jax import lax
from jax.experimental import pallas as pl
from jax.experimental.pallas import tpu as pltpu


def _fused_masked_seq_kernel(x_ref, m_ref, *args, layer_dims):
    """All conv layers for ONE batch element; activation resident in VMEM.

    x_ref:     (1, H, W, Cin)   input tile (NHWC, VMEM)
    m_ref:     (1, H, W, 1)     mask tile (VMEM)
    args:      w0, b0, ..., w_{L-1}, b_{L-1}, o_ref, pad_ref, patch_ref
               w_i: (9*Ci, Co) for i < L-1, (Co, 9*Ci) for the last layer
               b_i: (1, Co)    for i < L-1, (Co, 1)   for the last layer
    o_ref:     (1, Cout, H*W)   lane-dense output slab (VMEM)
    pad_ref:   (H+2, W+2, Cmax) zero-halo scratch
    patch_ref: (H*W, 9*Cmax)    im2col scratch
    """
    n_layers = len(layer_dims)
    w_refs = [args[2 * i] for i in range(n_layers)]
    b_refs = [args[2 * i + 1] for i in range(n_layers)]
    o_ref = args[2 * n_layers]
    pad_ref = args[2 * n_layers + 1]
    patch_ref = args[2 * n_layers + 2]

    Hp, Wp, _ = pad_ref.shape
    H, W = Hp - 2, Wp - 2
    HW = H * W

    # Zero the halo buffer once per grid step; only the interior is rewritten
    # each layer, so the 1-pixel zero border (== conv padding=1) persists.
    pad_ref[...] = jnp.zeros(pad_ref.shape, jnp.float32)

    mask = m_ref[0]                                   # (H, W, 1), hoisted once
    # forward(): x = mask * x
    act = x_ref[0].astype(jnp.float32) * mask         # (H, W, Cin)

    for i, (ci, co) in enumerate(layer_dims):
        # MaskedConv: conv3x3(mask * x) + b  — write masked act into the halo.
        pad_ref[1:H + 1, 1:W + 1, 0:ci] = act * mask

        # im2col: gather the 9 shifted taps into (H*W, 9*ci) so the whole conv
        # is a single MXU matmul with K = 9*ci.
        for dy in range(3):
            for dx in range(3):
                t = dy * 3 + dx
                tap = pad_ref[dy:dy + H, dx:dx + W, 0:ci].reshape(HW, ci)
                patch_ref[:, t * ci:(t + 1) * ci] = tap
        patches = patch_ref[:, 0:9 * ci]              # (HW, 9*ci)

        if i < n_layers - 1:
            out = jnp.dot(patches, w_refs[i][...],
                          preferred_element_type=jnp.float32)   # (HW, co)
            out = out + b_refs[i][...]                # (1, co) broadcast
            act = jnp.maximum(out, 0.0).reshape(H, W, co)
        else:
            # Last layer: transposed weight (co, 9*ci) contracted against the
            # patches' K axis -> (co, HW) comes straight out of the MXU
            # lane-dense (HW = 256 lanes), no masked 3/128-lane store.
            out_t = lax.dot_general(
                w_refs[i][...], patches,
                dimension_numbers=(((1,), (1,)), ((), ())),
                preferred_element_type=jnp.float32)   # (co, HW)
            out_t = out_t + b_refs[i][...]            # (co, 1) broadcast
            o_ref[...] = out_t.reshape(1, co, HW).astype(o_ref.dtype)


def masked_sequential(x_nchw, mask_nchw, params):
    """Forward pass equivalent of MaskedSequential.forward (NCHW in / NCHW out).

    params: list of (w, b) with w in HWIO layout (3, 3, Cin, Cout), b (Cout,).
    """
    N, c_in, H, W = x_nchw.shape
    n_layers = len(params)
    layer_dims = tuple((w.shape[2], w.shape[3]) for w, _ in params)
    assert layer_dims[0][0] == c_in
    c_out = layer_dims[-1][1]
    c_max = max(ci for ci, _ in layer_dims)

    x = jnp.transpose(x_nchw, (0, 2, 3, 1))           # NCHW -> NHWC (lane = C)
    m = jnp.transpose(mask_nchw, (0, 2, 3, 1))        # (N, H, W, 1)

    flat_inputs = [x, m]
    in_specs = [
        pl.BlockSpec((1, H, W, c_in), lambda n: (n, 0, 0, 0)),
        pl.BlockSpec((1, H, W, 1), lambda n: (n, 0, 0, 0)),
    ]
    for i, (w, b) in enumerate(params):
        ci, co = layer_dims[i]
        w_flat = w.reshape(9 * ci, co)                # rows ordered (dy, dx, c)
        if i == n_layers - 1:
            w_flat = w_flat.T                         # (co, 9*ci) for lane-dense out
            b2 = b.reshape(co, 1)
        else:
            b2 = b.reshape(1, co)
        flat_inputs += [w_flat, b2]
        in_specs += [
            pl.BlockSpec(w_flat.shape, lambda n: (0, 0)),
            pl.BlockSpec(b2.shape, lambda n: (0, 0)),
        ]

    kernel = functools.partial(_fused_masked_seq_kernel, layer_dims=layer_dims)
    out = pl.pallas_call(
        kernel,
        out_shape=jax.ShapeDtypeStruct((N, c_out, H * W), x_nchw.dtype),
        grid_spec=pltpu.PrefetchScalarGridSpec(
            num_scalar_prefetch=0,
            grid=(N,),
            in_specs=in_specs,
            out_specs=pl.BlockSpec((1, c_out, H * W), lambda n: (n, 0, 0)),
            scratch_shapes=[
                pltpu.VMEM((H + 2, W + 2, c_max), jnp.float32),   # zero-halo buf
                pltpu.VMEM((H * W, 9 * c_max), jnp.float32),      # im2col buf
            ]),
        compiler_params=pltpu.CompilerParams(
            dimension_semantics=("parallel",)),       # N=2 -> both TCs on v7x
    )(*flat_inputs)
    return out.reshape(N, c_out, H, W)                # already NCHW, just unflatten


def init_params(key, n_inputs=3, n_feats=16, n_outputs=3, depth=4):
    """Deterministic Kaiming-uniform-like init matching nn.Conv2d shapes (HWIO)."""
    dims = [n_inputs] + [n_feats] * (depth - 1) + [n_outputs]
    params = []
    for i in range(depth):
        cin, cout = dims[i], dims[i + 1]
        key, kw, kb = jax.random.split(key, 3)
        bound = 1.0 / math.sqrt(cin * 9)
        w = jax.random.uniform(kw, (3, 3, cin, cout), jnp.float32, -bound, bound)
        b = jax.random.uniform(kb, (cout,), jnp.float32, -bound, bound)
        params.append((w, b))
    return params


def _reference(x, mask, params):
    """Pure-JAX reference with the same assumed MaskedConv semantics."""
    y = mask * x
    n = len(params)
    for i, (w, b) in enumerate(params):
        z = lax.conv_general_dilated(
            mask * y, w, window_strides=(1, 1), padding="SAME",
            dimension_numbers=("NCHW", "HWIO", "NCHW"),
            precision=lax.Precision.HIGHEST)
        z = z + b.reshape(1, -1, 1, 1)
        y = jnp.maximum(z, 0.0) if i < n - 1 else z
    return y


if __name__ == "__main__":
    key = jax.random.PRNGKey(0)
    k_x, k_m, k_p = jax.random.split(key, 3)

    N, C_IN, H, W = 2, 3, 16, 16
    N_FEATS, N_OUT, DEPTH = 16, 3, 4

    x = jax.random.normal(k_x, (N, C_IN, H, W), jnp.float32)
    mask = (jax.random.uniform(k_m, (N, 1, H, W)) > 0.3).astype(jnp.float32)

    params = init_params(k_p, n_inputs=C_IN, n_feats=N_FEATS,
                         n_outputs=N_OUT, depth=DEPTH)

    fwd = jax.jit(masked_sequential)
    out = fwd(x, mask, params)
    jax.block_until_ready(out)
    assert out.shape == (N, N_OUT, H, W), out.shape

    ref = _reference(x, mask, params)
    max_err = float(jnp.max(jnp.abs(out - ref)))
    assert jnp.allclose(out, ref, atol=1e-3, rtol=1e-3), max_err

    print("KERNEL_OK")
</pallas_src>

<mosaic_0001>
module attributes {stable_mosaic.version = 11 : i64} {
  func.func @_fused_masked_seq_kernel(%arg0: i32, %arg1: memref<1x16x16x3xf32, #tpu.memory_space<vmem>>, %arg2: memref<1x16x16x1xf32, #tpu.memory_space<vmem>>, %arg3: memref<27x16xf32, #tpu.memory_space<vmem>>, %arg4: memref<1x16xf32, #tpu.memory_space<vmem>>, %arg5: memref<144x16xf32, #tpu.memory_space<vmem>>, %arg6: memref<1x16xf32, #tpu.memory_space<vmem>>, %arg7: memref<144x16xf32, #tpu.memory_space<vmem>>, %arg8: memref<1x16xf32, #tpu.memory_space<vmem>>, %arg9: memref<3x144xf32, #tpu.memory_space<vmem>>, %arg10: memref<3x1xf32, #tpu.memory_space<vmem>>, %arg11: memref<1x3x256xf32, #tpu.memory_space<vmem>>, %arg12: memref<18x18x16xf32, #tpu.memory_space<vmem>>, %arg13: memref<256x144xf32, #tpu.memory_space<vmem>>) attributes {dimension_semantics = [#tpu.dimension_semantics<parallel>], iteration_bounds = array<i64: 2>, scalar_prefetch = 0 : i64, scratch_operands = 2 : i64, tpu.core_type = #tpu.core_type<tc>, window_params = [{transform_indices = @transform_0, window_bounds = array<i64: 1, 16, 16, 3>}, {transform_indices = @transform_1, window_bounds = array<i64: 1, 16, 16, 1>}, {pipeline_mode = #tpu.pipeline_mode<synchronous>, transform_indices = @transform_2, window_bounds = array<i64: 27, 16>}, {pipeline_mode = #tpu.pipeline_mode<synchronous>, transform_indices = @transform_3, window_bounds = array<i64: 1, 16>}, {pipeline_mode = #tpu.pipeline_mode<synchronous>, transform_indices = @transform_4, window_bounds = array<i64: 144, 16>}, {pipeline_mode = #tpu.pipeline_mode<synchronous>, transform_indices = @transform_5, window_bounds = array<i64: 1, 16>}, {pipeline_mode = #tpu.pipeline_mode<synchronous>, transform_indices = @transform_6, window_bounds = array<i64: 144, 16>}, {pipeline_mode = #tpu.pipeline_mode<synchronous>, transform_indices = @transform_7, window_bounds = array<i64: 1, 16>}, {pipeline_mode = #tpu.pipeline_mode<synchronous>, transform_indices = @transform_8, window_bounds = array<i64: 3, 144>}, {pipeline_mode = #tpu.pipeline_mode<synchronous>, transform_indices = @transform_9, window_bounds = array<i64: 3, 1>}, {transform_indices = @transform_10, window_bounds = array<i64: 1, 3, 256>}]} {
    %cst = arith.constant 0.000000e+00 : f32
    %0 = vector.broadcast %cst : f32 to vector<18x18x16xf32>
    %c0 = arith.constant 0 : index
    %c0_0 = arith.constant 0 : index
    %c0_1 = arith.constant 0 : index
    %1 = vector.load %arg12[%c0, %c0_0, %c0_1] : memref<18x18x16xf32, #tpu.memory_space<vmem>>, vector<18x18x16xf32>
    tpu.vector_store %arg12[%c0, %c0_0, %c0_1], %0 {strides = array<i32>} : memref<18x18x16xf32, #tpu.memory_space<vmem>>, vector<18x18x16xf32>,
    %c0_2 = arith.constant 0 : index
    %c0_3 = arith.constant 0 : index
    %c0_4 = arith.constant 0 : index
    %c0_5 = arith.constant 0 : index
    %2 = vector.load %arg2[%c0_2, %c0_3, %c0_4, %c0_5] : memref<1x16x16x1xf32, #tpu.memory_space<vmem>>, vector<1x16x16x1xf32>
    %3 = vector.shape_cast %2 : vector<1x16x16x1xf32> to vector<16x16x1xf32>
    %c0_6 = arith.constant 0 : index
    %c0_7 = arith.constant 0 : index
    %c0_8 = arith.constant 0 : index
    %c0_9 = arith.constant 0 : index
    %4 = vector.load %arg1[%c0_6, %c0_7, %c0_8, %c0_9] : memref<1x16x16x3xf32, #tpu.memory_space<vmem>>, vector<1x16x16x3xf32>
    %5 = vector.shape_cast %4 : vector<1x16x16x3xf32> to vector<16x16x3xf32>
    %6 = vector.broadcast %3 : vector<16x16x1xf32> to vector<16x16x3xf32>
    %7 = arith.mulf %5, %6 : vector<16x16x3xf32>
    %8 = vector.broadcast %3 : vector<16x16x1xf32> to vector<16x16x3xf32>
    %9 = arith.mulf %7, %8 : vector<16x16x3xf32>
    %c1 = arith.constant 1 : index
    %c1_10 = arith.constant 1 : index
    %c0_11 = arith.constant 0 : index
    %10 = vector.load %arg12[%c1, %c1_10, %c0_11] : memref<18x18x16xf32, #tpu.memory_space<vmem>>, vector<16x16x3xf32>
    tpu.vector_store %arg12[%c1, %c1_10, %c0_11], %9 {strides = array<i32>} : memref<18x18x16xf32, #tpu.memory_space<vmem>>, vector<16x16x3xf32>,
    %c0_12 = arith.constant 0 : index
    %c0_13 = arith.constant 0 : index
    %c0_14 = arith.constant 0 : index
    %11 = vector.load %arg12[%c0_12, %c0_13, %c0_14] : memref<18x18x16xf32, #tpu.memory_space<vmem>>, vector<16x16x3xf32>
    %12 = vector.shape_cast %11 : vector<16x16x3xf32> to vector<256x3xf32>
    %c0_15 = arith.constant 0 : index
    %c0_16 = arith.constant 0 : index
    %13 = vector.load %arg13[%c0_15, %c0_16] : memref<256x144xf32, #tpu.memory_space<vmem>>, vector<256x3xf32>
    tpu.vector_store %arg13[%c0_15, %c0_16], %12 {strides = array<i32>} : memref<256x144xf32, #tpu.memory_space<vmem>>, vector<256x3xf32>,
    %c0_17 = arith.constant 0 : index
    %c1_18 = arith.constant 1 : index
    %c0_19 = arith.constant 0 : index
    %14 = vector.load %arg12[%c0_17, %c1_18, %c0_19] : memref<18x18x16xf32, #tpu.memory_space<vmem>>, vector<16x16x3xf32>
    %15 = vector.shape_cast %14 : vector<16x16x3xf32> to vector<256x3xf32>
    %c0_20 = arith.constant 0 : index
    %c3 = arith.constant 3 : index
    %16 = vector.load %arg13[%c0_20, %c3] : memref<256x144xf32, #tpu.memory_space<vmem>>, vector<256x3xf32>
    tpu.vector_store %arg13[%c0_20, %c3], %15 {strides = array<i32>} : memref<256x144xf32, #tpu.memory_space<vmem>>, vector<256x3xf32>,
    %c0_21 = arith.constant 0 : index
    %c2 = arith.constant 2 : index
    %c0_22 = arith.constant 0 : index
    %17 = vector.load %arg12[%c0_21, %c2, %c0_22] : memref<18x18x16xf32, #tpu.memory_space<vmem>>, vector<16x16x3xf32>
    %18 = vector.shape_cast %17 : vector<16x16x3xf32> to vector<256x3xf32>
    %c0_23 = arith.constant 0 : index
    %c6 = arith.constant 6 : index
    %19 = vector.load %arg13[%c0_23, %c6] : memref<256x144xf32, #tpu.memory_space<vmem>>, vector<256x3xf32>
    tpu.vector_store %arg13[%c0_23, %c6], %18 {strides = array<i32>} : memref<256x144xf32, #tpu.memory_space<vmem>>, vector<256x3xf32>,
    %c1_24 = arith.constant 1 : index
    %c0_25 = arith.constant 0 : index
    %c0_26 = arith.constant 0 : index
    %20 = vector.load %arg12[%c1_24, %c0_25, %c0_26] : memref<18x18x16xf32, #tpu.memory_space<vmem>>, vector<16x16x3xf32>
    %21 = vector.shape_cast %20 : vector<16x16x3xf32> to vector<256x3xf32>
    %c0_27 = arith.constant 0 : index
    %c9 = arith.constant 9 : index
    %22 = vector.load %arg13[%c0_27, %c9] : memref<256x144xf32, #tpu.memory_space<vmem>>, vector<256x3xf32>
    tpu.vector_store %arg13[%c0_27, %c9], %21 {strides = array<i32>} : memref<256x144xf32, #tpu.memory_space<vmem>>, vector<256x3xf32>,
    %c1_28 = arith.constant 1 : index
    %c1_29 = arith.constant 1 : index
    %c0_30 = arith.constant 0 : index
    %23 = vector.load %arg12[%c1_28, %c1_29, %c0_30] : memref<18x18x16xf32, #tpu.memory_space<vmem>>, vector<16x16x3xf32>
    %24 = vector.shape_cast %23 : vector<16x16x3xf32> to vector<256x3xf32>
    %c0_31 = arith.constant 0 : index
    %c12 = arith.constant 12 : index
    %25 = vector.load %arg13[%c0_31, %c12] : memref<256x144xf32, #tpu.memory_space<vmem>>, vector<256x3xf32>
    tpu.vector_store %arg13[%c0_31, %c12], %24 {strides = array<i32>} : memref<256x144xf32, #tpu.memory_space<vmem>>, vector<256x3xf32>,
    %c1_32 = arith.constant 1 : index
    %c2_33 = arith.constant 2 : index
    %c0_34 = arith.constant 0 : index
    %26 = vector.load %arg12[%c1_32, %c2_33, %c0_34] : memref<18x18x16xf32, #tpu.memory_space<vmem>>, vector<16x16x3xf32>
    %27 = vector.shape_cast %26 : vector<16x16x3xf32> to vector<256x3xf32>
    %c0_35 = arith.constant 0 : index
    %c15 = arith.constant 15 : index
    %28 = vector.load %arg13[%c0_35, %c15] : memref<256x144xf32, #tpu.memory_space<vmem>>, vector<256x3xf32>
    tpu.vector_store %arg13[%c0_35, %c15], %27 {strides = array<i32>} : memref<256x144xf32, #tpu.memory_space<vmem>>, vector<256x3xf32>,
    %c2_36 = arith.constant 2 : index
    %c0_37 = arith.constant 0 : index
    %c0_38 = arith.constant 0 : index
    %29 = vector.load %arg12[%c2_36, %c0_37, %c0_38] : memref<18x18x16xf32, #tpu.memory_space<vmem>>, vector<16x16x3xf32>
    %30 = vector.shape_cast %29 : vector<16x16x3xf32> to vector<256x3xf32>
    %c0_39 = arith.constant 0 : index
    %c18 = arith.constant 18 : index
    %31 = vector.load %arg13[%c0_39, %c18] : memref<256x144xf32, #tpu.memory_space<vmem>>, vector<256x3xf32>
    tpu.vector_store %arg13[%c0_39, %c18], %30 {strides = array<i32>} : memref<256x144xf32, #tpu.memory_space<vmem>>, vector<256x3xf32>,
    %c2_40 = arith.constant 2 : index
    %c1_41 = arith.constant 1 : index
    %c0_42 = arith.constant 0 : index
    %32 = vector.load %arg12[%c2_40, %c1_41, %c0_42] : memref<18x18x16xf32, #tpu.memory_space<vmem>>, vector<16x16x3xf32>
    %33 = vector.shape_cast %32 : vector<16x16x3xf32> to vector<256x3xf32>
    %c0_43 = arith.constant 0 : index
    %c21 = arith.constant 21 : index
    %34 = vector.load %arg13[%c0_43, %c21] : memref<256x144xf32, #tpu.memory_space<vmem>>, vector<256x3xf32>
    tpu.vector_store %arg13[%c0_43, %c21], %33 {strides = array<i32>} : memref<256x144xf32, #tpu.memory_space<vmem>>, vector<256x3xf32>,
    %c2_44 = arith.constant 2 : index
    %c2_45 = arith.constant 2 : index
    %c0_46 = arith.constant 0 : index
    %35 = vector.load %arg12[%c2_44, %c2_45, %c0_46] : memref<18x18x16xf32, #tpu.memory_space<vmem>>, vector<16x16x3xf32>
    %36 = vector.shape_cast %35 : vector<16x16x3xf32> to vector<256x3xf32>
    %c0_47 = arith.constant 0 : index
    %c24 = arith.constant 24 : index
    %37 = vector.load %arg13[%c0_47, %c24] : memref<256x144xf32, #tpu.memory_space<vmem>>, vector<256x3xf32>
    tpu.vector_store %arg13[%c0_47, %c24], %36 {strides = array<i32>} : memref<256x144xf32, #tpu.memory_space<vmem>>, vector<256x3xf32>,
    %c0_48 = arith.constant 0 : index
    %c0_49 = arith.constant 0 : index
    %38 = vector.load %arg13[%c0_48, %c0_49] : memref<256x144xf32, #tpu.memory_space<vmem>>, vector<256x27xf32>
    %c0_50 = arith.constant 0 : index
    %c0_51 = arith.constant 0 : index
    %39 = vector.load %arg3[%c0_50, %c0_51] : memref<27x16xf32, #tpu.memory_space<vmem>>, vector<27x16xf32>
    %cst_52 = arith.constant dense<0.000000e+00> : vector<256x16xf32>
    %40 = tpu.matmul %38, %39, %cst_52 {dimension_numbers = #tpu.dot_dimension_numbers<[1], [0], [0], [1], [0, 0, 1, 1], [], []>} : vector<256x27xf32>, vector<27x16xf32>, vector<256x16xf32> -> vector<256x16xf32>
    %c0_53 = arith.constant 0 : index
    %c0_54 = arith.constant 0 : index
    %41 = vector.load %arg4[%c0_53, %c0_54] : memref<1x16xf32, #tpu.memory_space<vmem>>, vector<1x16xf32>
    %42 = vector.broadcast %41 : vector<1x16xf32> to vector<256x16xf32>
    %43 = arith.addf %40, %42 : vector<256x16xf32>
    %cst_55 = arith.constant 0.000000e+00 : f32
    %44 = vector.broadcast %cst_55 : f32 to vector<256x16xf32>
    %45 = arith.maximumf %43, %44 : vector<256x16xf32>
    %46 = vector.shape_cast %45 : vector<256x16xf32> to vector<16x16x16xf32>
    %47 = vector.broadcast %3 : vector<16x16x1xf32> to vector<16x16x16xf32>
    %48 = arith.mulf %46, %47 : vector<16x16x16xf32>
    %c1_56 = arith.constant 1 : index
    %c1_57 = arith.constant 1 : index
    %c0_58 = arith.constant 0 : index
    %49 = vector.load %arg12[%c1_56, %c1_57, %c0_58] : memref<18x18x16xf32, #tpu.memory_space<vmem>>, vector<16x16x16xf32>
    tpu.vector_store %arg12[%c1_56, %c1_57, %c0_58], %48 {strides = array<i32>} : memref<18x18x16xf32, #tpu.memory_space<vmem>>, vector<16x16x16xf32>,
    %c0_59 = arith.constant 0 : index
    %c0_60 = arith.constant 0 : index
    %c0_61 = arith.constant 0 : index
    %50 = vector.load %arg12[%c0_59, %c0_60, %c0_61] : memref<18x18x16xf32, #tpu.memory_space<vmem>>, vector<16x16x16xf32>
    %51 = vector.shape_cast %50 : vector<16x16x16xf32> to vector<256x16xf32>
    %c0_62 = arith.constant 0 : index
    %c0_63 = arith.constant 0 : index
    %52 = vector.load %arg13[%c0_62, %c0_63] : memref<256x144xf32, #tpu.memory_space<vmem>>, vector<256x16xf32>
    tpu.vector_store %arg13[%c0_62, %c0_63], %51 {strides = array<i32>} : memref<256x144xf32, #tpu.memory_space<vmem>>, vector<256x16xf32>,
    %c0_64 = arith.constant 0 : index
    %c1_65 = arith.constant 1 : index
    %c0_66 = arith.constant 0 : index
    %53 = vector.load %arg12[%c0_64, %c1_65, %c0_66] : memref<18x18x16xf32, #tpu.memory_space<vmem>>, vector<16x16x16xf32>
    %54 = vector.shape_cast %53 : vector<16x16x16xf32> to vector<256x16xf32>
    %c0_67 = arith.constant 0 : index
    %c16 = arith.constant 16 : index
    %55 = vector.load %arg13[%c0_67, %c16] : memref<256x144xf32, #tpu.memory_space<vmem>>, vector<256x16xf32>
    tpu.vector_store %arg13[%c0_67, %c16], %54 {strides = array<i32>} : memref<256x144xf32, #tpu.memory_space<vmem>>, vector<256x16xf32>,
    %c0_68 = arith.constant 0 : index
    %c2_69 = arith.constant 2 : index
    %c0_70 = arith.constant 0 : index
    %56 = vector.load %arg12[%c0_68, %c2_69, %c0_70] : memref<18x18x16xf32, #tpu.memory_space<vmem>>, vector<16x16x16xf32>
    %57 = vector.shape_cast %56 : vector<16x16x16xf32> to vector<256x16xf32>
    %c0_71 = arith.constant 0 : index
    %c32 = arith.constant 32 : index
    %58 = vector.load %arg13[%c0_71, %c32] : memref<256x144xf32, #tpu.memory_space<vmem>>, vector<256x16xf32>
    tpu.vector_store %arg13[%c0_71, %c32], %57 {strides = array<i32>} : memref<256x144xf32, #tpu.memory_space<vmem>>, vector<256x16xf32>,
    %c1_72 = arith.constant 1 : index
    %c0_73 = arith.constant 0 : index
    %c0_74 = arith.constant 0 : index
    %59 = vector.load %arg12[%c1_72, %c0_73, %c0_74] : memref<18x18x16xf32, #tpu.memory_space<vmem>>, vector<16x16x16xf32>
    %60 = vector.shape_cast %59 : vector<16x16x16xf32> to vector<256x16xf32>
    %c0_75 = arith.constant 0 : index
    %c48 = arith.constant 48 : index
    %61 = vector.load %arg13[%c0_75, %c48] : memref<256x144xf32, #tpu.memory_space<vmem>>, vector<256x16xf32>
    tpu.vector_store %arg13[%c0_75, %c48], %60 {strides = array<i32>} : memref<256x144xf32, #tpu.memory_space<vmem>>, vector<256x16xf32>,
    %c1_76 = arith.constant 1 : index
    %c1_77 = arith.constant 1 : index
    %c0_78 = arith.constant 0 : index
    %62 = vector.load %arg12[%c1_76, %c1_77, %c0_78] : memref<18x18x16xf32, #tpu.memory_space<vmem>>, vector<16x16x16xf32>
    %63 = vector.shape_cast %62 : vector<16x16x16xf32> to vector<256x16xf32>
    %c0_79 = arith.constant 0 : index
    %c64 = arith.constant 64 : index
    %64 = vector.load %arg13[%c0_79, %c64] : memref<256x144xf32, #tpu.memory_space<vmem>>, vector<256x16xf32>
    tpu.vector_store %arg13[%c0_79, %c64], %63 {strides = array<i32>} : memref<256x144xf32, #tpu.memory_space<vmem>>, vector<256x16xf32>,
    %c1_80 = arith.constant 1 : index
    %c2_81 = arith.constant 2 : index
    %c0_82 = arith.constant 0 : index
    %65 = vector.load %arg12[%c1_80, %c2_81, %c0_82] : memref<18x18x16xf32, #tpu.memory_space<vmem>>, vector<16x16x16xf32>
    %66 = vector.shape_cast %65 : vector<16x16x16xf32> to vector<256x16xf32>
    %c0_83 = arith.constant 0 : index
    %c80 = arith.constant 80 : index
    %67 = vector.load %arg13[%c0_83, %c80] : memref<256x144xf32, #tpu.memory_space<vmem>>, vector<256x16xf32>
    tpu.vector_store %arg13[%c0_83, %c80], %66 {strides = array<i32>} : memref<256x144xf32, #tpu.memory_space<vmem>>, vector<256x16xf32>,
    %c2_84 = arith.constant 2 : index
    %c0_85 = arith.constant 0 : index
    %c0_86 = arith.constant 0 : index
    %68 = vector.load %arg12[%c2_84, %c0_85, %c0_86] : memref<18x18x16xf32, #tpu.memory_space<vmem>>, vector<16x16x16xf32>
    %69 = vector.shape_cast %68 : vector<16x16x16xf32> to vector<256x16xf32>
    %c0_87 = arith.constant 0 : index
    %c96 = arith.constant 96 : index
    %70 = vector.load %arg13[%c0_87, %c96] : memref<256x144xf32, #tpu.memory_space<vmem>>, vector<256x16xf32>
    tpu.vector_store %arg13[%c0_87, %c96], %69 {strides = array<i32>} : memref<256x144xf32, #tpu.memory_space<vmem>>, vector<256x16xf32>,
    %c2_88 = arith.constant 2 : index
    %c1_89 = arith.constant 1 : index
    %c0_90 = arith.constant 0 : index
    %71 = vector.load %arg12[%c2_88, %c1_89, %c0_90] : memref<18x18x16xf32, #tpu.memory_space<vmem>>, vector<16x16x16xf32>
    %72 = vector.shape_cast %71 : vector<16x16x16xf32> to vector<256x16xf32>
    %c0_91 = arith.constant 0 : index
    %c112 = arith.constant 112 : index
    %73 = vector.load %arg13[%c0_91, %c112] : memref<256x144xf32, #tpu.memory_space<vmem>>, vector<256x16xf32>
    tpu.vector_store %arg13[%c0_91, %c112], %72 {strides = array<i32>} : memref<256x144xf32, #tpu.memory_space<vmem>>, vector<256x16xf32>,
    %c2_92 = arith.constant 2 : index
    %c2_93 = arith.constant 2 : index
    %c0_94 = arith.constant 0 : index
    %74 = vector.load %arg12[%c2_92, %c2_93, %c0_94] : memref<18x18x16xf32, #tpu.memory_space<vmem>>, vector<16x16x16xf32>
    %75 = vector.shape_cast %74 : vector<16x16x16xf32> to vector<256x16xf32>
    %c0_95 = arith.constant 0 : index
    %c128 = arith.constant 128 : index
    %76 = vector.load %arg13[%c0_95, %c128] : memref<256x144xf32, #tpu.memory_space<vmem>>, vector<256x16xf32>
    tpu.vector_store %arg13[%c0_95, %c128], %75 {strides = array<i32>} : memref<256x144xf32, #tpu.memory_space<vmem>>, vector<256x16xf32>,
    %c0_96 = arith.constant 0 : index
    %c0_97 = arith.constant 0 : index
    %77 = vector.load %arg13[%c0_96, %c0_97] : memref<256x144xf32, #tpu.memory_space<vmem>>, vector<256x144xf32>
    %c0_98 = arith.constant 0 : index
    %c0_99 = arith.constant 0 : index
    %78 = vector.load %arg5[%c0_98, %c0_99] : memref<144x16xf32, #tpu.memory_space<vmem>>, vector<144x16xf32>
    %cst_100 = arith.constant dense<0.000000e+00> : vector<256x16xf32>
    %79 = tpu.matmul %77, %78, %cst_100 {dimension_numbers = #tpu.dot_dimension_numbers<[1], [0], [0], [1], [0, 0, 1, 1], [], []>} : vector<256x144xf32>, vector<144x16xf32>, vector<256x16xf32> -> vector<256x16xf32>
    %c0_101 = arith.constant 0 : index
    %c0_102 = arith.constant 0 : index
    %80 = vector.load %arg6[%c0_101, %c0_102] : memref<1x16xf32, #tpu.memory_space<vmem>>, vector<1x16xf32>
    %81 = vector.broadcast %80 : vector<1x16xf32> to vector<256x16xf32>
    %82 = arith.addf %79, %81 : vector<256x16xf32>
    %cst_103 = arith.constant 0.000000e+00 : f32
    %83 = vector.broadcast %cst_103 : f32 to vector<256x16xf32>
    %84 = arith.maximumf %82, %83 : vector<256x16xf32>
    %85 = vector.shape_cast %84 : vector<256x16xf32> to vector<16x16x16xf32>
    %86 = vector.broadcast %3 : vector<16x16x1xf32> to vector<16x16x16xf32>
    %87 = arith.mulf %85, %86 : vector<16x16x16xf32>
    %c1_104 = arith.constant 1 : index
    %c1_105 = arith.constant 1 : index
    %c0_106 = arith.constant 0 : index
    %88 = vector.load %arg12[%c1_104, %c1_105, %c0_106] : memref<18x18x16xf32, #tpu.memory_space<vmem>>, vector<16x16x16xf32>
    tpu.vector_store %arg12[%c1_104, %c1_105, %c0_106], %87 {strides = array<i32>} : memref<18x18x16xf32, #tpu.memory_space<vmem>>, vector<16x16x16xf32>,
    %c0_107 = arith.constant 0 : index
    %c0_108 = arith.constant 0 : index
    %c0_109 = arith.constant 0 : index
    %89 = vector.load %arg12[%c0_107, %c0_108, %c0_109] : memref<18x18x16xf32, #tpu.memory_space<vmem>>, vector<16x16x16xf32>
    %90 = vector.shape_cast %89 : vector<16x16x16xf32> to vector<256x16xf32>
    %c0_110 = arith.constant 0 : index
    %c0_111 = arith.constant 0 : index
    %91 = vector.load %arg13[%c0_110, %c0_111] : memref<256x144xf32, #tpu.memory_space<vmem>>, vector<256x16xf32>
    tpu.vector_store %arg13[%c0_110, %c0_111], %90 {strides = array<i32>} : memref<256x144xf32, #tpu.memory_space<vmem>>, vector<256x16xf32>,
    %c0_112 = arith.constant 0 : index
    %c1_113 = arith.constant 1 : index
    %c0_114 = arith.constant 0 : index
    %92 = vector.load %arg12[%c0_112, %c1_113, %c0_114] : memref<18x18x16xf32, #tpu.memory_space<vmem>>, vector<16x16x16xf32>
    %93 = vector.shape_cast %92 : vector<16x16x16xf32> to vector<256x16xf32>
    %c0_115 = arith.constant 0 : index
    %c16_116 = arith.constant 16 : index
    %94 = vector.load %arg13[%c0_115, %c16_116] : memref<256x144xf32, #tpu.memory_space<vmem>>, vector<256x16xf32>
    tpu.vector_store %arg13[%c0_115, %c16_116], %93 {strides = array<i32>} : memref<256x144xf32, #tpu.memory_space<vmem>>, vector<256x16xf32>,
    %c0_117 = arith.constant 0 : index
    %c2_118 = arith.constant 2 : index
    %c0_119 = arith.constant 0 : index
    %95 = vector.load %arg12[%c0_117, %c2_118, %c0_119] : memref<18x18x16xf32, #tpu.memory_space<vmem>>, vector<16x16x16xf32>
    %96 = vector.shape_cast %95 : vector<16x16x16xf32> to vector<256x16xf32>
    %c0_120 = arith.constant 0 : index
    %c32_121 = arith.constant 32 : index
    %97 = vector.load %arg13[%c0_120, %c32_121] : memref<256x144xf32, #tpu.memory_space<vmem>>, vector<256x16xf32>
    tpu.vector_store %arg13[%c0_120, %c32_121], %96 {strides = array<i32>} : memref<256x144xf32, #tpu.memory_space<vmem>>, vector<256x16xf32>,
    %c1_122 = arith.constant 1 : index
    %c0_123 = arith.constant 0 : index
    %c0_124 = arith.constant 0 : index
    %98 = vector.load %arg12[%c1_122, %c0_123, %c0_124] : memref<18x18x16xf32, #tpu.memory_space<vmem>>, vector<16x16x16xf32>
    %99 = vector.shape_cast %98 : vector<16x16x16xf32> to vector<256x16xf32>
    %c0_125 = arith.constant 0 : index
    %c48_126 = arith.constant 48 : index
    %100 = vector.load %arg13[%c0_125, %c48_126] : memref<256x144xf32, #tpu.memory_space<vmem>>, vector<256x16xf32>
    tpu.vector_store %arg13[%c0_125, %c48_126], %99 {strides = array<i32>} : memref<256x144xf32, #tpu.memory_space<vmem>>, vector<256x16xf32>,
    %c1_127 = arith.constant 1 : index
    %c1_128 = arith.constant 1 : index
    %c0_129 = arith.constant 0 : index
    %101 = vector.load %arg12[%c1_127, %c1_128, %c0_129] : memref<18x18x16xf32, #tpu.memory_space<vmem>>, vector<16x16x16xf32>
    %102 = vector.shape_cast %101 : vector<16x16x16xf32> to vector<256x16xf32>
    %c0_130 = arith.constant 0 : index
    %c64_131 = arith.constant 64 : index
    %103 = vector.load %arg13[%c0_130, %c64_131] : memref<256x144xf32, #tpu.memory_space<vmem>>, vector<256x16xf32>
    tpu.vector_store %arg13[%c0_130, %c64_131], %102 {strides = array<i32>} : memref<256x144xf32, #tpu.memory_space<vmem>>, vector<256x16xf32>,
    %c1_132 = arith.constant 1 : index
    %c2_133 = arith.constant 2 : index
    %c0_134 = arith.constant 0 : index
    %104 = vector.load %arg12[%c1_132, %c2_133, %c0_134] : memref<18x18x16xf32, #tpu.memory_space<vmem>>, vector<16x16x16xf32>
    %105 = vector.shape_cast %104 : vector<16x16x16xf32> to vector<256x16xf32>
    %c0_135 = arith.constant 0 : index
    %c80_136 = arith.constant 80 : index
    %106 = vector.load %arg13[%c0_135, %c80_136] : memref<256x144xf32, #tpu.memory_space<vmem>>, vector<256x16xf32>
    tpu.vector_store %arg13[%c0_135, %c80_136], %105 {strides = array<i32>} : memref<256x144xf32, #tpu.memory_space<vmem>>, vector<256x16xf32>,
    %c2_137 = arith.constant 2 : index
    %c0_138 = arith.constant 0 : index
    %c0_139 = arith.constant 0 : index
    %107 = vector.load %arg12[%c2_137, %c0_138, %c0_139] : memref<18x18x16xf32, #tpu.memory_space<vmem>>, vector<16x16x16xf32>
    %108 = vector.shape_cast %107 : vector<16x16x16xf32> to vector<256x16xf32>
    %c0_140 = arith.constant 0 : index
    %c96_141 = arith.constant 96 : index
    %109 = vector.load %arg13[%c0_140, %c96_141] : memref<256x144xf32, #tpu.memory_space<vmem>>, vector<256x16xf32>
    tpu.vector_store %arg13[%c0_140, %c96_141], %108 {strides = array<i32>} : memref<256x144xf32, #tpu.memory_space<vmem>>, vector<256x16xf32>,
    %c2_142 = arith.constant 2 : index
    %c1_143 = arith.constant 1 : index
    %c0_144 = arith.constant 0 : index
    %110 = vector.load %arg12[%c2_142, %c1_143, %c0_144] : memref<18x18x16xf32, #tpu.memory_space<vmem>>, vector<16x16x16xf32>
    %111 = vector.shape_cast %110 : vector<16x16x16xf32> to vector<256x16xf32>
    %c0_145 = arith.constant 0 : index
    %c112_146 = arith.constant 112 : index
    %112 = vector.load %arg13[%c0_145, %c112_146] : memref<256x144xf32, #tpu.memory_space<vmem>>, vector<256x16xf32>
    tpu.vector_store %arg13[%c0_145, %c112_146], %111 {strides = array<i32>} : memref<256x144xf32, #tpu.memory_space<vmem>>, vector<256x16xf32>,
    %c2_147 = arith.constant 2 : index
    %c2_148 = arith.constant 2 : index
    %c0_149 = arith.constant 0 : index
    %113 = vector.load %arg12[%c2_147, %c2_148, %c0_149] : memref<18x18x16xf32, #tpu.memory_space<vmem>>, vector<16x16x16xf32>
    %114 = vector.shape_cast %113 : vector<16x16x16xf32> to vector<256x16xf32>
    %c0_150 = arith.constant 0 : index
    %c128_151 = arith.constant 128 : index
    %115 = vector.load %arg13[%c0_150, %c128_151] : memref<256x144xf32, #tpu.memory_space<vmem>>, vector<256x16xf32>
    tpu.vector_store %arg13[%c0_150, %c128_151], %114 {strides = array<i32>} : memref<256x144xf32, #tpu.memory_space<vmem>>, vector<256x16xf32>,
    %c0_152 = arith.constant 0 : index
    %c0_153 = arith.constant 0 : index
    %116 = vector.load %arg13[%c0_152, %c0_153] : memref<256x144xf32, #tpu.memory_space<vmem>>, vector<256x144xf32>
    %c0_154 = arith.constant 0 : index
    %c0_155 = arith.constant 0 : index
    %117 = vector.load %arg7[%c0_154, %c0_155] : memref<144x16xf32, #tpu.memory_space<vmem>>, vector<144x16xf32>
    %cst_156 = arith.constant dense<0.000000e+00> : vector<256x16xf32>
    %118 = tpu.matmul %116, %117, %cst_156 {dimension_numbers = #tpu.dot_dimension_numbers<[1], [0], [0], [1], [0, 0, 1, 1], [], []>} : vector<256x144xf32>, vector<144x16xf32>, vector<256x16xf32> -> vector<256x16xf32>
    %c0_157 = arith.constant 0 : index
    %c0_158 = arith.constant 0 : index
    %119 = vector.load %arg8[%c0_157, %c0_158] : memref<1x16xf32, #tpu.memory_space<vmem>>, vector<1x16xf32>
    %120 = vector.broadcast %119 : vector<1x16xf32> to vector<256x16xf32>
    %121 = arith.addf %118, %120 : vector<256x16xf32>
    %cst_159 = arith.constant 0.000000e+00 : f32
    %122 = vector.broadcast %cst_159 : f32 to vector<256x16xf32>
    %123 = arith.maximumf %121, %122 : vector<256x16xf32>
    %124 = vector.shape_cast %123 : vector<256x16xf32> to vector<16x16x16xf32>
    %125 = vector.broadcast %3 : vector<16x16x1xf32> to vector<16x16x16xf32>
    %126 = arith.mulf %124, %125 : vector<16x16x16xf32>
    %c1_160 = arith.constant 1 : index
    %c1_161 = arith.constant 1 : index
    %c0_162 = arith.constant 0 : index
    %127 = vector.load %arg12[%c1_160, %c1_161, %c0_162] : memref<18x18x16xf32, #tpu.memory_space<vmem>>, vector<16x16x16xf32>
    tpu.vector_store %arg12[%c1_160, %c1_161, %c0_162], %126 {strides = array<i32>} : memref<18x18x16xf32, #tpu.memory_space<vmem>>, vector<16x16x16xf32>,
    %c0_163 = arith.constant 0 : index
    %c0_164 = arith.constant 0 : index
    %c0_165 = arith.constant 0 : index
    %128 = vector.load %arg12[%c0_163, %c0_164, %c0_165] : memref<18x18x16xf32, #tpu.memory_space<vmem>>, vector<16x16x16xf32>
    %129 = vector.shape_cast %128 : vector<16x16x16xf32> to vector<256x16xf32>
    %c0_166 = arith.constant 0 : index
    %c0_167 = arith.constant 0 : index
    %130 = vector.load %arg13[%c0_166, %c0_167] : memref<256x144xf32, #tpu.memory_space<vmem>>, vector<256x16xf32>
    tpu.vector_store %arg13[%c0_166, %c0_167], %129 {strides = array<i32>} : memref<256x144xf32, #tpu.memory_space<vmem>>, vector<256x16xf32>,
    %c0_168 = arith.constant 0 : index
    %c1_169 = arith.constant 1 : index
    %c0_170 = arith.constant 0 : index
    %131 = vector.load %arg12[%c0_168, %c1_169, %c0_170] : memref<18x18x16xf32, #tpu.memory_space<vmem>>, vector<16x16x16xf32>
    %132 = vector.shape_cast %131 : vector<16x16x16xf32> to vector<256x16xf32>
    %c0_171 = arith.constant 0 : index
    %c16_172 = arith.constant 16 : index
    %133 = vector.load %arg13[%c0_171, %c16_172] : memref<256x144xf32, #tpu.memory_space<vmem>>, vector<256x16xf32>
    tpu.vector_store %arg13[%c0_171, %c16_172], %132 {strides = array<i32>} : memref<256x144xf32, #tpu.memory_space<vmem>>, vector<256x16xf32>,
    %c0_173 = arith.constant 0 : index
    %c2_174 = arith.constant 2 : index
    %c0_175 = arith.constant 0 : index
    %134 = vector.load %arg12[%c0_173, %c2_174, %c0_175] : memref<18x18x16xf32, #tpu.memory_space<vmem>>, vector<16x16x16xf32>
    %135 = vector.shape_cast %134 : vector<16x16x16xf32> to vector<256x16xf32>
    %c0_176 = arith.constant 0 : index
    %c32_177 = arith.constant 32 : index
    %136 = vector.load %arg13[%c0_176, %c32_177] : memref<256x144xf32, #tpu.memory_space<vmem>>, vector<256x16xf32>
    tpu.vector_store %arg13[%c0_176, %c32_177], %135 {strides = array<i32>} : memref<256x144xf32, #tpu.memory_space<vmem>>, vector<256x16xf32>,
    %c1_178 = arith.constant 1 : index
    %c0_179 = arith.constant 0 : index
    %c0_180 = arith.constant 0 : index
    %137 = vector.load %arg12[%c1_178, %c0_179, %c0_180] : memref<18x18x16xf32, #tpu.memory_space<vmem>>, vector<16x16x16xf32>
    %138 = vector.shape_cast %137 : vector<16x16x16xf32> to vector<256x16xf32>
    %c0_181 = arith.constant 0 : index
    %c48_182 = arith.constant 48 : index
    %139 = vector.load %arg13[%c0_181, %c48_182] : memref<256x144xf32, #tpu.memory_space<vmem>>, vector<256x16xf32>
    tpu.vector_store %arg13[%c0_181, %c48_182], %138 {strides = array<i32>} : memref<256x144xf32, #tpu.memory_space<vmem>>, vector<256x16xf32>,
    %c1_183 = arith.constant 1 : index
    %c1_184 = arith.constant 1 : index
    %c0_185 = arith.constant 0 : index
    %140 = vector.load %arg12[%c1_183, %c1_184, %c0_185] : memref<18x18x16xf32, #tpu.memory_space<vmem>>, vector<16x16x16xf32>
    %141 = vector.shape_cast %140 : vector<16x16x16xf32> to vector<256x16xf32>
    %c0_186 = arith.constant 0 : index
    %c64_187 = arith.constant 64 : index
    %142 = vector.load %arg13[%c0_186, %c64_187] : memref<256x144xf32, #tpu.memory_space<vmem>>, vector<256x16xf32>
    tpu.vector_store %arg13[%c0_186, %c64_187], %141 {strides = array<i32>} : memref<256x144xf32, #tpu.memory_space<vmem>>, vector<256x16xf32>,
    %c1_188 = arith.constant 1 : index
    %c2_189 = arith.constant 2 : index
    %c0_190 = arith.constant 0 : index
    %143 = vector.load %arg12[%c1_188, %c2_189, %c0_190] : memref<18x18x16xf32, #tpu.memory_space<vmem>>, vector<16x16x16xf32>
    %144 = vector.shape_cast %143 : vector<16x16x16xf32> to vector<256x16xf32>
    %c0_191 = arith.constant 0 : index
    %c80_192 = arith.constant 80 : index
    %145 = vector.load %arg13[%c0_191, %c80_192] : memref<256x144xf32, #tpu.memory_space<vmem>>, vector<256x16xf32>
    tpu.vector_store %arg13[%c0_191, %c80_192], %144 {strides = array<i32>} : memref<256x144xf32, #tpu.memory_space<vmem>>, vector<256x16xf32>,
    %c2_193 = arith.constant 2 : index
    %c0_194 = arith.constant 0 : index
    %c0_195 = arith.constant 0 : index
    %146 = vector.load %arg12[%c2_193, %c0_194, %c0_195] : memref<18x18x16xf32, #tpu.memory_space<vmem>>, vector<16x16x16xf32>
    %147 = vector.shape_cast %146 : vector<16x16x16xf32> to vector<256x16xf32>
    %c0_196 = arith.constant 0 : index
    %c96_197 = arith.constant 96 : index
    %148 = vector.load %arg13[%c0_196, %c96_197] : memref<256x144xf32, #tpu.memory_space<vmem>>, vector<256x16xf32>
    tpu.vector_store %arg13[%c0_196, %c96_197], %147 {strides = array<i32>} : memref<256x144xf32, #tpu.memory_space<vmem>>, vector<256x16xf32>,
    %c2_198 = arith.constant 2 : index
    %c1_199 = arith.constant 1 : index
    %c0_200 = arith.constant 0 : index
    %149 = vector.load %arg12[%c2_198, %c1_199, %c0_200] : memref<18x18x16xf32, #tpu.memory_space<vmem>>, vector<16x16x16xf32>
    %150 = vector.shape_cast %149 : vector<16x16x16xf32> to vector<256x16xf32>
    %c0_201 = arith.constant 0 : index
    %c112_202 = arith.constant 112 : index
    %151 = vector.load %arg13[%c0_201, %c112_202] : memref<256x144xf32, #tpu.memory_space<vmem>>, vector<256x16xf32>
    tpu.vector_store %arg13[%c0_201, %c112_202], %150 {strides = array<i32>} : memref<256x144xf32, #tpu.memory_space<vmem>>, vector<256x16xf32>,
    %c2_203 = arith.constant 2 : index
    %c2_204 = arith.constant 2 : index
    %c0_205 = arith.constant 0 : index
    %152 = vector.load %arg12[%c2_203, %c2_204, %c0_205] : memref<18x18x16xf32, #tpu.memory_space<vmem>>, vector<16x16x16xf32>
    %153 = vector.shape_cast %152 : vector<16x16x16xf32> to vector<256x16xf32>
    %c0_206 = arith.constant 0 : index
    %c128_207 = arith.constant 128 : index
    %154 = vector.load %arg13[%c0_206, %c128_207] : memref<256x144xf32, #tpu.memory_space<vmem>>, vector<256x16xf32>
    tpu.vector_store %arg13[%c0_206, %c128_207], %153 {strides = array<i32>} : memref<256x144xf32, #tpu.memory_space<vmem>>, vector<256x16xf32>,
    %c0_208 = arith.constant 0 : index
    %c0_209 = arith.constant 0 : index
    %155 = vector.load %arg13[%c0_208, %c0_209] : memref<256x144xf32, #tpu.memory_space<vmem>>, vector<256x144xf32>
    %c0_210 = arith.constant 0 : index
    %c0_211 = arith.constant 0 : index
    %156 = vector.load %arg9[%c0_210, %c0_211] : memref<3x144xf32, #tpu.memory_space<vmem>>, vector<3x144xf32>
    %cst_212 = arith.constant dense<0.000000e+00> : vector<3x256xf32>
    %157 = tpu.matmul %156, %155, %cst_212 {dimension_numbers = #tpu.dot_dimension_numbers<[1], [1], [0], [0], [0, 0, 1, 0], [], []>} : vector<3x144xf32>, vector<256x144xf32>, vector<3x256xf32> -> vector<3x256xf32>
    %c0_213 = arith.constant 0 : index
    %c0_214 = arith.constant 0 : index
    %158 = vector.load %arg10[%c0_213, %c0_214] : memref<3x1xf32, #tpu.memory_space<vmem>>, vector<3x1xf32>
    %159 = vector.broadcast %158 : vector<3x1xf32> to vector<3x256xf32>
    %160 = arith.addf %157, %159 : vector<3x256xf32>
    %161 = vector.shape_cast %160 : vector<3x256xf32> to vector<1x3x256xf32>
    %c0_215 = arith.constant 0 : index
    %c0_216 = arith.constant 0 : index
    %c0_217 = arith.constant 0 : index
    %162 = vector.load %arg11[%c0_215, %c0_216, %c0_217] : memref<1x3x256xf32, #tpu.memory_space<vmem>>, vector<1x3x256xf32>
    tpu.vector_store %arg11[%c0_215, %c0_216, %c0_217], %161 {strides = array<i32>} : memref<1x3x256xf32, #tpu.memory_space<vmem>>, vector<1x3x256xf32>,
    return
  }
  func.func @transform_0(%arg0: i32) -> (i32, i32, i32, i32) {
    %c0_i32 = arith.constant 0 : i32
    %c0_i32_0 = arith.constant 0 : i32
    %c0_i32_1 = arith.constant 0 : i32
    %c0_i32_2 = arith.constant 0 : i32
    return %arg0, %c0_i32, %c0_i32_0, %c0_i32_1 : i32, i32, i32, i32
  }
  func.func @transform_1(%arg0: i32) -> (i32, i32, i32, i32) {
    %c0_i32 = arith.constant 0 : i32
    %c0_i32_0 = arith.constant 0 : i32
    %c0_i32_1 = arith.constant 0 : i32
    %c0_i32_2 = arith.constant 0 : i32
    return %arg0, %c0_i32, %c0_i32_0, %c0_i32_1 : i32, i32, i32, i32
  }
  func.func @transform_2(%arg0: i32) -> (i32, i32) {
    %c0_i32 = arith.constant 0 : i32
    %c0_i32_0 = arith.constant 0 : i32
    %c0_i32_1 = arith.constant 0 : i32
    return %c0_i32, %c0_i32_0 : i32, i32
  }
  func.func @transform_3(%arg0: i32) -> (i32, i32) {
    %c0_i32 = arith.constant 0 : i32
    %c0_i32_0 = arith.constant 0 : i32
    %c0_i32_1 = arith.constant 0 : i32
    return %c0_i32, %c0_i32_0 : i32, i32
  }
  func.func @transform_4(%arg0: i32) -> (i32, i32) {
    %c0_i32 = arith.constant 0 : i32
    %c0_i32_0 = arith.constant 0 : i32
    %c0_i32_1 = arith.constant 0 : i32
    return %c0_i32, %c0_i32_0 : i32, i32
  }
  func.func @transform_5(%arg0: i32) -> (i32, i32) {
    %c0_i32 = arith.constant 0 : i32
    %c0_i32_0 = arith.constant 0 : i32
    %c0_i32_1 = arith.constant 0 : i32
    return %c0_i32, %c0_i32_0 : i32, i32
  }
  func.func @transform_6(%arg0: i32) -> (i32, i32) {
    %c0_i32 = arith.constant 0 : i32
    %c0_i32_0 = arith.constant 0 : i32
    %c0_i32_1 = arith.constant 0 : i32
    return %c0_i32, %c0_i32_0 : i32, i32
  }
  func.func @transform_7(%arg0: i32) -> (i32, i32) {
    %c0_i32 = arith.constant 0 : i32
    %c0_i32_0 = arith.constant 0 : i32
    %c0_i32_1 = arith.constant 0 : i32
    return %c0_i32, %c0_i32_0 : i32, i32
  }
  func.func @transform_8(%arg0: i32) -> (i32, i32) {
    %c0_i32 = arith.constant 0 : i32
    %c0_i32_0 = arith.constant 0 : i32
    %c0_i32_1 = arith.constant 0 : i32
    return %c0_i32, %c0_i32_0 : i32, i32
  }
  func.func @transform_9(%arg0: i32) -> (i32, i32) {
    %c0_i32 = arith.constant 0 : i32
    %c0_i32_0 = arith.constant 0 : i32
    %c0_i32_1 = arith.constant 0 : i32
    return %c0_i32, %c0_i32_0 : i32, i32
  }
  func.func @transform_10(%arg0: i32) -> (i32, i32, i32) {
    %c0_i32 = arith.constant 0 : i32
    %c0_i32_0 = arith.constant 0 : i32
    %c0_i32_1 = arith.constant 0 : i32
    return %arg0, %c0_i32, %c0_i32_0 : i32, i32, i32
  }
}

</mosaic_0001>

<llo_original>
// kernel: masked_sequential.1
$region0: #{masked_sequential.1}
  #allocation0 [shape = 'u32[]', space=smem, size = 0x4, offset = 0x4, fixed_abs, tag = 'smem constant byte address 0x4 - core index']
  #allocation1 [shape = 'u32[144,128]{1,0:T(1,128)}', space=vmem, size = 0x12000, scoped, tag = 'internal scratch']
  #allocation2 [shape = 'f32[18,18,16]{2,1,0:T(8,128)}', space=vmem, size = 0x36000, scoped, tag = 'scratch operand']
  #allocation3 [shape = 'f32[256,144]{1,0:T(8,128)}', space=vmem, size = 0x40000, scoped, tag = 'scratch operand']
  %s0 = inlined_call_operand.vmem [shape: f32[2,16,16,3], index: 0, kind: input, shape index: {}]
  %s1 = inlined_call_operand.vmem [shape: f32[2,16,16,1], index: 1, kind: input, shape index: {}]
  %s2 = inlined_call_operand.vmem [shape: f32[27,16], index: 2, kind: input, shape index: {}]
  %s3 = inlined_call_operand.vmem [shape: f32[1,16], index: 3, kind: input, shape index: {}]
  %s4 = inlined_call_operand.vmem [shape: f32[144,16], index: 4, kind: input, shape index: {}]
  %s5 = inlined_call_operand.vmem [shape: f32[1,16], index: 5, kind: input, shape index: {}]
  %s6 = inlined_call_operand.vmem [shape: f32[144,16], index: 6, kind: input, shape index: {}]
  %s7 = inlined_call_operand.vmem [shape: f32[1,16], index: 7, kind: input, shape index: {}]
  %s8 = inlined_call_operand.vmem [shape: f32[3,144], index: 8, kind: input, shape index: {}]
  %s9 = inlined_call_operand.vmem [shape: f32[3,1], index: 9, kind: input, shape index: {}]
  %s10 = inlined_call_operand.vmem [shape: f32[2,3,256], index: 10, kind: output, shape index: {}]
  %s11 = sld [smem:[#allocation0]]
  $region73: #{masked_sequential.1} parent=0
    _
  %s13 = ssub.s32 1, %s11
  %s14 = scalar_select 0, %s13, %s11
  loop: start=0, step=1, limit=4
  $region2: #{masked_sequential.1} parent=0 // loop_pre_header
    _
  $region3: #{masked_sequential.1} parent=0 // loop_header
    %s16 = sphi 0, %s20
    %p17 = scmp.ge.s32.totalorder %s16, 4
    %s26 = sphi 0, %s28
    %s29 = sphi 0, %s26
    %s30 = sphi 0, %s29
    %s46 = sphi 0, %s30
    %s52 = sphi 0, %s54
    %s55 = sphi 0, %s52
    %s56 = sphi 0, %s55
    %s72 = sphi 0, %s56
    %s76 = sphi 0, %s76
    %s78 = sphi 0, %s76
    %s79 = sphi 0, %s78
    %s93 = sphi 0, %s79
    %s97 = sphi 0, %s97
    %s99 = sphi 0, %s97
    %s100 = sphi 0, %s99
    %s114 = sphi 0, %s100
    %s118 = sphi 0, %s118
    %s120 = sphi 0, %s118
    %s121 = sphi 0, %s120
    %s135 = sphi 0, %s121
    %s139 = sphi 0, %s139
    %s141 = sphi 0, %s139
    %s142 = sphi 0, %s141
    %s156 = sphi 0, %s142
    %s160 = sphi 0, %s160
    %s162 = sphi 0, %s160
    %s163 = sphi 0, %s162
    %s177 = sphi 0, %s163
    %s181 = sphi 0, %s181
    %s183 = sphi 0, %s181
    %s184 = sphi 0, %s183
    %s198 = sphi 0, %s184
    %s202 = sphi 0, %s202
    %s204 = sphi 0, %s202
    %s205 = sphi 0, %s204
    %s219 = sphi 0, %s205
    %s223 = sphi 0, %s223
    %s225 = sphi 0, %s223
    %s226 = sphi 0, %s225
    %s240 = sphi 0, %s226
    %s246 = sphi 0, %s248
    %s249 = sphi 0, %s246
    %s250 = sphi 0, %s249
    %s266 = sphi 0, %s250
  $region4: #{masked_sequential.1} parent=0 // loop_header_branch
    %19 = sbr.rel (%p17) target = $region8
  $region5: #{masked_sequential.1} parent=0 // loop_body
    %s21 = ssub.s32 %s16, 1
    %s22 = ssub.s32 %s16, 2
    %s23 = sadd.s32 %s16, 1
    %s24 = ssub.s32 %s16, %s23
    %p25 = scmp.eq.s32.totalorder %s24, 0
    %s27 = sadd.s32 %s26, 1
    %s28 = scalar_select %p25, %s26, %s27
    %p31 = pneg %p25
    %p32 = scmp.eq.s32.totalorder %s16, 1
    %p33 = por %p31, %p32
    %p34 = scmp.ne.s32.totalorder %s26, %s29
    %p35 = scmp.eq.s32.totalorder %s16, 0
    %p36 = por %p34, %p35
    %p37 = scmp.ne.s32.totalorder %s26, %s29
    %p38 = scmp.eq.s32.totalorder %s21, 1
    %p39 = por %p37, %p38
    %p40 = scmp.ne.s32.totalorder %s29, %s30
    %p41 = scmp.eq.s32.totalorder %s21, 0
    %p42 = por %p40, %p41
    %p43 = scmp.ne.s32.totalorder %s29, %s30
    %p44 = scmp.eq.s32.totalorder %s22, 1
    %p45 = por %p43, %p44
    %p47 = scmp.ne.s32.totalorder %s30, %s46
    %p48 = scmp.eq.s32.totalorder %s22, 0
    %p49 = por %p47, %p48
    %s50 = ssub.s32 %s16, %s23
    %p51 = scmp.eq.s32.totalorder %s50, 0
    %s53 = sadd.s32 %s52, 1
    %s54 = scalar_select %p51, %s52, %s53
    %p57 = pneg %p51
    %p58 = scmp.eq.s32.totalorder %s16, 1
    %p59 = por %p57, %p58
    %p60 = scmp.ne.s32.totalorder %s52, %s55
    %p61 = scmp.eq.s32.totalorder %s16, 0
    %p62 = por %p60, %p61
    %p63 = scmp.ne.s32.totalorder %s52, %s55
    %p64 = scmp.eq.s32.totalorder %s21, 1
    %p65 = por %p63, %p64
    %p66 = scmp.ne.s32.totalorder %s55, %s56
    %p67 = scmp.eq.s32.totalorder %s21, 0
    %p68 = por %p66, %p67
    %p69 = scmp.ne.s32.totalorder %s55, %s56
    %p70 = scmp.eq.s32.totalorder %s22, 1
    %p71 = por %p69, %p70
    %p73 = scmp.ne.s32.totalorder %s56, %s72
    %p74 = scmp.eq.s32.totalorder %s22, 0
    %p75 = por %p73, %p74
    %s77 = sadd.s32 %s76, 1
    %p80 = scmp.eq.s32.totalorder %s16, 1
    %p81 = scmp.ne.s32.totalorder %s76, %s78
    %p82 = scmp.eq.s32.totalorder %s16, 0
    %p83 = por %p81, %p82
    %p84 = scmp.ne.s32.totalorder %s76, %s78
    %p85 = scmp.eq.s32.totalorder %s21, 1
    %p86 = por %p84, %p85
    %p87 = scmp.ne.s32.totalorder %s78, %s79
    %p88 = scmp.eq.s32.totalorder %s21, 0
    %p89 = por %p87, %p88
    %p90 = scmp.ne.s32.totalorder %s78, %s79
    %p91 = scmp.eq.s32.totalorder %s22, 1
    %p92 = por %p90, %p91
    %p94 = scmp.ne.s32.totalorder %s79, %s93
    %p95 = scmp.eq.s32.totalorder %s22, 0
    %p96 = por %p94, %p95
    %s98 = sadd.s32 %s97, 1
    %p101 = scmp.eq.s32.totalorder %s16, 1
    %p102 = scmp.ne.s32.totalorder %s97, %s99
    %p103 = scmp.eq.s32.totalorder %s16, 0
    %p104 = por %p102, %p103
    %p105 = scmp.ne.s32.totalorder %s97, %s99
    %p106 = scmp.eq.s32.totalorder %s21, 1
    %p107 = por %p105, %p106
    %p108 = scmp.ne.s32.totalorder %s99, %s100
    %p109 = scmp.eq.s32.totalorder %s21, 0
    %p110 = por %p108, %p109
    %p111 = scmp.ne.s32.totalorder %s99, %s100
    %p112 = scmp.eq.s32.totalorder %s22, 1
    %p113 = por %p111, %p112
    %p115 = scmp.ne.s32.totalorder %s100, %s114
    %p116 = scmp.eq.s32.totalorder %s22, 0
    %p117 = por %p115, %p116
    %s119 = sadd.s32 %s118, 1
    %p122 = scmp.eq.s32.totalorder %s16, 1
    %p123 = scmp.ne.s32.totalorder %s118, %s120
    %p124 = scmp.eq.s32.totalorder %s16, 0
    %p125 = por %p123, %p124
    %p126 = scmp.ne.s32.totalorder %s118, %s120
    %p127 = scmp.eq.s32.totalorder %s21, 1
    %p128 = por %p126, %p127
    %p129 = scmp.ne.s32.totalorder %s120, %s121
    %p130 = scmp.eq.s32.totalorder %s21, 0
    %p131 = por %p129, %p130
    %p132 = scmp.ne.s32.totalorder %s120, %s121
    %p133 = scmp.eq.s32.totalorder %s22, 1
    %p134 = por %p132, %p133
    %p136 = scmp.ne.s32.totalorder %s121, %s135
    %p137 = scmp.eq.s32.totalorder %s22, 0
    %p138 = por %p136, %p137
    %s140 = sadd.s32 %s139, 1
    %p143 = scmp.eq.s32.totalorder %s16, 1
    %p144 = scmp.ne.s32.totalorder %s139, %s141
    %p145 = scmp.eq.s32.totalorder %s16, 0
    %p146 = por %p144, %p145
    %p147 = scmp.ne.s32.totalorder %s139, %s141
    %p148 = scmp.eq.s32.totalorder %s21, 1
    %p149 = por %p147, %p148
    %p150 = scmp.ne.s32.totalorder %s141, %s142
    %p151 = scmp.eq.s32.totalorder %s21, 0
    %p152 = por %p150, %p151
    %p153 = scmp.ne.s32.totalorder %s141, %s142
    %p154 = scmp.eq.s32.totalorder %s22, 1
    %p155 = por %p153, %p154
    %p157 = scmp.ne.s32.totalorder %s142, %s156
    %p158 = scmp.eq.s32.totalorder %s22, 0
    %p159 = por %p157, %p158
    %s161 = sadd.s32 %s160, 1
    %p164 = scmp.eq.s32.totalorder %s16, 1
    %p165 = scmp.ne.s32.totalorder %s160, %s162
    %p166 = scmp.eq.s32.totalorder %s16, 0
    %p167 = por %p165, %p166
    %p168 = scmp.ne.s32.totalorder %s160, %s162
    %p169 = scmp.eq.s32.totalorder %s21, 1
    %p170 = por %p168, %p169
    %p171 = scmp.ne.s32.totalorder %s162, %s163
    %p172 = scmp.eq.s32.totalorder %s21, 0
    %p173 = por %p171, %p172
    %p174 = scmp.ne.s32.totalorder %s162, %s163
    %p175 = scmp.eq.s32.totalorder %s22, 1
    %p176 = por %p174, %p175
    %p178 = scmp.ne.s32.totalorder %s163, %s177
    %p179 = scmp.eq.s32.totalorder %s22, 0
    %p180 = por %p178, %p179
    %s182 = sadd.s32 %s181, 1
    %p185 = scmp.eq.s32.totalorder %s16, 1
    %p186 = scmp.ne.s32.totalorder %s181, %s183
    %p187 = scmp.eq.s32.totalorder %s16, 0
    %p188 = por %p186, %p187
    %p189 = scmp.ne.s32.totalorder %s181, %s183
    %p190 = scmp.eq.s32.totalorder %s21, 1
    %p191 = por %p189, %p190
    %p192 = scmp.ne.s32.totalorder %s183, %s184
    %p193 = scmp.eq.s32.totalorder %s21, 0
    %p194 = por %p192, %p193
    %p195 = scmp.ne.s32.totalorder %s183, %s184
    %p196 = scmp.eq.s32.totalorder %s22, 1
    %p197 = por %p195, %p196
    %p199 = scmp.ne.s32.totalorder %s184, %s198
    %p200 = scmp.eq.s32.totalorder %s22, 0
    %p201 = por %p199, %p200
    %s203 = sadd.s32 %s202, 1
    %p206 = scmp.eq.s32.totalorder %s16, 1
    %p207 = scmp.ne.s32.totalorder %s202, %s204
    %p208 = scmp.eq.s32.totalorder %s16, 0
    %p209 = por %p207, %p208
    %p210 = scmp.ne.s32.totalorder %s202, %s204
    %p211 = scmp.eq.s32.totalorder %s21, 1
    %p212 = por %p210, %p211
    %p213 = scmp.ne.s32.totalorder %s204, %s205
    %p214 = scmp.eq.s32.totalorder %s21, 0
    %p215 = por %p213, %p214
    %p216 = scmp.ne.s32.totalorder %s204, %s205
    %p217 = scmp.eq.s32.totalorder %s22, 1
    %p218 = por %p216, %p217
    %p220 = scmp.ne.s32.totalorder %s205, %s219
    %p221 = scmp.eq.s32.totalorder %s22, 0
    %p222 = por %p220, %p221
    %s224 = sadd.s32 %s223, 1
    %p227 = scmp.eq.s32.totalorder %s16, 1
    %p228 = scmp.ne.s32.totalorder %s223, %s225
    %p229 = scmp.eq.s32.totalorder %s16, 0
    %p230 = por %p228, %p229
    %p231 = scmp.ne.s32.totalorder %s223, %s225
    %p232 = scmp.eq.s32.totalorder %s21, 1
    %p233 = por %p231, %p232
    %p234 = scmp.ne.s32.totalorder %s225, %s226
    %p235 = scmp.eq.s32.totalorder %s21, 0
    %p236 = por %p234, %p235
    %p237 = scmp.ne.s32.totalorder %s225, %s226
    %p238 = scmp.eq.s32.totalorder %s22, 1
    %p239 = por %p237, %p238
    %p241 = scmp.ne.s32.totalorder %s226, %s240
    %p242 = scmp.eq.s32.totalorder %s22, 0
    %p243 = por %p241, %p242
    %s244 = ssub.s32 %s16, %s23
    %p245 = scmp.eq.s32.totalorder %s244, 0
    %s247 = sadd.s32 %s246, 1
    %s248 = scalar_select %p245, %s246, %s247
    %p251 = pneg %p245
    %p252 = scmp.eq.s32.totalorder %s16, 1
    %p253 = por %p251, %p252
    %p254 = scmp.ne.s32.totalorder %s246, %s249
    %p255 = scmp.eq.s32.totalorder %s16, 0
    %p256 = por %p254, %p255
    %p257 = scmp.ne.s32.totalorder %s246, %s249
    %p258 = scmp.eq.s32.totalorder %s21, 1
    %p259 = por %p257, %p258
    %p260 = scmp.ne.s32.totalorder %s249, %s250
    %p261 = scmp.eq.s32.totalorder %s21, 0
    %p262 = por %p260, %p261
    %p263 = scmp.ne.s32.totalorder %s249, %s250
    %p264 = scmp.eq.s32.totalorder %s22, 1
    %p265 = por %p263, %p264
    %p267 = scmp.ne.s32.totalorder %s250, %s266
    %p268 = scmp.eq.s32.totalorder %s22, 0
    %p269 = por %p267, %p268
    %p270 = scmp.le.s32.totalorder 1, %s16
    %p271 = scmp.lt.s32.totalorder %s16, 3
    %p272 = pnand %p270, %p271
    %p273 = pneg %p272
    // Predicated region
    $region9: #{masked_sequential.1} parent=5 // pred_check
      _
    $region10: #{masked_sequential.1} parent=5 // pred_check_branch
      %275 = sbr.rel (%p272) target = $region12
    $region11: #{masked_sequential.1} parent=5 // pred_region
      %s276 = ssub.s32 %s16, 1
      // Predicated region
      $region13: #{masked_sequential.1} parent=11 // pred_check
        %p277 = pneg %p89
      $region14: #{masked_sequential.1} parent=11 // pred_check_branch
        %279 = sbr.rel (%p277) target = $region16
      $region15: #{masked_sequential.1} parent=11 // pred_region
        _
      $region16: #{masked_sequential.1} parent=11 // pred_fallthru
        _
      // Predicated region
      $region17: #{masked_sequential.1} parent=11 // pred_check
        %p280 = pneg %p110
      $region18: #{masked_sequential.1} parent=11 // pred_check_branch
        %282 = sbr.rel (%p280) target = $region20
      $region19: #{masked_sequential.1} parent=11 // pred_region
        _
      $region20: #{masked_sequential.1} parent=11 // pred_fallthru
        _
      // Predicated region
      $region21: #{masked_sequential.1} parent=11 // pred_check
        %p283 = pneg %p131
      $region22: #{masked_sequential.1} parent=11 // pred_check_branch
        %285 = sbr.rel (%p283) target = $region24
      $region23: #{masked_sequential.1} parent=11 // pred_region
        _
      $region24: #{masked_sequential.1} parent=11 // pred_fallthru
        _
      // Predicated region
      $region25: #{masked_sequential.1} parent=11 // pred_check
        %p286 = pneg %p152
      $region26: #{masked_sequential.1} parent=11 // pred_check_branch
        %288 = sbr.rel (%p286) target = $region28
      $region27: #{masked_sequential.1} parent=11 // pred_region
        _
      $region28: #{masked_sequential.1} parent=11 // pred_fallthru
        _
      // Predicated region
      $region29: #{masked_sequential.1} parent=11 // pred_check
        %p289 = pneg %p173
      $region30: #{masked_sequential.1} parent=11 // pred_check_branch
        %291 = sbr.rel (%p289) target = $region32
      $region31: #{masked_sequential.1} parent=11 // pred_region
        _
      $region32: #{masked_sequential.1} parent=11 // pred_fallthru
        _
      // Predicated region
      $region33: #{masked_sequential.1} parent=11 // pred_check
        %p292 = pneg %p194
      $region34: #{masked_sequential.1} parent=11 // pred_check_branch
        %294 = sbr.rel (%p292) target = $region36
      $region35: #{masked_sequential.1} parent=11 // pred_region
        _
      $region36: #{masked_sequential.1} parent=11 // pred_fallthru
        _
      // Predicated region
      $region37: #{masked_sequential.1} parent=11 // pred_check
        %p295 = pneg %p215
      $region38: #{masked_sequential.1} parent=11 // pred_check_branch
        %297 = sbr.rel (%p295) target = $region40
      $region39: #{masked_sequential.1} parent=11 // pred_region
        _
      $region40: #{masked_sequential.1} parent=11 // pred_fallthru
        _
      // Predicated region
      $region41: #{masked_sequential.1} parent=11 // pred_check
        %p298 = pneg %p236
      $region42: #{masked_sequential.1} parent=11 // pred_check_branch
        %300 = sbr.rel (%p298) target = $region44
      $region43: #{masked_sequential.1} parent=11 // pred_region
        _
      $region44: #{masked_sequential.1} parent=11 // pred_fallthru
        _
    $region12: #{masked_sequential.1} parent=5 // pred_fallthru
      _
    %p301 = scmp.lt.s32.totalorder %s16, 2
    // Predicated region
    $region45: #{masked_sequential.1} parent=5 // pred_check
      %p302 = pneg %p301
    $region46: #{masked_sequential.1} parent=5 // pred_check_branch
      %304 = sbr.rel (%p302) target = $region48
    $region47: #{masked_sequential.1} parent=5 // pred_region
      // Predicated region
      $region49: #{masked_sequential.1} parent=47 // pred_check
        %p305 = pneg %p36
      $region50: #{masked_sequential.1} parent=47 // pred_check_branch
        %307 = sbr.rel (%p305) target = $region52
      $region51: #{masked_sequential.1} parent=47 // pred_region
        %p308 = scmp.lt.s32.totalorder %s16, 1
        %s309 = scalar_select %p308, %s16, 1
        %s310 = smul.addr %s309, 32
        %s311 = smul.addr %s310, 8
        %s312 = scalar_lea.vmem %s0, %s311
      $region52: #{masked_sequential.1} parent=47 // pred_fallthru
        _
      // Predicated region
      $region53: #{masked_sequential.1} parent=47 // pred_check
        %p313 = pneg %p62
      $region54: #{masked_sequential.1} parent=47 // pred_check_branch
        %315 = sbr.rel (%p313) target = $region56
      $region55: #{masked_sequential.1} parent=47 // pred_region
        %p316 = scmp.lt.s32.totalorder %s16, 1
        %s317 = scalar_select %p316, %s16, 1
        %s318 = smul.addr %s317, 32
        %s319 = smul.addr %s318, 8
        %s320 = scalar_lea.vmem %s1, %s319
      $region56: #{masked_sequential.1} parent=47 // pred_fallthru
        _
    $region48: #{masked_sequential.1} parent=5 // pred_fallthru
      _
    %p321 = scmp.le.s32.totalorder 1, %s16
    %p322 = scmp.lt.s32.totalorder %s16, 3
    %p323 = pnand %p321, %p322
    %p324 = pneg %p323
    // Predicated region
    $region57: #{masked_sequential.1} parent=5 // pred_check
      _
    $region58: #{masked_sequential.1} parent=5 // pred_check_branch
      %326 = sbr.rel (%p323) target = $region60
    $region59: #{masked_sequential.1} parent=5 // pred_region
      %s327 = ssub.s32 %s16, 1
      %p328 = scmp.lt.s32.totalorder %s21, 1
      %s329 = scalar_select %p328, %s21, 1
      %s330 = smul.addr %s329, 32
      %s331 = smul.addr %s330, 8
      %s332 = scalar_lea.vmem %s0, %s331
      %p333 = pneg %p42
      %p334 = pneg %p39
      %p335 = scmp.lt.s32.totalorder %s21, 1
      %s336 = scalar_select %p335, %s21, 1
      %s337 = smul.addr %s336, 32
      %s338 = smul.addr %s337, 8
      %s339 = scalar_lea.vmem %s1, %s338
      %p340 = pneg %p68
      %p341 = pneg %p65
      %p342 = pneg %p89
      %p343 = pneg %p86
      %p344 = pneg %p110
      %p345 = pneg %p107
      %p346 = pneg %p131
      %p347 = pneg %p128
      %p348 = pneg %p152
      %p349 = pneg %p149
      %p350 = pneg %p173
      %p351 = pneg %p170
      %p352 = pneg %p194
      %p353 = pneg %p191
      %p354 = pneg %p215
      %p355 = pneg %p212
      %p356 = pneg %p236
      %p357 = pneg %p233
      %p358 = pneg %p262
      %p359 = pneg %p259
      %p360 = scmp.lt.s32.totalorder %s21, 1
      %s361 = scalar_select %p360, %s21, 1
      %s362 = smul.addr %s361, 2
      %s363 = smul.addr %s362, 4
      %s364 = scalar_lea.vmem %s10, %s363
      %p365 = scmp.lt.s32.totalorder %s21, 1
      %s366 = scalar_select %p365, %s21, 1
      %s367 = smul.addr %s366, 32
      %s368 = smul.addr %s367, 8
      %s369 = scalar_lea.vmem %s0, %s368
      %p370 = scmp.lt.s32.totalorder %s21, 1
      %s371 = scalar_select %p370, %s21, 1
      %s372 = smul.addr %s371, 32
      %s373 = smul.addr %s372, 8
      %s374 = scalar_lea.vmem %s1, %s373
      %p375 = scmp.lt.s32.totalorder %s21, 1
      %s376 = scalar_select %p375, %s21, 1
      %s377 = smul.addr %s376, 2
      %s378 = smul.addr %s377, 4
      %s379 = scalar_lea.vmem %s10, %s378
      %vm380 = vcmask 130048
      %381 = vst.msk [vmem:[#allocation2] sm:$0xff] %vm380, 0.0
      %382 = vst.msk [vmem:[#allocation2 + $0x8] sm:$0xff] %vm380, 0.0
      %vm383 = vcmask 123904
      %384 = vst.msk [vmem:[#allocation2 + $0x10] sm:$0x3] %vm383, 0.0
      %385 = vst.msk [vmem:[#allocation2 + $0x18] sm:$0xff] %vm380, 0.0
      %386 = vst.msk [vmem:[#allocation2 + $0x20] sm:$0xff] %vm380, 0.0
      %387 = vst.msk [vmem:[#allocation2 + $0x28] sm:$0x3] %vm383, 0.0
      %388 = vst.msk [vmem:[#allocation2 + $0x30] sm:$0xff] %vm380, 0.0
      %389 = vst.msk [vmem:[#allocation2 + $0x38] sm:$0xff] %vm380, 0.0
      %390 = vst.msk [vmem:[#allocation2 + $0x40] sm:$0x3] %vm383, 0.0
      %391 = vst.msk [vmem:[#allocation2 + $0x48] sm:$0xff] %vm380, 0.0
      %392 = vst.msk [vmem:[#allocation2 + $0x50] sm:$0xff] %vm380, 0.0
      %393 = vst.msk [vmem:[#allocation2 + $0x58] sm:$0x3] %vm383, 0.0
      %394 = vst.msk [vmem:[#allocation2 + $0x60] sm:$0xff] %vm380, 0.0
      %395 = vst.msk [vmem:[#allocation2 + $0x68] sm:$0xff] %vm380, 0.0
      %396 = vst.msk [vmem:[#allocation2 + $0x70] sm:$0x3] %vm383, 0.0
      %397 = vst.msk [vmem:[#allocation2 + $0x78] sm:$0xff] %vm380, 0.0
      %398 = vst.msk [vmem:[#allocation2 + $0x80] sm:$0xff] %vm380, 0.0
      %399 = vst.msk [vmem:[#allocation2 + $0x88] sm:$0x3] %vm383, 0.0
      %400 = vst.msk [vmem:[#allocation2 + $0x90] sm:$0xff] %vm380, 0.0
      %401 = vst.msk [vmem:[#allocation2 + $0x98] sm:$0xff] %vm380, 0.0
      %402 = vst.msk [vmem:[#allocation2 + $0xa0] sm:$0x3] %vm383, 0.0
      %403 = vst.msk [vmem:[#allocation2 + $0xa8] sm:$0xff] %vm380, 0.0
      %404 = vst.msk [vmem:[#allocation2 + $0xb0] sm:$0xff] %vm380, 0.0
      %405 = vst.msk [vmem:[#allocation2 + $0xb8] sm:$0x3] %vm383, 0.0
      %406 = vst.msk [vmem:[#allocation2 + $0xc0] sm:$0xff] %vm380, 0.0
      %407 = vst.msk [vmem:[#allocation2 + $0xc8] sm:$0xff] %vm380, 0.0
      %408 = vst.msk [vmem:[#allocation2 + $0xd0] sm:$0x3] %vm383, 0.0
      %409 = vst.msk [vmem:[#allocation2 + $0xd8] sm:$0xff] %vm380, 0.0
      %410 = vst.msk [vmem:[#allocation2 + $0xe0] sm:$0xff] %vm380, 0.0
      %411 = vst.msk [vmem:[#allocation2 + $0xe8] sm:$0x3] %vm383, 0.0
      %412 = vst.msk [vmem:[#allocation2 + $0xf0] sm:$0xff] %vm380, 0.0
      %413 = vst.msk [vmem:[#allocation2 + $0xf8] sm:$0xff] %vm380, 0.0
      %414 = vst.msk [vmem:[#allocation2 + $0x100] sm:$0x3] %vm383, 0.0
      %415 = vst.msk [vmem:[#allocation2 + $0x108] sm:$0xff] %vm380, 0.0
      %416 = vst.msk [vmem:[#allocation2 + $0x110] sm:$0xff] %vm380, 0.0
      %417 = vst.msk [vmem:[#allocation2 + $0x118] sm:$0x3] %vm383, 0.0
      %418 = vst.msk [vmem:[#allocation2 + $0x120] sm:$0xff] %vm380, 0.0
      %419 = vst.msk [vmem:[#allocation2 + $0x128] sm:$0xff] %vm380, 0.0
      %420 = vst.msk [vmem:[#allocation2 + $0x130] sm:$0x3] %vm383, 0.0
      %421 = vst.msk [vmem:[#allocation2 + $0x138] sm:$0xff] %vm380, 0.0
      %422 = vst.msk [vmem:[#allocation2 + $0x140] sm:$0xff] %vm380, 0.0
      %423 = vst.msk [vmem:[#allocation2 + $0x148] sm:$0x3] %vm383, 0.0
      %424 = vst.msk [vmem:[#allocation2 + $0x150] sm:$0xff] %vm380, 0.0
      %425 = vst.msk [vmem:[#allocation2 + $0x158] sm:$0xff] %vm380, 0.0
      %426 = vst.msk [vmem:[#allocation2 + $0x160] sm:$0x3] %vm383, 0.0
      %427 = vst.msk [vmem:[#allocation2 + $0x168] sm:$0xff] %vm380, 0.0
      %428 = vst.msk [vmem:[#allocation2 + $0x170] sm:$0xff] %vm380, 0.0
      %429 = vst.msk [vmem:[#allocation2 + $0x178] sm:$0x3] %vm383, 0.0
      %430 = vst.msk [vmem:[#allocation2 + $0x180] sm:$0xff] %vm380, 0.0
      %431 = vst.msk [vmem:[#allocation2 + $0x188] sm:$0xff] %vm380, 0.0
      %432 = vst.msk [vmem:[#allocation2 + $0x190] sm:$0x3] %vm383, 0.0
      %433 = vst.msk [vmem:[#allocation2 + $0x198] sm:$0xff] %vm380, 0.0
      %434 = vst.msk [vmem:[#allocation2 + $0x1a0] sm:$0xff] %vm380, 0.0
      %435 = vst.msk [vmem:[#allocation2 + $0x1a8] sm:$0x3] %vm383, 0.0
      %v436 = vld [vmem:[%s374] sm:$0xff]
      %v437 = vld [vmem:[%s374 + $0x8] sm:$0xff]
      %v438 = vld [vmem:[%s374 + $0x10] sm:$0xff]
      %v439 = vld [vmem:[%s374 + $0x18] sm:$0xff]
      %v440 = vld [vmem:[%s374 + $0x20] sm:$0xff]
      %v441 = vld [vmem:[%s374 + $0x28] sm:$0xff]
      %v442 = vld [vmem:[%s374 + $0x30] sm:$0xff]
      %v443 = vld [vmem:[%s374 + $0x38] sm:$0xff]
      %v444 = vld [vmem:[%s374 + $0x40] sm:$0xff]
      %v445 = vld [vmem:[%s374 + $0x48] sm:$0xff]
      %v446 = vld [vmem:[%s374 + $0x50] sm:$0xff]
      %v447 = vld [vmem:[%s374 + $0x58] sm:$0xff]
      %v448 = vld [vmem:[%s374 + $0x60] sm:$0xff]
      %v449 = vld [vmem:[%s374 + $0x68] sm:$0xff]
      %v450 = vld [vmem:[%s374 + $0x70] sm:$0xff]
      %v451 = vld [vmem:[%s374 + $0x78] sm:$0xff]
      %v452 = vld [vmem:[%s374 + $0x80] sm:$0xff]
      %v453 = vld [vmem:[%s374 + $0x88] sm:$0xff]
      %v454 = vld [vmem:[%s374 + $0x90] sm:$0xff]
      %v455 = vld [vmem:[%s374 + $0x98] sm:$0xff]
      %v456 = vld [vmem:[%s374 + $0xa0] sm:$0xff]
      %v457 = vld [vmem:[%s374 + $0xa8] sm:$0xff]
      %v458 = vld [vmem:[%s374 + $0xb0] sm:$0xff]
      %v459 = vld [vmem:[%s374 + $0xb8] sm:$0xff]
      %v460 = vld [vmem:[%s374 + $0xc0] sm:$0xff]
      %v461 = vld [vmem:[%s374 + $0xc8] sm:$0xff]
      %v462 = vld [vmem:[%s374 + $0xd0] sm:$0xff]
      %v463 = vld [vmem:[%s374 + $0xd8] sm:$0xff]
      %v464 = vld [vmem:[%s374 + $0xe0] sm:$0xff]
      %v465 = vld [vmem:[%s374 + $0xe8] sm:$0xff]
      %v466 = vld [vmem:[%s374 + $0xf0] sm:$0xff]
      %v467 = vld [vmem:[%s374 + $0xf8] sm:$0xff]
      %v468 = vld [vmem:[%s369] sm:$0xff]
      %v469 = vld [vmem:[%s369 + $0x8] sm:$0xff]
      %v470 = vld [vmem:[%s369 + $0x10] sm:$0xff]
      %v471 = vld [vmem:[%s369 + $0x18] sm:$0xff]
      %v472 = vld [vmem:[%s369 + $0x20] sm:$0xff]
      %v473 = vld [vmem:[%s369 + $0x28] sm:$0xff]
      %v474 = vld [vmem:[%s369 + $0x30] sm:$0xff]
      %v475 = vld [vmem:[%s369 + $0x38] sm:$0xff]
      %v476 = vld [vmem:[%s369 + $0x40] sm:$0xff]
      %v477 = vld [vmem:[%s369 + $0x48] sm:$0xff]
      %v478 = vld [vmem:[%s369 + $0x50] sm:$0xff]
      %v479 = vld [vmem:[%s369 + $0x58] sm:$0xff]
      %v480 = vld [vmem:[%s369 + $0x60] sm:$0xff]
      %v481 = vld [vmem:[%s369 + $0x68] sm:$0xff]
      %v482 = vld [vmem:[%s369 + $0x70] sm:$0xff]
      %v483 = vld [vmem:[%s369 + $0x78] sm:$0xff]
      %v484 = vld [vmem:[%s369 + $0x80] sm:$0xff]
      %v485 = vld [vmem:[%s369 + $0x88] sm:$0xff]
      %v486 = vld [vmem:[%s369 + $0x90] sm:$0xff]
      %v487 = vld [vmem:[%s369 + $0x98] sm:$0xff]
      %v488 = vld [vmem:[%s369 + $0xa0] sm:$0xff]
      %v489 = vld [vmem:[%s369 + $0xa8] sm:$0xff]
      %v490 = vld [vmem:[%s369 + $0xb0] sm:$0xff]
      %v491 = vld [vmem:[%s369 + $0xb8] sm:$0xff]
      %v492 = vld [vmem:[%s369 + $0xc0] sm:$0xff]
      %v493 = vld [vmem:[%s369 + $0xc8] sm:$0xff]
      %v494 = vld [vmem:[%s369 + $0xd0] sm:$0xff]
      %v495 = vld [vmem:[%s369 + $0xd8] sm:$0xff]
      %v496 = vld [vmem:[%s369 + $0xe0] sm:$0xff]
      %v497 = vld [vmem:[%s369 + $0xe8] sm:$0xff]
      %v498 = vld [vmem:[%s369 + $0xf0] sm:$0xff]
      %v499 = vld [vmem:[%s369 + $0xf8] sm:$0xff]
      %501 = vset.pattern.permute.xlu0 0
      %502 = vperm.xlu0 %501, %v436
      %v503 = vpop.permute.xlu0 %502
      %506 = vset.pattern.permute.xlu0 0
      %507 = vperm.xlu0 %506, %v437
      %v508 = vpop.permute.xlu0 %507
      %511 = vset.pattern.permute.xlu0 0
      %512 = vperm.xlu0 %511, %v438
      %v513 = vpop.permute.xlu0 %512
      %516 = vset.pattern.permute.xlu0 0
      %517 = vperm.xlu0 %516, %v439
      %v518 = vpop.permute.xlu0 %517
      %521 = vset.pattern.permute.xlu0 0
      %522 = vperm.xlu0 %521, %v440
      %v523 = vpop.permute.xlu0 %522
      %526 = vset.pattern.permute.xlu0 0
      %527 = vperm.xlu0 %526, %v441
      %v528 = vpop.permute.xlu0 %527
      %531 = vset.pattern.permute.xlu0 0
      %532 = vperm.xlu0 %531, %v442
      %v533 = vpop.permute.xlu0 %532
      %536 = vset.pattern.permute.xlu0 0
      %537 = vperm.xlu0 %536, %v443
      %v538 = vpop.permute.xlu0 %537
      %541 = vset.pattern.permute.xlu0 0
      %542 = vperm.xlu0 %541, %v444
      %v543 = vpop.permute.xlu0 %542
      %546 = vset.pattern.permute.xlu0 0
      %547 = vperm.xlu0 %546, %v445
      %v548 = vpop.permute.xlu0 %547
      %551 = vset.pattern.permute.xlu0 0
      %552 = vperm.xlu0 %551, %v446
      %v553 = vpop.permute.xlu0 %552
      %556 = vset.pattern.permute.xlu0 0
      %557 = vperm.xlu0 %556, %v447
      %v558 = vpop.permute.xlu0 %557
      %561 = vset.pattern.permute.xlu0 0
      %562 = vperm.xlu0 %561, %v448
      %v563 = vpop.permute.xlu0 %562
      %566 = vset.pattern.permute.xlu0 0
      %567 = vperm.xlu0 %566, %v449
      %v568 = vpop.permute.xlu0 %567
      %571 = vset.pattern.permute.xlu0 0
      %572 = vperm.xlu0 %571, %v450
      %v573 = vpop.permute.xlu0 %572
      %576 = vset.pattern.permute.xlu0 0
      %577 = vperm.xlu0 %576, %v451
      %v578 = vpop.permute.xlu0 %577
      %581 = vset.pattern.permute.xlu0 0
      %582 = vperm.xlu0 %581, %v452
      %v583 = vpop.permute.xlu0 %582
      %586 = vset.pattern.permute.xlu0 0
      %587 = vperm.xlu0 %586, %v453
      %v588 = vpop.permute.xlu0 %587
      %591 = vset.pattern.permute.xlu0 0
      %592 = vperm.xlu0 %591, %v454
      %v593 = vpop.permute.xlu0 %592
      %596 = vset.pattern.permute.xlu0 0
      %597 = vperm.xlu0 %596, %v455
      %v598 = vpop.permute.xlu0 %597
      %601 = vset.pattern.permute.xlu0 0
      %602 = vperm.xlu0 %601, %v456
      %v603 = vpop.permute.xlu0 %602
      %606 = vset.pattern.permute.xlu0 0
      %607 = vperm.xlu0 %606, %v457
      %v608 = vpop.permute.xlu0 %607
      %611 = vset.pattern.permute.xlu0 0
      %612 = vperm.xlu0 %611, %v458
      %v613 = vpop.permute.xlu0 %612
      %616 = vset.pattern.permute.xlu0 0
      %617 = vperm.xlu0 %616, %v459
      %v618 = vpop.permute.xlu0 %617
      %621 = vset.pattern.permute.xlu0 0
      %622 = vperm.xlu0 %621, %v460
      %v623 = vpop.permute.xlu0 %622
      %626 = vset.pattern.permute.xlu0 0
      %627 = vperm.xlu0 %626, %v461
      %v628 = vpop.permute.xlu0 %627
      %631 = vset.pattern.permute.xlu0 0
      %632 = vperm.xlu0 %631, %v462
      %v633 = vpop.permute.xlu0 %632
      %636 = vset.pattern.permute.xlu0 0
      %637 = vperm.xlu0 %636, %v463
      %v638 = vpop.permute.xlu0 %637
      %641 = vset.pattern.permute.xlu0 0
      %642 = vperm.xlu0 %641, %v464
      %v643 = vpop.permute.xlu0 %642
      %646 = vset.pattern.permute.xlu0 0
      %647 = vperm.xlu0 %646, %v465
      %v648 = vpop.permute.xlu0 %647
      %651 = vset.pattern.permute.xlu0 0
      %652 = vperm.xlu0 %651, %v466
      %v653 = vpop.permute.xlu0 %652
      %656 = vset.pattern.permute.xlu0 0
      %657 = vperm.xlu0 %656, %v467
      %v658 = vpop.permute.xlu0 %657
      %v660 = vmul.f32 %v468, %v503
      %v661 = vmul.f32 %v469, %v508
      %v662 = vmul.f32 %v470, %v513
      %v663 = vmul.f32 %v471, %v518
      %v664 = vmul.f32 %v472, %v523
      %v665 = vmul.f32 %v473, %v528
      %v666 = vmul.f32 %v474, %v533
      %v667 = vmul.f32 %v475, %v538
      %v668 = vmul.f32 %v476, %v543
      %v669 = vmul.f32 %v477, %v548
      %v670 = vmul.f32 %v478, %v553
      %v671 = vmul.f32 %v479, %v558
      %v672 = vmul.f32 %v480, %v563
      %v673 = vmul.f32 %v481, %v568
      %v674 = vmul.f32 %v482, %v573
      %v675 = vmul.f32 %v483, %v578
      %v676 = vmul.f32 %v484, %v583
      %v677 = vmul.f32 %v485, %v588
      %v678 = vmul.f32 %v486, %v593
      %v679 = vmul.f32 %v487, %v598
      %v680 = vmul.f32 %v488, %v603
      %v681 = vmul.f32 %v489, %v608
      %v682 = vmul.f32 %v490, %v613
      %v683 = vmul.f32 %v491, %v618
      %v684 = vmul.f32 %v492, %v623
      %v685 = vmul.f32 %v493, %v628
      %v686 = vmul.f32 %v494, %v633
      %v687 = vmul.f32 %v495, %v638
      %v688 = vmul.f32 %v496, %v643
      %v689 = vmul.f32 %v497, %v648
      %v690 = vmul.f32 %v498, %v653
      %v691 = vmul.f32 %v499, %v658
      %v692 = vmul.f32 %v660, %v503
      %v693 = vmul.f32 %v661, %v508
      %v694 = vmul.f32 %v662, %v513
      %v695 = vmul.f32 %v663, %v518
      %v696 = vmul.f32 %v664, %v523
      %v697 = vmul.f32 %v665, %v528
      %v698 = vmul.f32 %v666, %v533
      %v699 = vmul.f32 %v667, %v538
      %v700 = vmul.f32 %v668, %v543
      %v701 = vmul.f32 %v669, %v548
      %v702 = vmul.f32 %v670, %v553
      %v703 = vmul.f32 %v671, %v558
      %v704 = vmul.f32 %v672, %v563
      %v705 = vmul.f32 %v673, %v568
      %v706 = vmul.f32 %v674, %v573
      %v707 = vmul.f32 %v675, %v578
      %v708 = vmul.f32 %v676, %v583
      %v709 = vmul.f32 %v677, %v588
      %v710 = vmul.f32 %v678, %v593
      %v711 = vmul.f32 %v679, %v598
      %v712 = vmul.f32 %v680, %v603
      %v713 = vmul.f32 %v681, %v608
      %v714 = vmul.f32 %v682, %v613
      %v715 = vmul.f32 %v683, %v618
      %v716 = vmul.f32 %v684, %v623
      %v717 = vmul.f32 %v685, %v628
      %v718 = vmul.f32 %v686, %v633
      %v719 = vmul.f32 %v687, %v638
      %v720 = vmul.f32 %v688, %v643
      %v721 = vmul.f32 %v689, %v648
      %v722 = vmul.f32 %v690, %v653
      %v723 = vmul.f32 %v691, %v658
      %s724 = scalar_lea.vmem [#allocation2], 24
      %vm725 = vcmask 23552
      %726 = vst.msk [vmem:[%s724 + $0x1] sm:$0xff] %vm725, %v692
      %727 = vst.msk [vmem:[%s724 + $0x9] sm:$0xff] %vm725, %v693
      %728 = vst.msk [vmem:[%s724 + $0x19] sm:$0xff] %vm725, %v694
      %729 = vst.msk [vmem:[%s724 + $0x21] sm:$0xff] %vm725, %v695
      %730 = vst.msk [vmem:[%s724 + $0x31] sm:$0xff] %vm725, %v696
      %731 = vst.msk [vmem:[%s724 + $0x39] sm:$0xff] %vm725, %v697
      %732 = vst.msk [vmem:[%s724 + $0x49] sm:$0xff] %vm725, %v698
      %733 = vst.msk [vmem:[%s724 + $0x51] sm:$0xff] %vm725, %v699
      %734 = vst.msk [vmem:[%s724 + $0x61] sm:$0xff] %vm725, %v700
      %735 = vst.msk [vmem:[%s724 + $0x69] sm:$0xff] %vm725, %v701
      %736 = vst.msk [vmem:[%s724 + $0x79] sm:$0xff] %vm725, %v702
      %737 = vst.msk [vmem:[%s724 + $0x81] sm:$0xff] %vm725, %v703
      %738 = vst.msk [vmem:[%s724 + $0x91] sm:$0xff] %vm725, %v704
      %739 = vst.msk [vmem:[%s724 + $0x99] sm:$0xff] %vm725, %v705
      %740 = vst.msk [vmem:[%s724 + $0xa9] sm:$0xff] %vm725, %v706
      %741 = vst.msk [vmem:[%s724 + $0xb1] sm:$0xff] %vm725, %v707
      %742 = vst.msk [vmem:[%s724 + $0xc1] sm:$0xff] %vm725, %v708
      %743 = vst.msk [vmem:[%s724 + $0xc9] sm:$0xff] %vm725, %v709
      %744 = vst.msk [vmem:[%s724 + $0xd9] sm:$0xff] %vm725, %v710
      %745 = vst.msk [vmem:[%s724 + $0xe1] sm:$0xff] %vm725, %v711
      %746 = vst.msk [vmem:[%s724 + $0xf1] sm:$0xff] %vm725, %v712
      %747 = vst.msk [vmem:[%s724 + $0xf9] sm:$0xff] %vm725, %v713
      %748 = vst.msk [vmem:[%s724 + $0x109] sm:$0xff] %vm725, %v714
      %749 = vst.msk [vmem:[%s724 + $0x111] sm:$0xff] %vm725, %v715
      %750 = vst.msk [vmem:[%s724 + $0x121] sm:$0xff] %vm725, %v716
      %751 = vst.msk [vmem:[%s724 + $0x129] sm:$0xff] %vm725, %v717
      %752 = vst.msk [vmem:[%s724 + $0x139] sm:$0xff] %vm725, %v718
      %753 = vst.msk [vmem:[%s724 + $0x141] sm:$0xff] %vm725, %v719
      %754 = vst.msk [vmem:[%s724 + $0x151] sm:$0xff] %vm725, %v720
      %755 = vst.msk [vmem:[%s724 + $0x159] sm:$0xff] %vm725, %v721
      %756 = vst.msk [vmem:[%s724 + $0x169] sm:$0xff] %vm725, %v722
      %757 = vst.msk [vmem:[%s724 + $0x171] sm:$0xff] %vm725, %v723
      %v758 = vld [vmem:[#allocation2] sm:$0xff]
      %v759 = vld [vmem:[#allocation2 + $0x8] sm:$0xff]
      %v760 = vld [vmem:[#allocation2 + $0x18] sm:$0xff]
      %v761 = vld [vmem:[#allocation2 + $0x20] sm:$0xff]
      %v762 = vld [vmem:[#allocation2 + $0x30] sm:$0xff]
      %v763 = vld [vmem:[#allocation2 + $0x38] sm:$0xff]
      %v764 = vld [vmem:[#allocation2 + $0x48] sm:$0xff]
      %v765 = vld [vmem:[#allocation2 + $0x50] sm:$0xff]
      %v766 = vld [vmem:[#allocation2 + $0x60] sm:$0xff]
      %v767 = vld [vmem:[#allocation2 + $0x68] sm:$0xff]
      %v768 = vld [vmem:[#allocation2 + $0x78] sm:$0xff]
      %v769 = vld [vmem:[#allocation2 + $0x80] sm:$0xff]
      %v770 = vld [vmem:[#allocation2 + $0x90] sm:$0xff]
      %v771 = vld [vmem:[#allocation2 + $0x98] sm:$0xff]
      %v772 = vld [vmem:[#allocation2 + $0xa8] sm:$0xff]
      %v773 = vld [vmem:[#allocation2 + $0xb0] sm:$0xff]
      %v774 = vld [vmem:[#allocation2 + $0xc0] sm:$0xff]
      %v775 = vld [vmem:[#allocation2 + $0xc8] sm:$0xff]
      %v776 = vld [vmem:[#allocation2 + $0xd8] sm:$0xff]
      %v777 = vld [vmem:[#allocation2 + $0xe0] sm:$0xff]
      %v778 = vld [vmem:[#allocation2 + $0xf0] sm:$0xff]
      %v779 = vld [vmem:[#allocation2 + $0xf8] sm:$0xff]
      %v780 = vld [vmem:[#allocation2 + $0x108] sm:$0xff]
      %v781 = vld [vmem:[#allocation2 + $0x110] sm:$0xff]
      %v782 = vld [vmem:[#allocation2 + $0x120] sm:$0xff]
      %v783 = vld [vmem:[#allocation2 + $0x128] sm:$0xff]
      %v784 = vld [vmem:[#allocation2 + $0x138] sm:$0xff]
      %v785 = vld [vmem:[#allocation2 + $0x140] sm:$0xff]
      %v786 = vld [vmem:[#allocation2 + $0x150] sm:$0xff]
      %v787 = vld [vmem:[#allocation2 + $0x158] sm:$0xff]
      %v788 = vld [vmem:[#allocation2 + $0x168] sm:$0xff]
      %v789 = vld [vmem:[#allocation2 + $0x170] sm:$0xff]
      %790 = vst.msk [vmem:[#allocation3] sm:$0xff] %vm725, %v758
      %791 = vst.msk [vmem:[#allocation3 + $0x10] sm:$0xff] %vm725, %v759
      %792 = vst.msk [vmem:[#allocation3 + $0x20] sm:$0xff] %vm725, %v760
      %793 = vst.msk [vmem:[#allocation3 + $0x30] sm:$0xff] %vm725, %v761
      %794 = vst.msk [vmem:[#allocation3 + $0x40] sm:$0xff] %vm725, %v762
      %795 = vst.msk [vmem:[#allocation3 + $0x50] sm:$0xff] %vm725, %v763
      %796 = vst.msk [vmem:[#allocation3 + $0x60] sm:$0xff] %vm725, %v764
      %797 = vst.msk [vmem:[#allocation3 + $0x70] sm:$0xff] %vm725, %v765
      %798 = vst.msk [vmem:[#allocation3 + $0x80] sm:$0xff] %vm725, %v766
      %799 = vst.msk [vmem:[#allocation3 + $0x90] sm:$0xff] %vm725, %v767
      %800 = vst.msk [vmem:[#allocation3 + $0xa0] sm:$0xff] %vm725, %v768
      %801 = vst.msk [vmem:[#allocation3 + $0xb0] sm:$0xff] %vm725, %v769
      %802 = vst.msk [vmem:[#allocation3 + $0xc0] sm:$0xff] %vm725, %v770
      %803 = vst.msk [vmem:[#allocation3 + $0xd0] sm:$0xff] %vm725, %v771
      %804 = vst.msk [vmem:[#allocation3 + $0xe0] sm:$0xff] %vm725, %v772
      %805 = vst.msk [vmem:[#allocation3 + $0xf0] sm:$0xff] %vm725, %v773
      %806 = vst.msk [vmem:[#allocation3 + $0x100] sm:$0xff] %vm725, %v774
      %807 = vst.msk [vmem:[#allocation3 + $0x110] sm:$0xff] %vm725, %v775
      %808 = vst.msk [vmem:[#allocation3 + $0x120] sm:$0xff] %vm725, %v776
      %809 = vst.msk [vmem:[#allocation3 + $0x130] sm:$0xff] %vm725, %v777
      %810 = vst.msk [vmem:[#allocation3 + $0x140] sm:$0xff] %vm725, %v778
      %811 = vst.msk [vmem:[#allocation3 + $0x150] sm:$0xff] %vm725, %v779
      %812 = vst.msk [vmem:[#allocation3 + $0x160] sm:$0xff] %vm725, %v780
      %813 = vst.msk [vmem:[#allocation3 + $0x170] sm:$0xff] %vm725, %v781
      %814 = vst.msk [vmem:[#allocation3 + $0x180] sm:$0xff] %vm725, %v782
      %815 = vst.msk [vmem:[#allocation3 + $0x190] sm:$0xff] %vm725, %v783
      %816 = vst.msk [vmem:[#allocation3 + $0x1a0] sm:$0xff] %vm725, %v784
      %817 = vst.msk [vmem:[#allocation3 + $0x1b0] sm:$0xff] %vm725, %v785
      %818 = vst.msk [vmem:[#allocation3 + $0x1c0] sm:$0xff] %vm725, %v786
      %819 = vst.msk [vmem:[#allocation3 + $0x1d0] sm:$0xff] %vm725, %v787
      %820 = vst.msk [vmem:[#allocation3 + $0x1e0] sm:$0xff] %vm725, %v788
      %821 = vst.msk [vmem:[#allocation3 + $0x1f0] sm:$0xff] %vm725, %v789
      %v822 = vld [vmem:[#allocation2 + $0x1] sm:$0xff]
      %v823 = vld [vmem:[#allocation2 + $0x9] sm:$0xff]
      %v824 = vld [vmem:[#allocation2 + $0x19] sm:$0xff]
      %v825 = vld [vmem:[#allocation2 + $0x21] sm:$0xff]
      %v826 = vld [vmem:[#allocation2 + $0x31] sm:$0xff]
      %v827 = vld [vmem:[#allocation2 + $0x39] sm:$0xff]
      %v828 = vld [vmem:[#allocation2 + $0x49] sm:$0xff]
      %v829 = vld [vmem:[#allocation2 + $0x51] sm:$0xff]
      %v830 = vld [vmem:[#allocation2 + $0x61] sm:$0xff]
      %v831 = vld [vmem:[#allocation2 + $0x69] sm:$0xff]
      %v832 = vld [vmem:[#allocation2 + $0x79] sm:$0xff]
      %v833 = vld [vmem:[#allocation2 + $0x81] sm:$0xff]
      %v834 = vld [vmem:[#allocation2 + $0x91] sm:$0xff]
      %v835 = vld [vmem:[#allocation2 + $0x99] sm:$0xff]
      %v836 = vld [vmem:[#allocation2 + $0xa9] sm:$0xff]
      %v837 = vld [vmem:[#allocation2 + $0xb1] sm:$0xff]
      %v838 = vld [vmem:[#allocation2 + $0xc1] sm:$0xff]
      %v839 = vld [vmem:[#allocation2 + $0xc9] sm:$0xff]
      %v840 = vld [vmem:[#allocation2 + $0xd9] sm:$0xff]
      %v841 = vld [vmem:[#allocation2 + $0xe1] sm:$0xff]
      %v842 = vld [vmem:[#allocation2 + $0xf1] sm:$0xff]
      %v843 = vld [vmem:[#allocation2 + $0xf9] sm:$0xff]
      %v844 = vld [vmem:[#allocation2 + $0x109] sm:$0xff]
      %v845 = vld [vmem:[#allocation2 + $0x111] sm:$0xff]
      %v846 = vld [vmem:[#allocation2 + $0x121] sm:$0xff]
      %v847 = vld [vmem:[#allocation2 + $0x129] sm:$0xff]
      %v848 = vld [vmem:[#allocation2 + $0x139] sm:$0xff]
      %v849 = vld [vmem:[#allocation2 + $0x141] sm:$0xff]
      %v850 = vld [vmem:[#allocation2 + $0x151] sm:$0xff]
      %v851 = vld [vmem:[#allocation2 + $0x159] sm:$0xff]
      %v852 = vld [vmem:[#allocation2 + $0x169] sm:$0xff]
      %v853 = vld [vmem:[#allocation2 + $0x171] sm:$0xff]
      %886 = vrot.lane.b32.xlu0 %v822, 3
      %v887 = vpop.permute.xlu0 %886
      %888 = vrot.lane.b32.xlu0 %v823, 3
      %v889 = vpop.permute.xlu0 %888
      %890 = vrot.lane.b32.xlu0 %v824, 3
      %v891 = vpop.permute.xlu0 %890
      %892 = vrot.lane.b32.xlu0 %v825, 3
      %v893 = vpop.permute.xlu0 %892
      %894 = vrot.lane.b32.xlu0 %v826, 3
      %v895 = vpop.permute.xlu0 %894
      %896 = vrot.lane.b32.xlu0 %v827, 3
      %v897 = vpop.permute.xlu0 %896
      %898 = vrot.lane.b32.xlu0 %v828, 3
      %v899 = vpop.permute.xlu0 %898
      %900 = vrot.lane.b32.xlu0 %v829, 3
      %v901 = vpop.permute.xlu0 %900
      %902 = vrot.lane.b32.xlu0 %v830, 3
      %v903 = vpop.permute.xlu0 %902
      %904 = vrot.lane.b32.xlu0 %v831, 3
      %v905 = vpop.permute.xlu0 %904
      %906 = vrot.lane.b32.xlu0 %v832, 3
      %v907 = vpop.permute.xlu0 %906
      %908 = vrot.lane.b32.xlu0 %v833, 3
      %v909 = vpop.permute.xlu0 %908
      %910 = vrot.lane.b32.xlu0 %v834, 3
      %v911 = vpop.permute.xlu0 %910
      %912 = vrot.lane.b32.xlu0 %v835, 3
      %v913 = vpop.permute.xlu0 %912
      %914 = vrot.lane.b32.xlu0 %v836, 3
      %v915 = vpop.permute.xlu0 %914
      %916 = vrot.lane.b32.xlu0 %v837, 3
      %v917 = vpop.permute.xlu0 %916
      %918 = vrot.lane.b32.xlu0 %v838, 3
      %v919 = vpop.permute.xlu0 %918
      %920 = vrot.lane.b32.xlu0 %v839, 3
      %v921 = vpop.permute.xlu0 %920
      %922 = vrot.lane.b32.xlu0 %v840, 3
      %v923 = vpop.permute.xlu0 %922
      %924 = vrot.lane.b32.xlu0 %v841, 3
      %v925 = vpop.permute.xlu0 %924
      %926 = vrot.lane.b32.xlu0 %v842, 3
      %v927 = vpop.permute.xlu0 %926
      %928 = vrot.lane.b32.xlu0 %v843, 3
      %v929 = vpop.permute.xlu0 %928
      %930 = vrot.lane.b32.xlu0 %v844, 3
      %v931 = vpop.permute.xlu0 %930
      %932 = vrot.lane.b32.xlu0 %v845, 3
      %v933 = vpop.permute.xlu0 %932
      %934 = vrot.lane.b32.xlu0 %v846, 3
      %v935 = vpop.permute.xlu0 %934
      %936 = vrot.lane.b32.xlu0 %v847, 3
      %v937 = vpop.permute.xlu0 %936
      %938 = vrot.lane.b32.xlu0 %v848, 3
      %v939 = vpop.permute.xlu0 %938
      %940 = vrot.lane.b32.xlu0 %v849, 3
      %v941 = vpop.permute.xlu0 %940
      %942 = vrot.lane.b32.xlu0 %v850, 3
      %v943 = vpop.permute.xlu0 %942
      %944 = vrot.lane.b32.xlu0 %v851, 3
      %v945 = vpop.permute.xlu0 %944
      %946 = vrot.lane.b32.xlu0 %v852, 3
      %v947 = vpop.permute.xlu0 %946
      %948 = vrot.lane.b32.xlu0 %v853, 3
      %v949 = vpop.permute.xlu0 %948
      %vm982 = vcmask 48152
      %983 = vst.msk [vmem:[#allocation3] sm:$0xff] %vm982, %v887
      %984 = vst.msk [vmem:[#allocation3 + $0x10] sm:$0xff] %vm982, %v889
      %985 = vst.msk [vmem:[#allocation3 + $0x20] sm:$0xff] %vm982, %v891
      %986 = vst.msk [vmem:[#allocation3 + $0x30] sm:$0xff] %vm982, %v893
      %987 = vst.msk [vmem:[#allocation3 + $0x40] sm:$0xff] %vm982, %v895
      %988 = vst.msk [vmem:[#allocation3 + $0x50] sm:$0xff] %vm982, %v897
      %989 = vst.msk [vmem:[#allocation3 + $0x60] sm:$0xff] %vm982, %v899
      %990 = vst.msk [vmem:[#allocation3 + $0x70] sm:$0xff] %vm982, %v901
      %991 = vst.msk [vmem:[#allocation3 + $0x80] sm:$0xff] %vm982, %v903
      %992 = vst.msk [vmem:[#allocation3 + $0x90] sm:$0xff] %vm982, %v905
      %993 = vst.msk [vmem:[#allocation3 + $0xa0] sm:$0xff] %vm982, %v907
      %994 = vst.msk [vmem:[#allocation3 + $0xb0] sm:$0xff] %vm982, %v909
      %995 = vst.msk [vmem:[#allocation3 + $0xc0] sm:$0xff] %vm982, %v911
      %996 = vst.msk [vmem:[#allocation3 + $0xd0] sm:$0xff] %vm982, %v913
      %997 = vst.msk [vmem:[#allocation3 + $0xe0] sm:$0xff] %vm982, %v915
      %998 = vst.msk [vmem:[#allocation3 + $0xf0] sm:$0xff] %vm982, %v917
      %999 = vst.msk [vmem:[#allocation3 + $0x100] sm:$0xff] %vm982, %v919
      %1000 = vst.msk [vmem:[#allocation3 + $0x110] sm:$0xff] %vm982, %v921
      %1001 = vst.msk [vmem:[#allocation3 + $0x120] sm:$0xff] %vm982, %v923
      %1002 = vst.msk [vmem:[#allocation3 + $0x130] sm:$0xff] %vm982, %v925
      %1003 = vst.msk [vmem:[#allocation3 + $0x140] sm:$0xff] %vm982, %v927
      %1004 = vst.msk [vmem:[#allocation3 + $0x150] sm:$0xff] %vm982, %v929
      %1005 = vst.msk [vmem:[#allocation3 + $0x160] sm:$0xff] %vm982, %v931
      %1006 = vst.msk [vmem:[#allocation3 + $0x170] sm:$0xff] %vm982, %v933
      %1007 = vst.msk [vmem:[#allocation3 + $0x180] sm:$0xff] %vm982, %v935
      %1008 = vst.msk [vmem:[#allocation3 + $0x190] sm:$0xff] %vm982, %v937
      %1009 = vst.msk [vmem:[#allocation3 + $0x1a0] sm:$0xff] %vm982, %v939
      %1010 = vst.msk [vmem:[#allocation3 + $0x1b0] sm:$0xff] %vm982, %v941
      %1011 = vst.msk [vmem:[#allocation3 + $0x1c0] sm:$0xff] %vm982, %v943
      %1012 = vst.msk [vmem:[#allocation3 + $0x1d0] sm:$0xff] %vm982, %v945
      %1013 = vst.msk [vmem:[#allocation3 + $0x1e0] sm:$0xff] %vm982, %v947
      %1014 = vst.msk [vmem:[#allocation3 + $0x1f0] sm:$0xff] %vm982, %v949
      %v1015 = vld [vmem:[#allocation2 + $0x2] sm:$0xff]
      %v1016 = vld [vmem:[#allocation2 + $0xa] sm:$0xff]
      %v1017 = vld [vmem:[#allocation2 + $0x1a] sm:$0xff]
      %v1018 = vld [vmem:[#allocation2 + $0x22] sm:$0xff]
      %v1019 = vld [vmem:[#allocation2 + $0x32] sm:$0xff]
      %v1020 = vld [vmem:[#allocation2 + $0x3a] sm:$0xff]
      %v1021 = vld [vmem:[#allocation2 + $0x4a] sm:$0xff]
      %v1022 = vld [vmem:[#allocation2 + $0x52] sm:$0xff]
      %v1023 = vld [vmem:[#allocation2 + $0x62] sm:$0xff]
      %v1024 = vld [vmem:[#allocation2 + $0x6a] sm:$0xff]
      %v1025 = vld [vmem:[#allocation2 + $0x7a] sm:$0xff]
      %v1026 = vld [vmem:[#allocation2 + $0x82] sm:$0xff]
      %v1027 = vld [vmem:[#allocation2 + $0x92] sm:$0xff]
      %v1028 = vld [vmem:[#allocation2 + $0x9a] sm:$0xff]
      %v1029 = vld [vmem:[#allocation2 + $0xaa] sm:$0xff]
      %v1030 = vld [vmem:[#allocation2 + $0xb2] sm:$0xff]
      %v1031 = vld [vmem:[#allocation2 + $0xc2] sm:$0xff]
      %v1032 = vld [vmem:[#allocation2 + $0xca] sm:$0xff]
      %v1033 = vld [vmem:[#allocation2 + $0xda] sm:$0xff]
      %v1034 = vld [vmem:[#allocation2 + $0xe2] sm:$0xff]
      %v1035 = vld [vmem:[#allocation2 + $0xf2] sm:$0xff]
      %v1036 = vld [vmem:[#allocation2 + $0xfa] sm:$0xff]
      %v1037 = vld [vmem:[#allocation2 + $0x10a] sm:$0xff]
      %v1038 = vld [vmem:[#allocation2 + $0x112] sm:$0xff]
      %v1039 = vld [vmem:[#allocation2 + $0x122] sm:$0xff]
      %v1040 = vld [vmem:[#allocation2 + $0x12a] sm:$0xff]
      %v1041 = vld [vmem:[#allocation2 + $0x13a] sm:$0xff]
      %v1042 = vld [vmem:[#allocation2 + $0x142] sm:$0xff]
      %v1043 = vld [vmem:[#allocation2 + $0x152] sm:$0xff]
      %v1044 = vld [vmem:[#allocation2 + $0x15a] sm:$0xff]
      %v1045 = vld [vmem:[#allocation2 + $0x16a] sm:$0xff]
      %v1046 = vld [vmem:[#allocation2 + $0x172] sm:$0xff]
      %1079 = vrot.lane.b32.xlu0 %v1015, 6
      %v1080 = vpop.permute.xlu0 %1079
      %1081 = vrot.lane.b32.xlu0 %v1016, 6
      %v1082 = vpop.permute.xlu0 %1081
      %1083 = vrot.lane.b32.xlu0 %v1017, 6
      %v1084 = vpop.permute.xlu0 %1083
      %1085 = vrot.lane.b32.xlu0 %v1018, 6
      %v1086 = vpop.permute.xlu0 %1085
      %1087 = vrot.lane.b32.xlu0 %v1019, 6
      %v1088 = vpop.permute.xlu0 %1087
      %1089 = vrot.lane.b32.xlu0 %v1020, 6
      %v1090 = vpop.permute.xlu0 %1089
      %1091 = vrot.lane.b32.xlu0 %v1021, 6
      %v1092 = vpop.permute.xlu0 %1091
      %1093 = vrot.lane.b32.xlu0 %v1022, 6
      %v1094 = vpop.permute.xlu0 %1093
      %1095 = vrot.lane.b32.xlu0 %v1023, 6
      %v1096 = vpop.permute.xlu0 %1095
      %1097 = vrot.lane.b32.xlu0 %v1024, 6
      %v1098 = vpop.permute.xlu0 %1097
      %1099 = vrot.lane.b32.xlu0 %v1025, 6
      %v1100 = vpop.permute.xlu0 %1099
      %1101 = vrot.lane.b32.xlu0 %v1026, 6
      %v1102 = vpop.permute.xlu0 %1101
      %1103 = vrot.lane.b32.xlu0 %v1027, 6
      %v1104 = vpop.permute.xlu0 %1103
      %1105 = vrot.lane.b32.xlu0 %v1028, 6
      %v1106 = vpop.permute.xlu0 %1105
      %1107 = vrot.lane.b32.xlu0 %v1029, 6
      %v1108 = vpop.permute.xlu0 %1107
      %1109 = vrot.lane.b32.xlu0 %v1030, 6
      %v1110 = vpop.permute.xlu0 %1109
      %1111 = vrot.lane.b32.xlu0 %v1031, 6
      %v1112 = vpop.permute.xlu0 %1111
      %1113 = vrot.lane.b32.xlu0 %v1032, 6
      %v1114 = vpop.permute.xlu0 %1113
      %1115 = vrot.lane.b32.xlu0 %v1033, 6
      %v1116 = vpop.permute.xlu0 %1115
      %1117 = vrot.lane.b32.xlu0 %v1034, 6
      %v1118 = vpop.permute.xlu0 %1117
      %1119 = vrot.lane.b32.xlu0 %v1035, 6
      %v1120 = vpop.permute.xlu0 %1119
      %1121 = vrot.lane.b32.xlu0 %v1036, 6
      %v1122 = vpop.permute.xlu0 %1121
      %1123 = vrot.lane.b32.xlu0 %v1037, 6
      %v1124 = vpop.permute.xlu0 %1123
      %1125 = vrot.lane.b32.xlu0 %v1038, 6
      %v1126 = vpop.permute.xlu0 %1125
      %1127 = vrot.lane.b32.xlu0 %v1039, 6
      %v1128 = vpop.permute.xlu0 %1127
      %1129 = vrot.lane.b32.xlu0 %v1040, 6
      %v1130 = vpop.permute.xlu0 %1129
      %1131 = vrot.lane.b32.xlu0 %v1041, 6
      %v1132 = vpop.permute.xlu0 %1131
      %1133 = vrot.lane.b32.xlu0 %v1042, 6
      %v1134 = vpop.permute.xlu0 %1133
      %1135 = vrot.lane.b32.xlu0 %v1043, 6
      %v1136 = vpop.permute.xlu0 %1135
      %1137 = vrot.lane.b32.xlu0 %v1044, 6
      %v1138 = vpop.permute.xlu0 %1137
      %1139 = vrot.lane.b32.xlu0 %v1045, 6
      %v1140 = vpop.permute.xlu0 %1139
      %1141 = vrot.lane.b32.xlu0 %v1046, 6
      %v1142 = vpop.permute.xlu0 %1141
      %vm1175 = vcmask 72752
      %1176 = vst.msk [vmem:[#allocation3] sm:$0xff] %vm1175, %v1080
      %1177 = vst.msk [vmem:[#allocation3 + $0x10] sm:$0xff] %vm1175, %v1082
      %1178 = vst.msk [vmem:[#allocation3 + $0x20] sm:$0xff] %vm1175, %v1084
      %1179 = vst.msk [vmem:[#allocation3 + $0x30] sm:$0xff] %vm1175, %v1086
      %1180 = vst.msk [vmem:[#allocation3 + $0x40] sm:$0xff] %vm1175, %v1088
      %1181 = vst.msk [vmem:[#allocation3 + $0x50] sm:$0xff] %vm1175, %v1090
      %1182 = vst.msk [vmem:[#allocation3 + $0x60] sm:$0xff] %vm1175, %v1092
      %1183 = vst.msk [vmem:[#allocation3 + $0x70] sm:$0xff] %vm1175, %v1094
      %1184 = vst.msk [vmem:[#allocation3 + $0x80] sm:$0xff] %vm1175, %v1096
      %1185 = vst.msk [vmem:[#allocation3 + $0x90] sm:$0xff] %vm1175, %v1098
      %1186 = vst.msk [vmem:[#allocation3 + $0xa0] sm:$0xff] %vm1175, %v1100
      %1187 = vst.msk [vmem:[#allocation3 + $0xb0] sm:$0xff] %vm1175, %v1102
      %1188 = vst.msk [vmem:[#allocation3 + $0xc0] sm:$0xff] %vm1175, %v1104
      %1189 = vst.msk [vmem:[#allocation3 + $0xd0] sm:$0xff] %vm1175, %v1106
      %1190 = vst.msk [vmem:[#allocation3 + $0xe0] sm:$0xff] %vm1175, %v1108
      %1191 = vst.msk [vmem:[#allocation3 + $0xf0] sm:$0xff] %vm1175, %v1110
      %1192 = vst.msk [vmem:[#allocation3 + $0x100] sm:$0xff] %vm1175, %v1112
      %1193 = vst.msk [vmem:[#allocation3 + $0x110] sm:$0xff] %vm1175, %v1114
      %1194 = vst.msk [vmem:[#allocation3 + $0x120] sm:$0xff] %vm1175, %v1116
      %1195 = vst.msk [vmem:[#allocation3 + $0x130] sm:$0xff] %vm1175, %v1118
      %1196 = vst.msk [vmem:[#allocation3 + $0x140] sm:$0xff] %vm1175, %v1120
      %1197 = vst.msk [vmem:[#allocation3 + $0x150] sm:$0xff] %vm1175, %v1122
      %1198 = vst.msk [vmem:[#allocation3 + $0x160] sm:$0xff] %vm1175, %v1124
      %1199 = vst.msk [vmem:[#allocation3 + $0x170] sm:$0xff] %vm1175, %v1126
      %1200 = vst.msk [vmem:[#allocation3 + $0x180] sm:$0xff] %vm1175, %v1128
      %1201 = vst.msk [vmem:[#allocation3 + $0x190] sm:$0xff] %vm1175, %v1130
      %1202 = vst.msk [vmem:[#allocation3 + $0x1a0] sm:$0xff] %vm1175, %v1132
      %1203 = vst.msk [vmem:[#allocation3 + $0x1b0] sm:$0xff] %vm1175, %v1134
      %1204 = vst.msk [vmem:[#allocation3 + $0x1c0] sm:$0xff] %vm1175, %v1136
      %1205 = vst.msk [vmem:[#allocation3 + $0x1d0] sm:$0xff] %vm1175, %v1138
      %1206 = vst.msk [vmem:[#allocation3 + $0x1e0] sm:$0xff] %vm1175, %v1140
      %1207 = vst.msk [vmem:[#allocation3 + $0x1f0] sm:$0xff] %vm1175, %v1142
      %v1208 = vld [vmem:[%s724] sm:$0xff]
      %v1209 = vld [vmem:[%s724 + $0x8] sm:$0xff]
      %v1210 = vld [vmem:[%s724 + $0x18] sm:$0xff]
      %v1211 = vld [vmem:[%s724 + $0x20] sm:$0xff]
      %v1212 = vld [vmem:[%s724 + $0x30] sm:$0xff]
      %v1213 = vld [vmem:[%s724 + $0x38] sm:$0xff]
      %v1214 = vld [vmem:[%s724 + $0x48] sm:$0xff]
      %v1215 = vld [vmem:[%s724 + $0x50] sm:$0xff]
      %v1216 = vld [vmem:[%s724 + $0x60] sm:$0xff]
      %v1217 = vld [vmem:[%s724 + $0x68] sm:$0xff]
      %v1218 = vld [vmem:[%s724 + $0x78] sm:$0xff]
      %v1219 = vld [vmem:[%s724 + $0x80] sm:$0xff]
      %v1220 = vld [vmem:[%s724 + $0x90] sm:$0xff]
      %v1221 = vld [vmem:[%s724 + $0x98] sm:$0xff]
      %v1222 = vld [vmem:[%s724 + $0xa8] sm:$0xff]
      %v1223 = vld [vmem:[%s724 + $0xb0] sm:$0xff]
      %v1224 = vld [vmem:[%s724 + $0xc0] sm:$0xff]
      %v1225 = vld [vmem:[%s724 + $0xc8] sm:$0xff]
      %v1226 = vld [vmem:[%s724 + $0xd8] sm:$0xff]
      %v1227 = vld [vmem:[%s724 + $0xe0] sm:$0xff]
      %v1228 = vld [vmem:[%s724 + $0xf0] sm:$0xff]
      %v1229 = vld [vmem:[%s724 + $0xf8] sm:$0xff]
      %v1230 = vld [vmem:[%s724 + $0x108] sm:$0xff]
      %v1231 = vld [vmem:[%s724 + $0x110] sm:$0xff]
      %v1232 = vld [vmem:[%s724 + $0x120] sm:$0xff]
      %v1233 = vld [vmem:[%s724 + $0x128] sm:$0xff]
      %v1234 = vld [vmem:[%s724 + $0x138] sm:$0xff]
      %v1235 = vld [vmem:[%s724 + $0x140] sm:$0xff]
      %v1236 = vld [vmem:[%s724 + $0x150] sm:$0xff]
      %v1237 = vld [vmem:[%s724 + $0x158] sm:$0xff]
      %v1238 = vld [vmem:[%s724 + $0x168] sm:$0xff]
      %v1239 = vld [vmem:[%s724 + $0x170] sm:$0xff]
      %1272 = vrot.lane.b32.xlu0 %v1208, 9
      %v1273 = vpop.permute.xlu0 %1272
      %1274 = vrot.lane.b32.xlu0 %v1209, 9
      %v1275 = vpop.permute.xlu0 %1274
      %1276 = vrot.lane.b32.xlu0 %v1210, 9
      %v1277 = vpop.permute.xlu0 %1276
      %1278 = vrot.lane.b32.xlu0 %v1211, 9
      %v1279 = vpop.permute.xlu0 %1278
      %1280 = vrot.lane.b32.xlu0 %v1212, 9
      %v1281 = vpop.permute.xlu0 %1280
      %1282 = vrot.lane.b32.xlu0 %v1213, 9
      %v1283 = vpop.permute.xlu0 %1282
      %1284 = vrot.lane.b32.xlu0 %v1214, 9
      %v1285 = vpop.permute.xlu0 %1284
      %1286 = vrot.lane.b32.xlu0 %v1215, 9
      %v1287 = vpop.permute.xlu0 %1286
      %1288 = vrot.lane.b32.xlu0 %v1216, 9
      %v1289 = vpop.permute.xlu0 %1288
      %1290 = vrot.lane.b32.xlu0 %v1217, 9
      %v1291 = vpop.permute.xlu0 %1290
      %1292 = vrot.lane.b32.xlu0 %v1218, 9
      %v1293 = vpop.permute.xlu0 %1292
      %1294 = vrot.lane.b32.xlu0 %v1219, 9
      %v1295 = vpop.permute.xlu0 %1294
      %1296 = vrot.lane.b32.xlu0 %v1220, 9
      %v1297 = vpop.permute.xlu0 %1296
      %1298 = vrot.lane.b32.xlu0 %v1221, 9
      %v1299 = vpop.permute.xlu0 %1298
      %1300 = vrot.lane.b32.xlu0 %v1222, 9
      %v1301 = vpop.permute.xlu0 %1300
      %1302 = vrot.lane.b32.xlu0 %v1223, 9
      %v1303 = vpop.permute.xlu0 %1302
      %1304 = vrot.lane.b32.xlu0 %v1224, 9
      %v1305 = vpop.permute.xlu0 %1304
      %1306 = vrot.lane.b32.xlu0 %v1225, 9
      %v1307 = vpop.permute.xlu0 %1306
      %1308 = vrot.lane.b32.xlu0 %v1226, 9
      %v1309 = vpop.permute.xlu0 %1308
      %1310 = vrot.lane.b32.xlu0 %v1227, 9
      %v1311 = vpop.permute.xlu0 %1310
      %1312 = vrot.lane.b32.xlu0 %v1228, 9
      %v1313 = vpop.permute.xlu0 %1312
      %1314 = vrot.lane.b32.xlu0 %v1229, 9
      %v1315 = vpop.permute.xlu0 %1314
      %1316 = vrot.lane.b32.xlu0 %v1230, 9
      %v1317 = vpop.permute.xlu0 %1316
      %1318 = vrot.lane.b32.xlu0 %v1231, 9
      %v1319 = vpop.permute.xlu0 %1318
      %1320 = vrot.lane.b32.xlu0 %v1232, 9
      %v1321 = vpop.permute.xlu0 %1320
      %1322 = vrot.lane.b32.xlu0 %v1233, 9
      %v1323 = vpop.permute.xlu0 %1322
      %1324 = vrot.lane.b32.xlu0 %v1234, 9
      %v1325 = vpop.permute.xlu0 %1324
      %1326 = vrot.lane.b32.xlu0 %v1235, 9
      %v1327 = vpop.permute.xlu0 %1326
      %1328 = vrot.lane.b32.xlu0 %v1236, 9
      %v1329 = vpop.permute.xlu0 %1328
      %1330 = vrot.lane.b32.xlu0 %v1237, 9
      %v1331 = vpop.permute.xlu0 %1330
      %1332 = vrot.lane.b32.xlu0 %v1238, 9
      %v1333 = vpop.permute.xlu0 %1332
      %1334 = vrot.lane.b32.xlu0 %v1239, 9
      %v1335 = vpop.permute.xlu0 %1334
      %vm1368 = vcmask 97352
      %1369 = vst.msk [vmem:[#allocation3] sm:$0xff] %vm1368, %v1273
      %1370 = vst.msk [vmem:[#allocation3 + $0x10] sm:$0xff] %vm1368, %v1275
      %1371 = vst.msk [vmem:[#allocation3 + $0x20] sm:$0xff] %vm1368, %v1277
      %1372 = vst.msk [vmem:[#allocation3 + $0x30] sm:$0xff] %vm1368, %v1279
      %1373 = vst.msk [vmem:[#allocation3 + $0x40] sm:$0xff] %vm1368, %v1281
      %1374 = vst.msk [vmem:[#allocation3 + $0x50] sm:$0xff] %vm1368, %v1283
      %1375 = vst.msk [vmem:[#allocation3 + $0x60] sm:$0xff] %vm1368, %v1285
      %1376 = vst.msk [vmem:[#allocation3 + $0x70] sm:$0xff] %vm1368, %v1287
      %1377 = vst.msk [vmem:[#allocation3 + $0x80] sm:$0xff] %vm1368, %v1289
      %1378 = vst.msk [vmem:[#allocation3 + $0x90] sm:$0xff] %vm1368, %v1291
      %1379 = vst.msk [vmem:[#allocation3 + $0xa0] sm:$0xff] %vm1368, %v1293
      %1380 = vst.msk [vmem:[#allocation3 + $0xb0] sm:$0xff] %vm1368, %v1295
      %1381 = vst.msk [vmem:[#allocation3 + $0xc0] sm:$0xff] %vm1368, %v1297
      %1382 = vst.msk [vmem:[#allocation3 + $0xd0] sm:$0xff] %vm1368, %v1299
      %1383 = vst.msk [vmem:[#allocation3 + $0xe0] sm:$0xff] %vm1368, %v1301
      %1384 = vst.msk [vmem:[#allocation3 + $0xf0] sm:$0xff] %vm1368, %v1303
      %1385 = vst.msk [vmem:[#allocation3 + $0x100] sm:$0xff] %vm1368, %v1305
      %1386 = vst.msk [vmem:[#allocation3 + $0x110] sm:$0xff] %vm1368, %v1307
      %1387 = vst.msk [vmem:[#allocation3 + $0x120] sm:$0xff] %vm1368, %v1309
      %1388 = vst.msk [vmem:[#allocation3 + $0x130] sm:$0xff] %vm1368, %v1311
      %1389 = vst.msk [vmem:[#allocation3 + $0x140] sm:$0xff] %vm1368, %v1313
      %1390 = vst.msk [vmem:[#allocation3 + $0x150] sm:$0xff] %vm1368, %v1315
      %1391 = vst.msk [vmem:[#allocation3 + $0x160] sm:$0xff] %vm1368, %v1317
      %1392 = vst.msk [vmem:[#allocation3 + $0x170] sm:$0xff] %vm1368, %v1319
      %1393 = vst.msk [vmem:[#allocation3 + $0x180] sm:$0xff] %vm1368, %v1321
      %1394 = vst.msk [vmem:[#allocation3 + $0x190] sm:$0xff] %vm1368, %v1323
      %1395 = vst.msk [vmem:[#allocation3 + $0x1a0] sm:$0xff] %vm1368, %v1325
      %1396 = vst.msk [vmem:[#allocation3 + $0x1b0] sm:$0xff] %vm1368, %v1327
      %1397 = vst.msk [vmem:[#allocation3 + $0x1c0] sm:$0xff] %vm1368, %v1329
      %1398 = vst.msk [vmem:[#allocation3 + $0x1d0] sm:$0xff] %vm1368, %v1331
      %1399 = vst.msk [vmem:[#allocation3 + $0x1e0] sm:$0xff] %vm1368, %v1333
      %1400 = vst.msk [vmem:[#allocation3 + $0x1f0] sm:$0xff] %vm1368, %v1335
      %v1401 = vld [vmem:[%s724 + $0x1] sm:$0xff]
      %v1402 = vld [vmem:[%s724 + $0x9] sm:$0xff]
      %v1403 = vld [vmem:[%s724 + $0x19] sm:$0xff]
      %v1404 = vld [vmem:[%s724 + $0x21] sm:$0xff]
      %v1405 = vld [vmem:[%s724 + $0x31] sm:$0xff]
      %v1406 = vld [vmem:[%s724 + $0x39] sm:$0xff]
      %v1407 = vld [vmem:[%s724 + $0x49] sm:$0xff]
      %v1408 = vld [vmem:[%s724 + $0x51] sm:$0xff]
      %v1409 = vld [vmem:[%s724 + $0x61] sm:$0xff]
      %v1410 = vld [vmem:[%s724 + $0x69] sm:$0xff]
      %v1411 = vld [vmem:[%s724 + $0x79] sm:$0xff]
      %v1412 = vld [vmem:[%s724 + $0x81] sm:$0xff]
      %v1413 = vld [vmem:[%s724 + $0x91] sm:$0xff]
      %v1414 = vld [vmem:[%s724 + $0x99] sm:$0xff]
      %v1415 = vld [vmem:[%s724 + $0xa9] sm:$0xff]
      %v1416 = vld [vmem:[%s724 + $0xb1] sm:$0xff]
      %v1417 = vld [vmem:[%s724 + $0xc1] sm:$0xff]
      %v1418 = vld [vmem:[%s724 + $0xc9] sm:$0xff]
      %v1419 = vld [vmem:[%s724 + $0xd9] sm:$0xff]
      %v1420 = vld [vmem:[%s724 + $0xe1] sm:$0xff]
      %v1421 = vld [vmem:[%s724 + $0xf1] sm:$0xff]
      %v1422 = vld [vmem:[%s724 + $0xf9] sm:$0xff]
      %v1423 = vld [vmem:[%s724 + $0x109] sm:$0xff]
      %v1424 = vld [vmem:[%s724 + $0x111] sm:$0xff]
      %v1425 = vld [vmem:[%s724 + $0x121] sm:$0xff]
      %v1426 = vld [vmem:[%s724 + $0x129] sm:$0xff]
      %v1427 = vld [vmem:[%s724 + $0x139] sm:$0xff]
      %v1428 = vld [vmem:[%s724 + $0x141] sm:$0xff]
      %v1429 = vld [vmem:[%s724 + $0x151] sm:$0xff]
      %v1430 = vld [vmem:[%s724 + $0x159] sm:$0xff]
      %v1431 = vld [vmem:[%s724 + $0x169] sm:$0xff]
      %v1432 = vld [vmem:[%s724 + $0x171] sm:$0xff]
      %1465 = vrot.lane.b32.xlu0 %v1401, 12
      %v1466 = vpop.permute.xlu0 %1465
      %1467 = vrot.lane.b32.xlu0 %v1402, 12
      %v1468 = vpop.permute.xlu0 %1467
      %1469 = vrot.lane.b32.xlu0 %v1403, 12
      %v1470 = vpop.permute.xlu0 %1469
      %1471 = vrot.lane.b32.xlu0 %v1404, 12
      %v1472 = vpop.permute.xlu0 %1471
      %1473 = vrot.lane.b32.xlu0 %v1405, 12
      %v1474 = vpop.permute.xlu0 %1473
      %1475 = vrot.lane.b32.xlu0 %v1406, 12
      %v1476 = vpop.permute.xlu0 %1475
      %1477 = vrot.lane.b32.xlu0 %v1407, 12
      %v1478 = vpop.permute.xlu0 %1477
      %1479 = vrot.lane.b32.xlu0 %v1408, 12
      %v1480 = vpop.permute.xlu0 %1479
      %1481 = vrot.lane.b32.xlu0 %v1409, 12
      %v1482 = vpop.permute.xlu0 %1481
      %1483 = vrot.lane.b32.xlu0 %v1410, 12
      %v1484 = vpop.permute.xlu0 %1483
      %1485 = vrot.lane.b32.xlu0 %v1411, 12
      %v1486 = vpop.permute.xlu0 %1485
      %1487 = vrot.lane.b32.xlu0 %v1412, 12
      %v1488 = vpop.permute.xlu0 %1487
      %1489 = vrot.lane.b32.xlu0 %v1413, 12
      %v1490 = vpop.permute.xlu0 %1489
      %1491 = vrot.lane.b32.xlu0 %v1414, 12
      %v1492 = vpop.permute.xlu0 %1491
      %1493 = vrot.lane.b32.xlu0 %v1415, 12
      %v1494 = vpop.permute.xlu0 %1493
      %1495 = vrot.lane.b32.xlu0 %v1416, 12
      %v1496 = vpop.permute.xlu0 %1495
      %1497 = vrot.lane.b32.xlu0 %v1417, 12
      %v1498 = vpop.permute.xlu0 %1497
      %1499 = vrot.lane.b32.xlu0 %v1418, 12
      %v1500 = vpop.permute.xlu0 %1499
      %1501 = vrot.lane.b32.xlu0 %v1419, 12
      %v1502 = vpop.permute.xlu0 %1501
      %1503 = vrot.lane.b32.xlu0 %v1420, 12
      %v1504 = vpop.permute.xlu0 %1503
      %1505 = vrot.lane.b32.xlu0 %v1421, 12
      %v1506 = vpop.permute.xlu0 %1505
      %1507 = vrot.lane.b32.xlu0 %v1422, 12
      %v1508 = vpop.permute.xlu0 %1507
      %1509 = vrot.lane.b32.xlu0 %v1423, 12
      %v1510 = vpop.permute.xlu0 %1509
      %1511 = vrot.lane.b32.xlu0 %v1424, 12
      %v1512 = vpop.permute.xlu0 %1511
      %1513 = vrot.lane.b32.xlu0 %v1425, 12
      %v1514 = vpop.permute.xlu0 %1513
      %1515 = vrot.lane.b32.xlu0 %v1426, 12
      %v1516 = vpop.permute.xlu0 %1515
      %1517 = vrot.lane.b32.xlu0 %v1427, 12
      %v1518 = vpop.permute.xlu0 %1517
      %1519 = vrot.lane.b32.xlu0 %v1428, 12
      %v1520 = vpop.permute.xlu0 %1519
      %1521 = vrot.lane.b32.xlu0 %v1429, 12
      %v1522 = vpop.permute.xlu0 %1521
      %1523 = vrot.lane.b32.xlu0 %v1430, 12
      %v1524 = vpop.permute.xlu0 %1523
      %1525 = vrot.lane.b32.xlu0 %v1431, 12
      %v1526 = vpop.permute.xlu0 %1525
      %1527 = vrot.lane.b32.xlu0 %v1432, 12
      %v1528 = vpop.permute.xlu0 %1527
      %vm1561 = vcmask 121952
      %1562 = vst.msk [vmem:[#allocation3] sm:$0xff] %vm1561, %v1466
      %1563 = vst.msk [vmem:[#allocation3 + $0x10] sm:$0xff] %vm1561, %v1468
      %1564 = vst.msk [vmem:[#allocation3 + $0x20] sm:$0xff] %vm1561, %v1470
      %1565 = vst.msk [vmem:[#allocation3 + $0x30] sm:$0xff] %vm1561, %v1472
      %1566 = vst.msk [vmem:[#allocation3 + $0x40] sm:$0xff] %vm1561, %v1474
      %1567 = vst.msk [vmem:[#allocation3 + $0x50] sm:$0xff] %vm1561, %v1476
      %1568 = vst.msk [vmem:[#allocation3 + $0x60] sm:$0xff] %vm1561, %v1478
      %1569 = vst.msk [vmem:[#allocation3 + $0x70] sm:$0xff] %vm1561, %v1480
      %1570 = vst.msk [vmem:[#allocation3 + $0x80] sm:$0xff] %vm1561, %v1482
      %1571 = vst.msk [vmem:[#allocation3 + $0x90] sm:$0xff] %vm1561, %v1484
      %1572 = vst.msk [vmem:[#allocation3 + $0xa0] sm:$0xff] %vm1561, %v1486
      %1573 = vst.msk [vmem:[#allocation3 + $0xb0] sm:$0xff] %vm1561, %v1488
      %1574 = vst.msk [vmem:[#allocation3 + $0xc0] sm:$0xff] %vm1561, %v1490
      %1575 = vst.msk [vmem:[#allocation3 + $0xd0] sm:$0xff] %vm1561, %v1492
      %1576 = vst.msk [vmem:[#allocation3 + $0xe0] sm:$0xff] %vm1561, %v1494
      %1577 = vst.msk [vmem:[#allocation3 + $0xf0] sm:$0xff] %vm1561, %v1496
      %1578 = vst.msk [vmem:[#allocation3 + $0x100] sm:$0xff] %vm1561, %v1498
      %1579 = vst.msk [vmem:[#allocation3 + $0x110] sm:$0xff] %vm1561, %v1500
      %1580 = vst.msk [vmem:[#allocation3 + $0x120] sm:$0xff] %vm1561, %v1502
      %1581 = vst.msk [vmem:[#allocation3 + $0x130] sm:$0xff] %vm1561, %v1504
      %1582 = vst.msk [vmem:[#allocation3 + $0x140] sm:$0xff] %vm1561, %v1506
      %1583 = vst.msk [vmem:[#allocation3 + $0x150] sm:$0xff] %vm1561, %v1508
      %1584 = vst.msk [vmem:[#allocation3 + $0x160] sm:$0xff] %vm1561, %v1510
      %1585 = vst.msk [vmem:[#allocation3 + $0x170] sm:$0xff] %vm1561, %v1512
      %1586 = vst.msk [vmem:[#allocation3 + $0x180] sm:$0xff] %vm1561, %v1514
      %1587 = vst.msk [vmem:[#allocation3 + $0x190] sm:$0xff] %vm1561, %v1516
      %1588 = vst.msk [vmem:[#allocation3 + $0x1a0] sm:$0xff] %vm1561, %v1518
      %1589 = vst.msk [vmem:[#allocation3 + $0x1b0] sm:$0xff] %vm1561, %v1520
      %1590 = vst.msk [vmem:[#allocation3 + $0x1c0] sm:$0xff] %vm1561, %v1522
      %1591 = vst.msk [vmem:[#allocation3 + $0x1d0] sm:$0xff] %vm1561, %v1524
      %1592 = vst.msk [vmem:[#allocation3 + $0x1e0] sm:$0xff] %vm1561, %v1526
      %1593 = vst.msk [vmem:[#allocation3 + $0x1f0] sm:$0xff] %vm1561, %v1528
      %v1594 = vld [vmem:[%s724 + $0x2] sm:$0xff]
      %v1595 = vld [vmem:[%s724 + $0xa] sm:$0xff]
      %v1596 = vld [vmem:[%s724 + $0x1a] sm:$0xff]
      %v1597 = vld [vmem:[%s724 + $0x22] sm:$0xff]
      %v1598 = vld [vmem:[%s724 + $0x32] sm:$0xff]
      %v1599 = vld [vmem:[%s724 + $0x3a] sm:$0xff]
      %v1600 = vld [vmem:[%s724 + $0x4a] sm:$0xff]
      %v1601 = vld [vmem:[%s724 + $0x52] sm:$0xff]
      %v1602 = vld [vmem:[%s724 + $0x62] sm:$0xff]
      %v1603 = vld [vmem:[%s724 + $0x6a] sm:$0xff]
      %v1604 = vld [vmem:[%s724 + $0x7a] sm:$0xff]
      %v1605 = vld [vmem:[%s724 + $0x82] sm:$0xff]
      %v1606 = vld [vmem:[%s724 + $0x92] sm:$0xff]
      %v1607 = vld [vmem:[%s724 + $0x9a] sm:$0xff]
      %v1608 = vld [vmem:[%s724 + $0xaa] sm:$0xff]
      %v1609 = vld [vmem:[%s724 + $0xb2] sm:$0xff]
      %v1610 = vld [vmem:[%s724 + $0xc2] sm:$0xff]
      %v1611 = vld [vmem:[%s724 + $0xca] sm:$0xff]
      %v1612 = vld [vmem:[%s724 + $0xda] sm:$0xff]
      %v1613 = vld [vmem:[%s724 + $0xe2] sm:$0xff]
      %v1614 = vld [vmem:[%s724 + $0xf2] sm:$0xff]
      %v1615 = vld [vmem:[%s724 + $0xfa] sm:$0xff]
      %v1616 = vld [vmem:[%s724 + $0x10a] sm:$0xff]
      %v1617 = vld [vmem:[%s724 + $0x112] sm:$0xff]
      %v1618 = vld [vmem:[%s724 + $0x122] sm:$0xff]
      %v1619 = vld [vmem:[%s724 + $0x12a] sm:$0xff]
      %v1620 = vld [vmem:[%s724 + $0x13a] sm:$0xff]
      %v1621 = vld [vmem:[%s724 + $0x142] sm:$0xff]
      %v1622 = vld [vmem:[%s724 + $0x152] sm:$0xff]
      %v1623 = vld [vmem:[%s724 + $0x15a] sm:$0xff]
      %v1624 = vld [vmem:[%s724 + $0x16a] sm:$0xff]
      %v1625 = vld [vmem:[%s724 + $0x172] sm:$0xff]
      %1658 = vrot.lane.b32.xlu0 %v1594, 15
      %v1659 = vpop.permute.xlu0 %1658
      %1660 = vrot.lane.b32.xlu0 %v1595, 15
      %v1661 = vpop.permute.xlu0 %1660
      %1662 = vrot.lane.b32.xlu0 %v1596, 15
      %v1663 = vpop.permute.xlu0 %1662
      %1664 = vrot.lane.b32.xlu0 %v1597, 15
      %v1665 = vpop.permute.xlu0 %1664
      %1666 = vrot.lane.b32.xlu0 %v1598, 15
      %v1667 = vpop.permute.xlu0 %1666
      %1668 = vrot.lane.b32.xlu0 %v1599, 15
      %v1669 = vpop.permute.xlu0 %1668
      %1670 = vrot.lane.b32.xlu0 %v1600, 15
      %v1671 = vpop.permute.xlu0 %1670
      %1672 = vrot.lane.b32.xlu0 %v1601, 15
      %v1673 = vpop.permute.xlu0 %1672
      %1674 = vrot.lane.b32.xlu0 %v1602, 15
      %v1675 = vpop.permute.xlu0 %1674
      %1676 = vrot.lane.b32.xlu0 %v1603, 15
      %v1677 = vpop.permute.xlu0 %1676
      %1678 = vrot.lane.b32.xlu0 %v1604, 15
      %v1679 = vpop.permute.xlu0 %1678
      %1680 = vrot.lane.b32.xlu0 %v1605, 15
      %v1681 = vpop.permute.xlu0 %1680
      %1682 = vrot.lane.b32.xlu0 %v1606, 15
      %v1683 = vpop.permute.xlu0 %1682
      %1684 = vrot.lane.b32.xlu0 %v1607, 15
      %v1685 = vpop.permute.xlu0 %1684
      %1686 = vrot.lane.b32.xlu0 %v1608, 15
      %v1687 = vpop.permute.xlu0 %1686
      %1688 = vrot.lane.b32.xlu0 %v1609, 15
      %v1689 = vpop.permute.xlu0 %1688
      %1690 = vrot.lane.b32.xlu0 %v1610, 15
      %v1691 = vpop.permute.xlu0 %1690
      %1692 = vrot.lane.b32.xlu0 %v1611, 15
      %v1693 = vpop.permute.xlu0 %1692
      %1694 = vrot.lane.b32.xlu0 %v1612, 15
      %v1695 = vpop.permute.xlu0 %1694
      %1696 = vrot.lane.b32.xlu0 %v1613, 15
      %v1697 = vpop.permute.xlu0 %1696
      %1698 = vrot.lane.b32.xlu0 %v1614, 15
      %v1699 = vpop.permute.xlu0 %1698
      %1700 = vrot.lane.b32.xlu0 %v1615, 15
      %v1701 = vpop.permute.xlu0 %1700
      %1702 = vrot.lane.b32.xlu0 %v1616, 15
      %v1703 = vpop.permute.xlu0 %1702
      %1704 = vrot.lane.b32.xlu0 %v1617, 15
      %v1705 = vpop.permute.xlu0 %1704
      %1706 = vrot.lane.b32.xlu0 %v1618, 15
      %v1707 = vpop.permute.xlu0 %1706
      %1708 = vrot.lane.b32.xlu0 %v1619, 15
      %v1709 = vpop.permute.xlu0 %1708
      %1710 = vrot.lane.b32.xlu0 %v1620, 15
      %v1711 = vpop.permute.xlu0 %1710
      %1712 = vrot.lane.b32.xlu0 %v1621, 15
      %v1713 = vpop.permute.xlu0 %1712
      %1714 = vrot.lane.b32.xlu0 %v1622, 15
      %v1715 = vpop.permute.xlu0 %1714
      %1716 = vrot.lane.b32.xlu0 %v1623, 15
      %v1717 = vpop.permute.xlu0 %1716
      %1718 = vrot.lane.b32.xlu0 %v1624, 15
      %v1719 = vpop.permute.xlu0 %1718
      %1720 = vrot.lane.b32.xlu0 %v1625, 15
      %v1721 = vpop.permute.xlu0 %1720
      %vm1754 = vcmask 146552
      %1755 = vst.msk [vmem:[#allocation3] sm:$0xff] %vm1754, %v1659
      %1756 = vst.msk [vmem:[#allocation3 + $0x10] sm:$0xff] %vm1754, %v1661
      %1757 = vst.msk [vmem:[#allocation3 + $0x20] sm:$0xff] %vm1754, %v1663
      %1758 = vst.msk [vmem:[#allocation3 + $0x30] sm:$0xff] %vm1754, %v1665
      %1759 = vst.msk [vmem:[#allocation3 + $0x40] sm:$0xff] %vm1754, %v1667
      %1760 = vst.msk [vmem:[#allocation3 + $0x50] sm:$0xff] %vm1754, %v1669
      %1761 = vst.msk [vmem:[#allocation3 + $0x60] sm:$0xff] %vm1754, %v1671
      %1762 = vst.msk [vmem:[#allocation3 + $0x70] sm:$0xff] %vm1754, %v1673
      %1763 = vst.msk [vmem:[#allocation3 + $0x80] sm:$0xff] %vm1754, %v1675
      %1764 = vst.msk [vmem:[#allocation3 + $0x90] sm:$0xff] %vm1754, %v1677
      %1765 = vst.msk [vmem:[#allocation3 + $0xa0] sm:$0xff] %vm1754, %v1679
      %1766 = vst.msk [vmem:[#allocation3 + $0xb0] sm:$0xff] %vm1754, %v1681
      %1767 = vst.msk [vmem:[#allocation3 + $0xc0] sm:$0xff] %vm1754, %v1683
      %1768 = vst.msk [vmem:[#allocation3 + $0xd0] sm:$0xff] %vm1754, %v1685
      %1769 = vst.msk [vmem:[#allocation3 + $0xe0] sm:$0xff] %vm1754, %v1687
      %1770 = vst.msk [vmem:[#allocation3 + $0xf0] sm:$0xff] %vm1754, %v1689
      %1771 = vst.msk [vmem:[#allocation3 + $0x100] sm:$0xff] %vm1754, %v1691
      %1772 = vst.msk [vmem:[#allocation3 + $0x110] sm:$0xff] %vm1754, %v1693
      %1773 = vst.msk [vmem:[#allocation3 + $0x120] sm:$0xff] %vm1754, %v1695
      %1774 = vst.msk [vmem:[#allocation3 + $0x130] sm:$0xff] %vm1754, %v1697
      %1775 = vst.msk [vmem:[#allocation3 + $0x140] sm:$0xff] %vm1754, %v1699
      %1776 = vst.msk [vmem:[#allocation3 + $0x150] sm:$0xff] %vm1754, %v1701
      %1777 = vst.msk [vmem:[#allocation3 + $0x160] sm:$0xff] %vm1754, %v1703
      %1778 = vst.msk [vmem:[#allocation3 + $0x170] sm:$0xff] %vm1754, %v1705
      %1779 = vst.msk [vmem:[#allocation3 + $0x180] sm:$0xff] %vm1754, %v1707
      %1780 = vst.msk [vmem:[#allocation3 + $0x190] sm:$0xff] %vm1754, %v1709
      %1781 = vst.msk [vmem:[#allocation3 + $0x1a0] sm:$0xff] %vm1754, %v1711
      %1782 = vst.msk [vmem:[#allocation3 + $0x1b0] sm:$0xff] %vm1754, %v1713
      %1783 = vst.msk [vmem:[#allocation3 + $0x1c0] sm:$0xff] %vm1754, %v1715
      %1784 = vst.msk [vmem:[#allocation3 + $0x1d0] sm:$0xff] %vm1754, %v1717
      %1785 = vst.msk [vmem:[#allocation3 + $0x1e0] sm:$0xff] %vm1754, %v1719
      %1786 = vst.msk [vmem:[#allocation3 + $0x1f0] sm:$0xff] %vm1754, %v1721
      %s1787 = scalar_lea.vmem [#allocation2], 48
      %v1788 = vld [vmem:[%s1787] sm:$0xff]
      %v1789 = vld [vmem:[%s1787 + $0x8] sm:$0xff]
      %v1790 = vld [vmem:[%s1787 + $0x18] sm:$0xff]
      %v1791 = vld [vmem:[%s1787 + $0x20] sm:$0xff]
      %v1792 = vld [vmem:[%s1787 + $0x30] sm:$0xff]
      %v1793 = vld [vmem:[%s1787 + $0x38] sm:$0xff]
      %v1794 = vld [vmem:[%s1787 + $0x48] sm:$0xff]
      %v1795 = vld [vmem:[%s1787 + $0x50] sm:$0xff]
      %v1796 = vld [vmem:[%s1787 + $0x60] sm:$0xff]
      %v1797 = vld [vmem:[%s1787 + $0x68] sm:$0xff]
      %v1798 = vld [vmem:[%s1787 + $0x78] sm:$0xff]
      %v1799 = vld [vmem:[%s1787 + $0x80] sm:$0xff]
      %v1800 = vld [vmem:[%s1787 + $0x90] sm:$0xff]
      %v1801 = vld [vmem:[%s1787 + $0x98] sm:$0xff]
      %v1802 = vld [vmem:[%s1787 + $0xa8] sm:$0xff]
      %v1803 = vld [vmem:[%s1787 + $0xb0] sm:$0xff]
      %v1804 = vld [vmem:[%s1787 + $0xc0] sm:$0xff]
      %v1805 = vld [vmem:[%s1787 + $0xc8] sm:$0xff]
      %v1806 = vld [vmem:[%s1787 + $0xd8] sm:$0xff]
      %v1807 = vld [vmem:[%s1787 + $0xe0] sm:$0xff]
      %v1808 = vld [vmem:[%s1787 + $0xf0] sm:$0xff]
      %v1809 = vld [vmem:[%s1787 + $0xf8] sm:$0xff]
      %v1810 = vld [vmem:[%s1787 + $0x108] sm:$0xff]
      %v1811 = vld [vmem:[%s1787 + $0x110] sm:$0xff]
      %v1812 = vld [vmem:[%s1787 + $0x120] sm:$0xff]
      %v1813 = vld [vmem:[%s1787 + $0x128] sm:$0xff]
      %v1814 = vld [vmem:[%s1787 + $0x138] sm:$0xff]
      %v1815 = vld [vmem:[%s1787 + $0x140] sm:$0xff]
      %v1816 = vld [vmem:[%s1787 + $0x150] sm:$0xff]
      %v1817 = vld [vmem:[%s1787 + $0x158] sm:$0xff]
      %v1818 = vld [vmem:[%s1787 + $0x168] sm:$0xff]
      %v1819 = vld [vmem:[%s1787 + $0x170] sm:$0xff]
      %1852 = vrot.lane.b32.xlu0 %v1788, 18
      %v1853 = vpop.permute.xlu0 %1852
      %1854 = vrot.lane.b32.xlu0 %v1789, 18
      %v1855 = vpop.permute.xlu0 %1854
      %1856 = vrot.lane.b32.xlu0 %v1790, 18
      %v1857 = vpop.permute.xlu0 %1856
      %1858 = vrot.lane.b32.xlu0 %v1791, 18
      %v1859 = vpop.permute.xlu0 %1858
      %1860 = vrot.lane.b32.xlu0 %v1792, 18
      %v1861 = vpop.permute.xlu0 %1860
      %1862 = vrot.lane.b32.xlu0 %v1793, 18
      %v1863 = vpop.permute.xlu0 %1862
      %1864 = vrot.lane.b32.xlu0 %v1794, 18
      %v1865 = vpop.permute.xlu0 %1864
      %1866 = vrot.lane.b32.xlu0 %v1795, 18
      %v1867 = vpop.permute.xlu0 %1866
      %1868 = vrot.lane.b32.xlu0 %v1796, 18
      %v1869 = vpop.permute.xlu0 %1868
      %1870 = vrot.lane.b32.xlu0 %v1797, 18
      %v1871 = vpop.permute.xlu0 %1870
      %1872 = vrot.lane.b32.xlu0 %v1798, 18
      %v1873 = vpop.permute.xlu0 %1872
      %1874 = vrot.lane.b32.xlu0 %v1799, 18
      %v1875 = vpop.permute.xlu0 %1874
      %1876 = vrot.lane.b32.xlu0 %v1800, 18
      %v1877 = vpop.permute.xlu0 %1876
      %1878 = vrot.lane.b32.xlu0 %v1801, 18
      %v1879 = vpop.permute.xlu0 %1878
      %1880 = vrot.lane.b32.xlu0 %v1802, 18
      %v1881 = vpop.permute.xlu0 %1880
      %1882 = vrot.lane.b32.xlu0 %v1803, 18
      %v1883 = vpop.permute.xlu0 %1882
      %1884 = vrot.lane.b32.xlu0 %v1804, 18
      %v1885 = vpop.permute.xlu0 %1884
      %1886 = vrot.lane.b32.xlu0 %v1805, 18
      %v1887 = vpop.permute.xlu0 %1886
      %1888 = vrot.lane.b32.xlu0 %v1806, 18
      %v1889 = vpop.permute.xlu0 %1888
      %1890 = vrot.lane.b32.xlu0 %v1807, 18
      %v1891 = vpop.permute.xlu0 %1890
      %1892 = vrot.lane.b32.xlu0 %v1808, 18
      %v1893 = vpop.permute.xlu0 %1892
      %1894 = vrot.lane.b32.xlu0 %v1809, 18
      %v1895 = vpop.permute.xlu0 %1894
      %1896 = vrot.lane.b32.xlu0 %v1810, 18
      %v1897 = vpop.permute.xlu0 %1896
      %1898 = vrot.lane.b32.xlu0 %v1811, 18
      %v1899 = vpop.permute.xlu0 %1898
      %1900 = vrot.lane.b32.xlu0 %v1812, 18
      %v1901 = vpop.permute.xlu0 %1900
      %1902 = vrot.lane.b32.xlu0 %v1813, 18
      %v1903 = vpop.permute.xlu0 %1902
      %1904 = vrot.lane.b32.xlu0 %v1814, 18
      %v1905 = vpop.permute.xlu0 %1904
      %1906 = vrot.lane.b32.xlu0 %v1815, 18
      %v1907 = vpop.permute.xlu0 %1906
      %1908 = vrot.lane.b32.xlu0 %v1816, 18
      %v1909 = vpop.permute.xlu0 %1908
      %1910 = vrot.lane.b32.xlu0 %v1817, 18
      %v1911 = vpop.permute.xlu0 %1910
      %1912 = vrot.lane.b32.xlu0 %v1818, 18
      %v1913 = vpop.permute.xlu0 %1912
      %1914 = vrot.lane.b32.xlu0 %v1819, 18
      %v1915 = vpop.permute.xlu0 %1914
      %vm1948 = vcmask 171152
      %1949 = vst.msk [vmem:[#allocation3] sm:$0xff] %vm1948, %v1853
      %1950 = vst.msk [vmem:[#allocation3 + $0x10] sm:$0xff] %vm1948, %v1855
      %1951 = vst.msk [vmem:[#allocation3 + $0x20] sm:$0xff] %vm1948, %v1857
      %1952 = vst.msk [vmem:[#allocation3 + $0x30] sm:$0xff] %vm1948, %v1859
      %1953 = vst.msk [vmem:[#allocation3 + $0x40] sm:$0xff] %vm1948, %v1861
      %1954 = vst.msk [vmem:[#allocation3 + $0x50] sm:$0xff] %vm1948, %v1863
      %1955 = vst.msk [vmem:[#allocation3 + $0x60] sm:$0xff] %vm1948, %v1865
      %1956 = vst.msk [vmem:[#allocation3 + $0x70] sm:$0xff] %vm1948, %v1867
      %1957 = vst.msk [vmem:[#allocation3 + $0x80] sm:$0xff] %vm1948, %v1869
      %1958 = vst.msk [vmem:[#allocation3 + $0x90] sm:$0xff] %vm1948, %v1871
      %1959 = vst.msk [vmem:[#allocation3 + $0xa0] sm:$0xff] %vm1948, %v1873
      %1960 = vst.msk [vmem:[#allocation3 + $0xb0] sm:$0xff] %vm1948, %v1875
      %1961 = vst.msk [vmem:[#allocation3 + $0xc0] sm:$0xff] %vm1948, %v1877
      %1962 = vst.msk [vmem:[#allocation3 + $0xd0] sm:$0xff] %vm1948, %v1879
      %1963 = vst.msk [vmem:[#allocation3 + $0xe0] sm:$0xff] %vm1948, %v1881
      %1964 = vst.msk [vmem:[#allocation3 + $0xf0] sm:$0xff] %vm1948, %v1883
      %1965 = vst.msk [vmem:[#allocation3 + $0x100] sm:$0xff] %vm1948, %v1885
      %1966 = vst.msk [vmem:[#allocation3 + $0x110] sm:$0xff] %vm1948, %v1887
      %1967 = vst.msk [vmem:[#allocation3 + $0x120] sm:$0xff] %vm1948, %v1889
      %1968 = vst.msk [vmem:[#allocation3 + $0x130] sm:$0xff] %vm1948, %v1891
      %1969 = vst.msk [vmem:[#allocation3 + $0x140] sm:$0xff] %vm1948, %v1893
      %1970 = vst.msk [vmem:[#allocation3 + $0x150] sm:$0xff] %vm1948, %v1895
      %1971 = vst.msk [vmem:[#allocation3 + $0x160] sm:$0xff] %vm1948, %v1897
      %1972 = vst.msk [vmem:[#allocation3 + $0x170] sm:$0xff] %vm1948, %v1899
      %1973 = vst.msk [vmem:[#allocation3 + $0x180] sm:$0xff] %vm1948, %v1901
      %1974 = vst.msk [vmem:[#allocation3 + $0x190] sm:$0xff] %vm1948, %v1903
      %1975 = vst.msk [vmem:[#allocation3 + $0x1a0] sm:$0xff] %vm1948, %v1905
      %1976 = vst.msk [vmem:[#allocation3 + $0x1b0] sm:$0xff] %vm1948, %v1907
      %1977 = vst.msk [vmem:[#allocation3 + $0x1c0] sm:$0xff] %vm1948, %v1909
      %1978 = vst.msk [vmem:[#allocation3 + $0x1d0] sm:$0xff] %vm1948, %v1911
      %1979 = vst.msk [vmem:[#allocation3 + $0x1e0] sm:$0xff] %vm1948, %v1913
      %1980 = vst.msk [vmem:[#allocation3 + $0x1f0] sm:$0xff] %vm1948, %v1915
      %v1981 = vld [vmem:[%s1787 + $0x1] sm:$0xff]
      %v1982 = vld [vmem:[%s1787 + $0x9] sm:$0xff]
      %v1983 = vld [vmem:[%s1787 + $0x19] sm:$0xff]
      %v1984 = vld [vmem:[%s1787 + $0x21] sm:$0xff]
      %v1985 = vld [vmem:[%s1787 + $0x31] sm:$0xff]
      %v1986 = vld [vmem:[%s1787 + $0x39] sm:$0xff]
      %v1987 = vld [vmem:[%s1787 + $0x49] sm:$0xff]
      %v1988 = vld [vmem:[%s1787 + $0x51] sm:$0xff]
      %v1989 = vld [vmem:[%s1787 + $0x61] sm:$0xff]
      %v1990 = vld [vmem:[%s1787 + $0x69] sm:$0xff]
      %v1991 = vld [vmem:[%s1787 + $0x79] sm:$0xff]
      %v1992 = vld [vmem:[%s1787 + $0x81] sm:$0xff]
      %v1993 = vld [vmem:[%s1787 + $0x91] sm:$0xff]
      %v1994 = vld [vmem:[%s1787 + $0x99] sm:$0xff]
      %v1995 = vld [vmem:[%s1787 + $0xa9] sm:$0xff]
      %v1996 = vld [vmem:[%s1787 + $0xb1] sm:$0xff]
      %v1997 = vld [vmem:[%s1787 + $0xc1] sm:$0xff]
      %v1998 = vld [vmem:[%s1787 + $0xc9] sm:$0xff]
      %v1999 = vld [vmem:[%s1787 + $0xd9] sm:$0xff]
      %v2000 = vld [vmem:[%s1787 + $0xe1] sm:$0xff]
      %v2001 = vld [vmem:[%s1787 + $0xf1] sm:$0xff]
      %v2002 = vld [vmem:[%s1787 + $0xf9] sm:$0xff]
      %v2003 = vld [vmem:[%s1787 + $0x109] sm:$0xff]
      %v2004 = vld [vmem:[%s1787 + $0x111] sm:$0xff]
      %v2005 = vld [vmem:[%s1787 + $0x121] sm:$0xff]
      %v2006 = vld [vmem:[%s1787 + $0x129] sm:$0xff]
      %v2007 = vld [vmem:[%s1787 + $0x139] sm:$0xff]
      %v2008 = vld [vmem:[%s1787 + $0x141] sm:$0xff]
      %v2009 = vld [vmem:[%s1787 + $0x151] sm:$0xff]
      %v2010 = vld [vmem:[%s1787 + $0x159] sm:$0xff]
      %v2011 = vld [vmem:[%s1787 + $0x169] sm:$0xff]
      %v2012 = vld [vmem:[%s1787 + $0x171] sm:$0xff]
      %2045 = vrot.lane.b32.xlu0 %v1981, 21
      %v2046 = vpop.permute.xlu0 %2045
      %2047 = vrot.lane.b32.xlu0 %v1982, 21
      %v2048 = vpop.permute.xlu0 %2047
      %2049 = vrot.lane.b32.xlu0 %v1983, 21
      %v2050 = vpop.permute.xlu0 %2049
      %2051 = vrot.lane.b32.xlu0 %v1984, 21
      %v2052 = vpop.permute.xlu0 %2051
      %2053 = vrot.lane.b32.xlu0 %v1985, 21
      %v2054 = vpop.permute.xlu0 %2053
      %2055 = vrot.lane.b32.xlu0 %v1986, 21
      %v2056 = vpop.permute.xlu0 %2055
      %2057 = vrot.lane.b32.xlu0 %v1987, 21
      %v2058 = vpop.permute.xlu0 %2057
      %2059 = vrot.lane.b32.xlu0 %v1988, 21
      %v2060 = vpop.permute.xlu0 %2059
      %2061 = vrot.lane.b32.xlu0 %v1989, 21
      %v2062 = vpop.permute.xlu0 %2061
      %2063 = vrot.lane.b32.xlu0 %v1990, 21
      %v2064 = vpop.permute.xlu0 %2063
      %2065 = vrot.lane.b32.xlu0 %v1991, 21
      %v2066 = vpop.permute.xlu0 %2065
      %2067 = vrot.lane.b32.xlu0 %v1992, 21
      %v2068 = vpop.permute.xlu0 %2067
      %2069 = vrot.lane.b32.xlu0 %v1993, 21
      %v2070 = vpop.permute.xlu0 %2069
      %2071 = vrot.lane.b32.xlu0 %v1994, 21
      %v2072 = vpop.permute.xlu0 %2071
      %2073 = vrot.lane.b32.xlu0 %v1995, 21
      %v2074 = vpop.permute.xlu0 %2073
      %2075 = vrot.lane.b32.xlu0 %v1996, 21
      %v2076 = vpop.permute.xlu0 %2075
      %2077 = vrot.lane.b32.xlu0 %v1997, 21
      %v2078 = vpop.permute.xlu0 %2077
      %2079 = vrot.lane.b32.xlu0 %v1998, 21
      %v2080 = vpop.permute.xlu0 %2079
      %2081 = vrot.lane.b32.xlu0 %v1999, 21
      %v2082 = vpop.permute.xlu0 %2081
      %2083 = vrot.lane.b32.xlu0 %v2000, 21
      %v2084 = vpop.permute.xlu0 %2083
      %2085 = vrot.lane.b32.xlu0 %v2001, 21
      %v2086 = vpop.permute.xlu0 %2085
      %2087 = vrot.lane.b32.xlu0 %v2002, 21
      %v2088 = vpop.permute.xlu0 %2087
      %2089 = vrot.lane.b32.xlu0 %v2003, 21
      %v2090 = vpop.permute.xlu0 %2089
      %2091 = vrot.lane.b32.xlu0 %v2004, 21
      %v2092 = vpop.permute.xlu0 %2091
      %2093 = vrot.lane.b32.xlu0 %v2005, 21
      %v2094 = vpop.permute.xlu0 %2093
      %2095 = vrot.lane.b32.xlu0 %v2006, 21
      %v2096 = vpop.permute.xlu0 %2095
      %2097 = vrot.lane.b32.xlu0 %v2007, 21
      %v2098 = vpop.permute.xlu0 %2097
      %2099 = vrot.lane.b32.xlu0 %v2008, 21
      %v2100 = vpop.permute.xlu0 %2099
      %2101 = vrot.lane.b32.xlu0 %v2009, 21
      %v2102 = vpop.permute.xlu0 %2101
      %2103 = vrot.lane.b32.xlu0 %v2010, 21
      %v2104 = vpop.permute.xlu0 %2103
      %2105 = vrot.lane.b32.xlu0 %v2011, 21
      %v2106 = vpop.permute.xlu0 %2105
      %2107 = vrot.lane.b32.xlu0 %v2012, 21
      %v2108 = vpop.permute.xlu0 %2107
      %vm2141 = vcmask 195752
      %2142 = vst.msk [vmem:[#allocation3] sm:$0xff] %vm2141, %v2046
      %2143 = vst.msk [vmem:[#allocation3 + $0x10] sm:$0xff] %vm2141, %v2048
      %2144 = vst.msk [vmem:[#allocation3 + $0x20] sm:$0xff] %vm2141, %v2050
      %2145 = vst.msk [vmem:[#allocation3 + $0x30] sm:$0xff] %vm2141, %v2052
      %2146 = vst.msk [vmem:[#allocation3 + $0x40] sm:$0xff] %vm2141, %v2054
      %2147 = vst.msk [vmem:[#allocation3 + $0x50] sm:$0xff] %vm2141, %v2056
      %2148 = vst.msk [vmem:[#allocation3 + $0x60] sm:$0xff] %vm2141, %v2058
      %2149 = vst.msk [vmem:[#allocation3 + $0x70] sm:$0xff] %vm2141, %v2060
      %2150 = vst.msk [vmem:[#allocation3 + $0x80] sm:$0xff] %vm2141, %v2062
      %2151 = vst.msk [vmem:[#allocation3 + $0x90] sm:$0xff] %vm2141, %v2064
      %2152 = vst.msk [vmem:[#allocation3 + $0xa0] sm:$0xff] %vm2141, %v2066
      %2153 = vst.msk [vmem:[#allocation3 + $0xb0] sm:$0xff] %vm2141, %v2068
      %2154 = vst.msk [vmem:[#allocation3 + $0xc0] sm:$0xff] %vm2141, %v2070
      %2155 = vst.msk [vmem:[#allocation3 + $0xd0] sm:$0xff] %vm2141, %v2072
      %2156 = vst.msk [vmem:[#allocation3 + $0xe0] sm:$0xff] %vm2141, %v2074
      %2157 = vst.msk [vmem:[#allocation3 + $0xf0] sm:$0xff] %vm2141, %v2076
      %2158 = vst.msk [vmem:[#allocation3 + $0x100] sm:$0xff] %vm2141, %v2078
      %2159 = vst.msk [vmem:[#allocation3 + $0x110] sm:$0xff] %vm2141, %v2080
      %2160 = vst.msk [vmem:[#allocation3 + $0x120] sm:$0xff] %vm2141, %v2082
      %2161 = vst.msk [vmem:[#allocation3 + $0x130] sm:$0xff] %vm2141, %v2084
      %2162 = vst.msk [vmem:[#allocation3 + $0x140] sm:$0xff] %vm2141, %v2086
      %2163 = vst.msk [vmem:[#allocation3 + $0x150] sm:$0xff] %vm2141, %v2088
      %2164 = vst.msk [vmem:[#allocation3 + $0x160] sm:$0xff] %vm2141, %v2090
      %2165 = vst.msk [vmem:[#allocation3 + $0x170] sm:$0xff] %vm2141, %v2092
      %2166 = vst.msk [vmem:[#allocation3 + $0x180] sm:$0xff] %vm2141, %v2094
      %2167 = vst.msk [vmem:[#allocation3 + $0x190] sm:$0xff] %vm2141, %v2096
      %2168 = vst.msk [vmem:[#allocation3 + $0x1a0] sm:$0xff] %vm2141, %v2098
      %2169 = vst.msk [vmem:[#allocation3 + $0x1b0] sm:$0xff] %vm2141, %v2100
      %2170 = vst.msk [vmem:[#allocation3 + $0x1c0] sm:$0xff] %vm2141, %v2102
      %2171 = vst.msk [vmem:[#allocation3 + $0x1d0] sm:$0xff] %vm2141, %v2104
      %2172 = vst.msk [vmem:[#allocation3 + $0x1e0] sm:$0xff] %vm2141, %v2106
      %2173 = vst.msk [vmem:[#allocation3 + $0x1f0] sm:$0xff] %vm2141, %v2108
      %v2174 = vld [vmem:[%s1787 + $0x2] sm:$0xff]
      %v2175 = vld [vmem:[%s1787 + $0xa] sm:$0xff]
      %v2176 = vld [vmem:[%s1787 + $0x1a] sm:$0xff]
      %v2177 = vld [vmem:[%s1787 + $0x22] sm:$0xff]
      %v2178 = vld [vmem:[%s1787 + $0x32] sm:$0xff]
      %v2179 = vld [vmem:[%s1787 + $0x3a] sm:$0xff]
      %v2180 = vld [vmem:[%s1787 + $0x4a] sm:$0xff]
      %v2181 = vld [vmem:[%s1787 + $0x52] sm:$0xff]
      %v2182 = vld [vmem:[%s1787 + $0x62] sm:$0xff]
      %v2183 = vld [vmem:[%s1787 + $0x6a] sm:$0xff]
      %v2184 = vld [vmem:[%s1787 + $0x7a] sm:$0xff]
      %v2185 = vld [vmem:[%s1787 + $0x82] sm:$0xff]
      %v2186 = vld [vmem:[%s1787 + $0x92] sm:$0xff]
      %v2187 = vld [vmem:[%s1787 + $0x9a] sm:$0xff]
      %v2188 = vld [vmem:[%s1787 + $0xaa] sm:$0xff]
      %v2189 = vld [vmem:[%s1787 + $0xb2] sm:$0xff]
      %v2190 = vld [vmem:[%s1787 + $0xc2] sm:$0xff]
      %v2191 = vld [vmem:[%s1787 + $0xca] sm:$0xff]
      %v2192 = vld [vmem:[%s1787 + $0xda] sm:$0xff]
      %v2193 = vld [vmem:[%s1787 + $0xe2] sm:$0xff]
      %v2194 = vld [vmem:[%s1787 + $0xf2] sm:$0xff]
      %v2195 = vld [vmem:[%s1787 + $0xfa] sm:$0xff]
      %v2196 = vld [vmem:[%s1787 + $0x10a] sm:$0xff]
      %v2197 = vld [vmem:[%s1787 + $0x112] sm:$0xff]
      %v2198 = vld [vmem:[%s1787 + $0x122] sm:$0xff]
      %v2199 = vld [vmem:[%s1787 + $0x12a] sm:$0xff]
      %v2200 = vld [vmem:[%s1787 + $0x13a] sm:$0xff]
      %v2201 = vld [vmem:[%s1787 + $0x142] sm:$0xff]
      %v2202 = vld [vmem:[%s1787 + $0x152] sm:$0xff]
      %v2203 = vld [vmem:[%s1787 + $0x15a] sm:$0xff]
      %v2204 = vld [vmem:[%s1787 + $0x16a] sm:$0xff]
      %v2205 = vld [vmem:[%s1787 + $0x172] sm:$0xff]
      %2238 = vrot.lane.b32.xlu0 %v2174, 24
      %v2239 = vpop.permute.xlu0 %2238
      %2240 = vrot.lane.b32.xlu0 %v2175, 24
      %v2241 = vpop.permute.xlu0 %2240
      %2242 = vrot.lane.b32.xlu0 %v2176, 24
      %v2243 = vpop.permute.xlu0 %2242
      %2244 = vrot.lane.b32.xlu0 %v2177, 24
      %v2245 = vpop.permute.xlu0 %2244
      %2246 = vrot.lane.b32.xlu0 %v2178, 24
      %v2247 = vpop.permute.xlu0 %2246
      %2248 = vrot.lane.b32.xlu0 %v2179, 24
      %v2249 = vpop.permute.xlu0 %2248
      %2250 = vrot.lane.b32.xlu0 %v2180, 24
      %v2251 = vpop.permute.xlu0 %2250
      %2252 = vrot.lane.b32.xlu0 %v2181, 24
      %v2253 = vpop.permute.xlu0 %2252
      %2254 = vrot.lane.b32.xlu0 %v2182, 24
      %v2255 = vpop.permute.xlu0 %2254
      %2256 = vrot.lane.b32.xlu0 %v2183, 24
      %v2257 = vpop.permute.xlu0 %2256
      %2258 = vrot.lane.b32.xlu0 %v2184, 24
      %v2259 = vpop.permute.xlu0 %2258
      %2260 = vrot.lane.b32.xlu0 %v2185, 24
      %v2261 = vpop.permute.xlu0 %2260
      %2262 = vrot.lane.b32.xlu0 %v2186, 24
      %v2263 = vpop.permute.xlu0 %2262
      %2264 = vrot.lane.b32.xlu0 %v2187, 24
      %v2265 = vpop.permute.xlu0 %2264
      %2266 = vrot.lane.b32.xlu0 %v2188, 24
      %v2267 = vpop.permute.xlu0 %2266
      %2268 = vrot.lane.b32.xlu0 %v2189, 24
      %v2269 = vpop.permute.xlu0 %2268
      %2270 = vrot.lane.b32.xlu0 %v2190, 24
      %v2271 = vpop.permute.xlu0 %2270
      %2272 = vrot.lane.b32.xlu0 %v2191, 24
      %v2273 = vpop.permute.xlu0 %2272
      %2274 = vrot.lane.b32.xlu0 %v2192, 24
      %v2275 = vpop.permute.xlu0 %2274
      %2276 = vrot.lane.b32.xlu0 %v2193, 24
      %v2277 = vpop.permute.xlu0 %2276
      %2278 = vrot.lane.b32.xlu0 %v2194, 24
      %v2279 = vpop.permute.xlu0 %2278
      %2280 = vrot.lane.b32.xlu0 %v2195, 24
      %v2281 = vpop.permute.xlu0 %2280
      %2282 = vrot.lane.b32.xlu0 %v2196, 24
      %v2283 = vpop.permute.xlu0 %2282
      %2284 = vrot.lane.b32.xlu0 %v2197, 24
      %v2285 = vpop.permute.xlu0 %2284
      %2286 = vrot.lane.b32.xlu0 %v2198, 24
      %v2287 = vpop.permute.xlu0 %2286
      %2288 = vrot.lane.b32.xlu0 %v2199, 24
      %v2289 = vpop.permute.xlu0 %2288
      %2290 = vrot.lane.b32.xlu0 %v2200, 24
      %v2291 = vpop.permute.xlu0 %2290
      %2292 = vrot.lane.b32.xlu0 %v2201, 24
      %v2293 = vpop.permute.xlu0 %2292
      %2294 = vrot.lane.b32.xlu0 %v2202, 24
      %v2295 = vpop.permute.xlu0 %2294
      %2296 = vrot.lane.b32.xlu0 %v2203, 24
      %v2297 = vpop.permute.xlu0 %2296
      %2298 = vrot.lane.b32.xlu0 %v2204, 24
      %v2299 = vpop.permute.xlu0 %2298
      %2300 = vrot.lane.b32.xlu0 %v2205, 24
      %v2301 = vpop.permute.xlu0 %2300
      %vm2334 = vcmask 220352
      %2335 = vst.msk [vmem:[#allocation3] sm:$0xff] %vm2334, %v2239
      %2336 = vst.msk [vmem:[#allocation3 + $0x10] sm:$0xff] %vm2334, %v2241
      %2337 = vst.msk [vmem:[#allocation3 + $0x20] sm:$0xff] %vm2334, %v2243
      %2338 = vst.msk [vmem:[#allocation3 + $0x30] sm:$0xff] %vm2334, %v2245
      %2339 = vst.msk [vmem:[#allocation3 + $0x40] sm:$0xff] %vm2334, %v2247
      %2340 = vst.msk [vmem:[#allocation3 + $0x50] sm:$0xff] %vm2334, %v2249
      %2341 = vst.msk [vmem:[#allocation3 + $0x60] sm:$0xff] %vm2334, %v2251
      %2342 = vst.msk [vmem:[#allocation3 + $0x70] sm:$0xff] %vm2334, %v2253
      %2343 = vst.msk [vmem:[#allocation3 + $0x80] sm:$0xff] %vm2334, %v2255
      %2344 = vst.msk [vmem:[#allocation3 + $0x90] sm:$0xff] %vm2334, %v2257
      %2345 = vst.msk [vmem:[#allocation3 + $0xa0] sm:$0xff] %vm2334, %v2259
      %2346 = vst.msk [vmem:[#allocation3 + $0xb0] sm:$0xff] %vm2334, %v2261
      %2347 = vst.msk [vmem:[#allocation3 + $0xc0] sm:$0xff] %vm2334, %v2263
      %2348 = vst.msk [vmem:[#allocation3 + $0xd0] sm:$0xff] %vm2334, %v2265
      %2349 = vst.msk [vmem:[#allocation3 + $0xe0] sm:$0xff] %vm2334, %v2267
      %2350 = vst.msk [vmem:[#allocation3 + $0xf0] sm:$0xff] %vm2334, %v2269
      %2351 = vst.msk [vmem:[#allocation3 + $0x100] sm:$0xff] %vm2334, %v2271
      %2352 = vst.msk [vmem:[#allocation3 + $0x110] sm:$0xff] %vm2334, %v2273
      %2353 = vst.msk [vmem:[#allocation3 + $0x120] sm:$0xff] %vm2334, %v2275
      %2354 = vst.msk [vmem:[#allocation3 + $0x130] sm:$0xff] %vm2334, %v2277
      %2355 = vst.msk [vmem:[#allocation3 + $0x140] sm:$0xff] %vm2334, %v2279
      %2356 = vst.msk [vmem:[#allocation3 + $0x150] sm:$0xff] %vm2334, %v2281
      %2357 = vst.msk [vmem:[#allocation3 + $0x160] sm:$0xff] %vm2334, %v2283
      %2358 = vst.msk [vmem:[#allocation3 + $0x170] sm:$0xff] %vm2334, %v2285
      %2359 = vst.msk [vmem:[#allocation3 + $0x180] sm:$0xff] %vm2334, %v2287
      %2360 = vst.msk [vmem:[#allocation3 + $0x190] sm:$0xff] %vm2334, %v2289
      %2361 = vst.msk [vmem:[#allocation3 + $0x1a0] sm:$0xff] %vm2334, %v2291
      %2362 = vst.msk [vmem:[#allocation3 + $0x1b0] sm:$0xff] %vm2334, %v2293
      %2363 = vst.msk [vmem:[#allocation3 + $0x1c0] sm:$0xff] %vm2334, %v2295
      %2364 = vst.msk [vmem:[#allocation3 + $0x1d0] sm:$0xff] %vm2334, %v2297
      %2365 = vst.msk [vmem:[#allocation3 + $0x1e0] sm:$0xff] %vm2334, %v2299
      %2366 = vst.msk [vmem:[#allocation3 + $0x1f0] sm:$0xff] %vm2334, %v2301
      %v2367 = vld [vmem:[#allocation3] sm:$0xff]
      %v2368 = vld [vmem:[#allocation3 + $0x10] sm:$0xff]
      %v2369 = vld [vmem:[#allocation3 + $0x20] sm:$0xff]
      %v2370 = vld [vmem:[#allocation3 + $0x30] sm:$0xff]
      %v2371 = vld [vmem:[#allocation3 + $0x40] sm:$0xff]
      %v2372 = vld [vmem:[#allocation3 + $0x50] sm:$0xff]
      %v2373 = vld [vmem:[#allocation3 + $0x60] sm:$0xff]
      %v2374 = vld [vmem:[#allocation3 + $0x70] sm:$0xff]
      %v2375 = vld [vmem:[#allocation3 + $0x80] sm:$0xff]
      %v2376 = vld [vmem:[#allocation3 + $0x90] sm:$0xff]
      %v2377 = vld [vmem:[#allocation3 + $0xa0] sm:$0xff]
      %v2378 = vld [vmem:[#allocation3 + $0xb0] sm:$0xff]
      %v2379 = vld [vmem:[#allocation3 + $0xc0] sm:$0xff]
      %v2380 = vld [vmem:[#allocation3 + $0xd0] sm:$0xff]
      %v2381 = vld [vmem:[#allocation3 + $0xe0] sm:$0xff]
      %v2382 = vld [vmem:[#allocation3 + $0xf0] sm:$0xff]
      %v2383 = vld [vmem:[#allocation3 + $0x100] sm:$0xff]
      %v2384 = vld [vmem:[#allocation3 + $0x110] sm:$0xff]
      %v2385 = vld [vmem:[#allocation3 + $0x120] sm:$0xff]
      %v2386 = vld [vmem:[#allocation3 + $0x130] sm:$0xff]
      %v2387 = vld [vmem:[#allocation3 + $0x140] sm:$0xff]
      %v2388 = vld [vmem:[#allocation3 + $0x150] sm:$0xff]
      %v2389 = vld [vmem:[#allocation3 + $0x160] sm:$0xff]
      %v2390 = vld [vmem:[#allocation3 + $0x170] sm:$0xff]
      %v2391 = vld [vmem:[#allocation3 + $0x180] sm:$0xff]
      %v2392 = vld [vmem:[#allocation3 + $0x190] sm:$0xff]
      %v2393 = vld [vmem:[#allocation3 + $0x1a0] sm:$0xff]
      %v2394 = vld [vmem:[#allocation3 + $0x1b0] sm:$0xff]
      %v2395 = vld [vmem:[#allocation3 + $0x1c0] sm:$0xff]
      %v2396 = vld [vmem:[#allocation3 + $0x1d0] sm:$0xff]
      %v2397 = vld [vmem:[#allocation3 + $0x1e0] sm:$0xff]
      %v2398 = vld [vmem:[#allocation3 + $0x1f0] sm:$0xff]
      %v2399 = vld [vmem:[%s2] sm:$0xff]
      %v2400 = vld [vmem:[%s2 + $0x8] sm:$0xff]
      %v2401 = vld [vmem:[%s2 + $0x10] sm:$0xff]
      %v2402 = vld [vmem:[%s2 + $0x18] sm:$0x7]
      %v2403 = vld [vmem:[%s3] sm:$0x1]
      %v2405 = vlaneseq
      %v2406 = vshrl.u32 %v2405, 7
      %v2407 = vsub.s32 0, %v2406
      %v2408 = vrot.slane %v2403, %v2407
      %vm2410 = vcmask 220160
      %v2412 = vsel %vm2410, %v2367, 0
      %v2415 = vsel %vm2410, %v2368, 0
      %v2418 = vsel %vm2410, %v2369, 0
      %v2421 = vsel %vm2410, %v2370, 0
      %v2424 = vsel %vm2410, %v2371, 0
      %v2427 = vsel %vm2410, %v2372, 0
      %v2430 = vsel %vm2410, %v2373, 0
      %v2433 = vsel %vm2410, %v2374, 0
      %v2436 = vsel %vm2410, %v2375, 0
      %v2439 = vsel %vm2410, %v2376, 0
      %v2442 = vsel %vm2410, %v2377, 0
      %v2445 = vsel %vm2410, %v2378, 0
      %v2448 = vsel %vm2410, %v2379, 0
      %v2451 = vsel %vm2410, %v2380, 0
      %v2454 = vsel %vm2410, %v2381, 0
      %v2457 = vsel %vm2410, %v2382, 0
      %v2460 = vsel %vm2410, %v2383, 0
      %v2463 = vsel %vm2410, %v2384, 0
      %v2466 = vsel %vm2410, %v2385, 0
      %v2469 = vsel %vm2410, %v2386, 0
      %v2472 = vsel %vm2410, %v2387, 0
      %v2475 = vsel %vm2410, %v2388, 0
      %v2478 = vsel %vm2410, %v2389, 0
      %v2481 = vsel %vm2410, %v2390, 0
      %v2484 = vsel %vm2410, %v2391, 0
      %v2487 = vsel %vm2410, %v2392, 0
      %v2490 = vsel %vm2410, %v2393, 0
      %v2493 = vsel %vm2410, %v2394, 0
      %v2496 = vsel %vm2410, %v2395, 0
      %v2499 = vsel %vm2410, %v2396, 0
      %v2502 = vsel %vm2410, %v2397, 0
      %v2505 = vsel %vm2410, %v2398, 0
      %vm2507 = vcmask 1042432
      %v2509 = vsel %vm2507, %v2402, 0
      %2511 = vmatprep.subr.mxu0 0.0
      %2512 = vmatpush1.msra.mxu0 %v2399
      %2513 = vmatprep.subr.mxu0 0.0
      %2514 = vmatpush1.msra.mxu0 %v2400
      %2515 = vmatprep.subr.mxu0 0.0
      %2516 = vmatpush1.msra.mxu0 %v2401
      %2517 = vmatprep.subr.mxu0 0.0
      %2518 = vmatpush1.msra.mxu0 %v2509
      %2519 = vmatprep.subr.mxu0 0.0
      %2520 = vmatpush1.msra.mxu0 0.0
      %2521 = vmatprep.subr.mxu0 0.0
      %2522 = vmatpush1.msra.mxu0 0.0
      %2523 = vmatprep.subr.mxu0 0.0
      %2524 = vmatpush1.msra.mxu0 0.0
      %2525 = vmatprep.subr.mxu0 0.0
      %2526 = vmatpush1.msra.mxu0 0.0
      %2527 = vmatprep.subr.mxu0 0.0
      %2528 = vmatpush1.msra.mxu0 0.0
      %2529 = vmatprep.subr.mxu0 0.0
      %2530 = vmatpush1.msra.mxu0 0.0
      %2531 = vmatprep.subr.mxu0 0.0
      %2532 = vmatpush1.msra.mxu0 0.0
      %2533 = vmatprep.subr.mxu0 0.0
      %2534 = vmatpush1.msra.mxu0 0.0
      %2535 = vmatprep.subr.mxu0 0.0
      %2536 = vmatpush1.msra.mxu0 0.0
      %2537 = vmatprep.subr.mxu0 0.0
      %2538 = vmatpush1.msra.mxu0 0.0
      %2539 = vmatprep.subr.mxu0 0.0
      %2540 = vmatpush1.msra.mxu0 0.0
      %2541 = vmatprep.subr.mxu0 0.0
      %2542 = vmatpush1.msra.mxu0 0.0
      %2543 = vmatprep.subr.mxu0 0.0
      %2544 = vmatpush1.msra.mxu0 0.0
      %2545 = vmatprep.subr.mxu0 0.0
      %2546 = vmatpush1.msra.mxu0 0.0
      %2547 = vmatprep.subr.mxu0 0.0
      %2548 = vmatpush1.msra.mxu0 0.0
      %2549 = vmatprep.subr.mxu0 0.0
      %2550 = vmatpush1.msra.mxu0 0.0
      %2551 = vmatprep.subr.mxu0 0.0
      %2552 = vmatpush1.msra.mxu0 0.0
      %2553 = vmatprep.subr.mxu0 0.0
      %2554 = vmatpush1.msra.mxu0 0.0
      %2555 = vmatprep.subr.mxu0 0.0
      %2556 = vmatpush1.msra.mxu0 0.0
      %2557 = vmatprep.subr.mxu0 0.0
      %2558 = vmatpush1.msra.mxu0 0.0
      %2559 = vmatprep.subr.mxu0 0.0
      %2560 = vmatpush1.msra.mxu0 0.0
      %2561 = vmatprep.subr.mxu0 0.0
      %2562 = vmatpush1.msra.mxu0 0.0
      %2563 = vmatprep.subr.mxu0 0.0
      %2564 = vmatpush1.msra.mxu0 0.0
      %2565 = vmatprep.subr.mxu0 0.0
      %2566 = vmatpush1.msra.mxu0 0.0
      %2567 = vmatprep.subr.mxu0 0.0
      %2568 = vmatpush1.msra.mxu0 0.0
      %2569 = vmatprep.subr.mxu0 0.0
      %2570 = vmatpush1.msra.mxu0 0.0
      %2571 = vmatprep.subr.mxu0 0.0
      %2572 = vmatpush1.msra.mxu0 0.0
      %2573 = vmatprep.subr.mxu0 0.0
      %2574 = vmatpush1.msra.mxu0 0.0
      %2575 = vmatprep.mubr.f32.mxu0 0.0
      %2576 = vmatmul.mubr.f32.gmra.mrb[0].mxu0 %v2412
      %v2577 = vpop.f32.mrb[0].mxu0
      %v2578 = vadd.f32 %v2408, %v2577
      %v2579 = vpop.f32.mrb[0].mxu0
      %2580 = vmatprep.mubr.f32.mxu0 0.0
      %2581 = vmatmul.mubr.f32.gmra.mrb[0].mxu0 %v2415
      %v2582 = vpop.f32.mrb[0].mxu0
      %v2583 = vadd.f32 %v2408, %v2582
      %v2584 = vpop.f32.mrb[0].mxu0
      %2585 = vmatprep.mubr.f32.mxu0 0.0
      %2586 = vmatmul.mubr.f32.gmra.mrb[0].mxu0 %v2418
      %v2587 = vpop.f32.mrb[0].mxu0
      %v2588 = vadd.f32 %v2408, %v2587
      %v2589 = vpop.f32.mrb[0].mxu0
      %2590 = vmatprep.mubr.f32.mxu0 0.0
      %2591 = vmatmul.mubr.f32.gmra.mrb[0].mxu0 %v2421
      %v2592 = vpop.f32.mrb[0].mxu0
      %v2593 = vadd.f32 %v2408, %v2592
      %v2594 = vpop.f32.mrb[0].mxu0
      %2595 = vmatprep.mubr.f32.mxu0 0.0
      %2596 = vmatmul.mubr.f32.gmra.mrb[0].mxu0 %v2424
      %v2597 = vpop.f32.mrb[0].mxu0
      %v2598 = vadd.f32 %v2408, %v2597
      %v2599 = vpop.f32.mrb[0].mxu0
      %2600 = vmatprep.mubr.f32.mxu0 0.0
      %2601 = vmatmul.mubr.f32.gmra.mrb[0].mxu0 %v2427
      %v2602 = vpop.f32.mrb[0].mxu0
      %v2603 = vadd.f32 %v2408, %v2602
      %v2604 = vpop.f32.mrb[0].mxu0
      %2605 = vmatprep.mubr.f32.mxu0 0.0
      %2606 = vmatmul.mubr.f32.gmra.mrb[0].mxu0 %v2430
      %v2607 = vpop.f32.mrb[0].mxu0
      %v2608 = vadd.f32 %v2408, %v2607
      %v2609 = vpop.f32.mrb[0].mxu0
      %2610 = vmatprep.mubr.f32.mxu0 0.0
      %2611 = vmatmul.mubr.f32.gmra.mrb[0].mxu0 %v2433
      %v2612 = vpop.f32.mrb[0].mxu0
      %v2613 = vadd.f32 %v2408, %v2612
      %v2614 = vpop.f32.mrb[0].mxu0
      %2615 = vmatprep.mubr.f32.mxu0 0.0
      %2616 = vmatmul.mubr.f32.gmra.mrb[0].mxu0 %v2436
      %v2617 = vpop.f32.mrb[0].mxu0
      %v2618 = vadd.f32 %v2408, %v2617
      %v2619 = vpop.f32.mrb[0].mxu0
      %2620 = vmatprep.mubr.f32.mxu0 0.0
      %2621 = vmatmul.mubr.f32.gmra.mrb[0].mxu0 %v2439
      %v2622 = vpop.f32.mrb[0].mxu0
      %v2623 = vadd.f32 %v2408, %v2622
      %v2624 = vpop.f32.mrb[0].mxu0
      %2625 = vmatprep.mubr.f32.mxu0 0.0
      %2626 = vmatmul.mubr.f32.gmra.mrb[0].mxu0 %v2442
      %v2627 = vpop.f32.mrb[0].mxu0
      %v2628 = vadd.f32 %v2408, %v2627
      %v2629 = vpop.f32.mrb[0].mxu0
      %2630 = vmatprep.mubr.f32.mxu0 0.0
      %2631 = vmatmul.mubr.f32.gmra.mrb[0].mxu0 %v2445
      %v2632 = vpop.f32.mrb[0].mxu0
      %v2633 = vadd.f32 %v2408, %v2632
      %v2634 = vpop.f32.mrb[0].mxu0
      %2635 = vmatprep.mubr.f32.mxu0 0.0
      %2636 = vmatmul.mubr.f32.gmra.mrb[0].mxu0 %v2448
      %v2637 = vpop.f32.mrb[0].mxu0
      %v2638 = vadd.f32 %v2408, %v2637
      %v2639 = vpop.f32.mrb[0].mxu0
      %2640 = vmatprep.mubr.f32.mxu0 0.0
      %2641 = vmatmul.mubr.f32.gmra.mrb[0].mxu0 %v2451
      %v2642 = vpop.f32.mrb[0].mxu0
      %v2643 = vadd.f32 %v2408, %v2642
      %v2644 = vpop.f32.mrb[0].mxu0
      %2645 = vmatprep.mubr.f32.mxu0 0.0
      %2646 = vmatmul.mubr.f32.gmra.mrb[0].mxu0 %v2454
      %v2647 = vpop.f32.mrb[0].mxu0
      %v2648 = vadd.f32 %v2408, %v2647
      %v2649 = vpop.f32.mrb[0].mxu0
      %2650 = vmatprep.mubr.f32.mxu0 0.0
      %2651 = vmatmul.mubr.f32.gmra.mrb[0].mxu0 %v2457
      %v2652 = vpop.f32.mrb[0].mxu0
      %v2653 = vadd.f32 %v2408, %v2652
      %v2654 = vpop.f32.mrb[0].mxu0
      %2655 = vmatprep.mubr.f32.mxu0 0.0
      %2656 = vmatmul.mubr.f32.gmra.mrb[0].mxu0 %v2460
      %v2657 = vpop.f32.mrb[0].mxu0
      %v2658 = vadd.f32 %v2408, %v2657
      %v2659 = vpop.f32.mrb[0].mxu0
      %2660 = vmatprep.mubr.f32.mxu0 0.0
      %2661 = vmatmul.mubr.f32.gmra.mrb[0].mxu0 %v2463
      %v2662 = vpop.f32.mrb[0].mxu0
      %v2663 = vadd.f32 %v2408, %v2662
      %v2664 = vpop.f32.mrb[0].mxu0
      %2665 = vmatprep.mubr.f32.mxu0 0.0
      %2666 = vmatmul.mubr.f32.gmra.mrb[0].mxu0 %v2466
      %v2667 = vpop.f32.mrb[0].mxu0
      %v2668 = vadd.f32 %v2408, %v2667
      %v2669 = vpop.f32.mrb[0].mxu0
      %2670 = vmatprep.mubr.f32.mxu0 0.0
      %2671 = vmatmul.mubr.f32.gmra.mrb[0].mxu0 %v2469
      %v2672 = vpop.f32.mrb[0].mxu0
      %v2673 = vadd.f32 %v2408, %v2672
      %v2674 = vpop.f32.mrb[0].mxu0
      %2675 = vmatprep.mubr.f32.mxu0 0.0
      %2676 = vmatmul.mubr.f32.gmra.mrb[0].mxu0 %v2472
      %v2677 = vpop.f32.mrb[0].mxu0
      %v2678 = vadd.f32 %v2408, %v2677
      %v2679 = vpop.f32.mrb[0].mxu0
      %2680 = vmatprep.mubr.f32.mxu0 0.0
      %2681 = vmatmul.mubr.f32.gmra.mrb[0].mxu0 %v2475
      %v2682 = vpop.f32.mrb[0].mxu0
      %v2683 = vadd.f32 %v2408, %v2682
      %v2684 = vpop.f32.mrb[0].mxu0
      %2685 = vmatprep.mubr.f32.mxu0 0.0
      %2686 = vmatmul.mubr.f32.gmra.mrb[0].mxu0 %v2478
      %v2687 = vpop.f32.mrb[0].mxu0
      %v2688 = vadd.f32 %v2408, %v2687
      %v2689 = vpop.f32.mrb[0].mxu0
      %2690 = vmatprep.mubr.f32.mxu0 0.0
      %2691 = vmatmul.mubr.f32.gmra.mrb[0].mxu0 %v2481
      %v2692 = vpop.f32.mrb[0].mxu0
      %v2693 = vadd.f32 %v2408, %v2692
      %v2694 = vpop.f32.mrb[0].mxu0
      %2695 = vmatprep.mubr.f32.mxu0 0.0
      %2696 = vmatmul.mubr.f32.gmra.mrb[0].mxu0 %v2484
      %v2697 = vpop.f32.mrb[0].mxu0
      %v2698 = vadd.f32 %v2408, %v2697
      %v2699 = vpop.f32.mrb[0].mxu0
      %2700 = vmatprep.mubr.f32.mxu0 0.0
      %2701 = vmatmul.mubr.f32.gmra.mrb[0].mxu0 %v2487
      %v2702 = vpop.f32.mrb[0].mxu0
      %v2703 = vadd.f32 %v2408, %v2702
      %v2704 = vpop.f32.mrb[0].mxu0
      %2705 = vmatprep.mubr.f32.mxu0 0.0
      %2706 = vmatmul.mubr.f32.gmra.mrb[0].mxu0 %v2490
      %v2707 = vpop.f32.mrb[0].mxu0
      %v2708 = vadd.f32 %v2408, %v2707
      %v2709 = vpop.f32.mrb[0].mxu0
      %2710 = vmatprep.mubr.f32.mxu0 0.0
      %2711 = vmatmul.mubr.f32.gmra.mrb[0].mxu0 %v2493
      %v2712 = vpop.f32.mrb[0].mxu0
      %v2713 = vadd.f32 %v2408, %v2712
      %v2714 = vpop.f32.mrb[0].mxu0
      %2715 = vmatprep.mubr.f32.mxu0 0.0
      %2716 = vmatmul.mubr.f32.gmra.mrb[0].mxu0 %v2496
      %v2717 = vpop.f32.mrb[0].mxu0
      %v2718 = vadd.f32 %v2408, %v2717
      %v2719 = vpop.f32.mrb[0].mxu0
      %2720 = vmatprep.mubr.f32.mxu0 0.0
      %2721 = vmatmul.mubr.f32.gmra.mrb[0].mxu0 %v2499
      %v2722 = vpop.f32.mrb[0].mxu0
      %v2723 = vadd.f32 %v2408, %v2722
      %v2724 = vpop.f32.mrb[0].mxu0
      %2725 = vmatprep.mubr.f32.mxu0 0.0
      %2726 = vmatmul.mubr.f32.gmra.mrb[0].mxu0 %v2502
      %v2727 = vpop.f32.mrb[0].mxu0
      %v2728 = vadd.f32 %v2408, %v2727
      %v2729 = vpop.f32.mrb[0].mxu0
      %2730 = vmatprep.mubr.f32.mxu0 0.0
      %2731 = vmatmul.mubr.f32.gmra.mrb[0].mxu0 %v2505
      %v2732 = vpop.f32.mrb[0].mxu0
      %v2733 = vadd.f32 %v2408, %v2732
      %v2734 = vpop.f32.mrb[0].mxu0
      %2735 = vdwg.mxu0
      %v2736 = vmax.f32 %v2578, 0.0
      %v2737 = vmax.f32 %v2583, 0.0
      %v2738 = vmax.f32 %v2588, 0.0
      %v2739 = vmax.f32 %v2593, 0.0
      %v2740 = vmax.f32 %v2598, 0.0
      %v2741 = vmax.f32 %v2603, 0.0
      %v2742 = vmax.f32 %v2608, 0.0
      %v2743 = vmax.f32 %v2613, 0.0
      %v2744 = vmax.f32 %v2618, 0.0
      %v2745 = vmax.f32 %v2623, 0.0
      %v2746 = vmax.f32 %v2628, 0.0
      %v2747 = vmax.f32 %v2633, 0.0
      %v2748 = vmax.f32 %v2638, 0.0
      %v2749 = vmax.f32 %v2643, 0.0
      %v2750 = vmax.f32 %v2648, 0.0
      %v2751 = vmax.f32 %v2653, 0.0
      %v2752 = vmax.f32 %v2658, 0.0
      %v2753 = vmax.f32 %v2663, 0.0
      %v2754 = vmax.f32 %v2668, 0.0
      %v2755 = vmax.f32 %v2673, 0.0
      %v2756 = vmax.f32 %v2678, 0.0
      %v2757 = vmax.f32 %v2683, 0.0
      %v2758 = vmax.f32 %v2688, 0.0
      %v2759 = vmax.f32 %v2693, 0.0
      %v2760 = vmax.f32 %v2698, 0.0
      %v2761 = vmax.f32 %v2703, 0.0
      %v2762 = vmax.f32 %v2708, 0.0
      %v2763 = vmax.f32 %v2713, 0.0
      %v2764 = vmax.f32 %v2718, 0.0
      %v2765 = vmax.f32 %v2723, 0.0
      %v2766 = vmax.f32 %v2728, 0.0
      %v2767 = vmax.f32 %v2733, 0.0
      %v2768 = vmul.f32 %v2736, %v503
      %v2769 = vmul.f32 %v2737, %v508
      %v2770 = vmul.f32 %v2738, %v513
      %v2771 = vmul.f32 %v2739, %v518
      %v2772 = vmul.f32 %v2740, %v523
      %v2773 = vmul.f32 %v2741, %v528
      %v2774 = vmul.f32 %v2742, %v533
      %v2775 = vmul.f32 %v2743, %v538
      %v2776 = vmul.f32 %v2744, %v543
      %v2777 = vmul.f32 %v2745, %v548
      %v2778 = vmul.f32 %v2746, %v553
      %v2779 = vmul.f32 %v2747, %v558
      %v2780 = vmul.f32 %v2748, %v563
      %v2781 = vmul.f32 %v2749, %v568
      %v2782 = vmul.f32 %v2750, %v573
      %v2783 = vmul.f32 %v2751, %v578
      %v2784 = vmul.f32 %v2752, %v583
      %v2785 = vmul.f32 %v2753, %v588
      %v2786 = vmul.f32 %v2754, %v593
      %v2787 = vmul.f32 %v2755, %v598
      %v2788 = vmul.f32 %v2756, %v603
      %v2789 = vmul.f32 %v2757, %v608
      %v2790 = vmul.f32 %v2758, %v613
      %v2791 = vmul.f32 %v2759, %v618
      %v2792 = vmul.f32 %v2760, %v623
      %v2793 = vmul.f32 %v2761, %v628
      %v2794 = vmul.f32 %v2762, %v633
      %v2795 = vmul.f32 %v2763, %v638
      %v2796 = vmul.f32 %v2764, %v643
      %v2797 = vmul.f32 %v2765, %v648
      %v2798 = vmul.f32 %v2766, %v653
      %v2799 = vmul.f32 %v2767, %v658
      %2800 = vst.msk [vmem:[%s724 + $0x1] sm:$0xff] %vm380, %v2768
      %2801 = vst.msk [vmem:[%s724 + $0x9] sm:$0xff] %vm380, %v2769
      %2802 = vst.msk [vmem:[%s724 + $0x19] sm:$0xff] %vm380, %v2770
      %2803 = vst.msk [vmem:[%s724 + $0x21] sm:$0xff] %vm380, %v2771
      %2804 = vst.msk [vmem:[%s724 + $0x31] sm:$0xff] %vm380, %v2772
      %2805 = vst.msk [vmem:[%s724 + $0x39] sm:$0xff] %vm380, %v2773
      %2806 = vst.msk [vmem:[%s724 + $0x49] sm:$0xff] %vm380, %v2774
      %2807 = vst.msk [vmem:[%s724 + $0x51] sm:$0xff] %vm380, %v2775
      %2808 = vst.msk [vmem:[%s724 + $0x61] sm:$0xff] %vm380, %v2776
      %2809 = vst.msk [vmem:[%s724 + $0x69] sm:$0xff] %vm380, %v2777
      %2810 = vst.msk [vmem:[%s724 + $0x79] sm:$0xff] %vm380, %v2778
      %2811 = vst.msk [vmem:[%s724 + $0x81] sm:$0xff] %vm380, %v2779
      %2812 = vst.msk [vmem:[%s724 + $0x91] sm:$0xff] %vm380, %v2780
      %2813 = vst.msk [vmem:[%s724 + $0x99] sm:$0xff] %vm380, %v2781
      %2814 = vst.msk [vmem:[%s724 + $0xa9] sm:$0xff] %vm380, %v2782
      %2815 = vst.msk [vmem:[%s724 + $0xb1] sm:$0xff] %vm380, %v2783
      %2816 = vst.msk [vmem:[%s724 + $0xc1] sm:$0xff] %vm380, %v2784
      %2817 = vst.msk [vmem:[%s724 + $0xc9] sm:$0xff] %vm380, %v2785
      %2818 = vst.msk [vmem:[%s724 + $0xd9] sm:$0xff] %vm380, %v2786
      %2819 = vst.msk [vmem:[%s724 + $0xe1] sm:$0xff] %vm380, %v2787
      %2820 = vst.msk [vmem:[%s724 + $0xf1] sm:$0xff] %vm380, %v2788
      %2821 = vst.msk [vmem:[%s724 + $0xf9] sm:$0xff] %vm380, %v2789
      %2822 = vst.msk [vmem:[%s724 + $0x109] sm:$0xff] %vm380, %v2790
      %2823 = vst.msk [vmem:[%s724 + $0x111] sm:$0xff] %vm380, %v2791
      %2824 = vst.msk [vmem:[%s724 + $0x121] sm:$0xff] %vm380, %v2792
      %2825 = vst.msk [vmem:[%s724 + $0x129] sm:$0xff] %vm380, %v2793
      %2826 = vst.msk [vmem:[%s724 + $0x139] sm:$0xff] %vm380, %v2794
      %2827 = vst.msk [vmem:[%s724 + $0x141] sm:$0xff] %vm380, %v2795
      %2828 = vst.msk [vmem:[%s724 + $0x151] sm:$0xff] %vm380, %v2796
      %2829 = vst.msk [vmem:[%s724 + $0x159] sm:$0xff] %vm380, %v2797
      %2830 = vst.msk [vmem:[%s724 + $0x169] sm:$0xff] %vm380, %v2798
      %2831 = vst.msk [vmem:[%s724 + $0x171] sm:$0xff] %vm380, %v2799
      %v2832 = vld [vmem:[#allocation2] sm:$0xff]
      %v2833 = vld [vmem:[#allocation2 + $0x8] sm:$0xff]
      %v2834 = vld [vmem:[#allocation2 + $0x18] sm:$0xff]
      %v2835 = vld [vmem:[#allocation2 + $0x20] sm:$0xff]
      %v2836 = vld [vmem:[#allocation2 + $0x30] sm:$0xff]
      %v2837 = vld [vmem:[#allocation2 + $0x38] sm:$0xff]
      %v2838 = vld [vmem:[#allocation2 + $0x48] sm:$0xff]
      %v2839 = vld [vmem:[#allocation2 + $0x50] sm:$0xff]
      %v2840 = vld [vmem:[#allocation2 + $0x60] sm:$0xff]
      %v2841 = vld [vmem:[#allocation2 + $0x68] sm:$0xff]
      %v2842 = vld [vmem:[#allocation2 + $0x78] sm:$0xff]
      %v2843 = vld [vmem:[#allocation2 + $0x80] sm:$0xff]
      %v2844 = vld [vmem:[#allocation2 + $0x90] sm:$0xff]
      %v2845 = vld [vmem:[#allocation2 + $0x98] sm:$0xff]
      %v2846 = vld [vmem:[#allocation2 + $0xa8] sm:$0xff]
      %v2847 = vld [vmem:[#allocation2 + $0xb0] sm:$0xff]
      %v2848 = vld [vmem:[#allocation2 + $0xc0] sm:$0xff]
      %v2849 = vld [vmem:[#allocation2 + $0xc8] sm:$0xff]
      %v2850 = vld [vmem:[#allocation2 + $0xd8] sm:$0xff]
      %v2851 = vld [vmem:[#allocation2 + $0xe0] sm:$0xff]
      %v2852 = vld [vmem:[#allocation2 + $0xf0] sm:$0xff]
      %v2853 = vld [vmem:[#allocation2 + $0xf8] sm:$0xff]
      %v2854 = vld [vmem:[#allocation2 + $0x108] sm:$0xff]
      %v2855 = vld [vmem:[#allocation2 + $0x110] sm:$0xff]
      %v2856 = vld [vmem:[#allocation2 + $0x120] sm:$0xff]
      %v2857 = vld [vmem:[#allocation2 + $0x128] sm:$0xff]
      %v2858 = vld [vmem:[#allocation2 + $0x138] sm:$0xff]
      %v2859 = vld [vmem:[#allocation2 + $0x140] sm:$0xff]
      %v2860 = vld [vmem:[#allocation2 + $0x150] sm:$0xff]
      %v2861 = vld [vmem:[#allocation2 + $0x158] sm:$0xff]
      %v2862 = vld [vmem:[#allocation2 + $0x168] sm:$0xff]
      %v2863 = vld [vmem:[#allocation2 + $0x170] sm:$0xff]
      %2864 = vst.msk [vmem:[#allocation3] sm:$0xff] %vm380, %v2832
      %2865 = vst.msk [vmem:[#allocation3 + $0x10] sm:$0xff] %vm380, %v2833
      %2866 = vst.msk [vmem:[#allocation3 + $0x20] sm:$0xff] %vm380, %v2834
      %2867 = vst.msk [vmem:[#allocation3 + $0x30] sm:$0xff] %vm380, %v2835
      %2868 = vst.msk [vmem:[#allocation3 + $0x40] sm:$0xff] %vm380, %v2836
      %2869 = vst.msk [vmem:[#allocation3 + $0x50] sm:$0xff] %vm380, %v2837
      %2870 = vst.msk [vmem:[#allocation3 + $0x60] sm:$0xff] %vm380, %v2838
      %2871 = vst.msk [vmem:[#allocation3 + $0x70] sm:$0xff] %vm380, %v2839
      %2872 = vst.msk [vmem:[#allocation3 + $0x80] sm:$0xff] %vm380, %v2840
      %2873 = vst.msk [vmem:[#allocation3 + $0x90] sm:$0xff] %vm380, %v2841
      %2874 = vst.msk [vmem:[#allocation3 + $0xa0] sm:$0xff] %vm380, %v2842
      %2875 = vst.msk [vmem:[#allocation3 + $0xb0] sm:$0xff] %vm380, %v2843
      %2876 = vst.msk [vmem:[#allocation3 + $0xc0] sm:$0xff] %vm380, %v2844
      %2877 = vst.msk [vmem:[#allocation3 + $0xd0] sm:$0xff] %vm380, %v2845
      %2878 = vst.msk [vmem:[#allocation3 + $0xe0] sm:$0xff] %vm380, %v2846
      %2879 = vst.msk [vmem:[#allocation3 + $0xf0] sm:$0xff] %vm380, %v2847
      %2880 = vst.msk [vmem:[#allocation3 + $0x100] sm:$0xff] %vm380, %v2848
      %2881 = vst.msk [vmem:[#allocation3 + $0x110] sm:$0xff] %vm380, %v2849
      %2882 = vst.msk [vmem:[#allocation3 + $0x120] sm:$0xff] %vm380, %v2850
      %2883 = vst.msk [vmem:[#allocation3 + $0x130] sm:$0xff] %vm380, %v2851
      %2884 = vst.msk [vmem:[#allocation3 + $0x140] sm:$0xff] %vm380, %v2852
      %2885 = vst.msk [vmem:[#allocation3 + $0x150] sm:$0xff] %vm380, %v2853
      %2886 = vst.msk [vmem:[#allocation3 + $0x160] sm:$0xff] %vm380, %v2854
      %2887 = vst.msk [vmem:[#allocation3 + $0x170] sm:$0xff] %vm380, %v2855
      %2888 = vst.msk [vmem:[#allocation3 + $0x180] sm:$0xff] %vm380, %v2856
      %2889 = vst.msk [vmem:[#allocation3 + $0x190] sm:$0xff] %vm380, %v2857
      %2890 = vst.msk [vmem:[#allocation3 + $0x1a0] sm:$0xff] %vm380, %v2858
      %2891 = vst.msk [vmem:[#allocation3 + $0x1b0] sm:$0xff] %vm380, %v2859
      %2892 = vst.msk [vmem:[#allocation3 + $0x1c0] sm:$0xff] %vm380, %v2860
      %2893 = vst.msk [vmem:[#allocation3 + $0x1d0] sm:$0xff] %vm380, %v2861
      %2894 = vst.msk [vmem:[#allocation3 + $0x1e0] sm:$0xff] %vm380, %v2862
      %2895 = vst.msk [vmem:[#allocation3 + $0x1f0] sm:$0xff] %vm380, %v2863
      %v2896 = vld [vmem:[#allocation2 + $0x1] sm:$0xff]
      %v2897 = vld [vmem:[#allocation2 + $0x9] sm:$0xff]
      %v2898 = vld [vmem:[#allocation2 + $0x19] sm:$0xff]
      %v2899 = vld [vmem:[#allocation2 + $0x21] sm:$0xff]
      %v2900 = vld [vmem:[#allocation2 + $0x31] sm:$0xff]
      %v2901 = vld [vmem:[#allocation2 + $0x39] sm:$0xff]
      %v2902 = vld [vmem:[#allocation2 + $0x49] sm:$0xff]
      %v2903 = vld [vmem:[#allocation2 + $0x51] sm:$0xff]
      %v2904 = vld [vmem:[#allocation2 + $0x61] sm:$0xff]
      %v2905 = vld [vmem:[#allocation2 + $0x69] sm:$0xff]
      %v2906 = vld [vmem:[#allocation2 + $0x79] sm:$0xff]
      %v2907 = vld [vmem:[#allocation2 + $0x81] sm:$0xff]
      %v2908 = vld [vmem:[#allocation2 + $0x91] sm:$0xff]
      %v2909 = vld [vmem:[#allocation2 + $0x99] sm:$0xff]
      %v2910 = vld [vmem:[#allocation2 + $0xa9] sm:$0xff]
      %v2911 = vld [vmem:[#allocation2 + $0xb1] sm:$0xff]
      %v2912 = vld [vmem:[#allocation2 + $0xc1] sm:$0xff]
      %v2913 = vld [vmem:[#allocation2 + $0xc9] sm:$0xff]
      %v2914 = vld [vmem:[#allocation2 + $0xd9] sm:$0xff]
      %v2915 = vld [vmem:[#allocation2 + $0xe1] sm:$0xff]
      %v2916 = vld [vmem:[#allocation2 + $0xf1] sm:$0xff]
      %v2917 = vld [vmem:[#allocation2 + $0xf9] sm:$0xff]
      %v2918 = vld [vmem:[#allocation2 + $0x109] sm:$0xff]
      %v2919 = vld [vmem:[#allocation2 + $0x111] sm:$0xff]
      %v2920 = vld [vmem:[#allocation2 + $0x121] sm:$0xff]
      %v2921 = vld [vmem:[#allocation2 + $0x129] sm:$0xff]
      %v2922 = vld [vmem:[#allocation2 + $0x139] sm:$0xff]
      %v2923 = vld [vmem:[#allocation2 + $0x141] sm:$0xff]
      %v2924 = vld [vmem:[#allocation2 + $0x151] sm:$0xff]
      %v2925 = vld [vmem:[#allocation2 + $0x159] sm:$0xff]
      %v2926 = vld [vmem:[#allocation2 + $0x169] sm:$0xff]
      %v2927 = vld [vmem:[#allocation2 + $0x171] sm:$0xff]
      %2960 = vrot.lane.b32.xlu0 %v2896, 16
      %v2961 = vpop.permute.xlu0 %2960
      %2962 = vrot.lane.b32.xlu0 %v2897, 16
      %v2963 = vpop.permute.xlu0 %2962
      %2964 = vrot.lane.b32.xlu0 %v2898, 16
      %v2965 = vpop.permute.xlu0 %2964
      %2966 = vrot.lane.b32.xlu0 %v2899, 16
      %v2967 = vpop.permute.xlu0 %2966
      %2968 = vrot.lane.b32.xlu0 %v2900, 16
      %v2969 = vpop.permute.xlu0 %2968
      %2970 = vrot.lane.b32.xlu0 %v2901, 16
      %v2971 = vpop.permute.xlu0 %2970
      %2972 = vrot.lane.b32.xlu0 %v2902, 16
      %v2973 = vpop.permute.xlu0 %2972
      %2974 = vrot.lane.b32.xlu0 %v2903, 16
      %v2975 = vpop.permute.xlu0 %2974
      %2976 = vrot.lane.b32.xlu0 %v2904, 16
      %v2977 = vpop.permute.xlu0 %2976
      %2978 = vrot.lane.b32.xlu0 %v2905, 16
      %v2979 = vpop.permute.xlu0 %2978
      %2980 = vrot.lane.b32.xlu0 %v2906, 16
      %v2981 = vpop.permute.xlu0 %2980
      %2982 = vrot.lane.b32.xlu0 %v2907, 16
      %v2983 = vpop.permute.xlu0 %2982
      %2984 = vrot.lane.b32.xlu0 %v2908, 16
      %v2985 = vpop.permute.xlu0 %2984
      %2986 = vrot.lane.b32.xlu0 %v2909, 16
      %v2987 = vpop.permute.xlu0 %2986
      %2988 = vrot.lane.b32.xlu0 %v2910, 16
      %v2989 = vpop.permute.xlu0 %2988
      %2990 = vrot.lane.b32.xlu0 %v2911, 16
      %v2991 = vpop.permute.xlu0 %2990
      %2992 = vrot.lane.b32.xlu0 %v2912, 16
      %v2993 = vpop.permute.xlu0 %2992
      %2994 = vrot.lane.b32.xlu0 %v2913, 16
      %v2995 = vpop.permute.xlu0 %2994
      %2996 = vrot.lane.b32.xlu0 %v2914, 16
      %v2997 = vpop.permute.xlu0 %2996
      %2998 = vrot.lane.b32.xlu0 %v2915, 16
      %v2999 = vpop.permute.xlu0 %2998
      %3000 = vrot.lane.b32.xlu0 %v2916, 16
      %v3001 = vpop.permute.xlu0 %3000
      %3002 = vrot.lane.b32.xlu0 %v2917, 16
      %v3003 = vpop.permute.xlu0 %3002
      %3004 = vrot.lane.b32.xlu0 %v2918, 16
      %v3005 = vpop.permute.xlu0 %3004
      %3006 = vrot.lane.b32.xlu0 %v2919, 16
      %v3007 = vpop.permute.xlu0 %3006
      %3008 = vrot.lane.b32.xlu0 %v2920, 16
      %v3009 = vpop.permute.xlu0 %3008
      %3010 = vrot.lane.b32.xlu0 %v2921, 16
      %v3011 = vpop.permute.xlu0 %3010
      %3012 = vrot.lane.b32.xlu0 %v2922, 16
      %v3013 = vpop.permute.xlu0 %3012
      %3014 = vrot.lane.b32.xlu0 %v2923, 16
      %v3015 = vpop.permute.xlu0 %3014
      %3016 = vrot.lane.b32.xlu0 %v2924, 16
      %v3017 = vpop.permute.xlu0 %3016
      %3018 = vrot.lane.b32.xlu0 %v2925, 16
      %v3019 = vpop.permute.xlu0 %3018
      %3020 = vrot.lane.b32.xlu0 %v2926, 16
      %v3021 = vpop.permute.xlu0 %3020
      %3022 = vrot.lane.b32.xlu0 %v2927, 16
      %v3023 = vpop.permute.xlu0 %3022
      %vm3056 = vcmask 261248
      %3057 = vst.msk [vmem:[#allocation3] sm:$0xff] %vm3056, %v2961
      %3058 = vst.msk [vmem:[#allocation3 + $0x10] sm:$0xff] %vm3056, %v2963
      %3059 = vst.msk [vmem:[#allocation3 + $0x20] sm:$0xff] %vm3056, %v2965
      %3060 = vst.msk [vmem:[#allocation3 + $0x30] sm:$0xff] %vm3056, %v2967
      %3061 = vst.msk [vmem:[#allocation3 + $0x40] sm:$0xff] %vm3056, %v2969
      %3062 = vst.msk [vmem:[#allocation3 + $0x50] sm:$0xff] %vm3056, %v2971
      %3063 = vst.msk [vmem:[#allocation3 + $0x60] sm:$0xff] %vm3056, %v2973
      %3064 = vst.msk [vmem:[#allocation3 + $0x70] sm:$0xff] %vm3056, %v2975
      %3065 = vst.msk [vmem:[#allocation3 + $0x80] sm:$0xff] %vm3056, %v2977
      %3066 = vst.msk [vmem:[#allocation3 + $0x90] sm:$0xff] %vm3056, %v2979
      %3067 = vst.msk [vmem:[#allocation3 + $0xa0] sm:$0xff] %vm3056, %v2981
      %3068 = vst.msk [vmem:[#allocation3 + $0xb0] sm:$0xff] %vm3056, %v2983
      %3069 = vst.msk [vmem:[#allocation3 + $0xc0] sm:$0xff] %vm3056, %v2985
      %3070 = vst.msk [vmem:[#allocation3 + $0xd0] sm:$0xff] %vm3056, %v2987
      %3071 = vst.msk [vmem:[#allocation3 + $0xe0] sm:$0xff] %vm3056, %v2989
      %3072 = vst.msk [vmem:[#allocation3 + $0xf0] sm:$0xff] %vm3056, %v2991
      %3073 = vst.msk [vmem:[#allocation3 + $0x100] sm:$0xff] %vm3056, %v2993
      %3074 = vst.msk [vmem:[#allocation3 + $0x110] sm:$0xff] %vm3056, %v2995
      %3075 = vst.msk [vmem:[#allocation3 + $0x120] sm:$0xff] %vm3056, %v2997
      %3076 = vst.msk [vmem:[#allocation3 + $0x130] sm:$0xff] %vm3056, %v2999
      %3077 = vst.msk [vmem:[#allocation3 + $0x140] sm:$0xff] %vm3056, %v3001
      %3078 = vst.msk [vmem:[#allocation3 + $0x150] sm:$0xff] %vm3056, %v3003
      %3079 = vst.msk [vmem:[#allocation3 + $0x160] sm:$0xff] %vm3056, %v3005
      %3080 = vst.msk [vmem:[#allocation3 + $0x170] sm:$0xff] %vm3056, %v3007
      %3081 = vst.msk [vmem:[#allocation3 + $0x180] sm:$0xff] %vm3056, %v3009
      %3082 = vst.msk [vmem:[#allocation3 + $0x190] sm:$0xff] %vm3056, %v3011
      %3083 = vst.msk [vmem:[#allocation3 + $0x1a0] sm:$0xff] %vm3056, %v3013
      %3084 = vst.msk [vmem:[#allocation3 + $0x1b0] sm:$0xff] %vm3056, %v3015
      %3085 = vst.msk [vmem:[#allocation3 + $0x1c0] sm:$0xff] %vm3056, %v3017
      %3086 = vst.msk [vmem:[#allocation3 + $0x1d0] sm:$0xff] %vm3056, %v3019
      %3087 = vst.msk [vmem:[#allocation3 + $0x1e0] sm:$0xff] %vm3056, %v3021
      %3088 = vst.msk [vmem:[#allocation3 + $0x1f0] sm:$0xff] %vm3056, %v3023
      %v3089 = vld [vmem:[#allocation2 + $0x2] sm:$0xff]
      %v3090 = vld [vmem:[#allocation2 + $0xa] sm:$0xff]
      %v3091 = vld [vmem:[#allocation2 + $0x1a] sm:$0xff]
      %v3092 = vld [vmem:[#allocation2 + $0x22] sm:$0xff]
      %v3093 = vld [vmem:[#allocation2 + $0x32] sm:$0xff]
      %v3094 = vld [vmem:[#allocation2 + $0x3a] sm:$0xff]
      %v3095 = vld [vmem:[#allocation2 + $0x4a] sm:$0xff]
      %v3096 = vld [vmem:[#allocation2 + $0x52] sm:$0xff]
      %v3097 = vld [vmem:[#allocation2 + $0x62] sm:$0xff]
      %v3098 = vld [vmem:[#allocation2 + $0x6a] sm:$0xff]
      %v3099 = vld [vmem:[#allocation2 + $0x7a] sm:$0xff]
      %v3100 = vld [vmem:[#allocation2 + $0x82] sm:$0xff]
      %v3101 = vld [vmem:[#allocation2 + $0x92] sm:$0xff]
      %v3102 = vld [vmem:[#allocation2 + $0x9a] sm:$0xff]
      %v3103 = vld [vmem:[#allocation2 + $0xaa] sm:$0xff]
      %v3104 = vld [vmem:[#allocation2 + $0xb2] sm:$0xff]
      %v3105 = vld [vmem:[#allocation2 + $0xc2] sm:$0xff]
      %v3106 = vld [vmem:[#allocation2 + $0xca] sm:$0xff]
      %v3107 = vld [vmem:[#allocation2 + $0xda] sm:$0xff]
      %v3108 = vld [vmem:[#allocation2 + $0xe2] sm:$0xff]
      %v3109 = vld [vmem:[#allocation2 + $0xf2] sm:$0xff]
      %v3110 = vld [vmem:[#allocation2 + $0xfa] sm:$0xff]
      %v3111 = vld [vmem:[#allocation2 + $0x10a] sm:$0xff]
      %v3112 = vld [vmem:[#allocation2 + $0x112] sm:$0xff]
      %v3113 = vld [vmem:[#allocation2 + $0x122] sm:$0xff]
      %v3114 = vld [vmem:[#allocation2 + $0x12a] sm:$0xff]
      %v3115 = vld [vmem:[#allocation2 + $0x13a] sm:$0xff]
      %v3116 = vld [vmem:[#allocation2 + $0x142] sm:$0xff]
      %v3117 = vld [vmem:[#allocation2 + $0x152] sm:$0xff]
      %v3118 = vld [vmem:[#allocation2 + $0x15a] sm:$0xff]
      %v3119 = vld [vmem:[#allocation2 + $0x16a] sm:$0xff]
      %v3120 = vld [vmem:[#allocation2 + $0x172] sm:$0xff]
      %3153 = vrot.lane.b32.xlu0 %v3089, 32
      %v3154 = vpop.permute.xlu0 %3153
      %3155 = vrot.lane.b32.xlu0 %v3090, 32
      %v3156 = vpop.permute.xlu0 %3155
      %3157 = vrot.lane.b32.xlu0 %v3091, 32
      %v3158 = vpop.permute.xlu0 %3157
      %3159 = vrot.lane.b32.xlu0 %v3092, 32
      %v3160 = vpop.permute.xlu0 %3159
      %3161 = vrot.lane.b32.xlu0 %v3093, 32
      %v3162 = vpop.permute.xlu0 %3161
      %3163 = vrot.lane.b32.xlu0 %v3094, 32
      %v3164 = vpop.permute.xlu0 %3163
      %3165 = vrot.lane.b32.xlu0 %v3095, 32
      %v3166 = vpop.permute.xlu0 %3165
      %3167 = vrot.lane.b32.xlu0 %v3096, 32
      %v3168 = vpop.permute.xlu0 %3167
      %3169 = vrot.lane.b32.xlu0 %v3097, 32
      %v3170 = vpop.permute.xlu0 %3169
      %3171 = vrot.lane.b32.xlu0 %v3098, 32
      %v3172 = vpop.permute.xlu0 %3171
      %3173 = vrot.lane.b32.xlu0 %v3099, 32
      %v3174 = vpop.permute.xlu0 %3173
      %3175 = vrot.lane.b32.xlu0 %v3100, 32
      %v3176 = vpop.permute.xlu0 %3175
      %3177 = vrot.lane.b32.xlu0 %v3101, 32
      %v3178 = vpop.permute.xlu0 %3177
      %3179 = vrot.lane.b32.xlu0 %v3102, 32
      %v3180 = vpop.permute.xlu0 %3179
      %3181 = vrot.lane.b32.xlu0 %v3103, 32
      %v3182 = vpop.permute.xlu0 %3181
      %3183 = vrot.lane.b32.xlu0 %v3104, 32
      %v3184 = vpop.permute.xlu0 %3183
      %3185 = vrot.lane.b32.xlu0 %v3105, 32
      %v3186 = vpop.permute.xlu0 %3185
      %3187 = vrot.lane.b32.xlu0 %v3106, 32
      %v3188 = vpop.permute.xlu0 %3187
      %3189 = vrot.lane.b32.xlu0 %v3107, 32
      %v3190 = vpop.permute.xlu0 %3189
      %3191 = vrot.lane.b32.xlu0 %v3108, 32
      %v3192 = vpop.permute.xlu0 %3191
      %3193 = vrot.lane.b32.xlu0 %v3109, 32
      %v3194 = vpop.permute.xlu0 %3193
      %3195 = vrot.lane.b32.xlu0 %v3110, 32
      %v3196 = vpop.permute.xlu0 %3195
      %3197 = vrot.lane.b32.xlu0 %v3111, 32
      %v3198 = vpop.permute.xlu0 %3197
      %3199 = vrot.lane.b32.xlu0 %v3112, 32
      %v3200 = vpop.permute.xlu0 %3199
      %3201 = vrot.lane.b32.xlu0 %v3113, 32
      %v3202 = vpop.permute.xlu0 %3201
      %3203 = vrot.lane.b32.xlu0 %v3114, 32
      %v3204 = vpop.permute.xlu0 %3203
      %3205 = vrot.lane.b32.xlu0 %v3115, 32
      %v3206 = vpop.permute.xlu0 %3205
      %3207 = vrot.lane.b32.xlu0 %v3116, 32
      %v3208 = vpop.permute.xlu0 %3207
      %3209 = vrot.lane.b32.xlu0 %v3117, 32
      %v3210 = vpop.permute.xlu0 %3209
      %3211 = vrot.lane.b32.xlu0 %v3118, 32
      %v3212 = vpop.permute.xlu0 %3211
      %3213 = vrot.lane.b32.xlu0 %v3119, 32
      %v3214 = vpop.permute.xlu0 %3213
      %3215 = vrot.lane.b32.xlu0 %v3120, 32
      %v3216 = vpop.permute.xlu0 %3215
      %vm3249 = vcmask 392448
      %3250 = vst.msk [vmem:[#allocation3] sm:$0xff] %vm3249, %v3154
      %3251 = vst.msk [vmem:[#allocation3 + $0x10] sm:$0xff] %vm3249, %v3156
      %3252 = vst.msk [vmem:[#allocation3 + $0x20] sm:$0xff] %vm3249, %v3158
      %3253 = vst.msk [vmem:[#allocation3 + $0x30] sm:$0xff] %vm3249, %v3160
      %3254 = vst.msk [vmem:[#allocation3 + $0x40] sm:$0xff] %vm3249, %v3162
      %3255 = vst.msk [vmem:[#allocation3 + $0x50] sm:$0xff] %vm3249, %v3164
      %3256 = vst.msk [vmem:[#allocation3 + $0x60] sm:$0xff] %vm3249, %v3166
      %3257 = vst.msk [vmem:[#allocation3 + $0x70] sm:$0xff] %vm3249, %v3168
      %3258 = vst.msk [vmem:[#allocation3 + $0x80] sm:$0xff] %vm3249, %v3170
      %3259 = vst.msk [vmem:[#allocation3 + $0x90] sm:$0xff] %vm3249, %v3172
      %3260 = vst.msk [vmem:[#allocation3 + $0xa0] sm:$0xff] %vm3249, %v3174
      %3261 = vst.msk [vmem:[#allocation3 + $0xb0] sm:$0xff] %vm3249, %v3176
      %3262 = vst.msk [vmem:[#allocation3 + $0xc0] sm:$0xff] %vm3249, %v3178
      %3263 = vst.msk [vmem:[#allocation3 + $0xd0] sm:$0xff] %vm3249, %v3180
      %3264 = vst.msk [vmem:[#allocation3 + $0xe0] sm:$0xff] %vm3249, %v3182
      %3265 = vst.msk [vmem:[#allocation3 + $0xf0] sm:$0xff] %vm3249, %v3184
      %3266 = vst.msk [vmem:[#allocation3 + $0x100] sm:$0xff] %vm3249, %v3186
      %3267 = vst.msk [vmem:[#allocation3 + $0x110] sm:$0xff] %vm3249, %v3188
      %3268 = vst.msk [vmem:[#allocation3 + $0x120] sm:$0xff] %vm3249, %v3190
      %3269 = vst.msk [vmem:[#allocation3 + $0x130] sm:$0xff] %vm3249, %v3192
      %3270 = vst.msk [vmem:[#allocation3 + $0x140] sm:$0xff] %vm3249, %v3194
      %3271 = vst.msk [vmem:[#allocation3 + $0x150] sm:$0xff] %vm3249, %v3196
      %3272 = vst.msk [vmem:[#allocation3 + $0x160] sm:$0xff] %vm3249, %v3198
      %3273 = vst.msk [vmem:[#allocation3 + $0x170] sm:$0xff] %vm3249, %v3200
      %3274 = vst.msk [vmem:[#allocation3 + $0x180] sm:$0xff] %vm3249, %v3202
      %3275 = vst.msk [vmem:[#allocation3 + $0x190] sm:$0xff] %vm3249, %v3204
      %3276 = vst.msk [vmem:[#allocation3 + $0x1a0] sm:$0xff] %vm3249, %v3206
      %3277 = vst.msk [vmem:[#allocation3 + $0x1b0] sm:$0xff] %vm3249, %v3208
      %3278 = vst.msk [vmem:[#allocation3 + $0x1c0] sm:$0xff] %vm3249, %v3210
      %3279 = vst.msk [vmem:[#allocation3 + $0x1d0] sm:$0xff] %vm3249, %v3212
      %3280 = vst.msk [vmem:[#allocation3 + $0x1e0] sm:$0xff] %vm3249, %v3214
      %3281 = vst.msk [vmem:[#allocation3 + $0x1f0] sm:$0xff] %vm3249, %v3216
      %v3282 = vld [vmem:[%s724] sm:$0xff]
      %v3283 = vld [vmem:[%s724 + $0x8] sm:$0xff]
      %v3284 = vld [vmem:[%s724 + $0x18] sm:$0xff]
      %v3285 = vld [vmem:[%s724 + $0x20] sm:$0xff]
      %v3286 = vld [vmem:[%s724 + $0x30] sm:$0xff]
      %v3287 = vld [vmem:[%s724 + $0x38] sm:$0xff]
      %v3288 = vld [vmem:[%s724 + $0x48] sm:$0xff]
      %v3289 = vld [vmem:[%s724 + $0x50] sm:$0xff]
      %v3290 = vld [vmem:[%s724 + $0x60] sm:$0xff]
      %v3291 = vld [vmem:[%s724 + $0x68] sm:$0xff]
      %v3292 = vld [vmem:[%s724 + $0x78] sm:$0xff]
      %v3293 = vld [vmem:[%s724 + $0x80] sm:$0xff]
      %v3294 = vld [vmem:[%s724 + $0x90] sm:$0xff]
      %v3295 = vld [vmem:[%s724 + $0x98] sm:$0xff]
      %v3296 = vld [vmem:[%s724 + $0xa8] sm:$0xff]
      %v3297 = vld [vmem:[%s724 + $0xb0] sm:$0xff]
      %v3298 = vld [vmem:[%s724 + $0xc0] sm:$0xff]
      %v3299 = vld [vmem:[%s724 + $0xc8] sm:$0xff]
      %v3300 = vld [vmem:[%s724 + $0xd8] sm:$0xff]
      %v3301 = vld [vmem:[%s724 + $0xe0] sm:$0xff]
      %v3302 = vld [vmem:[%s724 + $0xf0] sm:$0xff]
      %v3303 = vld [vmem:[%s724 + $0xf8] sm:$0xff]
      %v3304 = vld [vmem:[%s724 + $0x108] sm:$0xff]
      %v3305 = vld [vmem:[%s724 + $0x110] sm:$0xff]
      %v3306 = vld [vmem:[%s724 + $0x120] sm:$0xff]
      %v3307 = vld [vmem:[%s724 + $0x128] sm:$0xff]
      %v3308 = vld [vmem:[%s724 + $0x138] sm:$0xff]
      %v3309 = vld [vmem:[%s724 + $0x140] sm:$0xff]
      %v3310 = vld [vmem:[%s724 + $0x150] sm:$0xff]
      %v3311 = vld [vmem:[%s724 + $0x158] sm:$0xff]
      %v3312 = vld [vmem:[%s724 + $0x168] sm:$0xff]
      %v3313 = vld [vmem:[%s724 + $0x170] sm:$0xff]
      %3346 = vrot.lane.b32.xlu0 %v3282, 48
      %v3347 = vpop.permute.xlu0 %3346
      %3348 = vrot.lane.b32.xlu0 %v3283, 48
      %v3349 = vpop.permute.xlu0 %3348
      %3350 = vrot.lane.b32.xlu0 %v3284, 48
      %v3351 = vpop.permute.xlu0 %3350
      %3352 = vrot.lane.b32.xlu0 %v3285, 48
      %v3353 = vpop.permute.xlu0 %3352
      %3354 = vrot.lane.b32.xlu0 %v3286, 48
      %v3355 = vpop.permute.xlu0 %3354
      %3356 = vrot.lane.b32.xlu0 %v3287, 48
      %v3357 = vpop.permute.xlu0 %3356
      %3358 = vrot.lane.b32.xlu0 %v3288, 48
      %v3359 = vpop.permute.xlu0 %3358
      %3360 = vrot.lane.b32.xlu0 %v3289, 48
      %v3361 = vpop.permute.xlu0 %3360
      %3362 = vrot.lane.b32.xlu0 %v3290, 48
      %v3363 = vpop.permute.xlu0 %3362
      %3364 = vrot.lane.b32.xlu0 %v3291, 48
      %v3365 = vpop.permute.xlu0 %3364
      %3366 = vrot.lane.b32.xlu0 %v3292, 48
      %v3367 = vpop.permute.xlu0 %3366
      %3368 = vrot.lane.b32.xlu0 %v3293, 48
      %v3369 = vpop.permute.xlu0 %3368
      %3370 = vrot.lane.b32.xlu0 %v3294, 48
      %v3371 = vpop.permute.xlu0 %3370
      %3372 = vrot.lane.b32.xlu0 %v3295, 48
      %v3373 = vpop.permute.xlu0 %3372
      %3374 = vrot.lane.b32.xlu0 %v3296, 48
      %v3375 = vpop.permute.xlu0 %3374
      %3376 = vrot.lane.b32.xlu0 %v3297, 48
      %v3377 = vpop.permute.xlu0 %3376
      %3378 = vrot.lane.b32.xlu0 %v3298, 48
      %v3379 = vpop.permute.xlu0 %3378
      %3380 = vrot.lane.b32.xlu0 %v3299, 48
      %v3381 = vpop.permute.xlu0 %3380
      %3382 = vrot.lane.b32.xlu0 %v3300, 48
      %v3383 = vpop.permute.xlu0 %3382
      %3384 = vrot.lane.b32.xlu0 %v3301, 48
      %v3385 = vpop.permute.xlu0 %3384
      %3386 = vrot.lane.b32.xlu0 %v3302, 48
      %v3387 = vpop.permute.xlu0 %3386
      %3388 = vrot.lane.b32.xlu0 %v3303, 48
      %v3389 = vpop.permute.xlu0 %3388
      %3390 = vrot.lane.b32.xlu0 %v3304, 48
      %v3391 = vpop.permute.xlu0 %3390
      %3392 = vrot.lane.b32.xlu0 %v3305, 48
      %v3393 = vpop.permute.xlu0 %3392
      %3394 = vrot.lane.b32.xlu0 %v3306, 48
      %v3395 = vpop.permute.xlu0 %3394
      %3396 = vrot.lane.b32.xlu0 %v3307, 48
      %v3397 = vpop.permute.xlu0 %3396
      %3398 = vrot.lane.b32.xlu0 %v3308, 48
      %v3399 = vpop.permute.xlu0 %3398
      %3400 = vrot.lane.b32.xlu0 %v3309, 48
      %v3401 = vpop.permute.xlu0 %3400
      %3402 = vrot.lane.b32.xlu0 %v3310, 48
      %v3403 = vpop.permute.xlu0 %3402
      %3404 = vrot.lane.b32.xlu0 %v3311, 48
      %v3405 = vpop.permute.xlu0 %3404
      %3406 = vrot.lane.b32.xlu0 %v3312, 48
      %v3407 = vpop.permute.xlu0 %3406
      %3408 = vrot.lane.b32.xlu0 %v3313, 48
      %v3409 = vpop.permute.xlu0 %3408
      %vm3442 = vcmask 523648
      %3443 = vst.msk [vmem:[#allocation3] sm:$0xff] %vm3442, %v3347
      %3444 = vst.msk [vmem:[#allocation3 + $0x10] sm:$0xff] %vm3442, %v3349
      %3445 = vst.msk [vmem:[#allocation3 + $0x20] sm:$0xff] %vm3442, %v3351
      %3446 = vst.msk [vmem:[#allocation3 + $0x30] sm:$0xff] %vm3442, %v3353
      %3447 = vst.msk [vmem:[#allocation3 + $0x40] sm:$0xff] %vm3442, %v3355
      %3448 = vst.msk [vmem:[#allocation3 + $0x50] sm:$0xff] %vm3442, %v3357
      %3449 = vst.msk [vmem:[#allocation3 + $0x60] sm:$0xff] %vm3442, %v3359
      %3450 = vst.msk [vmem:[#allocation3 + $0x70] sm:$0xff] %vm3442, %v3361
      %3451 = vst.msk [vmem:[#allocation3 + $0x80] sm:$0xff] %vm3442, %v3363
      %3452 = vst.msk [vmem:[#allocation3 + $0x90] sm:$0xff] %vm3442, %v3365
      %3453 = vst.msk [vmem:[#allocation3 + $0xa0] sm:$0xff] %vm3442, %v3367
      %3454 = vst.msk [vmem:[#allocation3 + $0xb0] sm:$0xff] %vm3442, %v3369
      %3455 = vst.msk [vmem:[#allocation3 + $0xc0] sm:$0xff] %vm3442, %v3371
      %3456 = vst.msk [vmem:[#allocation3 + $0xd0] sm:$0xff] %vm3442, %v3373
      %3457 = vst.msk [vmem:[#allocation3 + $0xe0] sm:$0xff] %vm3442, %v3375
      %3458 = vst.msk [vmem:[#allocation3 + $0xf0] sm:$0xff] %vm3442, %v3377
      %3459 = vst.msk [vmem:[#allocation3 + $0x100] sm:$0xff] %vm3442, %v3379
      %3460 = vst.msk [vmem:[#allocation3 + $0x110] sm:$0xff] %vm3442, %v3381
      %3461 = vst.msk [vmem:[#allocation3 + $0x120] sm:$0xff] %vm3442, %v3383
      %3462 = vst.msk [vmem:[#allocation3 + $0x130] sm:$0xff] %vm3442, %v3385
      %3463 = vst.msk [vmem:[#allocation3 + $0x140] sm:$0xff] %vm3442, %v3387
      %3464 = vst.msk [vmem:[#allocation3 + $0x150] sm:$0xff] %vm3442, %v3389
      %3465 = vst.msk [vmem:[#allocation3 + $0x160] sm:$0xff] %vm3442, %v3391
      %3466 = vst.msk [vmem:[#allocation3 + $0x170] sm:$0xff] %vm3442, %v3393
      %3467 = vst.msk [vmem:[#allocation3 + $0x180] sm:$0xff] %vm3442, %v3395
      %3468 = vst.msk [vmem:[#allocation3 + $0x190] sm:$0xff] %vm3442, %v3397
      %3469 = vst.msk [vmem:[#allocation3 + $0x1a0] sm:$0xff] %vm3442, %v3399
      %3470 = vst.msk [vmem:[#allocation3 + $0x1b0] sm:$0xff] %vm3442, %v3401
      %3471 = vst.msk [vmem:[#allocation3 + $0x1c0] sm:$0xff] %vm3442, %v3403
      %3472 = vst.msk [vmem:[#allocation3 + $0x1d0] sm:$0xff] %vm3442, %v3405
      %3473 = vst.msk [vmem:[#allocation3 + $0x1e0] sm:$0xff] %vm3442, %v3407
      %3474 = vst.msk [vmem:[#allocation3 + $0x1f0] sm:$0xff] %vm3442, %v3409
      %v3475 = vld [vmem:[%s724 + $0x1] sm:$0xff]
      %v3476 = vld [vmem:[%s724 + $0x9] sm:$0xff]
      %v3477 = vld [vmem:[%s724 + $0x19] sm:$0xff]
      %v3478 = vld [vmem:[%s724 + $0x21] sm:$0xff]
      %v3479 = vld [vmem:[%s724 + $0x31] sm:$0xff]
      %v3480 = vld [vmem:[%s724 + $0x39] sm:$0xff]
      %v3481 = vld [vmem:[%s724 + $0x49] sm:$0xff]
      %v3482 = vld [vmem:[%s724 + $0x51] sm:$0xff]
      %v3483 = vld [vmem:[%s724 + $0x61] sm:$0xff]
      %v3484 = vld [vmem:[%s724 + $0x69] sm:$0xff]
      %v3485 = vld [vmem:[%s724 + $0x79] sm:$0xff]
      %v3486 = vld [vmem:[%s724 + $0x81] sm:$0xff]
      %v3487 = vld [vmem:[%s724 + $0x91] sm:$0xff]
      %v3488 = vld [vmem:[%s724 + $0x99] sm:$0xff]
      %v3489 = vld [vmem:[%s724 + $0xa9] sm:$0xff]
      %v3490 = vld [vmem:[%s724 + $0xb1] sm:$0xff]
      %v3491 = vld [vmem:[%s724 + $0xc1] sm:$0xff]
      %v3492 = vld [vmem:[%s724 + $0xc9] sm:$0xff]
      %v3493 = vld [vmem:[%s724 + $0xd9] sm:$0xff]
      %v3494 = vld [vmem:[%s724 + $0xe1] sm:$0xff]
      %v3495 = vld [vmem:[%s724 + $0xf1] sm:$0xff]
      %v3496 = vld [vmem:[%s724 + $0xf9] sm:$0xff]
      %v3497 = vld [vmem:[%s724 + $0x109] sm:$0xff]
      %v3498 = vld [vmem:[%s724 + $0x111] sm:$0xff]
      %v3499 = vld [vmem:[%s724 + $0x121] sm:$0xff]
      %v3500 = vld [vmem:[%s724 + $0x129] sm:$0xff]
      %v3501 = vld [vmem:[%s724 + $0x139] sm:$0xff]
      %v3502 = vld [vmem:[%s724 + $0x141] sm:$0xff]
      %v3503 = vld [vmem:[%s724 + $0x151] sm:$0xff]
      %v3504 = vld [vmem:[%s724 + $0x159] sm:$0xff]
      %v3505 = vld [vmem:[%s724 + $0x169] sm:$0xff]
      %v3506 = vld [vmem:[%s724 + $0x171] sm:$0xff]
      %3539 = vrot.lane.b32.xlu0 %v3475, 64
      %v3540 = vpop.permute.xlu0 %3539
      %3541 = vrot.lane.b32.xlu0 %v3476, 64
      %v3542 = vpop.permute.xlu0 %3541
      %3543 = vrot.lane.b32.xlu0 %v3477, 64
      %v3544 = vpop.permute.xlu0 %3543
      %3545 = vrot.lane.b32.xlu0 %v3478, 64
      %v3546 = vpop.permute.xlu0 %3545
      %3547 = vrot.lane.b32.xlu0 %v3479, 64
      %v3548 = vpop.permute.xlu0 %3547
      %3549 = vrot.lane.b32.xlu0 %v3480, 64
      %v3550 = vpop.permute.xlu0 %3549
      %3551 = vrot.lane.b32.xlu0 %v3481, 64
      %v3552 = vpop.permute.xlu0 %3551
      %3553 = vrot.lane.b32.xlu0 %v3482, 64
      %v3554 = vpop.permute.xlu0 %3553
      %3555 = vrot.lane.b32.xlu0 %v3483, 64
      %v3556 = vpop.permute.xlu0 %3555
      %3557 = vrot.lane.b32.xlu0 %v3484, 64
      %v3558 = vpop.permute.xlu0 %3557
      %3559 = vrot.lane.b32.xlu0 %v3485, 64
      %v3560 = vpop.permute.xlu0 %3559
      %3561 = vrot.lane.b32.xlu0 %v3486, 64
      %v3562 = vpop.permute.xlu0 %3561
      %3563 = vrot.lane.b32.xlu0 %v3487, 64
      %v3564 = vpop.permute.xlu0 %3563
      %3565 = vrot.lane.b32.xlu0 %v3488, 64
      %v3566 = vpop.permute.xlu0 %3565
      %3567 = vrot.lane.b32.xlu0 %v3489, 64
      %v3568 = vpop.permute.xlu0 %3567
      %3569 = vrot.lane.b32.xlu0 %v3490, 64
      %v3570 = vpop.permute.xlu0 %3569
      %3571 = vrot.lane.b32.xlu0 %v3491, 64
      %v3572 = vpop.permute.xlu0 %3571
      %3573 = vrot.lane.b32.xlu0 %v3492, 64
      %v3574 = vpop.permute.xlu0 %3573
      %3575 = vrot.lane.b32.xlu0 %v3493, 64
      %v3576 = vpop.permute.xlu0 %3575
      %3577 = vrot.lane.b32.xlu0 %v3494, 64
      %v3578 = vpop.permute.xlu0 %3577
      %3579 = vrot.lane.b32.xlu0 %v3495, 64
      %v3580 = vpop.permute.xlu0 %3579
      %3581 = vrot.lane.b32.xlu0 %v3496, 64
      %v3582 = vpop.permute.xlu0 %3581
      %3583 = vrot.lane.b32.xlu0 %v3497, 64
      %v3584 = vpop.permute.xlu0 %3583
      %3585 = vrot.lane.b32.xlu0 %v3498, 64
      %v3586 = vpop.permute.xlu0 %3585
      %3587 = vrot.lane.b32.xlu0 %v3499, 64
      %v3588 = vpop.permute.xlu0 %3587
      %3589 = vrot.lane.b32.xlu0 %v3500, 64
      %v3590 = vpop.permute.xlu0 %3589
      %3591 = vrot.lane.b32.xlu0 %v3501, 64
      %v3592 = vpop.permute.xlu0 %3591
      %3593 = vrot.lane.b32.xlu0 %v3502, 64
      %v3594 = vpop.permute.xlu0 %3593
      %3595 = vrot.lane.b32.xlu0 %v3503, 64
      %v3596 = vpop.permute.xlu0 %3595
      %3597 = vrot.lane.b32.xlu0 %v3504, 64
      %v3598 = vpop.permute.xlu0 %3597
      %3599 = vrot.lane.b32.xlu0 %v3505, 64
      %v3600 = vpop.permute.xlu0 %3599
      %3601 = vrot.lane.b32.xlu0 %v3506, 64
      %v3602 = vpop.permute.xlu0 %3601
      %vm3635 = vcmask 654848
      %3636 = vst.msk [vmem:[#allocation3] sm:$0xff] %vm3635, %v3540
      %3637 = vst.msk [vmem:[#allocation3 + $0x10] sm:$0xff] %vm3635, %v3542
      %3638 = vst.msk [vmem:[#allocation3 + $0x20] sm:$0xff] %vm3635, %v3544
      %3639 = vst.msk [vmem:[#allocation3 + $0x30] sm:$0xff] %vm3635, %v3546
      %3640 = vst.msk [vmem:[#allocation3 + $0x40] sm:$0xff] %vm3635, %v3548
      %3641 = vst.msk [vmem:[#allocation3 + $0x50] sm:$0xff] %vm3635, %v3550
      %3642 = vst.msk [vmem:[#allocation3 + $0x60] sm:$0xff] %vm3635, %v3552
      %3643 = vst.msk [vmem:[#allocation3 + $0x70] sm:$0xff] %vm3635, %v3554
      %3644 = vst.msk [vmem:[#allocation3 + $0x80] sm:$0xff] %vm3635, %v3556
      %3645 = vst.msk [vmem:[#allocation3 + $0x90] sm:$0xff] %vm3635, %v3558
      %3646 = vst.msk [vmem:[#allocation3 + $0xa0] sm:$0xff] %vm3635, %v3560
      %3647 = vst.msk [vmem:[#allocation3 + $0xb0] sm:$0xff] %vm3635, %v3562
      %3648 = vst.msk [vmem:[#allocation3 + $0xc0] sm:$0xff] %vm3635, %v3564
      %3649 = vst.msk [vmem:[#allocation3 + $0xd0] sm:$0xff] %vm3635, %v3566
      %3650 = vst.msk [vmem:[#allocation3 + $0xe0] sm:$0xff] %vm3635, %v3568
      %3651 = vst.msk [vmem:[#allocation3 + $0xf0] sm:$0xff] %vm3635, %v3570
      %3652 = vst.msk [vmem:[#allocation3 + $0x100] sm:$0xff] %vm3635, %v3572
      %3653 = vst.msk [vmem:[#allocation3 + $0x110] sm:$0xff] %vm3635, %v3574
      %3654 = vst.msk [vmem:[#allocation3 + $0x120] sm:$0xff] %vm3635, %v3576
      %3655 = vst.msk [vmem:[#allocation3 + $0x130] sm:$0xff] %vm3635, %v3578
      %3656 = vst.msk [vmem:[#allocation3 + $0x140] sm:$0xff] %vm3635, %v3580
      %3657 = vst.msk [vmem:[#allocation3 + $0x150] sm:$0xff] %vm3635, %v3582
      %3658 = vst.msk [vmem:[#allocation3 + $0x160] sm:$0xff] %vm3635, %v3584
      %3659 = vst.msk [vmem:[#allocation3 + $0x170] sm:$0xff] %vm3635, %v3586
      %3660 = vst.msk [vmem:[#allocation3 + $0x180] sm:$0xff] %vm3635, %v3588
      %3661 = vst.msk [vmem:[#allocation3 + $0x190] sm:$0xff] %vm3635, %v3590
      %3662 = vst.msk [vmem:[#allocation3 + $0x1a0] sm:$0xff] %vm3635, %v3592
      %3663 = vst.msk [vmem:[#allocation3 + $0x1b0] sm:$0xff] %vm3635, %v3594
      %3664 = vst.msk [vmem:[#allocation3 + $0x1c0] sm:$0xff] %vm3635, %v3596
      %3665 = vst.msk [vmem:[#allocation3 + $0x1d0] sm:$0xff] %vm3635, %v3598
      %3666 = vst.msk [vmem:[#allocation3 + $0x1e0] sm:$0xff] %vm3635, %v3600
      %3667 = vst.msk [vmem:[#allocation3 + $0x1f0] sm:$0xff] %vm3635, %v3602
      %v3668 = vld [vmem:[%s724 + $0x2] sm:$0xff]
      %v3669 = vld [vmem:[%s724 + $0xa] sm:$0xff]
      %v3670 = vld [vmem:[%s724 + $0x1a] sm:$0xff]
      %v3671 = vld [vmem:[%s724 + $0x22] sm:$0xff]
      %v3672 = vld [vmem:[%s724 + $0x32] sm:$0xff]
      %v3673 = vld [vmem:[%s724 + $0x3a] sm:$0xff]
      %v3674 = vld [vmem:[%s724 + $0x4a] sm:$0xff]
      %v3675 = vld [vmem:[%s724 + $0x52] sm:$0xff]
      %v3676 = vld [vmem:[%s724 + $0x62] sm:$0xff]
      %v3677 = vld [vmem:[%s724 + $0x6a] sm:$0xff]
      %v3678 = vld [vmem:[%s724 + $0x7a] sm:$0xff]
      %v3679 = vld [vmem:[%s724 + $0x82] sm:$0xff]
      %v3680 = vld [vmem:[%s724 + $0x92] sm:$0xff]
      %v3681 = vld [vmem:[%s724 + $0x9a] sm:$0xff]
      %v3682 = vld [vmem:[%s724 + $0xaa] sm:$0xff]
      %v3683 = vld [vmem:[%s724 + $0xb2] sm:$0xff]
      %v3684 = vld [vmem:[%s724 + $0xc2] sm:$0xff]
      %v3685 = vld [vmem:[%s724 + $0xca] sm:$0xff]
      %v3686 = vld [vmem:[%s724 + $0xda] sm:$0xff]
      %v3687 = vld [vmem:[%s724 + $0xe2] sm:$0xff]
      %v3688 = vld [vmem:[%s724 + $0xf2] sm:$0xff]
      %v3689 = vld [vmem:[%s724 + $0xfa] sm:$0xff]
      %v3690 = vld [vmem:[%s724 + $0x10a] sm:$0xff]
      %v3691 = vld [vmem:[%s724 + $0x112] sm:$0xff]
      %v3692 = vld [vmem:[%s724 + $0x122] sm:$0xff]
      %v3693 = vld [vmem:[%s724 + $0x12a] sm:$0xff]
      %v3694 = vld [vmem:[%s724 + $0x13a] sm:$0xff]
      %v3695 = vld [vmem:[%s724 + $0x142] sm:$0xff]
      %v3696 = vld [vmem:[%s724 + $0x152] sm:$0xff]
      %v3697 = vld [vmem:[%s724 + $0x15a] sm:$0xff]
      %v3698 = vld [vmem:[%s724 + $0x16a] sm:$0xff]
      %v3699 = vld [vmem:[%s724 + $0x172] sm:$0xff]
      %3732 = vrot.lane.b32.xlu0 %v3668, 80
      %v3733 = vpop.permute.xlu0 %3732
      %3734 = vrot.lane.b32.xlu0 %v3669, 80
      %v3735 = vpop.permute.xlu0 %3734
      %3736 = vrot.lane.b32.xlu0 %v3670, 80
      %v3737 = vpop.permute.xlu0 %3736
      %3738 = vrot.lane.b32.xlu0 %v3671, 80
      %v3739 = vpop.permute.xlu0 %3738
      %3740 = vrot.lane.b32.xlu0 %v3672, 80
      %v3741 = vpop.permute.xlu0 %3740
      %3742 = vrot.lane.b32.xlu0 %v3673, 80
      %v3743 = vpop.permute.xlu0 %3742
      %3744 = vrot.lane.b32.xlu0 %v3674, 80
      %v3745 = vpop.permute.xlu0 %3744
      %3746 = vrot.lane.b32.xlu0 %v3675, 80
      %v3747 = vpop.permute.xlu0 %3746
      %3748 = vrot.lane.b32.xlu0 %v3676, 80
      %v3749 = vpop.permute.xlu0 %3748
      %3750 = vrot.lane.b32.xlu0 %v3677, 80
      %v3751 = vpop.permute.xlu0 %3750
      %3752 = vrot.lane.b32.xlu0 %v3678, 80
      %v3753 = vpop.permute.xlu0 %3752
      %3754 = vrot.lane.b32.xlu0 %v3679, 80
      %v3755 = vpop.permute.xlu0 %3754
      %3756 = vrot.lane.b32.xlu0 %v3680, 80
      %v3757 = vpop.permute.xlu0 %3756
      %3758 = vrot.lane.b32.xlu0 %v3681, 80
      %v3759 = vpop.permute.xlu0 %3758
      %3760 = vrot.lane.b32.xlu0 %v3682, 80
      %v3761 = vpop.permute.xlu0 %3760
      %3762 = vrot.lane.b32.xlu0 %v3683, 80
      %v3763 = vpop.permute.xlu0 %3762
      %3764 = vrot.lane.b32.xlu0 %v3684, 80
      %v3765 = vpop.permute.xlu0 %3764
      %3766 = vrot.lane.b32.xlu0 %v3685, 80
      %v3767 = vpop.permute.xlu0 %3766
      %3768 = vrot.lane.b32.xlu0 %v3686, 80
      %v3769 = vpop.permute.xlu0 %3768
      %3770 = vrot.lane.b32.xlu0 %v3687, 80
      %v3771 = vpop.permute.xlu0 %3770
      %3772 = vrot.lane.b32.xlu0 %v3688, 80
      %v3773 = vpop.permute.xlu0 %3772
      %3774 = vrot.lane.b32.xlu0 %v3689, 80
      %v3775 = vpop.permute.xlu0 %3774
      %3776 = vrot.lane.b32.xlu0 %v3690, 80
      %v3777 = vpop.permute.xlu0 %3776
      %3778 = vrot.lane.b32.xlu0 %v3691, 80
      %v3779 = vpop.permute.xlu0 %3778
      %3780 = vrot.lane.b32.xlu0 %v3692, 80
      %v3781 = vpop.permute.xlu0 %3780
      %3782 = vrot.lane.b32.xlu0 %v3693, 80
      %v3783 = vpop.permute.xlu0 %3782
      %3784 = vrot.lane.b32.xlu0 %v3694, 80
      %v3785 = vpop.permute.xlu0 %3784
      %3786 = vrot.lane.b32.xlu0 %v3695, 80
      %v3787 = vpop.permute.xlu0 %3786
      %3788 = vrot.lane.b32.xlu0 %v3696, 80
      %v3789 = vpop.permute.xlu0 %3788
      %3790 = vrot.lane.b32.xlu0 %v3697, 80
      %v3791 = vpop.permute.xlu0 %3790
      %3792 = vrot.lane.b32.xlu0 %v3698, 80
      %v3793 = vpop.permute.xlu0 %3792
      %3794 = vrot.lane.b32.xlu0 %v3699, 80
      %v3795 = vpop.permute.xlu0 %3794
      %vm3828 = vcmask 786048
      %3829 = vst.msk [vmem:[#allocation3] sm:$0xff] %vm3828, %v3733
      %3830 = vst.msk [vmem:[#allocation3 + $0x10] sm:$0xff] %vm3828, %v3735
      %3831 = vst.msk [vmem:[#allocation3 + $0x20] sm:$0xff] %vm3828, %v3737
      %3832 = vst.msk [vmem:[#allocation3 + $0x30] sm:$0xff] %vm3828, %v3739
      %3833 = vst.msk [vmem:[#allocation3 + $0x40] sm:$0xff] %vm3828, %v3741
      %3834 = vst.msk [vmem:[#allocation3 + $0x50] sm:$0xff] %vm3828, %v3743
      %3835 = vst.msk [vmem:[#allocation3 + $0x60] sm:$0xff] %vm3828, %v3745
      %3836 = vst.msk [vmem:[#allocation3 + $0x70] sm:$0xff] %vm3828, %v3747
      %3837 = vst.msk [vmem:[#allocation3 + $0x80] sm:$0xff] %vm3828, %v3749
      %3838 = vst.msk [vmem:[#allocation3 + $0x90] sm:$0xff] %vm3828, %v3751
      %3839 = vst.msk [vmem:[#allocation3 + $0xa0] sm:$0xff] %vm3828, %v3753
      %3840 = vst.msk [vmem:[#allocation3 + $0xb0] sm:$0xff] %vm3828, %v3755
      %3841 = vst.msk [vmem:[#allocation3 + $0xc0] sm:$0xff] %vm3828, %v3757
      %3842 = vst.msk [vmem:[#allocation3 + $0xd0] sm:$0xff] %vm3828, %v3759
      %3843 = vst.msk [vmem:[#allocation3 + $0xe0] sm:$0xff] %vm3828, %v3761
      %3844 = vst.msk [vmem:[#allocation3 + $0xf0] sm:$0xff] %vm3828, %v3763
      %3845 = vst.msk [vmem:[#allocation3 + $0x100] sm:$0xff] %vm3828, %v3765
      %3846 = vst.msk [vmem:[#allocation3 + $0x110] sm:$0xff] %vm3828, %v3767
      %3847 = vst.msk [vmem:[#allocation3 + $0x120] sm:$0xff] %vm3828, %v3769
      %3848 = vst.msk [vmem:[#allocation3 + $0x130] sm:$0xff] %vm3828, %v3771
      %3849 = vst.msk [vmem:[#allocation3 + $0x140] sm:$0xff] %vm3828, %v3773
      %3850 = vst.msk [vmem:[#allocation3 + $0x150] sm:$0xff] %vm3828, %v3775
      %3851 = vst.msk [vmem:[#allocation3 + $0x160] sm:$0xff] %vm3828, %v3777
      %3852 = vst.msk [vmem:[#allocation3 + $0x170] sm:$0xff] %vm3828, %v3779
      %3853 = vst.msk [vmem:[#allocation3 + $0x180] sm:$0xff] %vm3828, %v3781
      %3854 = vst.msk [vmem:[#allocation3 + $0x190] sm:$0xff] %vm3828, %v3783
      %3855 = vst.msk [vmem:[#allocation3 + $0x1a0] sm:$0xff] %vm3828, %v3785
      %3856 = vst.msk [vmem:[#allocation3 + $0x1b0] sm:$0xff] %vm3828, %v3787
      %3857 = vst.msk [vmem:[#allocation3 + $0x1c0] sm:$0xff] %vm3828, %v3789
      %3858 = vst.msk [vmem:[#allocation3 + $0x1d0] sm:$0xff] %vm3828, %v3791
      %3859 = vst.msk [vmem:[#allocation3 + $0x1e0] sm:$0xff] %vm3828, %v3793
      %3860 = vst.msk [vmem:[#allocation3 + $0x1f0] sm:$0xff] %vm3828, %v3795
      %v3861 = vld [vmem:[%s1787] sm:$0xff]
      %v3862 = vld [vmem:[%s1787 + $0x8] sm:$0xff]
      %v3863 = vld [vmem:[%s1787 + $0x18] sm:$0xff]
      %v3864 = vld [vmem:[%s1787 + $0x20] sm:$0xff]
      %v3865 = vld [vmem:[%s1787 + $0x30] sm:$0xff]
      %v3866 = vld [vmem:[%s1787 + $0x38] sm:$0xff]
      %v3867 = vld [vmem:[%s1787 + $0x48] sm:$0xff]
      %v3868 = vld [vmem:[%s1787 + $0x50] sm:$0xff]
      %v3869 = vld [vmem:[%s1787 + $0x60] sm:$0xff]
      %v3870 = vld [vmem:[%s1787 + $0x68] sm:$0xff]
      %v3871 = vld [vmem:[%s1787 + $0x78] sm:$0xff]
      %v3872 = vld [vmem:[%s1787 + $0x80] sm:$0xff]
      %v3873 = vld [vmem:[%s1787 + $0x90] sm:$0xff]
      %v3874 = vld [vmem:[%s1787 + $0x98] sm:$0xff]
      %v3875 = vld [vmem:[%s1787 + $0xa8] sm:$0xff]
      %v3876 = vld [vmem:[%s1787 + $0xb0] sm:$0xff]
      %v3877 = vld [vmem:[%s1787 + $0xc0] sm:$0xff]
      %v3878 = vld [vmem:[%s1787 + $0xc8] sm:$0xff]
      %v3879 = vld [vmem:[%s1787 + $0xd8] sm:$0xff]
      %v3880 = vld [vmem:[%s1787 + $0xe0] sm:$0xff]
      %v3881 = vld [vmem:[%s1787 + $0xf0] sm:$0xff]
      %v3882 = vld [vmem:[%s1787 + $0xf8] sm:$0xff]
      %v3883 = vld [vmem:[%s1787 + $0x108] sm:$0xff]
      %v3884 = vld [vmem:[%s1787 + $0x110] sm:$0xff]
      %v3885 = vld [vmem:[%s1787 + $0x120] sm:$0xff]
      %v3886 = vld [vmem:[%s1787 + $0x128] sm:$0xff]
      %v3887 = vld [vmem:[%s1787 + $0x138] sm:$0xff]
      %v3888 = vld [vmem:[%s1787 + $0x140] sm:$0xff]
      %v3889 = vld [vmem:[%s1787 + $0x150] sm:$0xff]
      %v3890 = vld [vmem:[%s1787 + $0x158] sm:$0xff]
      %v3891 = vld [vmem:[%s1787 + $0x168] sm:$0xff]
      %v3892 = vld [vmem:[%s1787 + $0x170] sm:$0xff]
      %3925 = vrot.lane.b32.xlu0 %v3861, 96
      %v3926 = vpop.permute.xlu0 %3925
      %3927 = vrot.lane.b32.xlu0 %v3862, 96
      %v3928 = vpop.permute.xlu0 %3927
      %3929 = vrot.lane.b32.xlu0 %v3863, 96
      %v3930 = vpop.permute.xlu0 %3929
      %3931 = vrot.lane.b32.xlu0 %v3864, 96
      %v3932 = vpop.permute.xlu0 %3931
      %3933 = vrot.lane.b32.xlu0 %v3865, 96
      %v3934 = vpop.permute.xlu0 %3933
      %3935 = vrot.lane.b32.xlu0 %v3866, 96
      %v3936 = vpop.permute.xlu0 %3935
      %3937 = vrot.lane.b32.xlu0 %v3867, 96
      %v3938 = vpop.permute.xlu0 %3937
      %3939 = vrot.lane.b32.xlu0 %v3868, 96
      %v3940 = vpop.permute.xlu0 %3939
      %3941 = vrot.lane.b32.xlu0 %v3869, 96
      %v3942 = vpop.permute.xlu0 %3941
      %3943 = vrot.lane.b32.xlu0 %v3870, 96
      %v3944 = vpop.permute.xlu0 %3943
      %3945 = vrot.lane.b32.xlu0 %v3871, 96
      %v3946 = vpop.permute.xlu0 %3945
      %3947 = vrot.lane.b32.xlu0 %v3872, 96
      %v3948 = vpop.permute.xlu0 %3947
      %3949 = vrot.lane.b32.xlu0 %v3873, 96
      %v3950 = vpop.permute.xlu0 %3949
      %3951 = vrot.lane.b32.xlu0 %v3874, 96
      %v3952 = vpop.permute.xlu0 %3951
      %3953 = vrot.lane.b32.xlu0 %v3875, 96
      %v3954 = vpop.permute.xlu0 %3953
      %3955 = vrot.lane.b32.xlu0 %v3876, 96
      %v3956 = vpop.permute.xlu0 %3955
      %3957 = vrot.lane.b32.xlu0 %v3877, 96
      %v3958 = vpop.permute.xlu0 %3957
      %3959 = vrot.lane.b32.xlu0 %v3878, 96
      %v3960 = vpop.permute.xlu0 %3959
      %3961 = vrot.lane.b32.xlu0 %v3879, 96
      %v3962 = vpop.permute.xlu0 %3961
      %3963 = vrot.lane.b32.xlu0 %v3880, 96
      %v3964 = vpop.permute.xlu0 %3963
      %3965 = vrot.lane.b32.xlu0 %v3881, 96
      %v3966 = vpop.permute.xlu0 %3965
      %3967 = vrot.lane.b32.xlu0 %v3882, 96
      %v3968 = vpop.permute.xlu0 %3967
      %3969 = vrot.lane.b32.xlu0 %v3883, 96
      %v3970 = vpop.permute.xlu0 %3969
      %3971 = vrot.lane.b32.xlu0 %v3884, 96
      %v3972 = vpop.permute.xlu0 %3971
      %3973 = vrot.lane.b32.xlu0 %v3885, 96
      %v3974 = vpop.permute.xlu0 %3973
      %3975 = vrot.lane.b32.xlu0 %v3886, 96
      %v3976 = vpop.permute.xlu0 %3975
      %3977 = vrot.lane.b32.xlu0 %v3887, 96
      %v3978 = vpop.permute.xlu0 %3977
      %3979 = vrot.lane.b32.xlu0 %v3888, 96
      %v3980 = vpop.permute.xlu0 %3979
      %3981 = vrot.lane.b32.xlu0 %v3889, 96
      %v3982 = vpop.permute.xlu0 %3981
      %3983 = vrot.lane.b32.xlu0 %v3890, 96
      %v3984 = vpop.permute.xlu0 %3983
      %3985 = vrot.lane.b32.xlu0 %v3891, 96
      %v3986 = vpop.permute.xlu0 %3985
      %3987 = vrot.lane.b32.xlu0 %v3892, 96
      %v3988 = vpop.permute.xlu0 %3987
      %vm4021 = vcmask 917248
      %4022 = vst.msk [vmem:[#allocation3] sm:$0xff] %vm4021, %v3926
      %4023 = vst.msk [vmem:[#allocation3 + $0x10] sm:$0xff] %vm4021, %v3928
      %4024 = vst.msk [vmem:[#allocation3 + $0x20] sm:$0xff] %vm4021, %v3930
      %4025 = vst.msk [vmem:[#allocation3 + $0x30] sm:$0xff] %vm4021, %v3932
      %4026 = vst.msk [vmem:[#allocation3 + $0x40] sm:$0xff] %vm4021, %v3934
      %4027 = vst.msk [vmem:[#allocation3 + $0x50] sm:$0xff] %vm4021, %v3936
      %4028 = vst.msk [vmem:[#allocation3 + $0x60] sm:$0xff] %vm4021, %v3938
      %4029 = vst.msk [vmem:[#allocation3 + $0x70] sm:$0xff] %vm4021, %v3940
      %4030 = vst.msk [vmem:[#allocation3 + $0x80] sm:$0xff] %vm4021, %v3942
      %4031 = vst.msk [vmem:[#allocation3 + $0x90] sm:$0xff] %vm4021, %v3944
      %4032 = vst.msk [vmem:[#allocation3 + $0xa0] sm:$0xff] %vm4021, %v3946
      %4033 = vst.msk [vmem:[#allocation3 + $0xb0] sm:$0xff] %vm4021, %v3948
      %4034 = vst.msk [vmem:[#allocation3 + $0xc0] sm:$0xff] %vm4021, %v3950
      %4035 = vst.msk [vmem:[#allocation3 + $0xd0] sm:$0xff] %vm4021, %v3952
      %4036 = vst.msk [vmem:[#allocation3 + $0xe0] sm:$0xff] %vm4021, %v3954
      %4037 = vst.msk [vmem:[#allocation3 + $0xf0] sm:$0xff] %vm4021, %v3956
      %4038 = vst.msk [vmem:[#allocation3 + $0x100] sm:$0xff] %vm4021, %v3958
      %4039 = vst.msk [vmem:[#allocation3 + $0x110] sm:$0xff] %vm4021, %v3960
      %4040 = vst.msk [vmem:[#allocation3 + $0x120] sm:$0xff] %vm4021, %v3962
      %4041 = vst.msk [vmem:[#allocation3 + $0x130] sm:$0xff] %vm4021, %v3964
      %4042 = vst.msk [vmem:[#allocation3 + $0x140] sm:$0xff] %vm4021, %v3966
      %4043 = vst.msk [vmem:[#allocation3 + $0x150] sm:$0xff] %vm4021, %v3968
      %4044 = vst.msk [vmem:[#allocation3 + $0x160] sm:$0xff] %vm4021, %v3970
      %4045 = vst.msk [vmem:[#allocation3 + $0x170] sm:$0xff] %vm4021, %v3972
      %4046 = vst.msk [vmem:[#allocation3 + $0x180] sm:$0xff] %vm4021, %v3974
      %4047 = vst.msk [vmem:[#allocation3 + $0x190] sm:$0xff] %vm4021, %v3976
      %4048 = vst.msk [vmem:[#allocation3 + $0x1a0] sm:$0xff] %vm4021, %v3978
      %4049 = vst.msk [vmem:[#allocation3 + $0x1b0] sm:$0xff] %vm4021, %v3980
      %4050 = vst.msk [vmem:[#allocation3 + $0x1c0] sm:$0xff] %vm4021, %v3982
      %4051 = vst.msk [vmem:[#allocation3 + $0x1d0] sm:$0xff] %vm4021, %v3984
      %4052 = vst.msk [vmem:[#allocation3 + $0x1e0] sm:$0xff] %vm4021, %v3986
      %4053 = vst.msk [vmem:[#allocation3 + $0x1f0] sm:$0xff] %vm4021, %v3988
      %v4054 = vld [vmem:[%s1787 + $0x1] sm:$0xff]
      %v4055 = vld [vmem:[%s1787 + $0x9] sm:$0xff]
      %v4056 = vld [vmem:[%s1787 + $0x19] sm:$0xff]
      %v4057 = vld [vmem:[%s1787 + $0x21] sm:$0xff]
      %v4058 = vld [vmem:[%s1787 + $0x31] sm:$0xff]
      %v4059 = vld [vmem:[%s1787 + $0x39] sm:$0xff]
      %v4060 = vld [vmem:[%s1787 + $0x49] sm:$0xff]
      %v4061 = vld [vmem:[%s1787 + $0x51] sm:$0xff]
      %v4062 = vld [vmem:[%s1787 + $0x61] sm:$0xff]
      %v4063 = vld [vmem:[%s1787 + $0x69] sm:$0xff]
      %v4064 = vld [vmem:[%s1787 + $0x79] sm:$0xff]
      %v4065 = vld [vmem:[%s1787 + $0x81] sm:$0xff]
      %v4066 = vld [vmem:[%s1787 + $0x91] sm:$0xff]
      %v4067 = vld [vmem:[%s1787 + $0x99] sm:$0xff]
      %v4068 = vld [vmem:[%s1787 + $0xa9] sm:$0xff]
      %v4069 = vld [vmem:[%s1787 + $0xb1] sm:$0xff]
      %v4070 = vld [vmem:[%s1787 + $0xc1] sm:$0xff]
      %v4071 = vld [vmem:[%s1787 + $0xc9] sm:$0xff]
      %v4072 = vld [vmem:[%s1787 + $0xd9] sm:$0xff]
      %v4073 = vld [vmem:[%s1787 + $0xe1] sm:$0xff]
      %v4074 = vld [vmem:[%s1787 + $0xf1] sm:$0xff]
      %v4075 = vld [vmem:[%s1787 + $0xf9] sm:$0xff]
      %v4076 = vld [vmem:[%s1787 + $0x109] sm:$0xff]
      %v4077 = vld [vmem:[%s1787 + $0x111] sm:$0xff]
      %v4078 = vld [vmem:[%s1787 + $0x121] sm:$0xff]
      %v4079 = vld [vmem:[%s1787 + $0x129] sm:$0xff]
      %v4080 = vld [vmem:[%s1787 + $0x139] sm:$0xff]
      %v4081 = vld [vmem:[%s1787 + $0x141] sm:$0xff]
      %v4082 = vld [vmem:[%s1787 + $0x151] sm:$0xff]
      %v4083 = vld [vmem:[%s1787 + $0x159] sm:$0xff]
      %v4084 = vld [vmem:[%s1787 + $0x169] sm:$0xff]
      %v4085 = vld [vmem:[%s1787 + $0x171] sm:$0xff]
      %4118 = vrot.lane.b32.xlu0 %v4054, 112
      %v4119 = vpop.permute.xlu0 %4118
      %4120 = vrot.lane.b32.xlu0 %v4055, 112
      %v4121 = vpop.permute.xlu0 %4120
      %4122 = vrot.lane.b32.xlu0 %v4056, 112
      %v4123 = vpop.permute.xlu0 %4122
      %4124 = vrot.lane.b32.xlu0 %v4057, 112
      %v4125 = vpop.permute.xlu0 %4124
      %4126 = vrot.lane.b32.xlu0 %v4058, 112
      %v4127 = vpop.permute.xlu0 %4126
      %4128 = vrot.lane.b32.xlu0 %v4059, 112
      %v4129 = vpop.permute.xlu0 %4128
      %4130 = vrot.lane.b32.xlu0 %v4060, 112
      %v4131 = vpop.permute.xlu0 %4130
      %4132 = vrot.lane.b32.xlu0 %v4061, 112
      %v4133 = vpop.permute.xlu0 %4132
      %4134 = vrot.lane.b32.xlu0 %v4062, 112
      %v4135 = vpop.permute.xlu0 %4134
      %4136 = vrot.lane.b32.xlu0 %v4063, 112
      %v4137 = vpop.permute.xlu0 %4136
      %4138 = vrot.lane.b32.xlu0 %v4064, 112
      %v4139 = vpop.permute.xlu0 %4138
      %4140 = vrot.lane.b32.xlu0 %v4065, 112
      %v4141 = vpop.permute.xlu0 %4140
      %4142 = vrot.lane.b32.xlu0 %v4066, 112
      %v4143 = vpop.permute.xlu0 %4142
      %4144 = vrot.lane.b32.xlu0 %v4067, 112
      %v4145 = vpop.permute.xlu0 %4144
      %4146 = vrot.lane.b32.xlu0 %v4068, 112
      %v4147 = vpop.permute.xlu0 %4146
      %4148 = vrot.lane.b32.xlu0 %v4069, 112
      %v4149 = vpop.permute.xlu0 %4148
      %4150 = vrot.lane.b32.xlu0 %v4070, 112
      %v4151 = vpop.permute.xlu0 %4150
      %4152 = vrot.lane.b32.xlu0 %v4071, 112
      %v4153 = vpop.permute.xlu0 %4152
      %4154 = vrot.lane.b32.xlu0 %v4072, 112
      %v4155 = vpop.permute.xlu0 %4154
      %4156 = vrot.lane.b32.xlu0 %v4073, 112
      %v4157 = vpop.permute.xlu0 %4156
      %4158 = vrot.lane.b32.xlu0 %v4074, 112
      %v4159 = vpop.permute.xlu0 %4158
      %4160 = vrot.lane.b32.xlu0 %v4075, 112
      %v4161 = vpop.permute.xlu0 %4160
      %4162 = vrot.lane.b32.xlu0 %v4076, 112
      %v4163 = vpop.permute.xlu0 %4162
      %4164 = vrot.lane.b32.xlu0 %v4077, 112
      %v4165 = vpop.permute.xlu0 %4164
      %4166 = vrot.lane.b32.xlu0 %v4078, 112
      %v4167 = vpop.permute.xlu0 %4166
      %4168 = vrot.lane.b32.xlu0 %v4079, 112
      %v4169 = vpop.permute.xlu0 %4168
      %4170 = vrot.lane.b32.xlu0 %v4080, 112
      %v4171 = vpop.permute.xlu0 %4170
      %4172 = vrot.lane.b32.xlu0 %v4081, 112
      %v4173 = vpop.permute.xlu0 %4172
      %4174 = vrot.lane.b32.xlu0 %v4082, 112
      %v4175 = vpop.permute.xlu0 %4174
      %4176 = vrot.lane.b32.xlu0 %v4083, 112
      %v4177 = vpop.permute.xlu0 %4176
      %4178 = vrot.lane.b32.xlu0 %v4084, 112
      %v4179 = vpop.permute.xlu0 %4178
      %4180 = vrot.lane.b32.xlu0 %v4085, 112
      %v4181 = vpop.permute.xlu0 %4180
      %vm4214 = vcmask 1048448
      %4215 = vst.msk [vmem:[#allocation3] sm:$0xff] %vm4214, %v4119
      %4216 = vst.msk [vmem:[#allocation3 + $0x10] sm:$0xff] %vm4214, %v4121
      %4217 = vst.msk [vmem:[#allocation3 + $0x20] sm:$0xff] %vm4214, %v4123
      %4218 = vst.msk [vmem:[#allocation3 + $0x30] sm:$0xff] %vm4214, %v4125
      %4219 = vst.msk [vmem:[#allocation3 + $0x40] sm:$0xff] %vm4214, %v4127
      %4220 = vst.msk [vmem:[#allocation3 + $0x50] sm:$0xff] %vm4214, %v4129
      %4221 = vst.msk [vmem:[#allocation3 + $0x60] sm:$0xff] %vm4214, %v4131
      %4222 = vst.msk [vmem:[#allocation3 + $0x70] sm:$0xff] %vm4214, %v4133
      %4223 = vst.msk [vmem:[#allocation3 + $0x80] sm:$0xff] %vm4214, %v4135
      %4224 = vst.msk [vmem:[#allocation3 + $0x90] sm:$0xff] %vm4214, %v4137
      %4225 = vst.msk [vmem:[#allocation3 + $0xa0] sm:$0xff] %vm4214, %v4139
      %4226 = vst.msk [vmem:[#allocation3 + $0xb0] sm:$0xff] %vm4214, %v4141
      %4227 = vst.msk [vmem:[#allocation3 + $0xc0] sm:$0xff] %vm4214, %v4143
      %4228 = vst.msk [vmem:[#allocation3 + $0xd0] sm:$0xff] %vm4214, %v4145
      %4229 = vst.msk [vmem:[#allocation3 + $0xe0] sm:$0xff] %vm4214, %v4147
      %4230 = vst.msk [vmem:[#allocation3 + $0xf0] sm:$0xff] %vm4214, %v4149
      %4231 = vst.msk [vmem:[#allocation3 + $0x100] sm:$0xff] %vm4214, %v4151
      %4232 = vst.msk [vmem:[#allocation3 + $0x110] sm:$0xff] %vm4214, %v4153
      %4233 = vst.msk [vmem:[#allocation3 + $0x120] sm:$0xff] %vm4214, %v4155
      %4234 = vst.msk [vmem:[#allocation3 + $0x130] sm:$0xff] %vm4214, %v4157
      %4235 = vst.msk [vmem:[#allocation3 + $0x140] sm:$0xff] %vm4214, %v4159
      %4236 = vst.msk [vmem:[#allocation3 + $0x150] sm:$0xff] %vm4214, %v4161
      %4237 = vst.msk [vmem:[#allocation3 + $0x160] sm:$0xff] %vm4214, %v4163
      %4238 = vst.msk [vmem:[#allocation3 + $0x170] sm:$0xff] %vm4214, %v4165
      %4239 = vst.msk [vmem:[#allocation3 + $0x180] sm:$0xff] %vm4214, %v4167
      %4240 = vst.msk [vmem:[#allocation3 + $0x190] sm:$0xff] %vm4214, %v4169
      %4241 = vst.msk [vmem:[#allocation3 + $0x1a0] sm:$0xff] %vm4214, %v4171
      %4242 = vst.msk [vmem:[#allocation3 + $0x1b0] sm:$0xff] %vm4214, %v4173
      %4243 = vst.msk [vmem:[#allocation3 + $0x1c0] sm:$0xff] %vm4214, %v4175
      %4244 = vst.msk [vmem:[#allocation3 + $0x1d0] sm:$0xff] %vm4214, %v4177
      %4245 = vst.msk [vmem:[#allocation3 + $0x1e0] sm:$0xff] %vm4214, %v4179
      %4246 = vst.msk [vmem:[#allocation3 + $0x1f0] sm:$0xff] %vm4214, %v4181
      %v4247 = vld [vmem:[%s1787 + $0x2] sm:$0xff]
      %v4248 = vld [vmem:[%s1787 + $0xa] sm:$0xff]
      %v4249 = vld [vmem:[%s1787 + $0x1a] sm:$0xff]
      %v4250 = vld [vmem:[%s1787 + $0x22] sm:$0xff]
      %v4251 = vld [vmem:[%s1787 + $0x32] sm:$0xff]
      %v4252 = vld [vmem:[%s1787 + $0x3a] sm:$0xff]
      %v4253 = vld [vmem:[%s1787 + $0x4a] sm:$0xff]
      %v4254 = vld [vmem:[%s1787 + $0x52] sm:$0xff]
      %v4255 = vld [vmem:[%s1787 + $0x62] sm:$0xff]
      %v4256 = vld [vmem:[%s1787 + $0x6a] sm:$0xff]
      %v4257 = vld [vmem:[%s1787 + $0x7a] sm:$0xff]
      %v4258 = vld [vmem:[%s1787 + $0x82] sm:$0xff]
      %v4259 = vld [vmem:[%s1787 + $0x92] sm:$0xff]
      %v4260 = vld [vmem:[%s1787 + $0x9a] sm:$0xff]
      %v4261 = vld [vmem:[%s1787 + $0xaa] sm:$0xff]
      %v4262 = vld [vmem:[%s1787 + $0xb2] sm:$0xff]
      %v4263 = vld [vmem:[%s1787 + $0xc2] sm:$0xff]
      %v4264 = vld [vmem:[%s1787 + $0xca] sm:$0xff]
      %v4265 = vld [vmem:[%s1787 + $0xda] sm:$0xff]
      %v4266 = vld [vmem:[%s1787 + $0xe2] sm:$0xff]
      %v4267 = vld [vmem:[%s1787 + $0xf2] sm:$0xff]
      %v4268 = vld [vmem:[%s1787 + $0xfa] sm:$0xff]
      %v4269 = vld [vmem:[%s1787 + $0x10a] sm:$0xff]
      %v4270 = vld [vmem:[%s1787 + $0x112] sm:$0xff]
      %v4271 = vld [vmem:[%s1787 + $0x122] sm:$0xff]
      %v4272 = vld [vmem:[%s1787 + $0x12a] sm:$0xff]
      %v4273 = vld [vmem:[%s1787 + $0x13a] sm:$0xff]
      %v4274 = vld [vmem:[%s1787 + $0x142] sm:$0xff]
      %v4275 = vld [vmem:[%s1787 + $0x152] sm:$0xff]
      %v4276 = vld [vmem:[%s1787 + $0x15a] sm:$0xff]
      %v4277 = vld [vmem:[%s1787 + $0x16a] sm:$0xff]
      %v4278 = vld [vmem:[%s1787 + $0x172] sm:$0xff]
      %4279 = vst.msk [vmem:[#allocation3 + $0x8] sm:$0xff] %vm380, %v4247
      %4280 = vst.msk [vmem:[#allocation3 + $0x18] sm:$0xff] %vm380, %v4248
      %4281 = vst.msk [vmem:[#allocation3 + $0x28] sm:$0xff] %vm380, %v4249
      %4282 = vst.msk [vmem:[#allocation3 + $0x38] sm:$0xff] %vm380, %v4250
      %4283 = vst.msk [vmem:[#allocation3 + $0x48] sm:$0xff] %vm380, %v4251
      %4284 = vst.msk [vmem:[#allocation3 + $0x58] sm:$0xff] %vm380, %v4252
      %4285 = vst.msk [vmem:[#allocation3 + $0x68] sm:$0xff] %vm380, %v4253
      %4286 = vst.msk [vmem:[#allocation3 + $0x78] sm:$0xff] %vm380, %v4254
      %4287 = vst.msk [vmem:[#allocation3 + $0x88] sm:$0xff] %vm380, %v4255
      %4288 = vst.msk [vmem:[#allocation3 + $0x98] sm:$0xff] %vm380, %v4256
      %4289 = vst.msk [vmem:[#allocation3 + $0xa8] sm:$0xff] %vm380, %v4257
      %4290 = vst.msk [vmem:[#allocation3 + $0xb8] sm:$0xff] %vm380, %v4258
      %4291 = vst.msk [vmem:[#allocation3 + $0xc8] sm:$0xff] %vm380, %v4259
      %4292 = vst.msk [vmem:[#allocation3 + $0xd8] sm:$0xff] %vm380, %v4260
      %4293 = vst.msk [vmem:[#allocation3 + $0xe8] sm:$0xff] %vm380, %v4261
      %4294 = vst.msk [vmem:[#allocation3 + $0xf8] sm:$0xff] %vm380, %v4262
      %4295 = vst.msk [vmem:[#allocation3 + $0x108] sm:$0xff] %vm380, %v4263
      %4296 = vst.msk [vmem:[#allocation3 + $0x118] sm:$0xff] %vm380, %v4264
      %4297 = vst.msk [vmem:[#allocation3 + $0x128] sm:$0xff] %vm380, %v4265
      %4298 = vst.msk [vmem:[#allocation3 + $0x138] sm:$0xff] %vm380, %v4266
      %4299 = vst.msk [vmem:[#allocation3 + $0x148] sm:$0xff] %vm380, %v4267
      %4300 = vst.msk [vmem:[#allocation3 + $0x158] sm:$0xff] %vm380, %v4268
      %4301 = vst.msk [vmem:[#allocation3 + $0x168] sm:$0xff] %vm380, %v4269
      %4302 = vst.msk [vmem:[#allocation3 + $0x178] sm:$0xff] %vm380, %v4270
      %4303 = vst.msk [vmem:[#allocation3 + $0x188] sm:$0xff] %vm380, %v4271
      %4304 = vst.msk [vmem:[#allocation3 + $0x198] sm:$0xff] %vm380, %v4272
      %4305 = vst.msk [vmem:[#allocation3 + $0x1a8] sm:$0xff] %vm380, %v4273
      %4306 = vst.msk [vmem:[#allocation3 + $0x1b8] sm:$0xff] %vm380, %v4274
      %4307 = vst.msk [vmem:[#allocation3 + $0x1c8] sm:$0xff] %vm380, %v4275
      %4308 = vst.msk [vmem:[#allocation3 + $0x1d8] sm:$0xff] %vm380, %v4276
      %4309 = vst.msk [vmem:[#allocation3 + $0x1e8] sm:$0xff] %vm380, %v4277
      %4310 = vst.msk [vmem:[#allocation3 + $0x1f8] sm:$0xff] %vm380, %v4278
      %v4311 = vld [vmem:[#allocation3] sm:$0xff]
      %v4312 = vld [vmem:[#allocation3 + $0x8] sm:$0xff]
      %v4313 = vld [vmem:[#allocation3 + $0x10] sm:$0xff]
      %v4314 = vld [vmem:[#allocation3 + $0x18] sm:$0xff]
      %v4315 = vld [vmem:[#allocation3 + $0x20] sm:$0xff]
      %v4316 = vld [vmem:[#allocation3 + $0x28] sm:$0xff]
      %v4317 = vld [vmem:[#allocation3 + $0x30] sm:$0xff]
      %v4318 = vld [vmem:[#allocation3 + $0x38] sm:$0xff]
      %v4319 = vld [vmem:[#allocation3 + $0x40] sm:$0xff]
      %v4320 = vld [vmem:[#allocation3 + $0x48] sm:$0xff]
      %v4321 = vld [vmem:[#allocation3 + $0x50] sm:$0xff]
      %v4322 = vld [vmem:[#allocation3 + $0x58] sm:$0xff]
      %v4323 = vld [vmem:[#allocation3 + $0x60] sm:$0xff]
      %v4324 = vld [vmem:[#allocation3 + $0x68] sm:$0xff]
      %v4325 = vld [vmem:[#allocation3 + $0x70] sm:$0xff]
      %v4326 = vld [vmem:[#allocation3 + $0x78] sm:$0xff]
      %v4327 = vld [vmem:[#allocation3 + $0x80] sm:$0xff]
      %v4328 = vld [vmem:[#allocation3 + $0x88] sm:$0xff]
      %v4329 = vld [vmem:[#allocation3 + $0x90] sm:$0xff]
      %v4330 = vld [vmem:[#allocation3 + $0x98] sm:$0xff]
      %v4331 = vld [vmem:[#allocation3 + $0xa0] sm:$0xff]
      %v4332 = vld [vmem:[#allocation3 + $0xa8] sm:$0xff]
      %v4333 = vld [vmem:[#allocation3 + $0xb0] sm:$0xff]
      %v4334 = vld [vmem:[#allocation3 + $0xb8] sm:$0xff]
      %v4335 = vld [vmem:[#allocation3 + $0xc0] sm:$0xff]
      %v4336 = vld [vmem:[#allocation3 + $0xc8] sm:$0xff]
      %v4337 = vld [vmem:[#allocation3 + $0xd0] sm:$0xff]
      %v4338 = vld [vmem:[#allocation3 + $0xd8] sm:$0xff]
      %v4339 = vld [vmem:[#allocation3 + $0xe0] sm:$0xff]
      %v4340 = vld [vmem:[#allocation3 + $0xe8] sm:$0xff]
      %v4341 = vld [vmem:[#allocation3 + $0xf0] sm:$0xff]
      %v4342 = vld [vmem:[#allocation3 + $0xf8] sm:$0xff]
      %v4343 = vld [vmem:[#allocation3 + $0x100] sm:$0xff]
      %v4344 = vld [vmem:[#allocation3 + $0x108] sm:$0xff]
      %v4345 = vld [vmem:[#allocation3 + $0x110] sm:$0xff]
      %v4346 = vld [vmem:[#allocation3 + $0x118] sm:$0xff]
      %v4347 = vld [vmem:[#allocation3 + $0x120] sm:$0xff]
      %v4348 = vld [vmem:[#allocation3 + $0x128] sm:$0xff]
      %v4349 = vld [vmem:[#allocation3 + $0x130] sm:$0xff]
      %v4350 = vld [vmem:[#allocation3 + $0x138] sm:$0xff]
      %v4351 = vld [vmem:[#allocation3 + $0x140] sm:$0xff]
      %v4352 = vld [vmem:[#allocation3 + $0x148] sm:$0xff]
      %v4353 = vld [vmem:[#allocation3 + $0x150] sm:$0xff]
      %v4354 = vld [vmem:[#allocation3 + $0x158] sm:$0xff]
      %v4355 = vld [vmem:[#allocation3 + $0x160] sm:$0xff]
      %v4356 = vld [vmem:[#allocation3 + $0x168] sm:$0xff]
      %v4357 = vld [vmem:[#allocation3 + $0x170] sm:$0xff]
      %v4358 = vld [vmem:[#allocation3 + $0x178] sm:$0xff]
      %v4359 = vld [vmem:[#allocation3 + $0x180] sm:$0xff]
      %v4360 = vld [vmem:[#allocation3 + $0x188] sm:$0xff]
      %v4361 = vld [vmem:[#allocation3 + $0x190] sm:$0xff]
      %v4362 = vld [vmem:[#allocation3 + $0x198] sm:$0xff]
      %v4363 = vld [vmem:[#allocation3 + $0x1a0] sm:$0xff]
      %v4364 = vld [vmem:[#allocation3 + $0x1a8] sm:$0xff]
      %v4365 = vld [vmem:[#allocation3 + $0x1b0] sm:$0xff]
      %v4366 = vld [vmem:[#allocation3 + $0x1b8] sm:$0xff]
      %v4367 = vld [vmem:[#allocation3 + $0x1c0] sm:$0xff]
      %v4368 = vld [vmem:[#allocation3 + $0x1c8] sm:$0xff]
      %v4369 = vld [vmem:[#allocation3 + $0x1d0] sm:$0xff]
      %v4370 = vld [vmem:[#allocation3 + $0x1d8] sm:$0xff]
      %v4371 = vld [vmem:[#allocation3 + $0x1e0] sm:$0xff]
      %v4372 = vld [vmem:[#allocation3 + $0x1e8] sm:$0xff]
      %v4373 = vld [vmem:[#allocation3 + $0x1f0] sm:$0xff]
      %v4374 = vld [vmem:[#allocation3 + $0x1f8] sm:$0xff]
      %v4375 = vld [vmem:[%s4] sm:$0xff]
      %v4376 = vld [vmem:[%s4 + $0x8] sm:$0xff]
      %v4377 = vld [vmem:[%s4 + $0x10] sm:$0xff]
      %v4378 = vld [vmem:[%s4 + $0x18] sm:$0xff]
      %v4379 = vld [vmem:[%s4 + $0x20] sm:$0xff]
      %v4380 = vld [vmem:[%s4 + $0x28] sm:$0xff]
      %v4381 = vld [vmem:[%s4 + $0x30] sm:$0xff]
      %v4382 = vld [vmem:[%s4 + $0x38] sm:$0xff]
      %v4383 = vld [vmem:[%s4 + $0x40] sm:$0xff]
      %v4384 = vld [vmem:[%s4 + $0x48] sm:$0xff]
      %v4385 = vld [vmem:[%s4 + $0x50] sm:$0xff]
      %v4386 = vld [vmem:[%s4 + $0x58] sm:$0xff]
      %v4387 = vld [vmem:[%s4 + $0x60] sm:$0xff]
      %v4388 = vld [vmem:[%s4 + $0x68] sm:$0xff]
      %v4389 = vld [vmem:[%s4 + $0x70] sm:$0xff]
      %v4390 = vld [vmem:[%s4 + $0x78] sm:$0xff]
      %v4391 = vld [vmem:[%s4 + $0x80] sm:$0xff]
      %v4392 = vld [vmem:[%s4 + $0x88] sm:$0xff]
      %v4393 = vld [vmem:[%s5] sm:$0x1]
      %v4395 = vlaneseq
      %v4396 = vshrl.u32 %v4395, 7
      %v4397 = vsub.s32 0, %v4396
      %v4398 = vrot.slane %v4393, %v4397
      %v4401 = vsel %vm380, %v4312, 0
      %v4404 = vsel %vm380, %v4314, 0
      %v4407 = vsel %vm380, %v4316, 0
      %v4410 = vsel %vm380, %v4318, 0
      %v4413 = vsel %vm380, %v4320, 0
      %v4416 = vsel %vm380, %v4322, 0
      %v4419 = vsel %vm380, %v4324, 0
      %v4422 = vsel %vm380, %v4326, 0
      %v4425 = vsel %vm380, %v4328, 0
      %v4428 = vsel %vm380, %v4330, 0
      %v4431 = vsel %vm380, %v4332, 0
      %v4434 = vsel %vm380, %v4334, 0
      %v4437 = vsel %vm380, %v4336, 0
      %v4440 = vsel %vm380, %v4338, 0
      %v4443 = vsel %vm380, %v4340, 0
      %v4446 = vsel %vm380, %v4342, 0
      %v4449 = vsel %vm380, %v4344, 0
      %v4452 = vsel %vm380, %v4346, 0
      %v4455 = vsel %vm380, %v4348, 0
      %v4458 = vsel %vm380, %v4350, 0
      %v4461 = vsel %vm380, %v4352, 0
      %v4464 = vsel %vm380, %v4354, 0
      %v4467 = vsel %vm380, %v4356, 0
      %v4470 = vsel %vm380, %v4358, 0
      %v4473 = vsel %vm380, %v4360, 0
      %v4476 = vsel %vm380, %v4362, 0
      %v4479 = vsel %vm380, %v4364, 0
      %v4482 = vsel %vm380, %v4366, 0
      %v4485 = vsel %vm380, %v4368, 0
      %v4488 = vsel %vm380, %v4370, 0
      %v4491 = vsel %vm380, %v4372, 0
      %v4494 = vsel %vm380, %v4374, 0
      %4496 = vmatprep.subr.mxu0 0.0
      %4497 = vmatpush1.msra.mxu0 %v4375
      %4498 = vmatprep.subr.mxu0 0.0
      %4499 = vmatpush1.msra.mxu0 %v4376
      %4500 = vmatprep.subr.mxu0 0.0
      %4501 = vmatpush1.msra.mxu0 %v4377
      %4502 = vmatprep.subr.mxu0 0.0
      %4503 = vmatpush1.msra.mxu0 %v4378
      %4504 = vmatprep.subr.mxu0 0.0
      %4505 = vmatpush1.msra.mxu0 %v4379
      %4506 = vmatprep.subr.mxu0 0.0
      %4507 = vmatpush1.msra.mxu0 %v4380
      %4508 = vmatprep.subr.mxu0 0.0
      %4509 = vmatpush1.msra.mxu0 %v4381
      %4510 = vmatprep.subr.mxu0 0.0
      %4511 = vmatpush1.msra.mxu0 %v4382
      %4512 = vmatprep.subr.mxu0 0.0
      %4513 = vmatpush1.msra.mxu0 %v4383
      %4514 = vmatprep.subr.mxu0 0.0
      %4515 = vmatpush1.msra.mxu0 %v4384
      %4516 = vmatprep.subr.mxu0 0.0
      %4517 = vmatpush1.msra.mxu0 %v4385
      %4518 = vmatprep.subr.mxu0 0.0
      %4519 = vmatpush1.msra.mxu0 %v4386
      %4520 = vmatprep.subr.mxu0 0.0
      %4521 = vmatpush1.msra.mxu0 %v4387
      %4522 = vmatprep.subr.mxu0 0.0
      %4523 = vmatpush1.msra.mxu0 %v4388
      %4524 = vmatprep.subr.mxu0 0.0
      %4525 = vmatpush1.msra.mxu0 %v4389
      %4526 = vmatprep.subr.mxu0 0.0
      %4527 = vmatpush1.msra.mxu0 %v4390
      %4528 = vmatprep.subr.mxu0 0.0
      %4529 = vmatpush1.msra.mxu0 %v4391
      %4530 = vmatprep.subr.mxu0 0.0
      %4531 = vmatpush1.msra.mxu0 %v4392
      %4532 = vmatprep.subr.mxu0 0.0
      %4533 = vmatpush1.msra.mxu0 0.0
      %4534 = vmatprep.subr.mxu0 0.0
      %4535 = vmatpush1.msra.mxu0 0.0
      %4536 = vmatprep.subr.mxu0 0.0
      %4537 = vmatpush1.msra.mxu0 0.0
      %4538 = vmatprep.subr.mxu0 0.0
      %4539 = vmatpush1.msra.mxu0 0.0
      %4540 = vmatprep.subr.mxu0 0.0
      %4541 = vmatpush1.msra.mxu0 0.0
      %4542 = vmatprep.subr.mxu0 0.0
      %4543 = vmatpush1.msra.mxu0 0.0
      %4544 = vmatprep.subr.mxu0 0.0
      %4545 = vmatpush1.msra.mxu0 0.0
      %4546 = vmatprep.subr.mxu0 0.0
      %4547 = vmatpush1.msra.mxu0 0.0
      %4548 = vmatprep.subr.mxu0 0.0
      %4549 = vmatpush1.msra.mxu0 0.0
      %4550 = vmatprep.subr.mxu0 0.0
      %4551 = vmatpush1.msra.mxu0 0.0
      %4552 = vmatprep.subr.mxu0 0.0
      %4553 = vmatpush1.msra.mxu0 0.0
      %4554 = vmatprep.subr.mxu0 0.0
      %4555 = vmatpush1.msra.mxu0 0.0
      %4556 = vmatprep.subr.mxu0 0.0
      %4557 = vmatpush1.msra.mxu0 0.0
      %4558 = vmatprep.subr.mxu0 0.0
      %4559 = vmatpush1.msra.mxu0 0.0
      %4560 = vmatprep.mubr.f32.mxu0 %v4401
      %4561 = vmatmul.mubr.f32.gmra.mrb[0].mxu0 %v4311
      %v4562 = vpop.f32.mrb[0].mxu0
      %v4563 = vadd.f32 %v4398, %v4562
      %v4564 = vpop.f32.mrb[0].mxu0
      %4565 = vmatprep.mubr.f32.mxu0 %v4404
      %4566 = vmatmul.mubr.f32.gmra.mrb[0].mxu0 %v4313
      %v4567 = vpop.f32.mrb[0].mxu0
      %v4568 = vadd.f32 %v4398, %v4567
      %v4569 = vpop.f32.mrb[0].mxu0
      %4570 = vmatprep.mubr.f32.mxu0 %v4407
      %4571 = vmatmul.mubr.f32.gmra.mrb[0].mxu0 %v4315
      %v4572 = vpop.f32.mrb[0].mxu0
      %v4573 = vadd.f32 %v4398, %v4572
      %v4574 = vpop.f32.mrb[0].mxu0
      %4575 = vmatprep.mubr.f32.mxu0 %v4410
      %4576 = vmatmul.mubr.f32.gmra.mrb[0].mxu0 %v4317
      %v4577 = vpop.f32.mrb[0].mxu0
      %v4578 = vadd.f32 %v4398, %v4577
      %v4579 = vpop.f32.mrb[0].mxu0
      %4580 = vmatprep.mubr.f32.mxu0 %v4413
      %4581 = vmatmul.mubr.f32.gmra.mrb[0].mxu0 %v4319
      %v4582 = vpop.f32.mrb[0].mxu0
      %v4583 = vadd.f32 %v4398, %v4582
      %v4584 = vpop.f32.mrb[0].mxu0
      %4585 = vmatprep.mubr.f32.mxu0 %v4416
      %4586 = vmatmul.mubr.f32.gmra.mrb[0].mxu0 %v4321
      %v4587 = vpop.f32.mrb[0].mxu0
      %v4588 = vadd.f32 %v4398, %v4587
      %v4589 = vpop.f32.mrb[0].mxu0
      %4590 = vmatprep.mubr.f32.mxu0 %v4419
      %4591 = vmatmul.mubr.f32.gmra.mrb[0].mxu0 %v4323
      %v4592 = vpop.f32.mrb[0].mxu0
      %v4593 = vadd.f32 %v4398, %v4592
      %v4594 = vpop.f32.mrb[0].mxu0
      %4595 = vmatprep.mubr.f32.mxu0 %v4422
      %4596 = vmatmul.mubr.f32.gmra.mrb[0].mxu0 %v4325
      %v4597 = vpop.f32.mrb[0].mxu0
      %v4598 = vadd.f32 %v4398, %v4597
      %v4599 = vpop.f32.mrb[0].mxu0
      %4600 = vmatprep.mubr.f32.mxu0 %v4425
      %4601 = vmatmul.mubr.f32.gmra.mrb[0].mxu0 %v4327
      %v4602 = vpop.f32.mrb[0].mxu0
      %v4603 = vadd.f32 %v4398, %v4602
      %v4604 = vpop.f32.mrb[0].mxu0
      %4605 = vmatprep.mubr.f32.mxu0 %v4428
      %4606 = vmatmul.mubr.f32.gmra.mrb[0].mxu0 %v4329
      %v4607 = vpop.f32.mrb[0].mxu0
      %v4608 = vadd.f32 %v4398, %v4607
      %v4609 = vpop.f32.mrb[0].mxu0
      %4610 = vmatprep.mubr.f32.mxu0 %v4431
      %4611 = vmatmul.mubr.f32.gmra.mrb[0].mxu0 %v4331
      %v4612 = vpop.f32.mrb[0].mxu0
      %v4613 = vadd.f32 %v4398, %v4612
      %v4614 = vpop.f32.mrb[0].mxu0
      %4615 = vmatprep.mubr.f32.mxu0 %v4434
      %4616 = vmatmul.mubr.f32.gmra.mrb[0].mxu0 %v4333
      %v4617 = vpop.f32.mrb[0].mxu0
      %v4618 = vadd.f32 %v4398, %v4617
      %v4619 = vpop.f32.mrb[0].mxu0
      %4620 = vmatprep.mubr.f32.mxu0 %v4437
      %4621 = vmatmul.mubr.f32.gmra.mrb[0].mxu0 %v4335
      %v4622 = vpop.f32.mrb[0].mxu0
      %v4623 = vadd.f32 %v4398, %v4622
      %v4624 = vpop.f32.mrb[0].mxu0
      %4625 = vmatprep.mubr.f32.mxu0 %v4440
      %4626 = vmatmul.mubr.f32.gmra.mrb[0].mxu0 %v4337
      %v4627 = vpop.f32.mrb[0].mxu0
      %v4628 = vadd.f32 %v4398, %v4627
      %v4629 = vpop.f32.mrb[0].mxu0
      %4630 = vmatprep.mubr.f32.mxu0 %v4443
      %4631 = vmatmul.mubr.f32.gmra.mrb[0].mxu0 %v4339
      %v4632 = vpop.f32.mrb[0].mxu0
      %v4633 = vadd.f32 %v4398, %v4632
      %v4634 = vpop.f32.mrb[0].mxu0
      %4635 = vmatprep.mubr.f32.mxu0 %v4446
      %4636 = vmatmul.mubr.f32.gmra.mrb[0].mxu0 %v4341
      %v4637 = vpop.f32.mrb[0].mxu0
      %v4638 = vadd.f32 %v4398, %v4637
      %v4639 = vpop.f32.mrb[0].mxu0
      %4640 = vmatprep.mubr.f32.mxu0 %v4449
      %4641 = vmatmul.mubr.f32.gmra.mrb[0].mxu0 %v4343
      %v4642 = vpop.f32.mrb[0].mxu0
      %v4643 = vadd.f32 %v4398, %v4642
      %v4644 = vpop.f32.mrb[0].mxu0
      %4645 = vmatprep.mubr.f32.mxu0 %v4452
      %4646 = vmatmul.mubr.f32.gmra.mrb[0].mxu0 %v4345
      %v4647 = vpop.f32.mrb[0].mxu0
      %v4648 = vadd.f32 %v4398, %v4647
      %v4649 = vpop.f32.mrb[0].mxu0
      %4650 = vmatprep.mubr.f32.mxu0 %v4455
      %4651 = vmatmul.mubr.f32.gmra.mrb[0].mxu0 %v4347
      %v4652 = vpop.f32.mrb[0].mxu0
      %v4653 = vadd.f32 %v4398, %v4652
      %v4654 = vpop.f32.mrb[0].mxu0
      %4655 = vmatprep.mubr.f32.mxu0 %v4458
      %4656 = vmatmul.mubr.f32.gmra.mrb[0].mxu0 %v4349
      %v4657 = vpop.f32.mrb[0].mxu0
      %v4658 = vadd.f32 %v4398, %v4657
      %v4659 = vpop.f32.mrb[0].mxu0
      %4660 = vmatprep.mubr.f32.mxu0 %v4461
      %4661 = vmatmul.mubr.f32.gmra.mrb[0].mxu0 %v4351
      %v4662 = vpop.f32.mrb[0].mxu0
      %v4663 = vadd.f32 %v4398, %v4662
      %v4664 = vpop.f32.mrb[0].mxu0
      %4665 = vmatprep.mubr.f32.mxu0 %v4464
      %4666 = vmatmul.mubr.f32.gmra.mrb[0].mxu0 %v4353
      %v4667 = vpop.f32.mrb[0].mxu0
      %v4668 = vadd.f32 %v4398, %v4667
      %v4669 = vpop.f32.mrb[0].mxu0
      %4670 = vmatprep.mubr.f32.mxu0 %v4467
      %4671 = vmatmul.mubr.f32.gmra.mrb[0].mxu0 %v4355
      %v4672 = vpop.f32.mrb[0].mxu0
      %v4673 = vadd.f32 %v4398, %v4672
      %v4674 = vpop.f32.mrb[0].mxu0
      %4675 = vmatprep.mubr.f32.mxu0 %v4470
      %4676 = vmatmul.mubr.f32.gmra.mrb[0].mxu0 %v4357
      %v4677 = vpop.f32.mrb[0].mxu0
      %v4678 = vadd.f32 %v4398, %v4677
      %v4679 = vpop.f32.mrb[0].mxu0
      %4680 = vmatprep.mubr.f32.mxu0 %v4473
      %4681 = vmatmul.mubr.f32.gmra.mrb[0].mxu0 %v4359
      %v4682 = vpop.f32.mrb[0].mxu0
      %v4683 = vadd.f32 %v4398, %v4682
      %v4684 = vpop.f32.mrb[0].mxu0
      %4685 = vmatprep.mubr.f32.mxu0 %v4476
      %4686 = vmatmul.mubr.f32.gmra.mrb[0].mxu0 %v4361
      %v4687 = vpop.f32.mrb[0].mxu0
      %v4688 = vadd.f32 %v4398, %v4687
      %v4689 = vpop.f32.mrb[0].mxu0
      %4690 = vmatprep.mubr.f32.mxu0 %v4479
      %4691 = vmatmul.mubr.f32.gmra.mrb[0].mxu0 %v4363
      %v4692 = vpop.f32.mrb[0].mxu0
      %v4693 = vadd.f32 %v4398, %v4692
      %v4694 = vpop.f32.mrb[0].mxu0
      %4695 = vmatprep.mubr.f32.mxu0 %v4482
      %4696 = vmatmul.mubr.f32.gmra.mrb[0].mxu0 %v4365
      %v4697 = vpop.f32.mrb[0].mxu0
      %v4698 = vadd.f32 %v4398, %v4697
      %v4699 = vpop.f32.mrb[0].mxu0
      %4700 = vmatprep.mubr.f32.mxu0 %v4485
      %4701 = vmatmul.mubr.f32.gmra.mrb[0].mxu0 %v4367
      %v4702 = vpop.f32.mrb[0].mxu0
      %v4703 = vadd.f32 %v4398, %v4702
      %v4704 = vpop.f32.mrb[0].mxu0
      %4705 = vmatprep.mubr.f32.mxu0 %v4488
      %4706 = vmatmul.mubr.f32.gmra.mrb[0].mxu0 %v4369
      %v4707 = vpop.f32.mrb[0].mxu0
      %v4708 = vadd.f32 %v4398, %v4707
      %v4709 = vpop.f32.mrb[0].mxu0
      %4710 = vmatprep.mubr.f32.mxu0 %v4491
      %4711 = vmatmul.mubr.f32.gmra.mrb[0].mxu0 %v4371
      %v4712 = vpop.f32.mrb[0].mxu0
      %v4713 = vadd.f32 %v4398, %v4712
      %v4714 = vpop.f32.mrb[0].mxu0
      %4715 = vmatprep.mubr.f32.mxu0 %v4494
      %4716 = vmatmul.mubr.f32.gmra.mrb[0].mxu0 %v4373
      %v4717 = vpop.f32.mrb[0].mxu0
      %v4718 = vadd.f32 %v4398, %v4717
      %v4719 = vpop.f32.mrb[0].mxu0
      %4720 = vdwg.mxu0
      %v4721 = vmax.f32 %v4563, 0.0
      %v4722 = vmax.f32 %v4568, 0.0
      %v4723 = vmax.f32 %v4573, 0.0
      %v4724 = vmax.f32 %v4578, 0.0
      %v4725 = vmax.f32 %v4583, 0.0
      %v4726 = vmax.f32 %v4588, 0.0
      %v4727 = vmax.f32 %v4593, 0.0
      %v4728 = vmax.f32 %v4598, 0.0
      %v4729 = vmax.f32 %v4603, 0.0
      %v4730 = vmax.f32 %v4608, 0.0
      %v4731 = vmax.f32 %v4613, 0.0
      %v4732 = vmax.f32 %v4618, 0.0
      %v4733 = vmax.f32 %v4623, 0.0
      %v4734 = vmax.f32 %v4628, 0.0
      %v4735 = vmax.f32 %v4633, 0.0
      %v4736 = vmax.f32 %v4638, 0.0
      %v4737 = vmax.f32 %v4643, 0.0
      %v4738 = vmax.f32 %v4648, 0.0
      %v4739 = vmax.f32 %v4653, 0.0
      %v4740 = vmax.f32 %v4658, 0.0
      %v4741 = vmax.f32 %v4663, 0.0
      %v4742 = vmax.f32 %v4668, 0.0
      %v4743 = vmax.f32 %v4673, 0.0
      %v4744 = vmax.f32 %v4678, 0.0
      %v4745 = vmax.f32 %v4683, 0.0
      %v4746 = vmax.f32 %v4688, 0.0
      %v4747 = vmax.f32 %v4693, 0.0
      %v4748 = vmax.f32 %v4698, 0.0
      %v4749 = vmax.f32 %v4703, 0.0
      %v4750 = vmax.f32 %v4708, 0.0
      %v4751 = vmax.f32 %v4713, 0.0
      %v4752 = vmax.f32 %v4718, 0.0
      %v4753 = vmul.f32 %v4721, %v503
      %v4754 = vmul.f32 %v4722, %v508
      %v4755 = vmul.f32 %v4723, %v513
      %v4756 = vmul.f32 %v4724, %v518
      %v4757 = vmul.f32 %v4725, %v523
      %v4758 = vmul.f32 %v4726, %v528
      %v4759 = vmul.f32 %v4727, %v533
      %v4760 = vmul.f32 %v4728, %v538
      %v4761 = vmul.f32 %v4729, %v543
      %v4762 = vmul.f32 %v4730, %v548
      %v4763 = vmul.f32 %v4731, %v553
      %v4764 = vmul.f32 %v4732, %v558
      %v4765 = vmul.f32 %v4733, %v563
      %v4766 = vmul.f32 %v4734, %v568
      %v4767 = vmul.f32 %v4735, %v573
      %v4768 = vmul.f32 %v4736, %v578
      %v4769 = vmul.f32 %v4737, %v583
      %v4770 = vmul.f32 %v4738, %v588
      %v4771 = vmul.f32 %v4739, %v593
      %v4772 = vmul.f32 %v4740, %v598
      %v4773 = vmul.f32 %v4741, %v603
      %v4774 = vmul.f32 %v4742, %v608
      %v4775 = vmul.f32 %v4743, %v613
      %v4776 = vmul.f32 %v4744, %v618
      %v4777 = vmul.f32 %v4745, %v623
      %v4778 = vmul.f32 %v4746, %v628
      %v4779 = vmul.f32 %v4747, %v633
      %v4780 = vmul.f32 %v4748, %v638
      %v4781 = vmul.f32 %v4749, %v643
      %v4782 = vmul.f32 %v4750, %v648
      %v4783 = vmul.f32 %v4751, %v653
      %v4784 = vmul.f32 %v4752, %v658
      %4785 = vst.msk [vmem:[%s724 + $0x1] sm:$0xff] %vm380, %v4753
      %4786 = vst.msk [vmem:[%s724 + $0x9] sm:$0xff] %vm380, %v4754
      %4787 = vst.msk [vmem:[%s724 + $0x19] sm:$0xff] %vm380, %v4755
      %4788 = vst.msk [vmem:[%s724 + $0x21] sm:$0xff] %vm380, %v4756
      %4789 = vst.msk [vmem:[%s724 + $0x31] sm:$0xff] %vm380, %v4757
      %4790 = vst.msk [vmem:[%s724 + $0x39] sm:$0xff] %vm380, %v4758
      %4791 = vst.msk [vmem:[%s724 + $0x49] sm:$0xff] %vm380, %v4759
      %4792 = vst.msk [vmem:[%s724 + $0x51] sm:$0xff] %vm380, %v4760
      %4793 = vst.msk [vmem:[%s724 + $0x61] sm:$0xff] %vm380, %v4761
      %4794 = vst.msk [vmem:[%s724 + $0x69] sm:$0xff] %vm380, %v4762
      %4795 = vst.msk [vmem:[%s724 + $0x79] sm:$0xff] %vm380, %v4763
      %4796 = vst.msk [vmem:[%s724 + $0x81] sm:$0xff] %vm380, %v4764
      %4797 = vst.msk [vmem:[%s724 + $0x91] sm:$0xff] %vm380, %v4765
      %4798 = vst.msk [vmem:[%s724 + $0x99] sm:$0xff] %vm380, %v4766
      %4799 = vst.msk [vmem:[%s724 + $0xa9] sm:$0xff] %vm380, %v4767
      %4800 = vst.msk [vmem:[%s724 + $0xb1] sm:$0xff] %vm380, %v4768
      %4801 = vst.msk [vmem:[%s724 + $0xc1] sm:$0xff] %vm380, %v4769
      %4802 = vst.msk [vmem:[%s724 + $0xc9] sm:$0xff] %vm380, %v4770
      %4803 = vst.msk [vmem:[%s724 + $0xd9] sm:$0xff] %vm380, %v4771
      %4804 = vst.msk [vmem:[%s724 + $0xe1] sm:$0xff] %vm380, %v4772
      %4805 = vst.msk [vmem:[%s724 + $0xf1] sm:$0xff] %vm380, %v4773
      %4806 = vst.msk [vmem:[%s724 + $0xf9] sm:$0xff] %vm380, %v4774
      %4807 = vst.msk [vmem:[%s724 + $0x109] sm:$0xff] %vm380, %v4775
      %4808 = vst.msk [vmem:[%s724 + $0x111] sm:$0xff] %vm380, %v4776
      %4809 = vst.msk [vmem:[%s724 + $0x121] sm:$0xff] %vm380, %v4777
      %4810 = vst.msk [vmem:[%s724 + $0x129] sm:$0xff] %vm380, %v4778
      %4811 = vst.msk [vmem:[%s724 + $0x139] sm:$0xff] %vm380, %v4779
      %4812 = vst.msk [vmem:[%s724 + $0x141] sm:$0xff] %vm380, %v4780
      %4813 = vst.msk [vmem:[%s724 + $0x151] sm:$0xff] %vm380, %v4781
      %4814 = vst.msk [vmem:[%s724 + $0x159] sm:$0xff] %vm380, %v4782
      %4815 = vst.msk [vmem:[%s724 + $0x169] sm:$0xff] %vm380, %v4783
      %4816 = vst.msk [vmem:[%s724 + $0x171] sm:$0xff] %vm380, %v4784
      %v4817 = vld [vmem:[#allocation2] sm:$0xff]
      %v4818 = vld [vmem:[#allocation2 + $0x8] sm:$0xff]
      %v4819 = vld [vmem:[#allocation2 + $0x18] sm:$0xff]
      %v4820 = vld [vmem:[#allocation2 + $0x20] sm:$0xff]
      %v4821 = vld [vmem:[#allocation2 + $0x30] sm:$0xff]
      %v4822 = vld [vmem:[#allocation2 + $0x38] sm:$0xff]
      %v4823 = vld [vmem:[#allocation2 + $0x48] sm:$0xff]
      %v4824 = vld [vmem:[#allocation2 + $0x50] sm:$0xff]
      %v4825 = vld [vmem:[#allocation2 + $0x60] sm:$0xff]
      %v4826 = vld [vmem:[#allocation2 + $0x68] sm:$0xff]
      %v4827 = vld [vmem:[#allocation2 + $0x78] sm:$0xff]
      %v4828 = vld [vmem:[#allocation2 + $0x80] sm:$0xff]
      %v4829 = vld [vmem:[#allocation2 + $0x90] sm:$0xff]
      %v4830 = vld [vmem:[#allocation2 + $0x98] sm:$0xff]
      %v4831 = vld [vmem:[#allocation2 + $0xa8] sm:$0xff]
      %v4832 = vld [vmem:[#allocation2 + $0xb0] sm:$0xff]
      %v4833 = vld [vmem:[#allocation2 + $0xc0] sm:$0xff]
      %v4834 = vld [vmem:[#allocation2 + $0xc8] sm:$0xff]
      %v4835 = vld [vmem:[#allocation2 + $0xd8] sm:$0xff]
      %v4836 = vld [vmem:[#allocation2 + $0xe0] sm:$0xff]
      %v4837 = vld [vmem:[#allocation2 + $0xf0] sm:$0xff]
      %v4838 = vld [vmem:[#allocation2 + $0xf8] sm:$0xff]
      %v4839 = vld [vmem:[#allocation2 + $0x108] sm:$0xff]
      %v4840 = vld [vmem:[#allocation2 + $0x110] sm:$0xff]
      %v4841 = vld [vmem:[#allocation2 + $0x120] sm:$0xff]
      %v4842 = vld [vmem:[#allocation2 + $0x128] sm:$0xff]
      %v4843 = vld [vmem:[#allocation2 + $0x138] sm:$0xff]
      %v4844 = vld [vmem:[#allocation2 + $0x140] sm:$0xff]
      %v4845 = vld [vmem:[#allocation2 + $0x150] sm:$0xff]
      %v4846 = vld [vmem:[#allocation2 + $0x158] sm:$0xff]
      %v4847 = vld [vmem:[#allocation2 + $0x168] sm:$0xff]
      %v4848 = vld [vmem:[#allocation2 + $0x170] sm:$0xff]
      %4849 = vst.msk [vmem:[#allocation3] sm:$0xff] %vm380, %v4817
      %4850 = vst.msk [vmem:[#allocation3 + $0x10] sm:$0xff] %vm380, %v4818
      %4851 = vst.msk [vmem:[#allocation3 + $0x20] sm:$0xff] %vm380, %v4819
      %4852 = vst.msk [vmem:[#allocation3 + $0x30] sm:$0xff] %vm380, %v4820
      %4853 = vst.msk [vmem:[#allocation3 + $0x40] sm:$0xff] %vm380, %v4821
      %4854 = vst.msk [vmem:[#allocation3 + $0x50] sm:$0xff] %vm380, %v4822
      %4855 = vst.msk [vmem:[#allocation3 + $0x60] sm:$0xff] %vm380, %v4823
      %4856 = vst.msk [vmem:[#allocation3 + $0x70] sm:$0xff] %vm380, %v4824
      %4857 = vst.msk [vmem:[#allocation3 + $0x80] sm:$0xff] %vm380, %v4825
      %4858 = vst.msk [vmem:[#allocation3 + $0x90] sm:$0xff] %vm380, %v4826
      %4859 = vst.msk [vmem:[#allocation3 + $0xa0] sm:$0xff] %vm380, %v4827
      %4860 = vst.msk [vmem:[#allocation3 + $0xb0] sm:$0xff] %vm380, %v4828
      %4861 = vst.msk [vmem:[#allocation3 + $0xc0] sm:$0xff] %vm380, %v4829
      %4862 = vst.msk [vmem:[#allocation3 + $0xd0] sm:$0xff] %vm380, %v4830
      %4863 = vst.msk [vmem:[#allocation3 + $0xe0] sm:$0xff] %vm380, %v4831
      %4864 = vst.msk [vmem:[#allocation3 + $0xf0] sm:$0xff] %vm380, %v4832
      %4865 = vst.msk [vmem:[#allocation3 + $0x100] sm:$0xff] %vm380, %v4833
      %4866 = vst.msk [vmem:[#allocation3 + $0x110] sm:$0xff] %vm380, %v4834
      %4867 = vst.msk [vmem:[#allocation3 + $0x120] sm:$0xff] %vm380, %v4835
      %4868 = vst.msk [vmem:[#allocation3 + $0x130] sm:$0xff] %vm380, %v4836
      %4869 = vst.msk [vmem:[#allocation3 + $0x140] sm:$0xff] %vm380, %v4837
      %4870 = vst.msk [vmem:[#allocation3 + $0x150] sm:$0xff] %vm380, %v4838
      %4871 = vst.msk [vmem:[#allocation3 + $0x160] sm:$0xff] %vm380, %v4839
      %4872 = vst.msk [vmem:[#allocation3 + $0x170] sm:$0xff] %vm380, %v4840
      %4873 = vst.msk [vmem:[#allocation3 + $0x180] sm:$0xff] %vm380, %v4841
      %4874 = vst.msk [vmem:[#allocation3 + $0x190] sm:$0xff] %vm380, %v4842
      %4875 = vst.msk [vmem:[#allocation3 + $0x1a0] sm:$0xff] %vm380, %v4843
      %4876 = vst.msk [vmem:[#allocation3 + $0x1b0] sm:$0xff] %vm380, %v4844
      %4877 = vst.msk [vmem:[#allocation3 + $0x1c0] sm:$0xff] %vm380, %v4845
      %4878 = vst.msk [vmem:[#allocation3 + $0x1d0] sm:$0xff] %vm380, %v4846
      %4879 = vst.msk [vmem:[#allocation3 + $0x1e0] sm:$0xff] %vm380, %v4847
      %4880 = vst.msk [vmem:[#allocation3 + $0x1f0] sm:$0xff] %vm380, %v4848
      %v4881 = vld [vmem:[#allocation2 + $0x1] sm:$0xff]
      %v4882 = vld [vmem:[#allocation2 + $0x9] sm:$0xff]
      %v4883 = vld [vmem:[#allocation2 + $0x19] sm:$0xff]
      %v4884 = vld [vmem:[#allocation2 + $0x21] sm:$0xff]
      %v4885 = vld [vmem:[#allocation2 + $0x31] sm:$0xff]
      %v4886 = vld [vmem:[#allocation2 + $0x39] sm:$0xff]
      %v4887 = vld [vmem:[#allocation2 + $0x49] sm:$0xff]
      %v4888 = vld [vmem:[#allocation2 + $0x51] sm:$0xff]
      %v4889 = vld [vmem:[#allocation2 + $0x61] sm:$0xff]
      %v4890 = vld [vmem:[#allocation2 + $0x69] sm:$0xff]
      %v4891 = vld [vmem:[#allocation2 + $0x79] sm:$0xff]
      %v4892 = vld [vmem:[#allocation2 + $0x81] sm:$0xff]
      %v4893 = vld [vmem:[#allocation2 + $0x91] sm:$0xff]
      %v4894 = vld [vmem:[#allocation2 + $0x99] sm:$0xff]
      %v4895 = vld [vmem:[#allocation2 + $0xa9] sm:$0xff]
      %v4896 = vld [vmem:[#allocation2 + $0xb1] sm:$0xff]
      %v4897 = vld [vmem:[#allocation2 + $0xc1] sm:$0xff]
      %v4898 = vld [vmem:[#allocation2 + $0xc9] sm:$0xff]
      %v4899 = vld [vmem:[#allocation2 + $0xd9] sm:$0xff]
      %v4900 = vld [vmem:[#allocation2 + $0xe1] sm:$0xff]
      %v4901 = vld [vmem:[#allocation2 + $0xf1] sm:$0xff]
      %v4902 = vld [vmem:[#allocation2 + $0xf9] sm:$0xff]
      %v4903 = vld [vmem:[#allocation2 + $0x109] sm:$0xff]
      %v4904 = vld [vmem:[#allocation2 + $0x111] sm:$0xff]
      %v4905 = vld [vmem:[#allocation2 + $0x121] sm:$0xff]
      %v4906 = vld [vmem:[#allocation2 + $0x129] sm:$0xff]
      %v4907 = vld [vmem:[#allocation2 + $0x139] sm:$0xff]
      %v4908 = vld [vmem:[#allocation2 + $0x141] sm:$0xff]
      %v4909 = vld [vmem:[#allocation2 + $0x151] sm:$0xff]
      %v4910 = vld [vmem:[#allocation2 + $0x159] sm:$0xff]
      %v4911 = vld [vmem:[#allocation2 + $0x169] sm:$0xff]
      %v4912 = vld [vmem:[#allocation2 + $0x171] sm:$0xff]
      %4945 = vrot.lane.b32.xlu0 %v4881, 16
      %v4946 = vpop.permute.xlu0 %4945
      %4947 = vrot.lane.b32.xlu0 %v4882, 16
      %v4948 = vpop.permute.xlu0 %4947
      %4949 = vrot.lane.b32.xlu0 %v4883, 16
      %v4950 = vpop.permute.xlu0 %4949
      %4951 = vrot.lane.b32.xlu0 %v4884, 16
      %v4952 = vpop.permute.xlu0 %4951
      %4953 = vrot.lane.b32.xlu0 %v4885, 16
      %v4954 = vpop.permute.xlu0 %4953
      %4955 = vrot.lane.b32.xlu0 %v4886, 16
      %v4956 = vpop.permute.xlu0 %4955
      %4957 = vrot.lane.b32.xlu0 %v4887, 16
      %v4958 = vpop.permute.xlu0 %4957
      %4959 = vrot.lane.b32.xlu0 %v4888, 16
      %v4960 = vpop.permute.xlu0 %4959
      %4961 = vrot.lane.b32.xlu0 %v4889, 16
      %v4962 = vpop.permute.xlu0 %4961
      %4963 = vrot.lane.b32.xlu0 %v4890, 16
      %v4964 = vpop.permute.xlu0 %4963
      %4965 = vrot.lane.b32.xlu0 %v4891, 16
      %v4966 = vpop.permute.xlu0 %4965
      %4967 = vrot.lane.b32.xlu0 %v4892, 16
      %v4968 = vpop.permute.xlu0 %4967
      %4969 = vrot.lane.b32.xlu0 %v4893, 16
      %v4970 = vpop.permute.xlu0 %4969
      %4971 = vrot.lane.b32.xlu0 %v4894, 16
      %v4972 = vpop.permute.xlu0 %4971
      %4973 = vrot.lane.b32.xlu0 %v4895, 16
      %v4974 = vpop.permute.xlu0 %4973
      %4975 = vrot.lane.b32.xlu0 %v4896, 16
      %v4976 = vpop.permute.xlu0 %4975
      %4977 = vrot.lane.b32.xlu0 %v4897, 16
      %v4978 = vpop.permute.xlu0 %4977
      %4979 = vrot.lane.b32.xlu0 %v4898, 16
      %v4980 = vpop.permute.xlu0 %4979
      %4981 = vrot.lane.b32.xlu0 %v4899, 16
      %v4982 = vpop.permute.xlu0 %4981
      %4983 = vrot.lane.b32.xlu0 %v4900, 16
      %v4984 = vpop.permute.xlu0 %4983
      %4985 = vrot.lane.b32.xlu0 %v4901, 16
      %v4986 = vpop.permute.xlu0 %4985
      %4987 = vrot.lane.b32.xlu0 %v4902, 16
      %v4988 = vpop.permute.xlu0 %4987
      %4989 = vrot.lane.b32.xlu0 %v4903, 16
      %v4990 = vpop.permute.xlu0 %4989
      %4991 = vrot.lane.b32.xlu0 %v4904, 16
      %v4992 = vpop.permute.xlu0 %4991
      %4993 = vrot.lane.b32.xlu0 %v4905, 16
      %v4994 = vpop.permute.xlu0 %4993
      %4995 = vrot.lane.b32.xlu0 %v4906, 16
      %v4996 = vpop.permute.xlu0 %4995
      %4997 = vrot.lane.b32.xlu0 %v4907, 16
      %v4998 = vpop.permute.xlu0 %4997
      %4999 = vrot.lane.b32.xlu0 %v4908, 16
      %v5000 = vpop.permute.xlu0 %4999
      %5001 = vrot.lane.b32.xlu0 %v4909, 16
      %v5002 = vpop.permute.xlu0 %5001
      %5003 = vrot.lane.b32.xlu0 %v4910, 16
      %v5004 = vpop.permute.xlu0 %5003
      %5005 = vrot.lane.b32.xlu0 %v4911, 16
      %v5006 = vpop.permute.xlu0 %5005
      %5007 = vrot.lane.b32.xlu0 %v4912, 16
      %v5008 = vpop.permute.xlu0 %5007
      %5041 = vst.msk [vmem:[#allocation3] sm:$0xff] %vm3056, %v4946
      %5042 = vst.msk [vmem:[#allocation3 + $0x10] sm:$0xff] %vm3056, %v4948
      %5043 = vst.msk [vmem:[#allocation3 + $0x20] sm:$0xff] %vm3056, %v4950
      %5044 = vst.msk [vmem:[#allocation3 + $0x30] sm:$0xff] %vm3056, %v4952
      %5045 = vst.msk [vmem:[#allocation3 + $0x40] sm:$0xff] %vm3056, %v4954
      %5046 = vst.msk [vmem:[#allocation3 + $0x50] sm:$0xff] %vm3056, %v4956
      %5047 = vst.msk [vmem:[#allocation3 + $0x60] sm:$0xff] %vm3056, %v4958
      %5048 = vst.msk [vmem:[#allocation3 + $0x70] sm:$0xff] %vm3056, %v4960
      %5049 = vst.msk [vmem:[#allocation3 + $0x80] sm:$0xff] %vm3056, %v4962
      %5050 = vst.msk [vmem:[#allocation3 + $0x90] sm:$0xff] %vm3056, %v4964
      %5051 = vst.msk [vmem:[#allocation3 + $0xa0] sm:$0xff] %vm3056, %v4966
      %5052 = vst.msk [vmem:[#allocation3 + $0xb0] sm:$0xff] %vm3056, %v4968
      %5053 = vst.msk [vmem:[#allocation3 + $0xc0] sm:$0xff] %vm3056, %v4970
      %5054 = vst.msk [vmem:[#allocation3 + $0xd0] sm:$0xff] %vm3056, %v4972
      %5055 = vst.msk [vmem:[#allocation3 + $0xe0] sm:$0xff] %vm3056, %v4974
      %5056 = vst.msk [vmem:[#allocation3 + $0xf0] sm:$0xff] %vm3056, %v4976
      %5057 = vst.msk [vmem:[#allocation3 + $0x100] sm:$0xff] %vm3056, %v4978
      %5058 = vst.msk [vmem:[#allocation3 + $0x110] sm:$0xff] %vm3056, %v4980
      %5059 = vst.msk [vmem:[#allocation3 + $0x120] sm:$0xff] %vm3056, %v4982
      %5060 = vst.msk [vmem:[#allocation3 + $0x130] sm:$0xff] %vm3056, %v4984
      %5061 = vst.msk [vmem:[#allocation3 + $0x140] sm:$0xff] %vm3056, %v4986
      %5062 = vst.msk [vmem:[#allocation3 + $0x150] sm:$0xff] %vm3056, %v4988
      %5063 = vst.msk [vmem:[#allocation3 + $0x160] sm:$0xff] %vm3056, %v4990
      %5064 = vst.msk [vmem:[#allocation3 + $0x170] sm:$0xff] %vm3056, %v4992
      %5065 = vst.msk [vmem:[#allocation3 + $0x180] sm:$0xff] %vm3056, %v4994
      %5066 = vst.msk [vmem:[#allocation3 + $0x190] sm:$0xff] %vm3056, %v4996
      %5067 = vst.msk [vmem:[#allocation3 + $0x1a0] sm:$0xff] %vm3056, %v4998
      %5068 = vst.msk [vmem:[#allocation3 + $0x1b0] sm:$0xff] %vm3056, %v5000
      %5069 = vst.msk [vmem:[#allocation3 + $0x1c0] sm:$0xff] %vm3056, %v5002
      %5070 = vst.msk [vmem:[#allocation3 + $0x1d0] sm:$0xff] %vm3056, %v5004
      %5071 = vst.msk [vmem:[#allocation3 + $0x1e0] sm:$0xff] %vm3056, %v5006
      %5072 = vst.msk [vmem:[#allocation3 + $0x1f0] sm:$0xff] %vm3056, %v5008
      %v5073 = vld [vmem:[#allocation2 + $0x2] sm:$0xff]
      %v5074 = vld [vmem:[#allocation2 + $0xa] sm:$0xff]
      %v5075 = vld [vmem:[#allocation2 + $0x1a] sm:$0xff]
      %v5076 = vld [vmem:[#allocation2 + $0x22] sm:$0xff]
      %v5077 = vld [vmem:[#allocation2 + $0x32] sm:$0xff]
      %v5078 = vld [vmem:[#allocation2 + $0x3a] sm:$0xff]
      %v5079 = vld [vmem:[#allocation2 + $0x4a] sm:$0xff]
      %v5080 = vld [vmem:[#allocation2 + $0x52] sm:$0xff]
      %v5081 = vld [vmem:[#allocation2 + $0x62] sm:$0xff]
      %v5082 = vld [vmem:[#allocation2 + $0x6a] sm:$0xff]
      %v5083 = vld [vmem:[#allocation2 + $0x7a] sm:$0xff]
      %v5084 = vld [vmem:[#allocation2 + $0x82] sm:$0xff]
      %v5085 = vld [vmem:[#allocation2 + $0x92] sm:$0xff]
      %v5086 = vld [vmem:[#allocation2 + $0x9a] sm:$0xff]
      %v5087 = vld [vmem:[#allocation2 + $0xaa] sm:$0xff]
      %v5088 = vld [vmem:[#allocation2 + $0xb2] sm:$0xff]
      %v5089 = vld [vmem:[#allocation2 + $0xc2] sm:$0xff]
      %v5090 = vld [vmem:[#allocation2 + $0xca] sm:$0xff]
      %v5091 = vld [vmem:[#allocation2 + $0xda] sm:$0xff]
      %v5092 = vld [vmem:[#allocation2 + $0xe2] sm:$0xff]
      %v5093 = vld [vmem:[#allocation2 + $0xf2] sm:$0xff]
      %v5094 = vld [vmem:[#allocation2 + $0xfa] sm:$0xff]
      %v5095 = vld [vmem:[#allocation2 + $0x10a] sm:$0xff]
      %v5096 = vld [vmem:[#allocation2 + $0x112] sm:$0xff]
      %v5097 = vld [vmem:[#allocation2 + $0x122] sm:$0xff]
      %v5098 = vld [vmem:[#allocation2 + $0x12a] sm:$0xff]
      %v5099 = vld [vmem:[#allocation2 + $0x13a] sm:$0xff]
      %v5100 = vld [vmem:[#allocation2 + $0x142] sm:$0xff]
      %v5101 = vld [vmem:[#allocation2 + $0x152] sm:$0xff]
      %v5102 = vld [vmem:[#allocation2 + $0x15a] sm:$0xff]
      %v5103 = vld [vmem:[#allocation2 + $0x16a] sm:$0xff]
      %v5104 = vld [vmem:[#allocation2 + $0x172] sm:$0xff]
      %5137 = vrot.lane.b32.xlu0 %v5073, 32
      %v5138 = vpop.permute.xlu0 %5137
      %5139 = vrot.lane.b32.xlu0 %v5074, 32
      %v5140 = vpop.permute.xlu0 %5139
      %5141 = vrot.lane.b32.xlu0 %v5075, 32
      %v5142 = vpop.permute.xlu0 %5141
      %5143 = vrot.lane.b32.xlu0 %v5076, 32
      %v5144 = vpop.permute.xlu0 %5143
      %5145 = vrot.lane.b32.xlu0 %v5077, 32
      %v5146 = vpop.permute.xlu0 %5145
      %5147 = vrot.lane.b32.xlu0 %v5078, 32
      %v5148 = vpop.permute.xlu0 %5147
      %5149 = vrot.lane.b32.xlu0 %v5079, 32
      %v5150 = vpop.permute.xlu0 %5149
      %5151 = vrot.lane.b32.xlu0 %v5080, 32
      %v5152 = vpop.permute.xlu0 %5151
      %5153 = vrot.lane.b32.xlu0 %v5081, 32
      %v5154 = vpop.permute.xlu0 %5153
      %5155 = vrot.lane.b32.xlu0 %v5082, 32
      %v5156 = vpop.permute.xlu0 %5155
      %5157 = vrot.lane.b32.xlu0 %v5083, 32
      %v5158 = vpop.permute.xlu0 %5157
      %5159 = vrot.lane.b32.xlu0 %v5084, 32
      %v5160 = vpop.permute.xlu0 %5159
      %5161 = vrot.lane.b32.xlu0 %v5085, 32
      %v5162 = vpop.permute.xlu0 %5161
      %5163 = vrot.lane.b32.xlu0 %v5086, 32
      %v5164 = vpop.permute.xlu0 %5163
      %5165 = vrot.lane.b32.xlu0 %v5087, 32
      %v5166 = vpop.permute.xlu0 %5165
      %5167 = vrot.lane.b32.xlu0 %v5088, 32
      %v5168 = vpop.permute.xlu0 %5167
      %5169 = vrot.lane.b32.xlu0 %v5089, 32
      %v5170 = vpop.permute.xlu0 %5169
      %5171 = vrot.lane.b32.xlu0 %v5090, 32
      %v5172 = vpop.permute.xlu0 %5171
      %5173 = vrot.lane.b32.xlu0 %v5091, 32
      %v5174 = vpop.permute.xlu0 %5173
      %5175 = vrot.lane.b32.xlu0 %v5092, 32
      %v5176 = vpop.permute.xlu0 %5175
      %5177 = vrot.lane.b32.xlu0 %v5093, 32
      %v5178 = vpop.permute.xlu0 %5177
      %5179 = vrot.lane.b32.xlu0 %v5094, 32
      %v5180 = vpop.permute.xlu0 %5179
      %5181 = vrot.lane.b32.xlu0 %v5095, 32
      %v5182 = vpop.permute.xlu0 %5181
      %5183 = vrot.lane.b32.xlu0 %v5096, 32
      %v5184 = vpop.permute.xlu0 %5183
      %5185 = vrot.lane.b32.xlu0 %v5097, 32
      %v5186 = vpop.permute.xlu0 %5185
      %5187 = vrot.lane.b32.xlu0 %v5098, 32
      %v5188 = vpop.permute.xlu0 %5187
      %5189 = vrot.lane.b32.xlu0 %v5099, 32
      %v5190 = vpop.permute.xlu0 %5189
      %5191 = vrot.lane.b32.xlu0 %v5100, 32
      %v5192 = vpop.permute.xlu0 %5191
      %5193 = vrot.lane.b32.xlu0 %v5101, 32
      %v5194 = vpop.permute.xlu0 %5193
      %5195 = vrot.lane.b32.xlu0 %v5102, 32
      %v5196 = vpop.permute.xlu0 %5195
      %5197 = vrot.lane.b32.xlu0 %v5103, 32
      %v5198 = vpop.permute.xlu0 %5197
      %5199 = vrot.lane.b32.xlu0 %v5104, 32
      %v5200 = vpop.permute.xlu0 %5199
      %5233 = vst.msk [vmem:[#allocation3] sm:$0xff] %vm3249, %v5138
      %5234 = vst.msk [vmem:[#allocation3 + $0x10] sm:$0xff] %vm3249, %v5140
      %5235 = vst.msk [vmem:[#allocation3 + $0x20] sm:$0xff] %vm3249, %v5142
      %5236 = vst.msk [vmem:[#allocation3 + $0x30] sm:$0xff] %vm3249, %v5144
      %5237 = vst.msk [vmem:[#allocation3 + $0x40] sm:$0xff] %vm3249, %v5146
      %5238 = vst.msk [vmem:[#allocation3 + $0x50] sm:$0xff] %vm3249, %v5148
      %5239 = vst.msk [vmem:[#allocation3 + $0x60] sm:$0xff] %vm3249, %v5150
      %5240 = vst.msk [vmem:[#allocation3 + $0x70] sm:$0xff] %vm3249, %v5152
      %5241 = vst.msk [vmem:[#allocation3 + $0x80] sm:$0xff] %vm3249, %v5154
      %5242 = vst.msk [vmem:[#allocation3 + $0x90] sm:$0xff] %vm3249, %v5156
      %5243 = vst.msk [vmem:[#allocation3 + $0xa0] sm:$0xff] %vm3249, %v5158
      %5244 = vst.msk [vmem:[#allocation3 + $0xb0] sm:$0xff] %vm3249, %v5160
      %5245 = vst.msk [vmem:[#allocation3 + $0xc0] sm:$0xff] %vm3249, %v5162
      %5246 = vst.msk [vmem:[#allocation3 + $0xd0] sm:$0xff] %vm3249, %v5164
      %5247 = vst.msk [vmem:[#allocation3 + $0xe0] sm:$0xff] %vm3249, %v5166
      %5248 = vst.msk [vmem:[#allocation3 + $0xf0] sm:$0xff] %vm3249, %v5168
      %5249 = vst.msk [vmem:[#allocation3 + $0x100] sm:$0xff] %vm3249, %v5170
      %5250 = vst.msk [vmem:[#allocation3 + $0x110] sm:$0xff] %vm3249, %v5172
      %5251 = vst.msk [vmem:[#allocation3 + $0x120] sm:$0xff] %vm3249, %v5174
      %5252 = vst.msk [vmem:[#allocation3 + $0x130] sm:$0xff] %vm3249, %v5176
      %5253 = vst.msk [vmem:[#allocation3 + $0x140] sm:$0xff] %vm3249, %v5178
      %5254 = vst.msk [vmem:[#allocation3 + $0x150] sm:$0xff] %vm3249, %v5180
      %5255 = vst.msk [vmem:[#allocation3 + $0x160] sm:$0xff] %vm3249, %v5182
      %5256 = vst.msk [vmem:[#allocation3 + $0x170] sm:$0xff] %vm3249, %v5184
      %5257 = vst.msk [vmem:[#allocation3 + $0x180] sm:$0xff] %vm3249, %v5186
      %5258 = vst.msk [vmem:[#allocation3 + $0x190] sm:$0xff] %vm3249, %v5188
      %5259 = vst.msk [vmem:[#allocation3 + $0x1a0] sm:$0xff] %vm3249, %v5190
      %5260 = vst.msk [vmem:[#allocation3 + $0x1b0] sm:$0xff] %vm3249, %v5192
      %5261 = vst.msk [vmem:[#allocation3 + $0x1c0] sm:$0xff] %vm3249, %v5194
      %5262 = vst.msk [vmem:[#allocation3 + $0x1d0] sm:$0xff] %vm3249, %v5196
      %5263 = vst.msk [vmem:[#allocation3 + $0x1e0] sm:$0xff] %vm3249, %v5198
      %5264 = vst.msk [vmem:[#allocation3 + $0x1f0] sm:$0xff] %vm3249, %v5200
      %v5265 = vld [vmem:[%s724] sm:$0xff]
      %v5266 = vld [vmem:[%s724 + $0x8] sm:$0xff]
      %v5267 = vld [vmem:[%s724 + $0x18] sm:$0xff]
      %v5268 = vld [vmem:[%s724 + $0x20] sm:$0xff]
      %v5269 = vld [vmem:[%s724 + $0x30] sm:$0xff]
      %v5270 = vld [vmem:[%s724 + $0x38] sm:$0xff]
      %v5271 = vld [vmem:[%s724 + $0x48] sm:$0xff]
      %v5272 = vld [vmem:[%s724 + $0x50] sm:$0xff]
      %v5273 = vld [vmem:[%s724 + $0x60] sm:$0xff]
      %v5274 = vld [vmem:[%s724 + $0x68] sm:$0xff]
      %v5275 = vld [vmem:[%s724 + $0x78] sm:$0xff]
      %v5276 = vld [vmem:[%s724 + $0x80] sm:$0xff]
      %v5277 = vld [vmem:[%s724 + $0x90] sm:$0xff]
      %v5278 = vld [vmem:[%s724 + $0x98] sm:$0xff]
      %v5279 = vld [vmem:[%s724 + $0xa8] sm:$0xff]
      %v5280 = vld [vmem:[%s724 + $0xb0] sm:$0xff]
      %v5281 = vld [vmem:[%s724 + $0xc0] sm:$0xff]
      %v5282 = vld [vmem:[%s724 + $0xc8] sm:$0xff]
      %v5283 = vld [vmem:[%s724 + $0xd8] sm:$0xff]
      %v5284 = vld [vmem:[%s724 + $0xe0] sm:$0xff]
      %v5285 = vld [vmem:[%s724 + $0xf0] sm:$0xff]
      %v5286 = vld [vmem:[%s724 + $0xf8] sm:$0xff]
      %v5287 = vld [vmem:[%s724 + $0x108] sm:$0xff]
      %v5288 = vld [vmem:[%s724 + $0x110] sm:$0xff]
      %v5289 = vld [vmem:[%s724 + $0x120] sm:$0xff]
      %v5290 = vld [vmem:[%s724 + $0x128] sm:$0xff]
      %v5291 = vld [vmem:[%s724 + $0x138] sm:$0xff]
      %v5292 = vld [vmem:[%s724 + $0x140] sm:$0xff]
      %v5293 = vld [vmem:[%s724 + $0x150] sm:$0xff]
      %v5294 = vld [vmem:[%s724 + $0x158] sm:$0xff]
      %v5295 = vld [vmem:[%s724 + $0x168] sm:$0xff]
      %v5296 = vld [vmem:[%s724 + $0x170] sm:$0xff]
      %5329 = vrot.lane.b32.xlu0 %v5265, 48
      %v5330 = vpop.permute.xlu0 %5329
      %5331 = vrot.lane.b32.xlu0 %v5266, 48
      %v5332 = vpop.permute.xlu0 %5331
      %5333 = vrot.lane.b32.xlu0 %v5267, 48
      %v5334 = vpop.permute.xlu0 %5333
      %5335 = vrot.lane.b32.xlu0 %v5268, 48
      %v5336 = vpop.permute.xlu0 %5335
      %5337 = vrot.lane.b32.xlu0 %v5269, 48
      %v5338 = vpop.permute.xlu0 %5337
      %5339 = vrot.lane.b32.xlu0 %v5270, 48
      %v5340 = vpop.permute.xlu0 %5339
      %5341 = vrot.lane.b32.xlu0 %v5271, 48
      %v5342 = vpop.permute.xlu0 %5341
      %5343 = vrot.lane.b32.xlu0 %v5272, 48
      %v5344 = vpop.permute.xlu0 %5343
      %5345 = vrot.lane.b32.xlu0 %v5273, 48
      %v5346 = vpop.permute.xlu0 %5345
      %5347 = vrot.lane.b32.xlu0 %v5274, 48
      %v5348 = vpop.permute.xlu0 %5347
      %5349 = vrot.lane.b32.xlu0 %v5275, 48
      %v5350 = vpop.permute.xlu0 %5349
      %5351 = vrot.lane.b32.xlu0 %v5276, 48
      %v5352 = vpop.permute.xlu0 %5351
      %5353 = vrot.lane.b32.xlu0 %v5277, 48
      %v5354 = vpop.permute.xlu0 %5353
      %5355 = vrot.lane.b32.xlu0 %v5278, 48
      %v5356 = vpop.permute.xlu0 %5355
      %5357 = vrot.lane.b32.xlu0 %v5279, 48
      %v5358 = vpop.permute.xlu0 %5357
      %5359 = vrot.lane.b32.xlu0 %v5280, 48
      %v5360 = vpop.permute.xlu0 %5359
      %5361 = vrot.lane.b32.xlu0 %v5281, 48
      %v5362 = vpop.permute.xlu0 %5361
      %5363 = vrot.lane.b32.xlu0 %v5282, 48
      %v5364 = vpop.permute.xlu0 %5363
      %5365 = vrot.lane.b32.xlu0 %v5283, 48
      %v5366 = vpop.permute.xlu0 %5365
      %5367 = vrot.lane.b32.xlu0 %v5284, 48
      %v5368 = vpop.permute.xlu0 %5367
      %5369 = vrot.lane.b32.xlu0 %v5285, 48
      %v5370 = vpop.permute.xlu0 %5369
      %5371 = vrot.lane.b32.xlu0 %v5286, 48
      %v5372 = vpop.permute.xlu0 %5371
      %5373 = vrot.lane.b32.xlu0 %v5287, 48
      %v5374 = vpop.permute.xlu0 %5373
      %5375 = vrot.lane.b32.xlu0 %v5288, 48
      %v5376 = vpop.permute.xlu0 %5375
      %5377 = vrot.lane.b32.xlu0 %v5289, 48
      %v5378 = vpop.permute.xlu0 %5377
      %5379 = vrot.lane.b32.xlu0 %v5290, 48
      %v5380 = vpop.permute.xlu0 %5379
      %5381 = vrot.lane.b32.xlu0 %v5291, 48
      %v5382 = vpop.permute.xlu0 %5381
      %5383 = vrot.lane.b32.xlu0 %v5292, 48
      %v5384 = vpop.permute.xlu0 %5383
      %5385 = vrot.lane.b32.xlu0 %v5293, 48
      %v5386 = vpop.permute.xlu0 %5385
      %5387 = vrot.lane.b32.xlu0 %v5294, 48
      %v5388 = vpop.permute.xlu0 %5387
      %5389 = vrot.lane.b32.xlu0 %v5295, 48
      %v5390 = vpop.permute.xlu0 %5389
      %5391 = vrot.lane.b32.xlu0 %v5296, 48
      %v5392 = vpop.permute.xlu0 %5391
      %5425 = vst.msk [vmem:[#allocation3] sm:$0xff] %vm3442, %v5330
      %5426 = vst.msk [vmem:[#allocation3 + $0x10] sm:$0xff] %vm3442, %v5332
      %5427 = vst.msk [vmem:[#allocation3 + $0x20] sm:$0xff] %vm3442, %v5334
      %5428 = vst.msk [vmem:[#allocation3 + $0x30] sm:$0xff] %vm3442, %v5336
      %5429 = vst.msk [vmem:[#allocation3 + $0x40] sm:$0xff] %vm3442, %v5338
      %5430 = vst.msk [vmem:[#allocation3 + $0x50] sm:$0xff] %vm3442, %v5340
      %5431 = vst.msk [vmem:[#allocation3 + $0x60] sm:$0xff] %vm3442, %v5342
      %5432 = vst.msk [vmem:[#allocation3 + $0x70] sm:$0xff] %vm3442, %v5344
      %5433 = vst.msk [vmem:[#allocation3 + $0x80] sm:$0xff] %vm3442, %v5346
      %5434 = vst.msk [vmem:[#allocation3 + $0x90] sm:$0xff] %vm3442, %v5348
      %5435 = vst.msk [vmem:[#allocation3 + $0xa0] sm:$0xff] %vm3442, %v5350
      %5436 = vst.msk [vmem:[#allocation3 + $0xb0] sm:$0xff] %vm3442, %v5352
      %5437 = vst.msk [vmem:[#allocation3 + $0xc0] sm:$0xff] %vm3442, %v5354
      %5438 = vst.msk [vmem:[#allocation3 + $0xd0] sm:$0xff] %vm3442, %v5356
      %5439 = vst.msk [vmem:[#allocation3 + $0xe0] sm:$0xff] %vm3442, %v5358
      %5440 = vst.msk [vmem:[#allocation3 + $0xf0] sm:$0xff] %vm3442, %v5360
      %5441 = vst.msk [vmem:[#allocation3 + $0x100] sm:$0xff] %vm3442, %v5362
      %5442 = vst.msk [vmem:[#allocation3 + $0x110] sm:$0xff] %vm3442, %v5364
      %5443 = vst.msk [vmem:[#allocation3 + $0x120] sm:$0xff] %vm3442, %v5366
      %5444 = vst.msk [vmem:[#allocation3 + $0x130] sm:$0xff] %vm3442, %v5368
      %5445 = vst.msk [vmem:[#allocation3 + $0x140] sm:$0xff] %vm3442, %v5370
      %5446 = vst.msk [vmem:[#allocation3 + $0x150] sm:$0xff] %vm3442, %v5372
      %5447 = vst.msk [vmem:[#allocation3 + $0x160] sm:$0xff] %vm3442, %v5374
      %5448 = vst.msk [vmem:[#allocation3 + $0x170] sm:$0xff] %vm3442, %v5376
      %5449 = vst.msk [vmem:[#allocation3 + $0x180] sm:$0xff] %vm3442, %v5378
      %5450 = vst.msk [vmem:[#allocation3 + $0x190] sm:$0xff] %vm3442, %v5380
      %5451 = vst.msk [vmem:[#allocation3 + $0x1a0] sm:$0xff] %vm3442, %v5382
      %5452 = vst.msk [vmem:[#allocation3 + $0x1b0] sm:$0xff] %vm3442, %v5384
      %5453 = vst.msk [vmem:[#allocation3 + $0x1c0] sm:$0xff] %vm3442, %v5386
      %5454 = vst.msk [vmem:[#allocation3 + $0x1d0] sm:$0xff] %vm3442, %v5388
      %5455 = vst.msk [vmem:[#allocation3 + $0x1e0] sm:$0xff] %vm3442, %v5390
      %5456 = vst.msk [vmem:[#allocation3 + $0x1f0] sm:$0xff] %vm3442, %v5392
      %v5457 = vld [vmem:[%s724 + $0x1] sm:$0xff]
      %v5458 = vld [vmem:[%s724 + $0x9] sm:$0xff]
      %v5459 = vld [vmem:[%s724 + $0x19] sm:$0xff]
      %v5460 = vld [vmem:[%s724 + $0x21] sm:$0xff]
      %v5461 = vld [vmem:[%s724 + $0x31] sm:$0xff]
      %v5462 = vld [vmem:[%s724 + $0x39] sm:$0xff]
      %v5463 = vld [vmem:[%s724 + $0x49] sm:$0xff]
      %v5464 = vld [vmem:[%s724 + $0x51] sm:$0xff]
      %v5465 = vld [vmem:[%s724 + $0x61] sm:$0xff]
      %v5466 = vld [vmem:[%s724 + $0x69] sm:$0xff]
      %v5467 = vld [vmem:[%s724 + $0x79] sm:$0xff]
      %v5468 = vld [vmem:[%s724 + $0x81] sm:$0xff]
      %v5469 = vld [vmem:[%s724 + $0x91] sm:$0xff]
      %v5470 = vld [vmem:[%s724 + $0x99] sm:$0xff]
      %v5471 = vld [vmem:[%s724 + $0xa9] sm:$0xff]
      %v5472 = vld [vmem:[%s724 + $0xb1] sm:$0xff]
      %v5473 = vld [vmem:[%s724 + $0xc1] sm:$0xff]
      %v5474 = vld [vmem:[%s724 + $0xc9] sm:$0xff]
      %v5475 = vld [vmem:[%s724 + $0xd9] sm:$0xff]
      %v5476 = vld [vmem:[%s724 + $0xe1] sm:$0xff]
      %v5477 = vld [vmem:[%s724 + $0xf1] sm:$0xff]
      %v5478 = vld [vmem:[%s724 + $0xf9] sm:$0xff]
      %v5479 = vld [vmem:[%s724 + $0x109] sm:$0xff]
      %v5480 = vld [vmem:[%s724 + $0x111] sm:$0xff]
      %v5481 = vld [vmem:[%s724 + $0x121] sm:$0xff]
      %v5482 = vld [vmem:[%s724 + $0x129] sm:$0xff]
      %v5483 = vld [vmem:[%s724 + $0x139] sm:$0xff]
      %v5484 = vld [vmem:[%s724 + $0x141] sm:$0xff]
      %v5485 = vld [vmem:[%s724 + $0x151] sm:$0xff]
      %v5486 = vld [vmem:[%s724 + $0x159] sm:$0xff]
      %v5487 = vld [vmem:[%s724 + $0x169] sm:$0xff]
      %v5488 = vld [vmem:[%s724 + $0x171] sm:$0xff]
      %5521 = vrot.lane.b32.xlu0 %v5457, 64
      %v5522 = vpop.permute.xlu0 %5521
      %5523 = vrot.lane.b32.xlu0 %v5458, 64
      %v5524 = vpop.permute.xlu0 %5523
      %5525 = vrot.lane.b32.xlu0 %v5459, 64
      %v5526 = vpop.permute.xlu0 %5525
      %5527 = vrot.lane.b32.xlu0 %v5460, 64
      %v5528 = vpop.permute.xlu0 %5527
      %5529 = vrot.lane.b32.xlu0 %v5461, 64
      %v5530 = vpop.permute.xlu0 %5529
      %5531 = vrot.lane.b32.xlu0 %v5462, 64
      %v5532 = vpop.permute.xlu0 %5531
      %5533 = vrot.lane.b32.xlu0 %v5463, 64
      %v5534 = vpop.permute.xlu0 %5533
      %5535 = vrot.lane.b32.xlu0 %v5464, 64
      %v5536 = vpop.permute.xlu0 %5535
      %5537 = vrot.lane.b32.xlu0 %v5465, 64
      %v5538 = vpop.permute.xlu0 %5537
      %5539 = vrot.lane.b32.xlu0 %v5466, 64
      %v5540 = vpop.permute.xlu0 %5539
      %5541 = vrot.lane.b32.xlu0 %v5467, 64
      %v5542 = vpop.permute.xlu0 %5541
      %5543 = vrot.lane.b32.xlu0 %v5468, 64
      %v5544 = vpop.permute.xlu0 %5543
      %5545 = vrot.lane.b32.xlu0 %v5469, 64
      %v5546 = vpop.permute.xlu0 %5545
      %5547 = vrot.lane.b32.xlu0 %v5470, 64
      %v5548 = vpop.permute.xlu0 %5547
      %5549 = vrot.lane.b32.xlu0 %v5471, 64
      %v5550 = vpop.permute.xlu0 %5549
      %5551 = vrot.lane.b32.xlu0 %v5472, 64
      %v5552 = vpop.permute.xlu0 %5551
      %5553 = vrot.lane.b32.xlu0 %v5473, 64
      %v5554 = vpop.permute.xlu0 %5553
      %5555 = vrot.lane.b32.xlu0 %v5474, 64
      %v5556 = vpop.permute.xlu0 %5555
      %5557 = vrot.lane.b32.xlu0 %v5475, 64
      %v5558 = vpop.permute.xlu0 %5557
      %5559 = vrot.lane.b32.xlu0 %v5476, 64
      %v5560 = vpop.permute.xlu0 %5559
      %5561 = vrot.lane.b32.xlu0 %v5477, 64
      %v5562 = vpop.permute.xlu0 %5561
      %5563 = vrot.lane.b32.xlu0 %v5478, 64
      %v5564 = vpop.permute.xlu0 %5563
      %5565 = vrot.lane.b32.xlu0 %v5479, 64
      %v5566 = vpop.permute.xlu0 %5565
      %5567 = vrot.lane.b32.xlu0 %v5480, 64
      %v5568 = vpop.permute.xlu0 %5567
      %5569 = vrot.lane.b32.xlu0 %v5481, 64
      %v5570 = vpop.permute.xlu0 %5569
      %5571 = vrot.lane.b32.xlu0 %v5482, 64
      %v5572 = vpop.permute.xlu0 %5571
      %5573 = vrot.lane.b32.xlu0 %v5483, 64
      %v5574 = vpop.permute.xlu0 %5573
      %5575 = vrot.lane.b32.xlu0 %v5484, 64
      %v5576 = vpop.permute.xlu0 %5575
      %5577 = vrot.lane.b32.xlu0 %v5485, 64
      %v5578 = vpop.permute.xlu0 %5577
      %5579 = vrot.lane.b32.xlu0 %v5486, 64
      %v5580 = vpop.permute.xlu0 %5579
      %5581 = vrot.lane.b32.xlu0 %v5487, 64
      %v5582 = vpop.permute.xlu0 %5581
      %5583 = vrot.lane.b32.xlu0 %v5488, 64
      %v5584 = vpop.permute.xlu0 %5583
      %5617 = vst.msk [vmem:[#allocation3] sm:$0xff] %vm3635, %v5522
      %5618 = vst.msk [vmem:[#allocation3 + $0x10] sm:$0xff] %vm3635, %v5524
      %5619 = vst.msk [vmem:[#allocation3 + $0x20] sm:$0xff] %vm3635, %v5526
      %5620 = vst.msk [vmem:[#allocation3 + $0x30] sm:$0xff] %vm3635, %v5528
      %5621 = vst.msk [vmem:[#allocation3 + $0x40] sm:$0xff] %vm3635, %v5530
      %5622 = vst.msk [vmem:[#allocation3 + $0x50] sm:$0xff] %vm3635, %v5532
      %5623 = vst.msk [vmem:[#allocation3 + $0x60] sm:$0xff] %vm3635, %v5534
      %5624 = vst.msk [vmem:[#allocation3 + $0x70] sm:$0xff] %vm3635, %v5536
      %5625 = vst.msk [vmem:[#allocation3 + $0x80] sm:$0xff] %vm3635, %v5538
      %5626 = vst.msk [vmem:[#allocation3 + $0x90] sm:$0xff] %vm3635, %v5540
      %5627 = vst.msk [vmem:[#allocation3 + $0xa0] sm:$0xff] %vm3635, %v5542
      %5628 = vst.msk [vmem:[#allocation3 + $0xb0] sm:$0xff] %vm3635, %v5544
      %5629 = vst.msk [vmem:[#allocation3 + $0xc0] sm:$0xff] %vm3635, %v5546
      %5630 = vst.msk [vmem:[#allocation3 + $0xd0] sm:$0xff] %vm3635, %v5548
      %5631 = vst.msk [vmem:[#allocation3 + $0xe0] sm:$0xff] %vm3635, %v5550
      %5632 = vst.msk [vmem:[#allocation3 + $0xf0] sm:$0xff] %vm3635, %v5552
      %5633 = vst.msk [vmem:[#allocation3 + $0x100] sm:$0xff] %vm3635, %v5554
      %5634 = vst.msk [vmem:[#allocation3 + $0x110] sm:$0xff] %vm3635, %v5556
      %5635 = vst.msk [vmem:[#allocation3 + $0x120] sm:$0xff] %vm3635, %v5558
      %5636 = vst.msk [vmem:[#allocation3 + $0x130] sm:$0xff] %vm3635, %v5560
      %5637 = vst.msk [vmem:[#allocation3 + $0x140] sm:$0xff] %vm3635, %v5562
      %5638 = vst.msk [vmem:[#allocation3 + $0x150] sm:$0xff] %vm3635, %v5564
      %5639 = vst.msk [vmem:[#allocation3 + $0x160] sm:$0xff] %vm3635, %v5566
      %5640 = vst.msk [vmem:[#allocation3 + $0x170] sm:$0xff] %vm3635, %v5568
      %5641 = vst.msk [vmem:[#allocation3 + $0x180] sm:$0xff] %vm3635, %v5570
      %5642 = vst.msk [vmem:[#allocation3 + $0x190] sm:$0xff] %vm3635, %v5572
      %5643 = vst.msk [vmem:[#allocation3 + $0x1a0] sm:$0xff] %vm3635, %v5574
      %5644 = vst.msk [vmem:[#allocation3 + $0x1b0] sm:$0xff] %vm3635, %v5576
      %5645 = vst.msk [vmem:[#allocation3 + $0x1c0] sm:$0xff] %vm3635, %v5578
      %5646 = vst.msk [vmem:[#allocation3 + $0x1d0] sm:$0xff] %vm3635, %v5580
      %5647 = vst.msk [vmem:[#allocation3 + $0x1e0] sm:$0xff] %vm3635, %v5582
      %5648 = vst.msk [vmem:[#allocation3 + $0x1f0] sm:$0xff] %vm3635, %v5584
      %v5649 = vld [vmem:[%s724 + $0x2] sm:$0xff]
      %v5650 = vld [vmem:[%s724 + $0xa] sm:$0xff]
      %v5651 = vld [vmem:[%s724 + $0x1a] sm:$0xff]
      %v5652 = vld [vmem:[%s724 + $0x22] sm:$0xff]
      %v5653 = vld [vmem:[%s724 + $0x32] sm:$0xff]
      %v5654 = vld [vmem:[%s724 + $0x3a] sm:$0xff]
      %v5655 = vld [vmem:[%s724 + $0x4a] sm:$0xff]
      %v5656 = vld [vmem:[%s724 + $0x52] sm:$0xff]
      %v5657 = vld [vmem:[%s724 + $0x62] sm:$0xff]
      %v5658 = vld [vmem:[%s724 + $0x6a] sm:$0xff]
      %v5659 = vld [vmem:[%s724 + $0x7a] sm:$0xff]
      %v5660 = vld [vmem:[%s724 + $0x82] sm:$0xff]
      %v5661 = vld [vmem:[%s724 + $0x92] sm:$0xff]
      %v5662 = vld [vmem:[%s724 + $0x9a] sm:$0xff]
      %v5663 = vld [vmem:[%s724 + $0xaa] sm:$0xff]
      %v5664 = vld [vmem:[%s724 + $0xb2] sm:$0xff]
      %v5665 = vld [vmem:[%s724 + $0xc2] sm:$0xff]
      %v5666 = vld [vmem:[%s724 + $0xca] sm:$0xff]
      %v5667 = vld [vmem:[%s724 + $0xda] sm:$0xff]
      %v5668 = vld [vmem:[%s724 + $0xe2] sm:$0xff]
      %v5669 = vld [vmem:[%s724 + $0xf2] sm:$0xff]
      %v5670 = vld [vmem:[%s724 + $0xfa] sm:$0xff]
      %v5671 = vld [vmem:[%s724 + $0x10a] sm:$0xff]
      %v5672 = vld [vmem:[%s724 + $0x112] sm:$0xff]
      %v5673 = vld [vmem:[%s724 + $0x122] sm:$0xff]
      %v5674 = vld [vmem:[%s724 + $0x12a] sm:$0xff]
      %v5675 = vld [vmem:[%s724 + $0x13a] sm:$0xff]
      %v5676 = vld [vmem:[%s724 + $0x142] sm:$0xff]
      %v5677 = vld [vmem:[%s724 + $0x152] sm:$0xff]
      %v5678 = vld [vmem:[%s724 + $0x15a] sm:$0xff]
      %v5679 = vld [vmem:[%s724 + $0x16a] sm:$0xff]
      %v5680 = vld [vmem:[%s724 + $0x172] sm:$0xff]
      %5713 = vrot.lane.b32.xlu0 %v5649, 80
      %v5714 = vpop.permute.xlu0 %5713
      %5715 = vrot.lane.b32.xlu0 %v5650, 80
      %v5716 = vpop.permute.xlu0 %5715
      %5717 = vrot.lane.b32.xlu0 %v5651, 80
      %v5718 = vpop.permute.xlu0 %5717
      %5719 = vrot.lane.b32.xlu0 %v5652, 80
      %v5720 = vpop.permute.xlu0 %5719
      %5721 = vrot.lane.b32.xlu0 %v5653, 80
      %v5722 = vpop.permute.xlu0 %5721
      %5723 = vrot.lane.b32.xlu0 %v5654, 80
      %v5724 = vpop.permute.xlu0 %5723
      %5725 = vrot.lane.b32.xlu0 %v5655, 80
      %v5726 = vpop.permute.xlu0 %5725
      %5727 = vrot.lane.b32.xlu0 %v5656, 80
      %v5728 = vpop.permute.xlu0 %5727
      %5729 = vrot.lane.b32.xlu0 %v5657, 80
      %v5730 = vpop.permute.xlu0 %5729
      %5731 = vrot.lane.b32.xlu0 %v5658, 80
      %v5732 = vpop.permute.xlu0 %5731
      %5733 = vrot.lane.b32.xlu0 %v5659, 80
      %v5734 = vpop.permute.xlu0 %5733
      %5735 = vrot.lane.b32.xlu0 %v5660, 80
      %v5736 = vpop.permute.xlu0 %5735
      %5737 = vrot.lane.b32.xlu0 %v5661, 80
      %v5738 = vpop.permute.xlu0 %5737
      %5739 = vrot.lane.b32.xlu0 %v5662, 80
      %v5740 = vpop.permute.xlu0 %5739
      %5741 = vrot.lane.b32.xlu0 %v5663, 80
      %v5742 = vpop.permute.xlu0 %5741
      %5743 = vrot.lane.b32.xlu0 %v5664, 80
      %v5744 = vpop.permute.xlu0 %5743
      %5745 = vrot.lane.b32.xlu0 %v5665, 80
      %v5746 = vpop.permute.xlu0 %5745
      %5747 = vrot.lane.b32.xlu0 %v5666, 80
      %v5748 = vpop.permute.xlu0 %5747
      %5749 = vrot.lane.b32.xlu0 %v5667, 80
      %v5750 = vpop.permute.xlu0 %5749
      %5751 = vrot.lane.b32.xlu0 %v5668, 80
      %v5752 = vpop.permute.xlu0 %5751
      %5753 = vrot.lane.b32.xlu0 %v5669, 80
      %v5754 = vpop.permute.xlu0 %5753
      %5755 = vrot.lane.b32.xlu0 %v5670, 80
      %v5756 = vpop.permute.xlu0 %5755
      %5757 = vrot.lane.b32.xlu0 %v5671, 80
      %v5758 = vpop.permute.xlu0 %5757
      %5759 = vrot.lane.b32.xlu0 %v5672, 80
      %v5760 = vpop.permute.xlu0 %5759
      %5761 = vrot.lane.b32.xlu0 %v5673, 80
      %v5762 = vpop.permute.xlu0 %5761
      %5763 = vrot.lane.b32.xlu0 %v5674, 80
      %v5764 = vpop.permute.xlu0 %5763
      %5765 = vrot.lane.b32.xlu0 %v5675, 80
      %v5766 = vpop.permute.xlu0 %5765
      %5767 = vrot.lane.b32.xlu0 %v5676, 80
      %v5768 = vpop.permute.xlu0 %5767
      %5769 = vrot.lane.b32.xlu0 %v5677, 80
      %v5770 = vpop.permute.xlu0 %5769
      %5771 = vrot.lane.b32.xlu0 %v5678, 80
      %v5772 = vpop.permute.xlu0 %5771
      %5773 = vrot.lane.b32.xlu0 %v5679, 80
      %v5774 = vpop.permute.xlu0 %5773
      %5775 = vrot.lane.b32.xlu0 %v5680, 80
      %v5776 = vpop.permute.xlu0 %5775
      %5809 = vst.msk [vmem:[#allocation3] sm:$0xff] %vm3828, %v5714
      %5810 = vst.msk [vmem:[#allocation3 + $0x10] sm:$0xff] %vm3828, %v5716
      %5811 = vst.msk [vmem:[#allocation3 + $0x20] sm:$0xff] %vm3828, %v5718
      %5812 = vst.msk [vmem:[#allocation3 + $0x30] sm:$0xff] %vm3828, %v5720
      %5813 = vst.msk [vmem:[#allocation3 + $0x40] sm:$0xff] %vm3828, %v5722
      %5814 = vst.msk [vmem:[#allocation3 + $0x50] sm:$0xff] %vm3828, %v5724
      %5815 = vst.msk [vmem:[#allocation3 + $0x60] sm:$0xff] %vm3828, %v5726
      %5816 = vst.msk [vmem:[#allocation3 + $0x70] sm:$0xff] %vm3828, %v5728
      %5817 = vst.msk [vmem:[#allocation3 + $0x80] sm:$0xff] %vm3828, %v5730
      %5818 = vst.msk [vmem:[#allocation3 + $0x90] sm:$0xff] %vm3828, %v5732
      %5819 = vst.msk [vmem:[#allocation3 + $0xa0] sm:$0xff] %vm3828, %v5734
      %5820 = vst.msk [vmem:[#allocation3 + $0xb0] sm:$0xff] %vm3828, %v5736
      %5821 = vst.msk [vmem:[#allocation3 + $0xc0] sm:$0xff] %vm3828, %v5738
      %5822 = vst.msk [vmem:[#allocation3 + $0xd0] sm:$0xff] %vm3828, %v5740
      %5823 = vst.msk [vmem:[#allocation3 + $0xe0] sm:$0xff] %vm3828, %v5742
      %5824 = vst.msk [vmem:[#allocation3 + $0xf0] sm:$0xff] %vm3828, %v5744
      %5825 = vst.msk [vmem:[#allocation3 + $0x100] sm:$0xff] %vm3828, %v5746
      %5826 = vst.msk [vmem:[#allocation3 + $0x110] sm:$0xff] %vm3828, %v5748
      %5827 = vst.msk [vmem:[#allocation3 + $0x120] sm:$0xff] %vm3828, %v5750
      %5828 = vst.msk [vmem:[#allocation3 + $0x130] sm:$0xff] %vm3828, %v5752
      %5829 = vst.msk [vmem:[#allocation3 + $0x140] sm:$0xff] %vm3828, %v5754
      %5830 = vst.msk [vmem:[#allocation3 + $0x150] sm:$0xff] %vm3828, %v5756
      %5831 = vst.msk [vmem:[#allocation3 + $0x160] sm:$0xff] %vm3828, %v5758
      %5832 = vst.msk [vmem:[#allocation3 + $0x170] sm:$0xff] %vm3828, %v5760
      %5833 = vst.msk [vmem:[#allocation3 + $0x180] sm:$0xff] %vm3828, %v5762
      %5834 = vst.msk [vmem:[#allocation3 + $0x190] sm:$0xff] %vm3828, %v5764
      %5835 = vst.msk [vmem:[#allocation3 + $0x1a0] sm:$0xff] %vm3828, %v5766
      %5836 = vst.msk [vmem:[#allocation3 + $0x1b0] sm:$0xff] %vm3828, %v5768
      %5837 = vst.msk [vmem:[#allocation3 + $0x1c0] sm:$0xff] %vm3828, %v5770
      %5838 = vst.msk [vmem:[#allocation3 + $0x1d0] sm:$0xff] %vm3828, %v5772
      %5839 = vst.msk [vmem:[#allocation3 + $0x1e0] sm:$0xff] %vm3828, %v5774
      %5840 = vst.msk [vmem:[#allocation3 + $0x1f0] sm:$0xff] %vm3828, %v5776
      %v5841 = vld [vmem:[%s1787] sm:$0xff]
      %v5842 = vld [vmem:[%s1787 + $0x8] sm:$0xff]
      %v5843 = vld [vmem:[%s1787 + $0x18] sm:$0xff]
      %v5844 = vld [vmem:[%s1787 + $0x20] sm:$0xff]
      %v5845 = vld [vmem:[%s1787 + $0x30] sm:$0xff]
      %v5846 = vld [vmem:[%s1787 + $0x38] sm:$0xff]
      %v5847 = vld [vmem:[%s1787 + $0x48] sm:$0xff]
      %v5848 = vld [vmem:[%s1787 + $0x50] sm:$0xff]
      %v5849 = vld [vmem:[%s1787 + $0x60] sm:$0xff]
      %v5850 = vld [vmem:[%s1787 + $0x68] sm:$0xff]
      %v5851 = vld [vmem:[%s1787 + $0x78] sm:$0xff]
      %v5852 = vld [vmem:[%s1787 + $0x80] sm:$0xff]
      %v5853 = vld [vmem:[%s1787 + $0x90] sm:$0xff]
      %v5854 = vld [vmem:[%s1787 + $0x98] sm:$0xff]
      %v5855 = vld [vmem:[%s1787 + $0xa8] sm:$0xff]
      %v5856 = vld [vmem:[%s1787 + $0xb0] sm:$0xff]
      %v5857 = vld [vmem:[%s1787 + $0xc0] sm:$0xff]
      %v5858 = vld [vmem:[%s1787 + $0xc8] sm:$0xff]
      %v5859 = vld [vmem:[%s1787 + $0xd8] sm:$0xff]
      %v5860 = vld [vmem:[%s1787 + $0xe0] sm:$0xff]
      %v5861 = vld [vmem:[%s1787 + $0xf0] sm:$0xff]
      %v5862 = vld [vmem:[%s1787 + $0xf8] sm:$0xff]
      %v5863 = vld [vmem:[%s1787 + $0x108] sm:$0xff]
      %v5864 = vld [vmem:[%s1787 + $0x110] sm:$0xff]
      %v5865 = vld [vmem:[%s1787 + $0x120] sm:$0xff]
      %v5866 = vld [vmem:[%s1787 + $0x128] sm:$0xff]
      %v5867 = vld [vmem:[%s1787 + $0x138] sm:$0xff]
      %v5868 = vld [vmem:[%s1787 + $0x140] sm:$0xff]
      %v5869 = vld [vmem:[%s1787 + $0x150] sm:$0xff]
      %v5870 = vld [vmem:[%s1787 + $0x158] sm:$0xff]
      %v5871 = vld [vmem:[%s1787 + $0x168] sm:$0xff]
      %v5872 = vld [vmem:[%s1787 + $0x170] sm:$0xff]
      %5905 = vrot.lane.b32.xlu0 %v5841, 96
      %v5906 = vpop.permute.xlu0 %5905
      %5907 = vrot.lane.b32.xlu0 %v5842, 96
      %v5908 = vpop.permute.xlu0 %5907
      %5909 = vrot.lane.b32.xlu0 %v5843, 96
      %v5910 = vpop.permute.xlu0 %5909
      %5911 = vrot.lane.b32.xlu0 %v5844, 96
      %v5912 = vpop.permute.xlu0 %5911
      %5913 = vrot.lane.b32.xlu0 %v5845, 96
      %v5914 = vpop.permute.xlu0 %5913
      %5915 = vrot.lane.b32.xlu0 %v5846, 96
      %v5916 = vpop.permute.xlu0 %5915
      %5917 = vrot.lane.b32.xlu0 %v5847, 96
      %v5918 = vpop.permute.xlu0 %5917
      %5919 = vrot.lane.b32.xlu0 %v5848, 96
      %v5920 = vpop.permute.xlu0 %5919
      %5921 = vrot.lane.b32.xlu0 %v5849, 96
      %v5922 = vpop.permute.xlu0 %5921
      %5923 = vrot.lane.b32.xlu0 %v5850, 96
      %v5924 = vpop.permute.xlu0 %5923
      %5925 = vrot.lane.b32.xlu0 %v5851, 96
      %v5926 = vpop.permute.xlu0 %5925
      %5927 = vrot.lane.b32.xlu0 %v5852, 96
      %v5928 = vpop.permute.xlu0 %5927
      %5929 = vrot.lane.b32.xlu0 %v5853, 96
      %v5930 = vpop.permute.xlu0 %5929
      %5931 = vrot.lane.b32.xlu0 %v5854, 96
      %v5932 = vpop.permute.xlu0 %5931
      %5933 = vrot.lane.b32.xlu0 %v5855, 96
      %v5934 = vpop.permute.xlu0 %5933
      %5935 = vrot.lane.b32.xlu0 %v5856, 96
      %v5936 = vpop.permute.xlu0 %5935
      %5937 = vrot.lane.b32.xlu0 %v5857, 96
      %v5938 = vpop.permute.xlu0 %5937
      %5939 = vrot.lane.b32.xlu0 %v5858, 96
      %v5940 = vpop.permute.xlu0 %5939
      %5941 = vrot.lane.b32.xlu0 %v5859, 96
      %v5942 = vpop.permute.xlu0 %5941
      %5943 = vrot.lane.b32.xlu0 %v5860, 96
      %v5944 = vpop.permute.xlu0 %5943
      %5945 = vrot.lane.b32.xlu0 %v5861, 96
      %v5946 = vpop.permute.xlu0 %5945
      %5947 = vrot.lane.b32.xlu0 %v5862, 96
      %v5948 = vpop.permute.xlu0 %5947
      %5949 = vrot.lane.b32.xlu0 %v5863, 96
      %v5950 = vpop.permute.xlu0 %5949
      %5951 = vrot.lane.b32.xlu0 %v5864, 96
      %v5952 = vpop.permute.xlu0 %5951
      %5953 = vrot.lane.b32.xlu0 %v5865, 96
      %v5954 = vpop.permute.xlu0 %5953
      %5955 = vrot.lane.b32.xlu0 %v5866, 96
      %v5956 = vpop.permute.xlu0 %5955
      %5957 = vrot.lane.b32.xlu0 %v5867, 96
      %v5958 = vpop.permute.xlu0 %5957
      %5959 = vrot.lane.b32.xlu0 %v5868, 96
      %v5960 = vpop.permute.xlu0 %5959
      %5961 = vrot.lane.b32.xlu0 %v5869, 96
      %v5962 = vpop.permute.xlu0 %5961
      %5963 = vrot.lane.b32.xlu0 %v5870, 96
      %v5964 = vpop.permute.xlu0 %5963
      %5965 = vrot.lane.b32.xlu0 %v5871, 96
      %v5966 = vpop.permute.xlu0 %5965
      %5967 = vrot.lane.b32.xlu0 %v5872, 96
      %v5968 = vpop.permute.xlu0 %5967
      %6001 = vst.msk [vmem:[#allocation3] sm:$0xff] %vm4021, %v5906
      %6002 = vst.msk [vmem:[#allocation3 + $0x10] sm:$0xff] %vm4021, %v5908
      %6003 = vst.msk [vmem:[#allocation3 + $0x20] sm:$0xff] %vm4021, %v5910
      %6004 = vst.msk [vmem:[#allocation3 + $0x30] sm:$0xff] %vm4021, %v5912
      %6005 = vst.msk [vmem:[#allocation3 + $0x40] sm:$0xff] %vm4021, %v5914
      %6006 = vst.msk [vmem:[#allocation3 + $0x50] sm:$0xff] %vm4021, %v5916
      %6007 = vst.msk [vmem:[#allocation3 + $0x60] sm:$0xff] %vm4021, %v5918
      %6008 = vst.msk [vmem:[#allocation3 + $0x70] sm:$0xff] %vm4021, %v5920
      %6009 = vst.msk [vmem:[#allocation3 + $0x80] sm:$0xff] %vm4021, %v5922
      %6010 = vst.msk [vmem:[#allocation3 + $0x90] sm:$0xff] %vm4021, %v5924
      %6011 = vst.msk [vmem:[#allocation3 + $0xa0] sm:$0xff] %vm4021, %v5926
      %6012 = vst.msk [vmem:[#allocation3 + $0xb0] sm:$0xff] %vm4021, %v5928
      %6013 = vst.msk [vmem:[#allocation3 + $0xc0] sm:$0xff] %vm4021, %v5930
      %6014 = vst.msk [vmem:[#allocation3 + $0xd0] sm:$0xff] %vm4021, %v5932
      %6015 = vst.msk [vmem:[#allocation3 + $0xe0] sm:$0xff] %vm4021, %v5934
      %6016 = vst.msk [vmem:[#allocation3 + $0xf0] sm:$0xff] %vm4021, %v5936
      %6017 = vst.msk [vmem:[#allocation3 + $0x100] sm:$0xff] %vm4021, %v5938
      %6018 = vst.msk [vmem:[#allocation3 + $0x110] sm:$0xff] %vm4021, %v5940
      %6019 = vst.msk [vmem:[#allocation3 + $0x120] sm:$0xff] %vm4021, %v5942
      %6020 = vst.msk [vmem:[#allocation3 + $0x130] sm:$0xff] %vm4021, %v5944
      %6021 = vst.msk [vmem:[#allocation3 + $0x140] sm:$0xff] %vm4021, %v5946
      %6022 = vst.msk [vmem:[#allocation3 + $0x150] sm:$0xff] %vm4021, %v5948
      %6023 = vst.msk [vmem:[#allocation3 + $0x160] sm:$0xff] %vm4021, %v5950
      %6024 = vst.msk [vmem:[#allocation3 + $0x170] sm:$0xff] %vm4021, %v5952
      %6025 = vst.msk [vmem:[#allocation3 + $0x180] sm:$0xff] %vm4021, %v5954
      %6026 = vst.msk [vmem:[#allocation3 + $0x190] sm:$0xff] %vm4021, %v5956
      %6027 = vst.msk [vmem:[#allocation3 + $0x1a0] sm:$0xff] %vm4021, %v5958
      %6028 = vst.msk [vmem:[#allocation3 + $0x1b0] sm:$0xff] %vm4021, %v5960
      %6029 = vst.msk [vmem:[#allocation3 + $0x1c0] sm:$0xff] %vm4021, %v5962
      %6030 = vst.msk [vmem:[#allocation3 + $0x1d0] sm:$0xff] %vm4021, %v5964
      %6031 = vst.msk [vmem:[#allocation3 + $0x1e0] sm:$0xff] %vm4021, %v5966
      %6032 = vst.msk [vmem:[#allocation3 + $0x1f0] sm:$0xff] %vm4021, %v5968
      %v6033 = vld [vmem:[%s1787 + $0x1] sm:$0xff]
      %v6034 = vld [vmem:[%s1787 + $0x9] sm:$0xff]
      %v6035 = vld [vmem:[%s1787 + $0x19] sm:$0xff]
      %v6036 = vld [vmem:[%s1787 + $0x21] sm:$0xff]
      %v6037 = vld [vmem:[%s1787 + $0x31] sm:$0xff]
      %v6038 = vld [vmem:[%s1787 + $0x39] sm:$0xff]
      %v6039 = vld [vmem:[%s1787 + $0x49] sm:$0xff]
      %v6040 = vld [vmem:[%s1787 + $0x51] sm:$0xff]
      %v6041 = vld [vmem:[%s1787 + $0x61] sm:$0xff]
      %v6042 = vld [vmem:[%s1787 + $0x69] sm:$0xff]
      %v6043 = vld [vmem:[%s1787 + $0x79] sm:$0xff]
      %v6044 = vld [vmem:[%s1787 + $0x81] sm:$0xff]
      %v6045 = vld [vmem:[%s1787 + $0x91] sm:$0xff]
      %v6046 = vld [vmem:[%s1787 + $0x99] sm:$0xff]
      %v6047 = vld [vmem:[%s1787 + $0xa9] sm:$0xff]
      %v6048 = vld [vmem:[%s1787 + $0xb1] sm:$0xff]
      %v6049 = vld [vmem:[%s1787 + $0xc1] sm:$0xff]
      %v6050 = vld [vmem:[%s1787 + $0xc9] sm:$0xff]
      %v6051 = vld [vmem:[%s1787 + $0xd9] sm:$0xff]
      %v6052 = vld [vmem:[%s1787 + $0xe1] sm:$0xff]
      %v6053 = vld [vmem:[%s1787 + $0xf1] sm:$0xff]
      %v6054 = vld [vmem:[%s1787 + $0xf9] sm:$0xff]
      %v6055 = vld [vmem:[%s1787 + $0x109] sm:$0xff]
      %v6056 = vld [vmem:[%s1787 + $0x111] sm:$0xff]
      %v6057 = vld [vmem:[%s1787 + $0x121] sm:$0xff]
      %v6058 = vld [vmem:[%s1787 + $0x129] sm:$0xff]
      %v6059 = vld [vmem:[%s1787 + $0x139] sm:$0xff]
      %v6060 = vld [vmem:[%s1787 + $0x141] sm:$0xff]
      %v6061 = vld [vmem:[%s1787 + $0x151] sm:$0xff]
      %v6062 = vld [vmem:[%s1787 + $0x159] sm:$0xff]
      %v6063 = vld [vmem:[%s1787 + $0x169] sm:$0xff]
      %v6064 = vld [vmem:[%s1787 + $0x171] sm:$0xff]
      %6097 = vrot.lane.b32.xlu0 %v6033, 112
      %v6098 = vpop.permute.xlu0 %6097
      %6099 = vrot.lane.b32.xlu0 %v6034, 112
      %v6100 = vpop.permute.xlu0 %6099
      %6101 = vrot.lane.b32.xlu0 %v6035, 112
      %v6102 = vpop.permute.xlu0 %6101
      %6103 = vrot.lane.b32.xlu0 %v6036, 112
      %v6104 = vpop.permute.xlu0 %6103
      %6105 = vrot.lane.b32.xlu0 %v6037, 112
      %v6106 = vpop.permute.xlu0 %6105
      %6107 = vrot.lane.b32.xlu0 %v6038, 112
      %v6108 = vpop.permute.xlu0 %6107
      %6109 = vrot.lane.b32.xlu0 %v6039, 112
      %v6110 = vpop.permute.xlu0 %6109
      %6111 = vrot.lane.b32.xlu0 %v6040, 112
      %v6112 = vpop.permute.xlu0 %6111
      %6113 = vrot.lane.b32.xlu0 %v6041, 112
      %v6114 = vpop.permute.xlu0 %6113
      %6115 = vrot.lane.b32.xlu0 %v6042, 112
      %v6116 = vpop.permute.xlu0 %6115
      %6117 = vrot.lane.b32.xlu0 %v6043, 112
      %v6118 = vpop.permute.xlu0 %6117
      %6119 = vrot.lane.b32.xlu0 %v6044, 112
      %v6120 = vpop.permute.xlu0 %6119
      %6121 = vrot.lane.b32.xlu0 %v6045, 112
      %v6122 = vpop.permute.xlu0 %6121
      %6123 = vrot.lane.b32.xlu0 %v6046, 112
      %v6124 = vpop.permute.xlu0 %6123
      %6125 = vrot.lane.b32.xlu0 %v6047, 112
      %v6126 = vpop.permute.xlu0 %6125
      %6127 = vrot.lane.b32.xlu0 %v6048, 112
      %v6128 = vpop.permute.xlu0 %6127
      %6129 = vrot.lane.b32.xlu0 %v6049, 112
      %v6130 = vpop.permute.xlu0 %6129
      %6131 = vrot.lane.b32.xlu0 %v6050, 112
      %v6132 = vpop.permute.xlu0 %6131
      %6133 = vrot.lane.b32.xlu0 %v6051, 112
      %v6134 = vpop.permute.xlu0 %6133
      %6135 = vrot.lane.b32.xlu0 %v6052, 112
      %v6136 = vpop.permute.xlu0 %6135
      %6137 = vrot.lane.b32.xlu0 %v6053, 112
      %v6138 = vpop.permute.xlu0 %6137
      %6139 = vrot.lane.b32.xlu0 %v6054, 112
      %v6140 = vpop.permute.xlu0 %6139
      %6141 = vrot.lane.b32.xlu0 %v6055, 112
      %v6142 = vpop.permute.xlu0 %6141
      %6143 = vrot.lane.b32.xlu0 %v6056, 112
      %v6144 = vpop.permute.xlu0 %6143
      %6145 = vrot.lane.b32.xlu0 %v6057, 112
      %v6146 = vpop.permute.xlu0 %6145
      %6147 = vrot.lane.b32.xlu0 %v6058, 112
      %v6148 = vpop.permute.xlu0 %6147
      %6149 = vrot.lane.b32.xlu0 %v6059, 112
      %v6150 = vpop.permute.xlu0 %6149
      %6151 = vrot.lane.b32.xlu0 %v6060, 112
      %v6152 = vpop.permute.xlu0 %6151
      %6153 = vrot.lane.b32.xlu0 %v6061, 112
      %v6154 = vpop.permute.xlu0 %6153
      %6155 = vrot.lane.b32.xlu0 %v6062, 112
      %v6156 = vpop.permute.xlu0 %6155
      %6157 = vrot.lane.b32.xlu0 %v6063, 112
      %v6158 = vpop.permute.xlu0 %6157
      %6159 = vrot.lane.b32.xlu0 %v6064, 112
      %v6160 = vpop.permute.xlu0 %6159
      %6193 = vst.msk [vmem:[#allocation3] sm:$0xff] %vm4214, %v6098
      %6194 = vst.msk [vmem:[#allocation3 + $0x10] sm:$0xff] %vm4214, %v6100
      %6195 = vst.msk [vmem:[#allocation3 + $0x20] sm:$0xff] %vm4214, %v6102
      %6196 = vst.msk [vmem:[#allocation3 + $0x30] sm:$0xff] %vm4214, %v6104
      %6197 = vst.msk [vmem:[#allocation3 + $0x40] sm:$0xff] %vm4214, %v6106
      %6198 = vst.msk [vmem:[#allocation3 + $0x50] sm:$0xff] %vm4214, %v6108
      %6199 = vst.msk [vmem:[#allocation3 + $0x60] sm:$0xff] %vm4214, %v6110
      %6200 = vst.msk [vmem:[#allocation3 + $0x70] sm:$0xff] %vm4214, %v6112
      %6201 = vst.msk [vmem:[#allocation3 + $0x80] sm:$0xff] %vm4214, %v6114
      %6202 = vst.msk [vmem:[#allocation3 + $0x90] sm:$0xff] %vm4214, %v6116
      %6203 = vst.msk [vmem:[#allocation3 + $0xa0] sm:$0xff] %vm4214, %v6118
      %6204 = vst.msk [vmem:[#allocation3 + $0xb0] sm:$0xff] %vm4214, %v6120
      %6205 = vst.msk [vmem:[#allocation3 + $0xc0] sm:$0xff] %vm4214, %v6122
      %6206 = vst.msk [vmem:[#allocation3 + $0xd0] sm:$0xff] %vm4214, %v6124
      %6207 = vst.msk [vmem:[#allocation3 + $0xe0] sm:$0xff] %vm4214, %v6126
      %6208 = vst.msk [vmem:[#allocation3 + $0xf0] sm:$0xff] %vm4214, %v6128
      %6209 = vst.msk [vmem:[#allocation3 + $0x100] sm:$0xff] %vm4214, %v6130
      %6210 = vst.msk [vmem:[#allocation3 + $0x110] sm:$0xff] %vm4214, %v6132
      %6211 = vst.msk [vmem:[#allocation3 + $0x120] sm:$0xff] %vm4214, %v6134
      %6212 = vst.msk [vmem:[#allocation3 + $0x130] sm:$0xff] %vm4214, %v6136
      %6213 = vst.msk [vmem:[#allocation3 + $0x140] sm:$0xff] %vm4214, %v6138
      %6214 = vst.msk [vmem:[#allocation3 + $0x150] sm:$0xff] %vm4214, %v6140
      %6215 = vst.msk [vmem:[#allocation3 + $0x160] sm:$0xff] %vm4214, %v6142
      %6216 = vst.msk [vmem:[#allocation3 + $0x170] sm:$0xff] %vm4214, %v6144
      %6217 = vst.msk [vmem:[#allocation3 + $0x180] sm:$0xff] %vm4214, %v6146
      %6218 = vst.msk [vmem:[#allocation3 + $0x190] sm:$0xff] %vm4214, %v6148
      %6219 = vst.msk [vmem:[#allocation3 + $0x1a0] sm:$0xff] %vm4214, %v6150
      %6220 = vst.msk [vmem:[#allocation3 + $0x1b0] sm:$0xff] %vm4214, %v6152
      %6221 = vst.msk [vmem:[#allocation3 + $0x1c0] sm:$0xff] %vm4214, %v6154
      %6222 = vst.msk [vmem:[#allocation3 + $0x1d0] sm:$0xff] %vm4214, %v6156
      %6223 = vst.msk [vmem:[#allocation3 + $0x1e0] sm:$0xff] %vm4214, %v6158
      %6224 = vst.msk [vmem:[#allocation3 + $0x1f0] sm:$0xff] %vm4214, %v6160
      %v6225 = vld [vmem:[%s1787 + $0x2] sm:$0xff]
      %v6226 = vld [vmem:[%s1787 + $0xa] sm:$0xff]
      %v6227 = vld [vmem:[%s1787 + $0x1a] sm:$0xff]
      %v6228 = vld [vmem:[%s1787 + $0x22] sm:$0xff]
      %v6229 = vld [vmem:[%s1787 + $0x32] sm:$0xff]
      %v6230 = vld [vmem:[%s1787 + $0x3a] sm:$0xff]
      %v6231 = vld [vmem:[%s1787 + $0x4a] sm:$0xff]
      %v6232 = vld [vmem:[%s1787 + $0x52] sm:$0xff]
      %v6233 = vld [vmem:[%s1787 + $0x62] sm:$0xff]
      %v6234 = vld [vmem:[%s1787 + $0x6a] sm:$0xff]
      %v6235 = vld [vmem:[%s1787 + $0x7a] sm:$0xff]
      %v6236 = vld [vmem:[%s1787 + $0x82] sm:$0xff]
      %v6237 = vld [vmem:[%s1787 + $0x92] sm:$0xff]
      %v6238 = vld [vmem:[%s1787 + $0x9a] sm:$0xff]
      %v6239 = vld [vmem:[%s1787 + $0xaa] sm:$0xff]
      %v6240 = vld [vmem:[%s1787 + $0xb2] sm:$0xff]
      %v6241 = vld [vmem:[%s1787 + $0xc2] sm:$0xff]
      %v6242 = vld [vmem:[%s1787 + $0xca] sm:$0xff]
      %v6243 = vld [vmem:[%s1787 + $0xda] sm:$0xff]
      %v6244 = vld [vmem:[%s1787 + $0xe2] sm:$0xff]
      %v6245 = vld [vmem:[%s1787 + $0xf2] sm:$0xff]
      %v6246 = vld [vmem:[%s1787 + $0xfa] sm:$0xff]
      %v6247 = vld [vmem:[%s1787 + $0x10a] sm:$0xff]
      %v6248 = vld [vmem:[%s1787 + $0x112] sm:$0xff]
      %v6249 = vld [vmem:[%s1787 + $0x122] sm:$0xff]
      %v6250 = vld [vmem:[%s1787 + $0x12a] sm:$0xff]
      %v6251 = vld [vmem:[%s1787 + $0x13a] sm:$0xff]
      %v6252 = vld [vmem:[%s1787 + $0x142] sm:$0xff]
      %v6253 = vld [vmem:[%s1787 + $0x152] sm:$0xff]
      %v6254 = vld [vmem:[%s1787 + $0x15a] sm:$0xff]
      %v6255 = vld [vmem:[%s1787 + $0x16a] sm:$0xff]
      %v6256 = vld [vmem:[%s1787 + $0x172] sm:$0xff]
      %6257 = vst.msk [vmem:[#allocation3 + $0x8] sm:$0xff] %vm380, %v6225
      %6258 = vst.msk [vmem:[#allocation3 + $0x18] sm:$0xff] %vm380, %v6226
      %6259 = vst.msk [vmem:[#allocation3 + $0x28] sm:$0xff] %vm380, %v6227
      %6260 = vst.msk [vmem:[#allocation3 + $0x38] sm:$0xff] %vm380, %v6228
      %6261 = vst.msk [vmem:[#allocation3 + $0x48] sm:$0xff] %vm380, %v6229
      %6262 = vst.msk [vmem:[#allocation3 + $0x58] sm:$0xff] %vm380, %v6230
      %6263 = vst.msk [vmem:[#allocation3 + $0x68] sm:$0xff] %vm380, %v6231
      %6264 = vst.msk [vmem:[#allocation3 + $0x78] sm:$0xff] %vm380, %v6232
      %6265 = vst.msk [vmem:[#allocation3 + $0x88] sm:$0xff] %vm380, %v6233
      %6266 = vst.msk [vmem:[#allocation3 + $0x98] sm:$0xff] %vm380, %v6234
      %6267 = vst.msk [vmem:[#allocation3 + $0xa8] sm:$0xff] %vm380, %v6235
      %6268 = vst.msk [vmem:[#allocation3 + $0xb8] sm:$0xff] %vm380, %v6236
      %6269 = vst.msk [vmem:[#allocation3 + $0xc8] sm:$0xff] %vm380, %v6237
      %6270 = vst.msk [vmem:[#allocation3 + $0xd8] sm:$0xff] %vm380, %v6238
      %6271 = vst.msk [vmem:[#allocation3 + $0xe8] sm:$0xff] %vm380, %v6239
      %6272 = vst.msk [vmem:[#allocation3 + $0xf8] sm:$0xff] %vm380, %v6240
      %6273 = vst.msk [vmem:[#allocation3 + $0x108] sm:$0xff] %vm380, %v6241
      %6274 = vst.msk [vmem:[#allocation3 + $0x118] sm:$0xff] %vm380, %v6242
      %6275 = vst.msk [vmem:[#allocation3 + $0x128] sm:$0xff] %vm380, %v6243
      %6276 = vst.msk [vmem:[#allocation3 + $0x138] sm:$0xff] %vm380, %v6244
      %6277 = vst.msk [vmem:[#allocation3 + $0x148] sm:$0xff] %vm380, %v6245
      %6278 = vst.msk [vmem:[#allocation3 + $0x158] sm:$0xff] %vm380, %v6246
      %6279 = vst.msk [vmem:[#allocation3 + $0x168] sm:$0xff] %vm380, %v6247
      %6280 = vst.msk [vmem:[#allocation3 + $0x178] sm:$0xff] %vm380, %v6248
      %6281 = vst.msk [vmem:[#allocation3 + $0x188] sm:$0xff] %vm380, %v6249
      %6282 = vst.msk [vmem:[#allocation3 + $0x198] sm:$0xff] %vm380, %v6250
      %6283 = vst.msk [vmem:[#allocation3 + $0x1a8] sm:$0xff] %vm380, %v6251
      %6284 = vst.msk [vmem:[#allocation3 + $0x1b8] sm:$0xff] %vm380, %v6252
      %6285 = vst.msk [vmem:[#allocation3 + $0x1c8] sm:$0xff] %vm380, %v6253
      %6286 = vst.msk [vmem:[#allocation3 + $0x1d8] sm:$0xff] %vm380, %v6254
      %6287 = vst.msk [vmem:[#allocation3 + $0x1e8] sm:$0xff] %vm380, %v6255
      %6288 = vst.msk [vmem:[#allocation3 + $0x1f8] sm:$0xff] %vm380, %v6256
      %v6289 = vld [vmem:[#allocation3] sm:$0xff]
      %v6290 = vld [vmem:[#allocation3 + $0x8] sm:$0xff]
      %v6291 = vld [vmem:[#allocation3 + $0x10] sm:$0xff]
      %v6292 = vld [vmem:[#allocation3 + $0x18] sm:$0xff]
      %v6293 = vld [vmem:[#allocation3 + $0x20] sm:$0xff]
      %v6294 = vld [vmem:[#allocation3 + $0x28] sm:$0xff]
      %v6295 = vld [vmem:[#allocation3 + $0x30] sm:$0xff]
      %v6296 = vld [vmem:[#allocation3 + $0x38] sm:$0xff]
      %v6297 = vld [vmem:[#allocation3 + $0x40] sm:$0xff]
      %v6298 = vld [vmem:[#allocation3 + $0x48] sm:$0xff]
      %v6299 = vld [vmem:[#allocation3 + $0x50] sm:$0xff]
      %v6300 = vld [vmem:[#allocation3 + $0x58] sm:$0xff]
      %v6301 = vld [vmem:[#allocation3 + $0x60] sm:$0xff]
      %v6302 = vld [vmem:[#allocation3 + $0x68] sm:$0xff]
      %v6303 = vld [vmem:[#allocation3 + $0x70] sm:$0xff]
      %v6304 = vld [vmem:[#allocation3 + $0x78] sm:$0xff]
      %v6305 = vld [vmem:[#allocation3 + $0x80] sm:$0xff]
      %v6306 = vld [vmem:[#allocation3 + $0x88] sm:$0xff]
      %v6307 = vld [vmem:[#allocation3 + $0x90] sm:$0xff]
      %v6308 = vld [vmem:[#allocation3 + $0x98] sm:$0xff]
      %v6309 = vld [vmem:[#allocation3 + $0xa0] sm:$0xff]
      %v6310 = vld [vmem:[#allocation3 + $0xa8] sm:$0xff]
      %v6311 = vld [vmem:[#allocation3 + $0xb0] sm:$0xff]
      %v6312 = vld [vmem:[#allocation3 + $0xb8] sm:$0xff]
      %v6313 = vld [vmem:[#allocation3 + $0xc0] sm:$0xff]
      %v6314 = vld [vmem:[#allocation3 + $0xc8] sm:$0xff]
      %v6315 = vld [vmem:[#allocation3 + $0xd0] sm:$0xff]
      %v6316 = vld [vmem:[#allocation3 + $0xd8] sm:$0xff]
      %v6317 = vld [vmem:[#allocation3 + $0xe0] sm:$0xff]
      %v6318 = vld [vmem:[#allocation3 + $0xe8] sm:$0xff]
      %v6319 = vld [vmem:[#allocation3 + $0xf0] sm:$0xff]
      %v6320 = vld [vmem:[#allocation3 + $0xf8] sm:$0xff]
      %v6321 = vld [vmem:[#allocation3 + $0x100] sm:$0xff]
      %v6322 = vld [vmem:[#allocation3 + $0x108] sm:$0xff]
      %v6323 = vld [vmem:[#allocation3 + $0x110] sm:$0xff]
      %v6324 = vld [vmem:[#allocation3 + $0x118] sm:$0xff]
      %v6325 = vld [vmem:[#allocation3 + $0x120] sm:$0xff]
      %v6326 = vld [vmem:[#allocation3 + $0x128] sm:$0xff]
      %v6327 = vld [vmem:[#allocation3 + $0x130] sm:$0xff]
      %v6328 = vld [vmem:[#allocation3 + $0x138] sm:$0xff]
      %v6329 = vld [vmem:[#allocation3 + $0x140] sm:$0xff]
      %v6330 = vld [vmem:[#allocation3 + $0x148] sm:$0xff]
      %v6331 = vld [vmem:[#allocation3 + $0x150] sm:$0xff]
      %v6332 = vld [vmem:[#allocation3 + $0x158] sm:$0xff]
      %v6333 = vld [vmem:[#allocation3 + $0x160] sm:$0xff]
      %v6334 = vld [vmem:[#allocation3 + $0x168] sm:$0xff]
      %v6335 = vld [vmem:[#allocation3 + $0x170] sm:$0xff]
      %v6336 = vld [vmem:[#allocation3 + $0x178] sm:$0xff]
      %v6337 = vld [vmem:[#allocation3 + $0x180] sm:$0xff]
      %v6338 = vld [vmem:[#allocation3 + $0x188] sm:$0xff]
      %v6339 = vld [vmem:[#allocation3 + $0x190] sm:$0xff]
      %v6340 = vld [vmem:[#allocation3 + $0x198] sm:$0xff]
      %v6341 = vld [vmem:[#allocation3 + $0x1a0] sm:$0xff]
      %v6342 = vld [vmem:[#allocation3 + $0x1a8] sm:$0xff]
      %v6343 = vld [vmem:[#allocation3 + $0x1b0] sm:$0xff]
      %v6344 = vld [vmem:[#allocation3 + $0x1b8] sm:$0xff]
      %v6345 = vld [vmem:[#allocation3 + $0x1c0] sm:$0xff]
      %v6346 = vld [vmem:[#allocation3 + $0x1c8] sm:$0xff]
      %v6347 = vld [vmem:[#allocation3 + $0x1d0] sm:$0xff]
      %v6348 = vld [vmem:[#allocation3 + $0x1d8] sm:$0xff]
      %v6349 = vld [vmem:[#allocation3 + $0x1e0] sm:$0xff]
      %v6350 = vld [vmem:[#allocation3 + $0x1e8] sm:$0xff]
      %v6351 = vld [vmem:[#allocation3 + $0x1f0] sm:$0xff]
      %v6352 = vld [vmem:[#allocation3 + $0x1f8] sm:$0xff]
      %v6353 = vld [vmem:[%s6] sm:$0xff]
      %v6354 = vld [vmem:[%s6 + $0x8] sm:$0xff]
      %v6355 = vld [vmem:[%s6 + $0x10] sm:$0xff]
      %v6356 = vld [vmem:[%s6 + $0x18] sm:$0xff]
      %v6357 = vld [vmem:[%s6 + $0x20] sm:$0xff]
      %v6358 = vld [vmem:[%s6 + $0x28] sm:$0xff]
      %v6359 = vld [vmem:[%s6 + $0x30] sm:$0xff]
      %v6360 = vld [vmem:[%s6 + $0x38] sm:$0xff]
      %v6361 = vld [vmem:[%s6 + $0x40] sm:$0xff]
      %v6362 = vld [vmem:[%s6 + $0x48] sm:$0xff]
      %v6363 = vld [vmem:[%s6 + $0x50] sm:$0xff]
      %v6364 = vld [vmem:[%s6 + $0x58] sm:$0xff]
      %v6365 = vld [vmem:[%s6 + $0x60] sm:$0xff]
      %v6366 = vld [vmem:[%s6 + $0x68] sm:$0xff]
      %v6367 = vld [vmem:[%s6 + $0x70] sm:$0xff]
      %v6368 = vld [vmem:[%s6 + $0x78] sm:$0xff]
      %v6369 = vld [vmem:[%s6 + $0x80] sm:$0xff]
      %v6370 = vld [vmem:[%s6 + $0x88] sm:$0xff]
      %v6371 = vld [vmem:[%s7] sm:$0x1]
      %v6373 = vlaneseq
      %v6374 = vshrl.u32 %v6373, 7
      %v6375 = vsub.s32 0, %v6374
      %v6376 = vrot.slane %v6371, %v6375
      %v6379 = vsel %vm380, %v6290, 0
      %v6382 = vsel %vm380, %v6292, 0
      %v6385 = vsel %vm380, %v6294, 0
      %v6388 = vsel %vm380, %v6296, 0
      %v6391 = vsel %vm380, %v6298, 0
      %v6394 = vsel %vm380, %v6300, 0
      %v6397 = vsel %vm380, %v6302, 0
      %v6400 = vsel %vm380, %v6304, 0
      %v6403 = vsel %vm380, %v6306, 0
      %v6406 = vsel %vm380, %v6308, 0
      %v6409 = vsel %vm380, %v6310, 0
      %v6412 = vsel %vm380, %v6312, 0
      %v6415 = vsel %vm380, %v6314, 0
      %v6418 = vsel %vm380, %v6316, 0
      %v6421 = vsel %vm380, %v6318, 0
      %v6424 = vsel %vm380, %v6320, 0
      %v6427 = vsel %vm380, %v6322, 0
      %v6430 = vsel %vm380, %v6324, 0
      %v6433 = vsel %vm380, %v6326, 0
      %v6436 = vsel %vm380, %v6328, 0
      %v6439 = vsel %vm380, %v6330, 0
      %v6442 = vsel %vm380, %v6332, 0
      %v6445 = vsel %vm380, %v6334, 0
      %v6448 = vsel %vm380, %v6336, 0
      %v6451 = vsel %vm380, %v6338, 0
      %v6454 = vsel %vm380, %v6340, 0
      %v6457 = vsel %vm380, %v6342, 0
      %v6460 = vsel %vm380, %v6344, 0
      %v6463 = vsel %vm380, %v6346, 0
      %v6466 = vsel %vm380, %v6348, 0
      %v6469 = vsel %vm380, %v6350, 0
      %v6472 = vsel %vm380, %v6352, 0
      %6474 = vmatprep.subr.mxu0 0.0
      %6475 = vmatpush1.msra.mxu0 %v6353
      %6476 = vmatprep.subr.mxu0 0.0
      %6477 = vmatpush1.msra.mxu0 %v6354
      %6478 = vmatprep.subr.mxu0 0.0
      %6479 = vmatpush1.msra.mxu0 %v6355
      %6480 = vmatprep.subr.mxu0 0.0
      %6481 = vmatpush1.msra.mxu0 %v6356
      %6482 = vmatprep.subr.mxu0 0.0
      %6483 = vmatpush1.msra.mxu0 %v6357
      %6484 = vmatprep.subr.mxu0 0.0
      %6485 = vmatpush1.msra.mxu0 %v6358
      %6486 = vmatprep.subr.mxu0 0.0
      %6487 = vmatpush1.msra.mxu0 %v6359
      %6488 = vmatprep.subr.mxu0 0.0
      %6489 = vmatpush1.msra.mxu0 %v6360
      %6490 = vmatprep.subr.mxu0 0.0
      %6491 = vmatpush1.msra.mxu0 %v6361
      %6492 = vmatprep.subr.mxu0 0.0
      %6493 = vmatpush1.msra.mxu0 %v6362
      %6494 = vmatprep.subr.mxu0 0.0
      %6495 = vmatpush1.msra.mxu0 %v6363
      %6496 = vmatprep.subr.mxu0 0.0
      %6497 = vmatpush1.msra.mxu0 %v6364
      %6498 = vmatprep.subr.mxu0 0.0
      %6499 = vmatpush1.msra.mxu0 %v6365
      %6500 = vmatprep.subr.mxu0 0.0
      %6501 = vmatpush1.msra.mxu0 %v6366
      %6502 = vmatprep.subr.mxu0 0.0
      %6503 = vmatpush1.msra.mxu0 %v6367
      %6504 = vmatprep.subr.mxu0 0.0
      %6505 = vmatpush1.msra.mxu0 %v6368
      %6506 = vmatprep.subr.mxu0 0.0
      %6507 = vmatpush1.msra.mxu0 %v6369
      %6508 = vmatprep.subr.mxu0 0.0
      %6509 = vmatpush1.msra.mxu0 %v6370
      %6510 = vmatprep.subr.mxu0 0.0
      %6511 = vmatpush1.msra.mxu0 0.0
      %6512 = vmatprep.subr.mxu0 0.0
      %6513 = vmatpush1.msra.mxu0 0.0
      %6514 = vmatprep.subr.mxu0 0.0
      %6515 = vmatpush1.msra.mxu0 0.0
      %6516 = vmatprep.subr.mxu0 0.0
      %6517 = vmatpush1.msra.mxu0 0.0
      %6518 = vmatprep.subr.mxu0 0.0
      %6519 = vmatpush1.msra.mxu0 0.0
      %6520 = vmatprep.subr.mxu0 0.0
      %6521 = vmatpush1.msra.mxu0 0.0
      %6522 = vmatprep.subr.mxu0 0.0
      %6523 = vmatpush1.msra.mxu0 0.0
      %6524 = vmatprep.subr.mxu0 0.0
      %6525 = vmatpush1.msra.mxu0 0.0
      %6526 = vmatprep.subr.mxu0 0.0
      %6527 = vmatpush1.msra.mxu0 0.0
      %6528 = vmatprep.subr.mxu0 0.0
      %6529 = vmatpush1.msra.mxu0 0.0
      %6530 = vmatprep.subr.mxu0 0.0
      %6531 = vmatpush1.msra.mxu0 0.0
      %6532 = vmatprep.subr.mxu0 0.0
      %6533 = vmatpush1.msra.mxu0 0.0
      %6534 = vmatprep.subr.mxu0 0.0
      %6535 = vmatpush1.msra.mxu0 0.0
      %6536 = vmatprep.subr.mxu0 0.0
      %6537 = vmatpush1.msra.mxu0 0.0
      %6538 = vmatprep.mubr.f32.mxu0 %v6379
      %6539 = vmatmul.mubr.f32.gmra.mrb[0].mxu0 %v6289
      %v6540 = vpop.f32.mrb[0].mxu0
      %v6541 = vadd.f32 %v6376, %v6540
      %v6542 = vpop.f32.mrb[0].mxu0
      %6543 = vmatprep.mubr.f32.mxu0 %v6382
      %6544 = vmatmul.mubr.f32.gmra.mrb[0].mxu0 %v6291
      %v6545 = vpop.f32.mrb[0].mxu0
      %v6546 = vadd.f32 %v6376, %v6545
      %v6547 = vpop.f32.mrb[0].mxu0
      %6548 = vmatprep.mubr.f32.mxu0 %v6385
      %6549 = vmatmul.mubr.f32.gmra.mrb[0].mxu0 %v6293
      %v6550 = vpop.f32.mrb[0].mxu0
      %v6551 = vadd.f32 %v6376, %v6550
      %v6552 = vpop.f32.mrb[0].mxu0
      %6553 = vmatprep.mubr.f32.mxu0 %v6388
      %6554 = vmatmul.mubr.f32.gmra.mrb[0].mxu0 %v6295
      %v6555 = vpop.f32.mrb[0].mxu0
      %v6556 = vadd.f32 %v6376, %v6555
      %v6557 = vpop.f32.mrb[0].mxu0
      %6558 = vmatprep.mubr.f32.mxu0 %v6391
      %6559 = vmatmul.mubr.f32.gmra.mrb[0].mxu0 %v6297
      %v6560 = vpop.f32.mrb[0].mxu0
      %v6561 = vadd.f32 %v6376, %v6560
      %v6562 = vpop.f32.mrb[0].mxu0
      %6563 = vmatprep.mubr.f32.mxu0 %v6394
      %6564 = vmatmul.mubr.f32.gmra.mrb[0].mxu0 %v6299
      %v6565 = vpop.f32.mrb[0].mxu0
      %v6566 = vadd.f32 %v6376, %v6565
      %v6567 = vpop.f32.mrb[0].mxu0
      %6568 = vmatprep.mubr.f32.mxu0 %v6397
      %6569 = vmatmul.mubr.f32.gmra.mrb[0].mxu0 %v6301
      %v6570 = vpop.f32.mrb[0].mxu0
      %v6571 = vadd.f32 %v6376, %v6570
      %v6572 = vpop.f32.mrb[0].mxu0
      %6573 = vmatprep.mubr.f32.mxu0 %v6400
      %6574 = vmatmul.mubr.f32.gmra.mrb[0].mxu0 %v6303
      %v6575 = vpop.f32.mrb[0].mxu0
      %v6576 = vadd.f32 %v6376, %v6575
      %v6577 = vpop.f32.mrb[0].mxu0
      %6578 = vmatprep.mubr.f32.mxu0 %v6403
      %6579 = vmatmul.mubr.f32.gmra.mrb[0].mxu0 %v6305
      %v6580 = vpop.f32.mrb[0].mxu0
      %v6581 = vadd.f32 %v6376, %v6580
      %v6582 = vpop.f32.mrb[0].mxu0
      %6583 = vmatprep.mubr.f32.mxu0 %v6406
      %6584 = vmatmul.mubr.f32.gmra.mrb[0].mxu0 %v6307
      %v6585 = vpop.f32.mrb[0].mxu0
      %v6586 = vadd.f32 %v6376, %v6585
      %v6587 = vpop.f32.mrb[0].mxu0
      %6588 = vmatprep.mubr.f32.mxu0 %v6409
      %6589 = vmatmul.mubr.f32.gmra.mrb[0].mxu0 %v6309
      %v6590 = vpop.f32.mrb[0].mxu0
      %v6591 = vadd.f32 %v6376, %v6590
      %v6592 = vpop.f32.mrb[0].mxu0
      %6593 = vmatprep.mubr.f32.mxu0 %v6412
      %6594 = vmatmul.mubr.f32.gmra.mrb[0].mxu0 %v6311
      %v6595 = vpop.f32.mrb[0].mxu0
      %v6596 = vadd.f32 %v6376, %v6595
      %v6597 = vpop.f32.mrb[0].mxu0
      %6598 = vmatprep.mubr.f32.mxu0 %v6415
      %6599 = vmatmul.mubr.f32.gmra.mrb[0].mxu0 %v6313
      %v6600 = vpop.f32.mrb[0].mxu0
      %v6601 = vadd.f32 %v6376, %v6600
      %v6602 = vpop.f32.mrb[0].mxu0
      %6603 = vmatprep.mubr.f32.mxu0 %v6418
      %6604 = vmatmul.mubr.f32.gmra.mrb[0].mxu0 %v6315
      %v6605 = vpop.f32.mrb[0].mxu0
      %v6606 = vadd.f32 %v6376, %v6605
      %v6607 = vpop.f32.mrb[0].mxu0
      %6608 = vmatprep.mubr.f32.mxu0 %v6421
      %6609 = vmatmul.mubr.f32.gmra.mrb[0].mxu0 %v6317
      %v6610 = vpop.f32.mrb[0].mxu0
      %v6611 = vadd.f32 %v6376, %v6610
      %v6612 = vpop.f32.mrb[0].mxu0
      %6613 = vmatprep.mubr.f32.mxu0 %v6424
      %6614 = vmatmul.mubr.f32.gmra.mrb[0].mxu0 %v6319
      %v6615 = vpop.f32.mrb[0].mxu0
      %v6616 = vadd.f32 %v6376, %v6615
      %v6617 = vpop.f32.mrb[0].mxu0
      %6618 = vmatprep.mubr.f32.mxu0 %v6427
      %6619 = vmatmul.mubr.f32.gmra.mrb[0].mxu0 %v6321
      %v6620 = vpop.f32.mrb[0].mxu0
      %v6621 = vadd.f32 %v6376, %v6620
      %v6622 = vpop.f32.mrb[0].mxu0
      %6623 = vmatprep.mubr.f32.mxu0 %v6430
      %6624 = vmatmul.mubr.f32.gmra.mrb[0].mxu0 %v6323
      %v6625 = vpop.f32.mrb[0].mxu0
      %v6626 = vadd.f32 %v6376, %v6625
      %v6627 = vpop.f32.mrb[0].mxu0
      %6628 = vmatprep.mubr.f32.mxu0 %v6433
      %6629 = vmatmul.mubr.f32.gmra.mrb[0].mxu0 %v6325
      %v6630 = vpop.f32.mrb[0].mxu0
      %v6631 = vadd.f32 %v6376, %v6630
      %v6632 = vpop.f32.mrb[0].mxu0
      %6633 = vmatprep.mubr.f32.mxu0 %v6436
      %6634 = vmatmul.mubr.f32.gmra.mrb[0].mxu0 %v6327
      %v6635 = vpop.f32.mrb[0].mxu0
      %v6636 = vadd.f32 %v6376, %v6635
      %v6637 = vpop.f32.mrb[0].mxu0
      %6638 = vmatprep.mubr.f32.mxu0 %v6439
      %6639 = vmatmul.mubr.f32.gmra.mrb[0].mxu0 %v6329
      %v6640 = vpop.f32.mrb[0].mxu0
      %v6641 = vadd.f32 %v6376, %v6640
      %v6642 = vpop.f32.mrb[0].mxu0
      %6643 = vmatprep.mubr.f32.mxu0 %v6442
      %6644 = vmatmul.mubr.f32.gmra.mrb[0].mxu0 %v6331
      %v6645 = vpop.f32.mrb[0].mxu0
      %v6646 = vadd.f32 %v6376, %v6645
      %v6647 = vpop.f32.mrb[0].mxu0
      %6648 = vmatprep.mubr.f32.mxu0 %v6445
      %6649 = vmatmul.mubr.f32.gmra.mrb[0].mxu0 %v6333
      %v6650 = vpop.f32.mrb[0].mxu0
      %v6651 = vadd.f32 %v6376, %v6650
      %v6652 = vpop.f32.mrb[0].mxu0
      %6653 = vmatprep.mubr.f32.mxu0 %v6448
      %6654 = vmatmul.mubr.f32.gmra.mrb[0].mxu0 %v6335
      %v6655 = vpop.f32.mrb[0].mxu0
      %v6656 = vadd.f32 %v6376, %v6655
      %v6657 = vpop.f32.mrb[0].mxu0
      %6658 = vmatprep.mubr.f32.mxu0 %v6451
      %6659 = vmatmul.mubr.f32.gmra.mrb[0].mxu0 %v6337
      %v6660 = vpop.f32.mrb[0].mxu0
      %v6661 = vadd.f32 %v6376, %v6660
      %v6662 = vpop.f32.mrb[0].mxu0
      %6663 = vmatprep.mubr.f32.mxu0 %v6454
      %6664 = vmatmul.mubr.f32.gmra.mrb[0].mxu0 %v6339
      %v6665 = vpop.f32.mrb[0].mxu0
      %v6666 = vadd.f32 %v6376, %v6665
      %v6667 = vpop.f32.mrb[0].mxu0
      %6668 = vmatprep.mubr.f32.mxu0 %v6457
      %6669 = vmatmul.mubr.f32.gmra.mrb[0].mxu0 %v6341
      %v6670 = vpop.f32.mrb[0].mxu0
      %v6671 = vadd.f32 %v6376, %v6670
      %v6672 = vpop.f32.mrb[0].mxu0
      %6673 = vmatprep.mubr.f32.mxu0 %v6460
      %6674 = vmatmul.mubr.f32.gmra.mrb[0].mxu0 %v6343
      %v6675 = vpop.f32.mrb[0].mxu0
      %v6676 = vadd.f32 %v6376, %v6675
      %v6677 = vpop.f32.mrb[0].mxu0
      %6678 = vmatprep.mubr.f32.mxu0 %v6463
      %6679 = vmatmul.mubr.f32.gmra.mrb[0].mxu0 %v6345
      %v6680 = vpop.f32.mrb[0].mxu0
      %v6681 = vadd.f32 %v6376, %v6680
      %v6682 = vpop.f32.mrb[0].mxu0
      %6683 = vmatprep.mubr.f32.mxu0 %v6466
      %6684 = vmatmul.mubr.f32.gmra.mrb[0].mxu0 %v6347
      %v6685 = vpop.f32.mrb[0].mxu0
      %v6686 = vadd.f32 %v6376, %v6685
      %v6687 = vpop.f32.mrb[0].mxu0
      %6688 = vmatprep.mubr.f32.mxu0 %v6469
      %6689 = vmatmul.mubr.f32.gmra.mrb[0].mxu0 %v6349
      %v6690 = vpop.f32.mrb[0].mxu0
      %v6691 = vadd.f32 %v6376, %v6690
      %v6692 = vpop.f32.mrb[0].mxu0
      %6693 = vmatprep.mubr.f32.mxu0 %v6472
      %6694 = vmatmul.mubr.f32.gmra.mrb[0].mxu0 %v6351
      %v6695 = vpop.f32.mrb[0].mxu0
      %v6696 = vadd.f32 %v6376, %v6695
      %v6697 = vpop.f32.mrb[0].mxu0
      %6698 = vdwg.mxu0
      %v6699 = vmax.f32 %v6541, 0.0
      %v6700 = vmax.f32 %v6546, 0.0
      %v6701 = vmax.f32 %v6551, 0.0
      %v6702 = vmax.f32 %v6556, 0.0
      %v6703 = vmax.f32 %v6561, 0.0
      %v6704 = vmax.f32 %v6566, 0.0
      %v6705 = vmax.f32 %v6571, 0.0
      %v6706 = vmax.f32 %v6576, 0.0
      %v6707 = vmax.f32 %v6581, 0.0
      %v6708 = vmax.f32 %v6586, 0.0
      %v6709 = vmax.f32 %v6591, 0.0
      %v6710 = vmax.f32 %v6596, 0.0
      %v6711 = vmax.f32 %v6601, 0.0
      %v6712 = vmax.f32 %v6606, 0.0
      %v6713 = vmax.f32 %v6611, 0.0
      %v6714 = vmax.f32 %v6616, 0.0
      %v6715 = vmax.f32 %v6621, 0.0
      %v6716 = vmax.f32 %v6626, 0.0
      %v6717 = vmax.f32 %v6631, 0.0
      %v6718 = vmax.f32 %v6636, 0.0
      %v6719 = vmax.f32 %v6641, 0.0
      %v6720 = vmax.f32 %v6646, 0.0
      %v6721 = vmax.f32 %v6651, 0.0
      %v6722 = vmax.f32 %v6656, 0.0
      %v6723 = vmax.f32 %v6661, 0.0
      %v6724 = vmax.f32 %v6666, 0.0
      %v6725 = vmax.f32 %v6671, 0.0
      %v6726 = vmax.f32 %v6676, 0.0
      %v6727 = vmax.f32 %v6681, 0.0
      %v6728 = vmax.f32 %v6686, 0.0
      %v6729 = vmax.f32 %v6691, 0.0
      %v6730 = vmax.f32 %v6696, 0.0
      %v6731 = vmul.f32 %v6699, %v503
      %v6732 = vmul.f32 %v6700, %v508
      %v6733 = vmul.f32 %v6701, %v513
      %v6734 = vmul.f32 %v6702, %v518
      %v6735 = vmul.f32 %v6703, %v523
      %v6736 = vmul.f32 %v6704, %v528
      %v6737 = vmul.f32 %v6705, %v533
      %v6738 = vmul.f32 %v6706, %v538
      %v6739 = vmul.f32 %v6707, %v543
      %v6740 = vmul.f32 %v6708, %v548
      %v6741 = vmul.f32 %v6709, %v553
      %v6742 = vmul.f32 %v6710, %v558
      %v6743 = vmul.f32 %v6711, %v563
      %v6744 = vmul.f32 %v6712, %v568
      %v6745 = vmul.f32 %v6713, %v573
      %v6746 = vmul.f32 %v6714, %v578
      %v6747 = vmul.f32 %v6715, %v583
      %v6748 = vmul.f32 %v6716, %v588
      %v6749 = vmul.f32 %v6717, %v593
      %v6750 = vmul.f32 %v6718, %v598
      %v6751 = vmul.f32 %v6719, %v603
      %v6752 = vmul.f32 %v6720, %v608
      %v6753 = vmul.f32 %v6721, %v613
      %v6754 = vmul.f32 %v6722, %v618
      %v6755 = vmul.f32 %v6723, %v623
      %v6756 = vmul.f32 %v6724, %v628
      %v6757 = vmul.f32 %v6725, %v633
      %v6758 = vmul.f32 %v6726, %v638
      %v6759 = vmul.f32 %v6727, %v643
      %v6760 = vmul.f32 %v6728, %v648
      %v6761 = vmul.f32 %v6729, %v653
      %v6762 = vmul.f32 %v6730, %v658
      %6763 = vst.msk [vmem:[%s724 + $0x1] sm:$0xff] %vm380, %v6731
      %6764 = vst.msk [vmem:[%s724 + $0x9] sm:$0xff] %vm380, %v6732
      %6765 = vst.msk [vmem:[%s724 + $0x19] sm:$0xff] %vm380, %v6733
      %6766 = vst.msk [vmem:[%s724 + $0x21] sm:$0xff] %vm380, %v6734
      %6767 = vst.msk [vmem:[%s724 + $0x31] sm:$0xff] %vm380, %v6735
      %6768 = vst.msk [vmem:[%s724 + $0x39] sm:$0xff] %vm380, %v6736
      %6769 = vst.msk [vmem:[%s724 + $0x49] sm:$0xff] %vm380, %v6737
      %6770 = vst.msk [vmem:[%s724 + $0x51] sm:$0xff] %vm380, %v6738
      %6771 = vst.msk [vmem:[%s724 + $0x61] sm:$0xff] %vm380, %v6739
      %6772 = vst.msk [vmem:[%s724 + $0x69] sm:$0xff] %vm380, %v6740
      %6773 = vst.msk [vmem:[%s724 + $0x79] sm:$0xff] %vm380, %v6741
      %6774 = vst.msk [vmem:[%s724 + $0x81] sm:$0xff] %vm380, %v6742
      %6775 = vst.msk [vmem:[%s724 + $0x91] sm:$0xff] %vm380, %v6743
      %6776 = vst.msk [vmem:[%s724 + $0x99] sm:$0xff] %vm380, %v6744
      %6777 = vst.msk [vmem:[%s724 + $0xa9] sm:$0xff] %vm380, %v6745
      %6778 = vst.msk [vmem:[%s724 + $0xb1] sm:$0xff] %vm380, %v6746
      %6779 = vst.msk [vmem:[%s724 + $0xc1] sm:$0xff] %vm380, %v6747
      %6780 = vst.msk [vmem:[%s724 + $0xc9] sm:$0xff] %vm380, %v6748
      %6781 = vst.msk [vmem:[%s724 + $0xd9] sm:$0xff] %vm380, %v6749
      %6782 = vst.msk [vmem:[%s724 + $0xe1] sm:$0xff] %vm380, %v6750
      %6783 = vst.msk [vmem:[%s724 + $0xf1] sm:$0xff] %vm380, %v6751
      %6784 = vst.msk [vmem:[%s724 + $0xf9] sm:$0xff] %vm380, %v6752
      %6785 = vst.msk [vmem:[%s724 + $0x109] sm:$0xff] %vm380, %v6753
      %6786 = vst.msk [vmem:[%s724 + $0x111] sm:$0xff] %vm380, %v6754
      %6787 = vst.msk [vmem:[%s724 + $0x121] sm:$0xff] %vm380, %v6755
      %6788 = vst.msk [vmem:[%s724 + $0x129] sm:$0xff] %vm380, %v6756
      %6789 = vst.msk [vmem:[%s724 + $0x139] sm:$0xff] %vm380, %v6757
      %6790 = vst.msk [vmem:[%s724 + $0x141] sm:$0xff] %vm380, %v6758
      %6791 = vst.msk [vmem:[%s724 + $0x151] sm:$0xff] %vm380, %v6759
      %6792 = vst.msk [vmem:[%s724 + $0x159] sm:$0xff] %vm380, %v6760
      %6793 = vst.msk [vmem:[%s724 + $0x169] sm:$0xff] %vm380, %v6761
      %6794 = vst.msk [vmem:[%s724 + $0x171] sm:$0xff] %vm380, %v6762
      %v6795 = vld [vmem:[#allocation2] sm:$0xff]
      %v6796 = vld [vmem:[#allocation2 + $0x8] sm:$0xff]
      %v6797 = vld [vmem:[#allocation2 + $0x18] sm:$0xff]
      %v6798 = vld [vmem:[#allocation2 + $0x20] sm:$0xff]
      %v6799 = vld [vmem:[#allocation2 + $0x30] sm:$0xff]
      %v6800 = vld [vmem:[#allocation2 + $0x38] sm:$0xff]
      %v6801 = vld [vmem:[#allocation2 + $0x48] sm:$0xff]
      %v6802 = vld [vmem:[#allocation2 + $0x50] sm:$0xff]
      %v6803 = vld [vmem:[#allocation2 + $0x60] sm:$0xff]
      %v6804 = vld [vmem:[#allocation2 + $0x68] sm:$0xff]
      %v6805 = vld [vmem:[#allocation2 + $0x78] sm:$0xff]
      %v6806 = vld [vmem:[#allocation2 + $0x80] sm:$0xff]
      %v6807 = vld [vmem:[#allocation2 + $0x90] sm:$0xff]
      %v6808 = vld [vmem:[#allocation2 + $0x98] sm:$0xff]
      %v6809 = vld [vmem:[#allocation2 + $0xa8] sm:$0xff]
      %v6810 = vld [vmem:[#allocation2 + $0xb0] sm:$0xff]
      %v6811 = vld [vmem:[#allocation2 + $0xc0] sm:$0xff]
      %v6812 = vld [vmem:[#allocation2 + $0xc8] sm:$0xff]
      %v6813 = vld [vmem:[#allocation2 + $0xd8] sm:$0xff]
      %v6814 = vld [vmem:[#allocation2 + $0xe0] sm:$0xff]
      %v6815 = vld [vmem:[#allocation2 + $0xf0] sm:$0xff]
      %v6816 = vld [vmem:[#allocation2 + $0xf8] sm:$0xff]
      %v6817 = vld [vmem:[#allocation2 + $0x108] sm:$0xff]
      %v6818 = vld [vmem:[#allocation2 + $0x110] sm:$0xff]
      %v6819 = vld [vmem:[#allocation2 + $0x120] sm:$0xff]
      %v6820 = vld [vmem:[#allocation2 + $0x128] sm:$0xff]
      %v6821 = vld [vmem:[#allocation2 + $0x138] sm:$0xff]
      %v6822 = vld [vmem:[#allocation2 + $0x140] sm:$0xff]
      %v6823 = vld [vmem:[#allocation2 + $0x150] sm:$0xff]
      %v6824 = vld [vmem:[#allocation2 + $0x158] sm:$0xff]
      %v6825 = vld [vmem:[#allocation2 + $0x168] sm:$0xff]
      %v6826 = vld [vmem:[#allocation2 + $0x170] sm:$0xff]
      %6827 = vst.msk [vmem:[#allocation3] sm:$0xff] %vm380, %v6795
      %6828 = vst.msk [vmem:[#allocation3 + $0x10] sm:$0xff] %vm380, %v6796
      %6829 = vst.msk [vmem:[#allocation3 + $0x20] sm:$0xff] %vm380, %v6797
      %6830 = vst.msk [vmem:[#allocation3 + $0x30] sm:$0xff] %vm380, %v6798
      %6831 = vst.msk [vmem:[#allocation3 + $0x40] sm:$0xff] %vm380, %v6799
      %6832 = vst.msk [vmem:[#allocation3 + $0x50] sm:$0xff] %vm380, %v6800
      %6833 = vst.msk [vmem:[#allocation3 + $0x60] sm:$0xff] %vm380, %v6801
      %6834 = vst.msk [vmem:[#allocation3 + $0x70] sm:$0xff] %vm380, %v6802
      %6835 = vst.msk [vmem:[#allocation3 + $0x80] sm:$0xff] %vm380, %v6803
      %6836 = vst.msk [vmem:[#allocation3 + $0x90] sm:$0xff] %vm380, %v6804
      %6837 = vst.msk [vmem:[#allocation3 + $0xa0] sm:$0xff] %vm380, %v6805
      %6838 = vst.msk [vmem:[#allocation3 + $0xb0] sm:$0xff] %vm380, %v6806
      %6839 = vst.msk [vmem:[#allocation3 + $0xc0] sm:$0xff] %vm380, %v6807
      %6840 = vst.msk [vmem:[#allocation3 + $0xd0] sm:$0xff] %vm380, %v6808
      %6841 = vst.msk [vmem:[#allocation3 + $0xe0] sm:$0xff] %vm380, %v6809
      %6842 = vst.msk [vmem:[#allocation3 + $0xf0] sm:$0xff] %vm380, %v6810
      %6843 = vst.msk [vmem:[#allocation3 + $0x100] sm:$0xff] %vm380, %v6811
      %6844 = vst.msk [vmem:[#allocation3 + $0x110] sm:$0xff] %vm380, %v6812
      %6845 = vst.msk [vmem:[#allocation3 + $0x120] sm:$0xff] %vm380, %v6813
      %6846 = vst.msk [vmem:[#allocation3 + $0x130] sm:$0xff] %vm380, %v6814
      %6847 = vst.msk [vmem:[#allocation3 + $0x140] sm:$0xff] %vm380, %v6815
      %6848 = vst.msk [vmem:[#allocation3 + $0x150] sm:$0xff] %vm380, %v6816
      %6849 = vst.msk [vmem:[#allocation3 + $0x160] sm:$0xff] %vm380, %v6817
      %6850 = vst.msk [vmem:[#allocation3 + $0x170] sm:$0xff] %vm380, %v6818
      %6851 = vst.msk [vmem:[#allocation3 + $0x180] sm:$0xff] %vm380, %v6819
      %6852 = vst.msk [vmem:[#allocation3 + $0x190] sm:$0xff] %vm380, %v6820
      %6853 = vst.msk [vmem:[#allocation3 + $0x1a0] sm:$0xff] %vm380, %v6821
      %6854 = vst.msk [vmem:[#allocation3 + $0x1b0] sm:$0xff] %vm380, %v6822
      %6855 = vst.msk [vmem:[#allocation3 + $0x1c0] sm:$0xff] %vm380, %v6823
      %6856 = vst.msk [vmem:[#allocation3 + $0x1d0] sm:$0xff] %vm380, %v6824
      %6857 = vst.msk [vmem:[#allocation3 + $0x1e0] sm:$0xff] %vm380, %v6825
      %6858 = vst.msk [vmem:[#allocation3 + $0x1f0] sm:$0xff] %vm380, %v6826
      %v6859 = vld [vmem:[#allocation2 + $0x1] sm:$0xff]
      %v6860 = vld [vmem:[#allocation2 + $0x9] sm:$0xff]
      %v6861 = vld [vmem:[#allocation2 + $0x19] sm:$0xff]
      %v6862 = vld [vmem:[#allocation2 + $0x21] sm:$0xff]
      %v6863 = vld [vmem:[#allocation2 + $0x31] sm:$0xff]
      %v6864 = vld [vmem:[#allocation2 + $0x39] sm:$0xff]
      %v6865 = vld [vmem:[#allocation2 + $0x49] sm:$0xff]
      %v6866 = vld [vmem:[#allocation2 + $0x51] sm:$0xff]
      %v6867 = vld [vmem:[#allocation2 + $0x61] sm:$0xff]
      %v6868 = vld [vmem:[#allocation2 + $0x69] sm:$0xff]
      %v6869 = vld [vmem:[#allocation2 + $0x79] sm:$0xff]
      %v6870 = vld [vmem:[#allocation2 + $0x81] sm:$0xff]
      %v6871 = vld [vmem:[#allocation2 + $0x91] sm:$0xff]
      %v6872 = vld [vmem:[#allocation2 + $0x99] sm:$0xff]
      %v6873 = vld [vmem:[#allocation2 + $0xa9] sm:$0xff]
      %v6874 = vld [vmem:[#allocation2 + $0xb1] sm:$0xff]
      %v6875 = vld [vmem:[#allocation2 + $0xc1] sm:$0xff]
      %v6876 = vld [vmem:[#allocation2 + $0xc9] sm:$0xff]
      %v6877 = vld [vmem:[#allocation2 + $0xd9] sm:$0xff]
      %v6878 = vld [vmem:[#allocation2 + $0xe1] sm:$0xff]
      %v6879 = vld [vmem:[#allocation2 + $0xf1] sm:$0xff]
      %v6880 = vld [vmem:[#allocation2 + $0xf9] sm:$0xff]
      %v6881 = vld [vmem:[#allocation2 + $0x109] sm:$0xff]
      %v6882 = vld [vmem:[#allocation2 + $0x111] sm:$0xff]
      %v6883 = vld [vmem:[#allocation2 + $0x121] sm:$0xff]
      %v6884 = vld [vmem:[#allocation2 + $0x129] sm:$0xff]
      %v6885 = vld [vmem:[#allocation2 + $0x139] sm:$0xff]
      %v6886 = vld [vmem:[#allocation2 + $0x141] sm:$0xff]
      %v6887 = vld [vmem:[#allocation2 + $0x151] sm:$0xff]
      %v6888 = vld [vmem:[#allocation2 + $0x159] sm:$0xff]
      %v6889 = vld [vmem:[#allocation2 + $0x169] sm:$0xff]
      %v6890 = vld [vmem:[#allocation2 + $0x171] sm:$0xff]
      %6923 = vrot.lane.b32.xlu0 %v6859, 16
      %v6924 = vpop.permute.xlu0 %6923
      %6925 = vrot.lane.b32.xlu0 %v6860, 16
      %v6926 = vpop.permute.xlu0 %6925
      %6927 = vrot.lane.b32.xlu0 %v6861, 16
      %v6928 = vpop.permute.xlu0 %6927
      %6929 = vrot.lane.b32.xlu0 %v6862, 16
      %v6930 = vpop.permute.xlu0 %6929
      %6931 = vrot.lane.b32.xlu0 %v6863, 16
      %v6932 = vpop.permute.xlu0 %6931
      %6933 = vrot.lane.b32.xlu0 %v6864, 16
      %v6934 = vpop.permute.xlu0 %6933
      %6935 = vrot.lane.b32.xlu0 %v6865, 16
      %v6936 = vpop.permute.xlu0 %6935
      %6937 = vrot.lane.b32.xlu0 %v6866, 16
      %v6938 = vpop.permute.xlu0 %6937
      %6939 = vrot.lane.b32.xlu0 %v6867, 16
      %v6940 = vpop.permute.xlu0 %6939
      %6941 = vrot.lane.b32.xlu0 %v6868, 16
      %v6942 = vpop.permute.xlu0 %6941
      %6943 = vrot.lane.b32.xlu0 %v6869, 16
      %v6944 = vpop.permute.xlu0 %6943
      %6945 = vrot.lane.b32.xlu0 %v6870, 16
      %v6946 = vpop.permute.xlu0 %6945
      %6947 = vrot.lane.b32.xlu0 %v6871, 16
      %v6948 = vpop.permute.xlu0 %6947
      %6949 = vrot.lane.b32.xlu0 %v6872, 16
      %v6950 = vpop.permute.xlu0 %6949
      %6951 = vrot.lane.b32.xlu0 %v6873, 16
      %v6952 = vpop.permute.xlu0 %6951
      %6953 = vrot.lane.b32.xlu0 %v6874, 16
      %v6954 = vpop.permute.xlu0 %6953
      %6955 = vrot.lane.b32.xlu0 %v6875, 16
      %v6956 = vpop.permute.xlu0 %6955
      %6957 = vrot.lane.b32.xlu0 %v6876, 16
      %v6958 = vpop.permute.xlu0 %6957
      %6959 = vrot.lane.b32.xlu0 %v6877, 16
      %v6960 = vpop.permute.xlu0 %6959
      %6961 = vrot.lane.b32.xlu0 %v6878, 16
      %v6962 = vpop.permute.xlu0 %6961
      %6963 = vrot.lane.b32.xlu0 %v6879, 16
      %v6964 = vpop.permute.xlu0 %6963
      %6965 = vrot.lane.b32.xlu0 %v6880, 16
      %v6966 = vpop.permute.xlu0 %6965
      %6967 = vrot.lane.b32.xlu0 %v6881, 16
      %v6968 = vpop.permute.xlu0 %6967
      %6969 = vrot.lane.b32.xlu0 %v6882, 16
      %v6970 = vpop.permute.xlu0 %6969
      %6971 = vrot.lane.b32.xlu0 %v6883, 16
      %v6972 = vpop.permute.xlu0 %6971
      %6973 = vrot.lane.b32.xlu0 %v6884, 16
      %v6974 = vpop.permute.xlu0 %6973
      %6975 = vrot.lane.b32.xlu0 %v6885, 16
      %v6976 = vpop.permute.xlu0 %6975
      %6977 = vrot.lane.b32.xlu0 %v6886, 16
      %v6978 = vpop.permute.xlu0 %6977
      %6979 = vrot.lane.b32.xlu0 %v6887, 16
      %v6980 = vpop.permute.xlu0 %6979
      %6981 = vrot.lane.b32.xlu0 %v6888, 16
      %v6982 = vpop.permute.xlu0 %6981
      %6983 = vrot.lane.b32.xlu0 %v6889, 16
      %v6984 = vpop.permute.xlu0 %6983
      %6985 = vrot.lane.b32.xlu0 %v6890, 16
      %v6986 = vpop.permute.xlu0 %6985
      %7019 = vst.msk [vmem:[#allocation3] sm:$0xff] %vm3056, %v6924
      %7020 = vst.msk [vmem:[#allocation3 + $0x10] sm:$0xff] %vm3056, %v6926
      %7021 = vst.msk [vmem:[#allocation3 + $0x20] sm:$0xff] %vm3056, %v6928
      %7022 = vst.msk [vmem:[#allocation3 + $0x30] sm:$0xff] %vm3056, %v6930
      %7023 = vst.msk [vmem:[#allocation3 + $0x40] sm:$0xff] %vm3056, %v6932
      %7024 = vst.msk [vmem:[#allocation3 + $0x50] sm:$0xff] %vm3056, %v6934
      %7025 = vst.msk [vmem:[#allocation3 + $0x60] sm:$0xff] %vm3056, %v6936
      %7026 = vst.msk [vmem:[#allocation3 + $0x70] sm:$0xff] %vm3056, %v6938
      %7027 = vst.msk [vmem:[#allocation3 + $0x80] sm:$0xff] %vm3056, %v6940
      %7028 = vst.msk [vmem:[#allocation3 + $0x90] sm:$0xff] %vm3056, %v6942
      %7029 = vst.msk [vmem:[#allocation3 + $0xa0] sm:$0xff] %vm3056, %v6944
      %7030 = vst.msk [vmem:[#allocation3 + $0xb0] sm:$0xff] %vm3056, %v6946
      %7031 = vst.msk [vmem:[#allocation3 + $0xc0] sm:$0xff] %vm3056, %v6948
      %7032 = vst.msk [vmem:[#allocation3 + $0xd0] sm:$0xff] %vm3056, %v6950
      %7033 = vst.msk [vmem:[#allocation3 + $0xe0] sm:$0xff] %vm3056, %v6952
      %7034 = vst.msk [vmem:[#allocation3 + $0xf0] sm:$0xff] %vm3056, %v6954
      %7035 = vst.msk [vmem:[#allocation3 + $0x100] sm:$0xff] %vm3056, %v6956
      %7036 = vst.msk [vmem:[#allocation3 + $0x110] sm:$0xff] %vm3056, %v6958
      %7037 = vst.msk [vmem:[#allocation3 + $0x120] sm:$0xff] %vm3056, %v6960
      %7038 = vst.msk [vmem:[#allocation3 + $0x130] sm:$0xff] %vm3056, %v6962
      %7039 = vst.msk [vmem:[#allocation3 + $0x140] sm:$0xff] %vm3056, %v6964
      %7040 = vst.msk [vmem:[#allocation3 + $0x150] sm:$0xff] %vm3056, %v6966
      %7041 = vst.msk [vmem:[#allocation3 + $0x160] sm:$0xff] %vm3056, %v6968
      %7042 = vst.msk [vmem:[#allocation3 + $0x170] sm:$0xff] %vm3056, %v6970
      %7043 = vst.msk [vmem:[#allocation3 + $0x180] sm:$0xff] %vm3056, %v6972
      %7044 = vst.msk [vmem:[#allocation3 + $0x190] sm:$0xff] %vm3056, %v6974
      %7045 = vst.msk [vmem:[#allocation3 + $0x1a0] sm:$0xff] %vm3056, %v6976
      %7046 = vst.msk [vmem:[#allocation3 + $0x1b0] sm:$0xff] %vm3056, %v6978
      %7047 = vst.msk [vmem:[#allocation3 + $0x1c0] sm:$0xff] %vm3056, %v6980
      %7048 = vst.msk [vmem:[#allocation3 + $0x1d0] sm:$0xff] %vm3056, %v6982
      %7049 = vst.msk [vmem:[#allocation3 + $0x1e0] sm:$0xff] %vm3056, %v6984
      %7050 = vst.msk [vmem:[#allocation3 + $0x1f0] sm:$0xff] %vm3056, %v6986
      %v7051 = vld [vmem:[#allocation2 + $0x2] sm:$0xff]
      %v7052 = vld [vmem:[#allocation2 + $0xa] sm:$0xff]
      %v7053 = vld [vmem:[#allocation2 + $0x1a] sm:$0xff]
      %v7054 = vld [vmem:[#allocation2 + $0x22] sm:$0xff]
      %v7055 = vld [vmem:[#allocation2 + $0x32] sm:$0xff]
      %v7056 = vld [vmem:[#allocation2 + $0x3a] sm:$0xff]
      %v7057 = vld [vmem:[#allocation2 + $0x4a] sm:$0xff]
      %v7058 = vld [vmem:[#allocation2 + $0x52] sm:$0xff]
      %v7059 = vld [vmem:[#allocation2 + $0x62] sm:$0xff]
      %v7060 = vld [vmem:[#allocation2 + $0x6a] sm:$0xff]
      %v7061 = vld [vmem:[#allocation2 + $0x7a] sm:$0xff]
      %v7062 = vld [vmem:[#allocation2 + $0x82] sm:$0xff]
      %v7063 = vld [vmem:[#allocation2 + $0x92] sm:$0xff]
      %v7064 = vld [vmem:[#allocation2 + $0x9a] sm:$0xff]
      %v7065 = vld [vmem:[#allocation2 + $0xaa] sm:$0xff]
      %v7066 = vld [vmem:[#allocation2 + $0xb2] sm:$0xff]
      %v7067 = vld [vmem:[#allocation2 + $0xc2] sm:$0xff]
      %v7068 = vld [vmem:[#allocation2 + $0xca] sm:$0xff]
      %v7069 = vld [vmem:[#allocation2 + $0xda] sm:$0xff]
      %v7070 = vld [vmem:[#allocation2 + $0xe2] sm:$0xff]
      %v7071 = vld [vmem:[#allocation2 + $0xf2] sm:$0xff]
      %v7072 = vld [vmem:[#allocation2 + $0xfa] sm:$0xff]
      %v7073 = vld [vmem:[#allocation2 + $0x10a] sm:$0xff]
      %v7074 = vld [vmem:[#allocation2 + $0x112] sm:$0xff]
      %v7075 = vld [vmem:[#allocation2 + $0x122] sm:$0xff]
      %v7076 = vld [vmem:[#allocation2 + $0x12a] sm:$0xff]
      %v7077 = vld [vmem:[#allocation2 + $0x13a] sm:$0xff]
      %v7078 = vld [vmem:[#allocation2 + $0x142] sm:$0xff]
      %v7079 = vld [vmem:[#allocation2 + $0x152] sm:$0xff]
      %v7080 = vld [vmem:[#allocation2 + $0x15a] sm:$0xff]
      %v7081 = vld [vmem:[#allocation2 + $0x16a] sm:$0xff]
      %v7082 = vld [vmem:[#allocation2 + $0x172] sm:$0xff]
      %7115 = vrot.lane.b32.xlu0 %v7051, 32
      %v7116 = vpop.permute.xlu0 %7115
      %7117 = vrot.lane.b32.xlu0 %v7052, 32
      %v7118 = vpop.permute.xlu0 %7117
      %7119 = vrot.lane.b32.xlu0 %v7053, 32
      %v7120 = vpop.permute.xlu0 %7119
      %7121 = vrot.lane.b32.xlu0 %v7054, 32
      %v7122 = vpop.permute.xlu0 %7121
      %7123 = vrot.lane.b32.xlu0 %v7055, 32
      %v7124 = vpop.permute.xlu0 %7123
      %7125 = vrot.lane.b32.xlu0 %v7056, 32
      %v7126 = vpop.permute.xlu0 %7125
      %7127 = vrot.lane.b32.xlu0 %v7057, 32
      %v7128 = vpop.permute.xlu0 %7127
      %7129 = vrot.lane.b32.xlu0 %v7058, 32
      %v7130 = vpop.permute.xlu0 %7129
      %7131 = vrot.lane.b32.xlu0 %v7059, 32
      %v7132 = vpop.permute.xlu0 %7131
      %7133 = vrot.lane.b32.xlu0 %v7060, 32
      %v7134 = vpop.permute.xlu0 %7133
      %7135 = vrot.lane.b32.xlu0 %v7061, 32
      %v7136 = vpop.permute.xlu0 %7135
      %7137 = vrot.lane.b32.xlu0 %v7062, 32
      %v7138 = vpop.permute.xlu0 %7137
      %7139 = vrot.lane.b32.xlu0 %v7063, 32
      %v7140 = vpop.permute.xlu0 %7139
      %7141 = vrot.lane.b32.xlu0 %v7064, 32
      %v7142 = vpop.permute.xlu0 %7141
      %7143 = vrot.lane.b32.xlu0 %v7065, 32
      %v7144 = vpop.permute.xlu0 %7143
      %7145 = vrot.lane.b32.xlu0 %v7066, 32
      %v7146 = vpop.permute.xlu0 %7145
      %7147 = vrot.lane.b32.xlu0 %v7067, 32
      %v7148 = vpop.permute.xlu0 %7147
      %7149 = vrot.lane.b32.xlu0 %v7068, 32
      %v7150 = vpop.permute.xlu0 %7149
      %7151 = vrot.lane.b32.xlu0 %v7069, 32
      %v7152 = vpop.permute.xlu0 %7151
      %7153 = vrot.lane.b32.xlu0 %v7070, 32
      %v7154 = vpop.permute.xlu0 %7153
      %7155 = vrot.lane.b32.xlu0 %v7071, 32
      %v7156 = vpop.permute.xlu0 %7155
      %7157 = vrot.lane.b32.xlu0 %v7072, 32
      %v7158 = vpop.permute.xlu0 %7157
      %7159 = vrot.lane.b32.xlu0 %v7073, 32
      %v7160 = vpop.permute.xlu0 %7159
      %7161 = vrot.lane.b32.xlu0 %v7074, 32
      %v7162 = vpop.permute.xlu0 %7161
      %7163 = vrot.lane.b32.xlu0 %v7075, 32
      %v7164 = vpop.permute.xlu0 %7163
      %7165 = vrot.lane.b32.xlu0 %v7076, 32
      %v7166 = vpop.permute.xlu0 %7165
      %7167 = vrot.lane.b32.xlu0 %v7077, 32
      %v7168 = vpop.permute.xlu0 %7167
      %7169 = vrot.lane.b32.xlu0 %v7078, 32
      %v7170 = vpop.permute.xlu0 %7169
      %7171 = vrot.lane.b32.xlu0 %v7079, 32
      %v7172 = vpop.permute.xlu0 %7171
      %7173 = vrot.lane.b32.xlu0 %v7080, 32
      %v7174 = vpop.permute.xlu0 %7173
      %7175 = vrot.lane.b32.xlu0 %v7081, 32
      %v7176 = vpop.permute.xlu0 %7175
      %7177 = vrot.lane.b32.xlu0 %v7082, 32
      %v7178 = vpop.permute.xlu0 %7177
      %7211 = vst.msk [vmem:[#allocation3] sm:$0xff] %vm3249, %v7116
      %7212 = vst.msk [vmem:[#allocation3 + $0x10] sm:$0xff] %vm3249, %v7118
      %7213 = vst.msk [vmem:[#allocation3 + $0x20] sm:$0xff] %vm3249, %v7120
      %7214 = vst.msk [vmem:[#allocation3 + $0x30] sm:$0xff] %vm3249, %v7122
      %7215 = vst.msk [vmem:[#allocation3 + $0x40] sm:$0xff] %vm3249, %v7124
      %7216 = vst.msk [vmem:[#allocation3 + $0x50] sm:$0xff] %vm3249, %v7126
      %7217 = vst.msk [vmem:[#allocation3 + $0x60] sm:$0xff] %vm3249, %v7128
      %7218 = vst.msk [vmem:[#allocation3 + $0x70] sm:$0xff] %vm3249, %v7130
      %7219 = vst.msk [vmem:[#allocation3 + $0x80] sm:$0xff] %vm3249, %v7132
      %7220 = vst.msk [vmem:[#allocation3 + $0x90] sm:$0xff] %vm3249, %v7134
      %7221 = vst.msk [vmem:[#allocation3 + $0xa0] sm:$0xff] %vm3249, %v7136
      %7222 = vst.msk [vmem:[#allocation3 + $0xb0] sm:$0xff] %vm3249, %v7138
      %7223 = vst.msk [vmem:[#allocation3 + $0xc0] sm:$0xff] %vm3249, %v7140
      %7224 = vst.msk [vmem:[#allocation3 + $0xd0] sm:$0xff] %vm3249, %v7142
      %7225 = vst.msk [vmem:[#allocation3 + $0xe0] sm:$0xff] %vm3249, %v7144
      %7226 = vst.msk [vmem:[#allocation3 + $0xf0] sm:$0xff] %vm3249, %v7146
      %7227 = vst.msk [vmem:[#allocation3 + $0x100] sm:$0xff] %vm3249, %v7148
      %7228 = vst.msk [vmem:[#allocation3 + $0x110] sm:$0xff] %vm3249, %v7150
      %7229 = vst.msk [vmem:[#allocation3 + $0x120] sm:$0xff] %vm3249, %v7152
      %7230 = vst.msk [vmem:[#allocation3 + $0x130] sm:$0xff] %vm3249, %v7154
      %7231 = vst.msk [vmem:[#allocation3 + $0x140] sm:$0xff] %vm3249, %v7156
      %7232 = vst.msk [vmem:[#allocation3 + $0x150] sm:$0xff] %vm3249, %v7158
      %7233 = vst.msk [vmem:[#allocation3 + $0x160] sm:$0xff] %vm3249, %v7160
      %7234 = vst.msk [vmem:[#allocation3 + $0x170] sm:$0xff] %vm3249, %v7162
      %7235 = vst.msk [vmem:[#allocation3 + $0x180] sm:$0xff] %vm3249, %v7164
      %7236 = vst.msk [vmem:[#allocation3 + $0x190] sm:$0xff] %vm3249, %v7166
      %7237 = vst.msk [vmem:[#allocation3 + $0x1a0] sm:$0xff] %vm3249, %v7168
      %7238 = vst.msk [vmem:[#allocation3 + $0x1b0] sm:$0xff] %vm3249, %v7170
      %7239 = vst.msk [vmem:[#allocation3 + $0x1c0] sm:$0xff] %vm3249, %v7172
      %7240 = vst.msk [vmem:[#allocation3 + $0x1d0] sm:$0xff] %vm3249, %v7174
      %7241 = vst.msk [vmem:[#allocation3 + $0x1e0] sm:$0xff] %vm3249, %v7176
      %7242 = vst.msk [vmem:[#allocation3 + $0x1f0] sm:$0xff] %vm3249, %v7178
      %v7243 = vld [vmem:[%s724] sm:$0xff]
      %v7244 = vld [vmem:[%s724 + $0x8] sm:$0xff]
      %v7245 = vld [vmem:[%s724 + $0x18] sm:$0xff]
      %v7246 = vld [vmem:[%s724 + $0x20] sm:$0xff]
      %v7247 = vld [vmem:[%s724 + $0x30] sm:$0xff]
      %v7248 = vld [vmem:[%s724 + $0x38] sm:$0xff]
      %v7249 = vld [vmem:[%s724 + $0x48] sm:$0xff]
      %v7250 = vld [vmem:[%s724 + $0x50] sm:$0xff]
      %v7251 = vld [vmem:[%s724 + $0x60] sm:$0xff]
      %v7252 = vld [vmem:[%s724 + $0x68] sm:$0xff]
      %v7253 = vld [vmem:[%s724 + $0x78] sm:$0xff]
      %v7254 = vld [vmem:[%s724 + $0x80] sm:$0xff]
      %v7255 = vld [vmem:[%s724 + $0x90] sm:$0xff]
      %v7256 = vld [vmem:[%s724 + $0x98] sm:$0xff]
      %v7257 = vld [vmem:[%s724 + $0xa8] sm:$0xff]
      %v7258 = vld [vmem:[%s724 + $0xb0] sm:$0xff]
      %v7259 = vld [vmem:[%s724 + $0xc0] sm:$0xff]
      %v7260 = vld [vmem:[%s724 + $0xc8] sm:$0xff]
      %v7261 = vld [vmem:[%s724 + $0xd8] sm:$0xff]
      %v7262 = vld [vmem:[%s724 + $0xe0] sm:$0xff]
      %v7263 = vld [vmem:[%s724 + $0xf0] sm:$0xff]
      %v7264 = vld [vmem:[%s724 + $0xf8] sm:$0xff]
      %v7265 = vld [vmem:[%s724 + $0x108] sm:$0xff]
      %v7266 = vld [vmem:[%s724 + $0x110] sm:$0xff]
      %v7267 = vld [vmem:[%s724 + $0x120] sm:$0xff]
      %v7268 = vld [vmem:[%s724 + $0x128] sm:$0xff]
      %v7269 = vld [vmem:[%s724 + $0x138] sm:$0xff]
      %v7270 = vld [vmem:[%s724 + $0x140] sm:$0xff]
      %v7271 = vld [vmem:[%s724 + $0x150] sm:$0xff]
      %v7272 = vld [vmem:[%s724 + $0x158] sm:$0xff]
      %v7273 = vld [vmem:[%s724 + $0x168] sm:$0xff]
      %v7274 = vld [vmem:[%s724 + $0x170] sm:$0xff]
      %7307 = vrot.lane.b32.xlu0 %v7243, 48
      %v7308 = vpop.permute.xlu0 %7307
      %7309 = vrot.lane.b32.xlu0 %v7244, 48
      %v7310 = vpop.permute.xlu0 %7309
      %7311 = vrot.lane.b32.xlu0 %v7245, 48
      %v7312 = vpop.permute.xlu0 %7311
      %7313 = vrot.lane.b32.xlu0 %v7246, 48
      %v7314 = vpop.permute.xlu0 %7313
      %7315 = vrot.lane.b32.xlu0 %v7247, 48
      %v7316 = vpop.permute.xlu0 %7315
      %7317 = vrot.lane.b32.xlu0 %v7248, 48
      %v7318 = vpop.permute.xlu0 %7317
      %7319 = vrot.lane.b32.xlu0 %v7249, 48
      %v7320 = vpop.permute.xlu0 %7319
      %7321 = vrot.lane.b32.xlu0 %v7250, 48
      %v7322 = vpop.permute.xlu0 %7321
      %7323 = vrot.lane.b32.xlu0 %v7251, 48
      %v7324 = vpop.permute.xlu0 %7323
      %7325 = vrot.lane.b32.xlu0 %v7252, 48
      %v7326 = vpop.permute.xlu0 %7325
      %7327 = vrot.lane.b32.xlu0 %v7253, 48
      %v7328 = vpop.permute.xlu0 %7327
      %7329 = vrot.lane.b32.xlu0 %v7254, 48
      %v7330 = vpop.permute.xlu0 %7329
      %7331 = vrot.lane.b32.xlu0 %v7255, 48
      %v7332 = vpop.permute.xlu0 %7331
      %7333 = vrot.lane.b32.xlu0 %v7256, 48
      %v7334 = vpop.permute.xlu0 %7333
      %7335 = vrot.lane.b32.xlu0 %v7257, 48
      %v7336 = vpop.permute.xlu0 %7335
      %7337 = vrot.lane.b32.xlu0 %v7258, 48
      %v7338 = vpop.permute.xlu0 %7337
      %7339 = vrot.lane.b32.xlu0 %v7259, 48
      %v7340 = vpop.permute.xlu0 %7339
      %7341 = vrot.lane.b32.xlu0 %v7260, 48
      %v7342 = vpop.permute.xlu0 %7341
      %7343 = vrot.lane.b32.xlu0 %v7261, 48
      %v7344 = vpop.permute.xlu0 %7343
      %7345 = vrot.lane.b32.xlu0 %v7262, 48
      %v7346 = vpop.permute.xlu0 %7345
      %7347 = vrot.lane.b32.xlu0 %v7263, 48
      %v7348 = vpop.permute.xlu0 %7347
      %7349 = vrot.lane.b32.xlu0 %v7264, 48
      %v7350 = vpop.permute.xlu0 %7349
      %7351 = vrot.lane.b32.xlu0 %v7265, 48
      %v7352 = vpop.permute.xlu0 %7351
      %7353 = vrot.lane.b32.xlu0 %v7266, 48
      %v7354 = vpop.permute.xlu0 %7353
      %7355 = vrot.lane.b32.xlu0 %v7267, 48
      %v7356 = vpop.permute.xlu0 %7355
      %7357 = vrot.lane.b32.xlu0 %v7268, 48
      %v7358 = vpop.permute.xlu0 %7357
      %7359 = vrot.lane.b32.xlu0 %v7269, 48
      %v7360 = vpop.permute.xlu0 %7359
      %7361 = vrot.lane.b32.xlu0 %v7270, 48
      %v7362 = vpop.permute.xlu0 %7361
      %7363 = vrot.lane.b32.xlu0 %v7271, 48
      %v7364 = vpop.permute.xlu0 %7363
      %7365 = vrot.lane.b32.xlu0 %v7272, 48
      %v7366 = vpop.permute.xlu0 %7365
      %7367 = vrot.lane.b32.xlu0 %v7273, 48
      %v7368 = vpop.permute.xlu0 %7367
      %7369 = vrot.lane.b32.xlu0 %v7274, 48
      %v7370 = vpop.permute.xlu0 %7369
      %7403 = vst.msk [vmem:[#allocation3] sm:$0xff] %vm3442, %v7308
      %7404 = vst.msk [vmem:[#allocation3 + $0x10] sm:$0xff] %vm3442, %v7310
      %7405 = vst.msk [vmem:[#allocation3 + $0x20] sm:$0xff] %vm3442, %v7312
      %7406 = vst.msk [vmem:[#allocation3 + $0x30] sm:$0xff] %vm3442, %v7314
      %7407 = vst.msk [vmem:[#allocation3 + $0x40] sm:$0xff] %vm3442, %v7316
      %7408 = vst.msk [vmem:[#allocation3 + $0x50] sm:$0xff] %vm3442, %v7318
      %7409 = vst.msk [vmem:[#allocation3 + $0x60] sm:$0xff] %vm3442, %v7320
      %7410 = vst.msk [vmem:[#allocation3 + $0x70] sm:$0xff] %vm3442, %v7322
      %7411 = vst.msk [vmem:[#allocation3 + $0x80] sm:$0xff] %vm3442, %v7324
      %7412 = vst.msk [vmem:[#allocation3 + $0x90] sm:$0xff] %vm3442, %v7326
      %7413 = vst.msk [vmem:[#allocation3 + $0xa0] sm:$0xff] %vm3442, %v7328
      %7414 = vst.msk [vmem:[#allocation3 + $0xb0] sm:$0xff] %vm3442, %v7330
      %7415 = vst.msk [vmem:[#allocation3 + $0xc0] sm:$0xff] %vm3442, %v7332
      %7416 = vst.msk [vmem:[#allocation3 + $0xd0] sm:$0xff] %vm3442, %v7334
      %7417 = vst.msk [vmem:[#allocation3 + $0xe0] sm:$0xff] %vm3442, %v7336
      %7418 = vst.msk [vmem:[#allocation3 + $0xf0] sm:$0xff] %vm3442, %v7338
      %7419 = vst.msk [vmem:[#allocation3 + $0x100] sm:$0xff] %vm3442, %v7340
      %7420 = vst.msk [vmem:[#allocation3 + $0x110] sm:$0xff] %vm3442, %v7342
      %7421 = vst.msk [vmem:[#allocation3 + $0x120] sm:$0xff] %vm3442, %v7344
      %7422 = vst.msk [vmem:[#allocation3 + $0x130] sm:$0xff] %vm3442, %v7346
      %7423 = vst.msk [vmem:[#allocation3 + $0x140] sm:$0xff] %vm3442, %v7348
      %7424 = vst.msk [vmem:[#allocation3 + $0x150] sm:$0xff] %vm3442, %v7350
      %7425 = vst.msk [vmem:[#allocation3 + $0x160] sm:$0xff] %vm3442, %v7352
      %7426 = vst.msk [vmem:[#allocation3 + $0x170] sm:$0xff] %vm3442, %v7354
      %7427 = vst.msk [vmem:[#allocation3 + $0x180] sm:$0xff] %vm3442, %v7356
      %7428 = vst.msk [vmem:[#allocation3 + $0x190] sm:$0xff] %vm3442, %v7358
      %7429 = vst.msk [vmem:[#allocation3 + $0x1a0] sm:$0xff] %vm3442, %v7360
      %7430 = vst.msk [vmem:[#allocation3 + $0x1b0] sm:$0xff] %vm3442, %v7362
      %7431 = vst.msk [vmem:[#allocation3 + $0x1c0] sm:$0xff] %vm3442, %v7364
      %7432 = vst.msk [vmem:[#allocation3 + $0x1d0] sm:$0xff] %vm3442, %v7366
      %7433 = vst.msk [vmem:[#allocation3 + $0x1e0] sm:$0xff] %vm3442, %v7368
      %7434 = vst.msk [vmem:[#allocation3 + $0x1f0] sm:$0xff] %vm3442, %v7370
      %v7435 = vld [vmem:[%s724 + $0x1] sm:$0xff]
      %v7436 = vld [vmem:[%s724 + $0x9] sm:$0xff]
      %v7437 = vld [vmem:[%s724 + $0x19] sm:$0xff]
      %v7438 = vld [vmem:[%s724 + $0x21] sm:$0xff]
      %v7439 = vld [vmem:[%s724 + $0x31] sm:$0xff]
      %v7440 = vld [vmem:[%s724 + $0x39] sm:$0xff]
      %v7441 = vld [vmem:[%s724 + $0x49] sm:$0xff]
      %v7442 = vld [vmem:[%s724 + $0x51] sm:$0xff]
      %v7443 = vld [vmem:[%s724 + $0x61] sm:$0xff]
      %v7444 = vld [vmem:[%s724 + $0x69] sm:$0xff]
      %v7445 = vld [vmem:[%s724 + $0x79] sm:$0xff]
      %v7446 = vld [vmem:[%s724 + $0x81] sm:$0xff]
      %v7447 = vld [vmem:[%s724 + $0x91] sm:$0xff]
      %v7448 = vld [vmem:[%s724 + $0x99] sm:$0xff]
      %v7449 = vld [vmem:[%s724 + $0xa9] sm:$0xff]
      %v7450 = vld [vmem:[%s724 + $0xb1] sm:$0xff]
      %v7451 = vld [vmem:[%s724 + $0xc1] sm:$0xff]
      %v7452 = vld [vmem:[%s724 + $0xc9] sm:$0xff]
      %v7453 = vld [vmem:[%s724 + $0xd9] sm:$0xff]
      %v7454 = vld [vmem:[%s724 + $0xe1] sm:$0xff]
      %v7455 = vld [vmem:[%s724 + $0xf1] sm:$0xff]
      %v7456 = vld [vmem:[%s724 + $0xf9] sm:$0xff]
      %v7457 = vld [vmem:[%s724 + $0x109] sm:$0xff]
      %v7458 = vld [vmem:[%s724 + $0x111] sm:$0xff]
      %v7459 = vld [vmem:[%s724 + $0x121] sm:$0xff]
      %v7460 = vld [vmem:[%s724 + $0x129] sm:$0xff]
      %v7461 = vld [vmem:[%s724 + $0x139] sm:$0xff]
      %v7462 = vld [vmem:[%s724 + $0x141] sm:$0xff]
      %v7463 = vld [vmem:[%s724 + $0x151] sm:$0xff]
      %v7464 = vld [vmem:[%s724 + $0x159] sm:$0xff]
      %v7465 = vld [vmem:[%s724 + $0x169] sm:$0xff]
      %v7466 = vld [vmem:[%s724 + $0x171] sm:$0xff]
      %7499 = vrot.lane.b32.xlu0 %v7435, 64
      %v7500 = vpop.permute.xlu0 %7499
      %7501 = vrot.lane.b32.xlu0 %v7436, 64
      %v7502 = vpop.permute.xlu0 %7501
      %7503 = vrot.lane.b32.xlu0 %v7437, 64
      %v7504 = vpop.permute.xlu0 %7503
      %7505 = vrot.lane.b32.xlu0 %v7438, 64
      %v7506 = vpop.permute.xlu0 %7505
      %7507 = vrot.lane.b32.xlu0 %v7439, 64
      %v7508 = vpop.permute.xlu0 %7507
      %7509 = vrot.lane.b32.xlu0 %v7440, 64
      %v7510 = vpop.permute.xlu0 %7509
      %7511 = vrot.lane.b32.xlu0 %v7441, 64
      %v7512 = vpop.permute.xlu0 %7511
      %7513 = vrot.lane.b32.xlu0 %v7442, 64
      %v7514 = vpop.permute.xlu0 %7513
      %7515 = vrot.lane.b32.xlu0 %v7443, 64
      %v7516 = vpop.permute.xlu0 %7515
      %7517 = vrot.lane.b32.xlu0 %v7444, 64
      %v7518 = vpop.permute.xlu0 %7517
      %7519 = vrot.lane.b32.xlu0 %v7445, 64
      %v7520 = vpop.permute.xlu0 %7519
      %7521 = vrot.lane.b32.xlu0 %v7446, 64
      %v7522 = vpop.permute.xlu0 %7521
      %7523 = vrot.lane.b32.xlu0 %v7447, 64
      %v7524 = vpop.permute.xlu0 %7523
      %7525 = vrot.lane.b32.xlu0 %v7448, 64
      %v7526 = vpop.permute.xlu0 %7525
      %7527 = vrot.lane.b32.xlu0 %v7449, 64
      %v7528 = vpop.permute.xlu0 %7527
      %7529 = vrot.lane.b32.xlu0 %v7450, 64
      %v7530 = vpop.permute.xlu0 %7529
      %7531 = vrot.lane.b32.xlu0 %v7451, 64
      %v7532 = vpop.permute.xlu0 %7531
      %7533 = vrot.lane.b32.xlu0 %v7452, 64
      %v7534 = vpop.permute.xlu0 %7533
      %7535 = vrot.lane.b32.xlu0 %v7453, 64
      %v7536 = vpop.permute.xlu0 %7535
      %7537 = vrot.lane.b32.xlu0 %v7454, 64
      %v7538 = vpop.permute.xlu0 %7537
      %7539 = vrot.lane.b32.xlu0 %v7455, 64
      %v7540 = vpop.permute.xlu0 %7539
      %7541 = vrot.lane.b32.xlu0 %v7456, 64
      %v7542 = vpop.permute.xlu0 %7541
      %7543 = vrot.lane.b32.xlu0 %v7457, 64
      %v7544 = vpop.permute.xlu0 %7543
      %7545 = vrot.lane.b32.xlu0 %v7458, 64
      %v7546 = vpop.permute.xlu0 %7545
      %7547 = vrot.lane.b32.xlu0 %v7459, 64
      %v7548 = vpop.permute.xlu0 %7547
      %7549 = vrot.lane.b32.xlu0 %v7460, 64
      %v7550 = vpop.permute.xlu0 %7549
      %7551 = vrot.lane.b32.xlu0 %v7461, 64
      %v7552 = vpop.permute.xlu0 %7551
      %7553 = vrot.lane.b32.xlu0 %v7462, 64
      %v7554 = vpop.permute.xlu0 %7553
      %7555 = vrot.lane.b32.xlu0 %v7463, 64
      %v7556 = vpop.permute.xlu0 %7555
      %7557 = vrot.lane.b32.xlu0 %v7464, 64
      %v7558 = vpop.permute.xlu0 %7557
      %7559 = vrot.lane.b32.xlu0 %v7465, 64
      %v7560 = vpop.permute.xlu0 %7559
      %7561 = vrot.lane.b32.xlu0 %v7466, 64
      %v7562 = vpop.permute.xlu0 %7561
      %7595 = vst.msk [vmem:[#allocation3] sm:$0xff] %vm3635, %v7500
      %7596 = vst.msk [vmem:[#allocation3 + $0x10] sm:$0xff] %vm3635, %v7502
      %7597 = vst.msk [vmem:[#allocation3 + $0x20] sm:$0xff] %vm3635, %v7504
      %7598 = vst.msk [vmem:[#allocation3 + $0x30] sm:$0xff] %vm3635, %v7506
      %7599 = vst.msk [vmem:[#allocation3 + $0x40] sm:$0xff] %vm3635, %v7508
      %7600 = vst.msk [vmem:[#allocation3 + $0x50] sm:$0xff] %vm3635, %v7510
      %7601 = vst.msk [vmem:[#allocation3 + $0x60] sm:$0xff] %vm3635, %v7512
      %7602 = vst.msk [vmem:[#allocation3 + $0x70] sm:$0xff] %vm3635, %v7514
      %7603 = vst.msk [vmem:[#allocation3 + $0x80] sm:$0xff] %vm3635, %v7516
      %7604 = vst.msk [vmem:[#allocation3 + $0x90] sm:$0xff] %vm3635, %v7518
      %7605 = vst.msk [vmem:[#allocation3 + $0xa0] sm:$0xff] %vm3635, %v7520
      %7606 = vst.msk [vmem:[#allocation3 + $0xb0] sm:$0xff] %vm3635, %v7522
      %7607 = vst.msk [vmem:[#allocation3 + $0xc0] sm:$0xff] %vm3635, %v7524
      %7608 = vst.msk [vmem:[#allocation3 + $0xd0] sm:$0xff] %vm3635, %v7526
      %7609 = vst.msk [vmem:[#allocation3 + $0xe0] sm:$0xff] %vm3635, %v7528
      %7610 = vst.msk [vmem:[#allocation3 + $0xf0] sm:$0xff] %vm3635, %v7530
      %7611 = vst.msk [vmem:[#allocation3 + $0x100] sm:$0xff] %vm3635, %v7532
      %7612 = vst.msk [vmem:[#allocation3 + $0x110] sm:$0xff] %vm3635, %v7534
      %7613 = vst.msk [vmem:[#allocation3 + $0x120] sm:$0xff] %vm3635, %v7536
      %7614 = vst.msk [vmem:[#allocation3 + $0x130] sm:$0xff] %vm3635, %v7538
      %7615 = vst.msk [vmem:[#allocation3 + $0x140] sm:$0xff] %vm3635, %v7540
      %7616 = vst.msk [vmem:[#allocation3 + $0x150] sm:$0xff] %vm3635, %v7542
      %7617 = vst.msk [vmem:[#allocation3 + $0x160] sm:$0xff] %vm3635, %v7544
      %7618 = vst.msk [vmem:[#allocation3 + $0x170] sm:$0xff] %vm3635, %v7546
      %7619 = vst.msk [vmem:[#allocation3 + $0x180] sm:$0xff] %vm3635, %v7548
      %7620 = vst.msk [vmem:[#allocation3 + $0x190] sm:$0xff] %vm3635, %v7550
      %7621 = vst.msk [vmem:[#allocation3 + $0x1a0] sm:$0xff] %vm3635, %v7552
      %7622 = vst.msk [vmem:[#allocation3 + $0x1b0] sm:$0xff] %vm3635, %v7554
      %7623 = vst.msk [vmem:[#allocation3 + $0x1c0] sm:$0xff] %vm3635, %v7556
      %7624 = vst.msk [vmem:[#allocation3 + $0x1d0] sm:$0xff] %vm3635, %v7558
      %7625 = vst.msk [vmem:[#allocation3 + $0x1e0] sm:$0xff] %vm3635, %v7560
      %7626 = vst.msk [vmem:[#allocation3 + $0x1f0] sm:$0xff] %vm3635, %v7562
      %v7627 = vld [vmem:[%s724 + $0x2] sm:$0xff]
      %v7628 = vld [vmem:[%s724 + $0xa] sm:$0xff]
      %v7629 = vld [vmem:[%s724 + $0x1a] sm:$0xff]
      %v7630 = vld [vmem:[%s724 + $0x22] sm:$0xff]
      %v7631 = vld [vmem:[%s724 + $0x32] sm:$0xff]
      %v7632 = vld [vmem:[%s724 + $0x3a] sm:$0xff]
      %v7633 = vld [vmem:[%s724 + $0x4a] sm:$0xff]
      %v7634 = vld [vmem:[%s724 + $0x52] sm:$0xff]
      %v7635 = vld [vmem:[%s724 + $0x62] sm:$0xff]
      %v7636 = vld [vmem:[%s724 + $0x6a] sm:$0xff]
      %v7637 = vld [vmem:[%s724 + $0x7a] sm:$0xff]
      %v7638 = vld [vmem:[%s724 + $0x82] sm:$0xff]
      %v7639 = vld [vmem:[%s724 + $0x92] sm:$0xff]
      %v7640 = vld [vmem:[%s724 + $0x9a] sm:$0xff]
      %v7641 = vld [vmem:[%s724 + $0xaa] sm:$0xff]
      %v7642 = vld [vmem:[%s724 + $0xb2] sm:$0xff]
      %v7643 = vld [vmem:[%s724 + $0xc2] sm:$0xff]
      %v7644 = vld [vmem:[%s724 + $0xca] sm:$0xff]
      %v7645 = vld [vmem:[%s724 + $0xda] sm:$0xff]
      %v7646 = vld [vmem:[%s724 + $0xe2] sm:$0xff]
      %v7647 = vld [vmem:[%s724 + $0xf2] sm:$0xff]
      %v7648 = vld [vmem:[%s724 + $0xfa] sm:$0xff]
      %v7649 = vld [vmem:[%s724 + $0x10a] sm:$0xff]
      %v7650 = vld [vmem:[%s724 + $0x112] sm:$0xff]
      %v7651 = vld [vmem:[%s724 + $0x122] sm:$0xff]
      %v7652 = vld [vmem:[%s724 + $0x12a] sm:$0xff]
      %v7653 = vld [vmem:[%s724 + $0x13a] sm:$0xff]
      %v7654 = vld [vmem:[%s724 + $0x142] sm:$0xff]
      %v7655 = vld [vmem:[%s724 + $0x152] sm:$0xff]
      %v7656 = vld [vmem:[%s724 + $0x15a] sm:$0xff]
      %v7657 = vld [vmem:[%s724 + $0x16a] sm:$0xff]
      %v7658 = vld [vmem:[%s724 + $0x172] sm:$0xff]
      %7691 = vrot.lane.b32.xlu0 %v7627, 80
      %v7692 = vpop.permute.xlu0 %7691
      %7693 = vrot.lane.b32.xlu0 %v7628, 80
      %v7694 = vpop.permute.xlu0 %7693
      %7695 = vrot.lane.b32.xlu0 %v7629, 80
      %v7696 = vpop.permute.xlu0 %7695
      %7697 = vrot.lane.b32.xlu0 %v7630, 80
      %v7698 = vpop.permute.xlu0 %7697
      %7699 = vrot.lane.b32.xlu0 %v7631, 80
      %v7700 = vpop.permute.xlu0 %7699
      %7701 = vrot.lane.b32.xlu0 %v7632, 80
      %v7702 = vpop.permute.xlu0 %7701
      %7703 = vrot.lane.b32.xlu0 %v7633, 80
      %v7704 = vpop.permute.xlu0 %7703
      %7705 = vrot.lane.b32.xlu0 %v7634, 80
      %v7706 = vpop.permute.xlu0 %7705
      %7707 = vrot.lane.b32.xlu0 %v7635, 80
      %v7708 = vpop.permute.xlu0 %7707
      %7709 = vrot.lane.b32.xlu0 %v7636, 80
      %v7710 = vpop.permute.xlu0 %7709
      %7711 = vrot.lane.b32.xlu0 %v7637, 80
      %v7712 = vpop.permute.xlu0 %7711
      %7713 = vrot.lane.b32.xlu0 %v7638, 80
      %v7714 = vpop.permute.xlu0 %7713
      %7715 = vrot.lane.b32.xlu0 %v7639, 80
      %v7716 = vpop.permute.xlu0 %7715
      %7717 = vrot.lane.b32.xlu0 %v7640, 80
      %v7718 = vpop.permute.xlu0 %7717
      %7719 = vrot.lane.b32.xlu0 %v7641, 80
      %v7720 = vpop.permute.xlu0 %7719
      %7721 = vrot.lane.b32.xlu0 %v7642, 80
      %v7722 = vpop.permute.xlu0 %7721
      %7723 = vrot.lane.b32.xlu0 %v7643, 80
      %v7724 = vpop.permute.xlu0 %7723
      %7725 = vrot.lane.b32.xlu0 %v7644, 80
      %v7726 = vpop.permute.xlu0 %7725
      %7727 = vrot.lane.b32.xlu0 %v7645, 80
      %v7728 = vpop.permute.xlu0 %7727
      %7729 = vrot.lane.b32.xlu0 %v7646, 80
      %v7730 = vpop.permute.xlu0 %7729
      %7731 = vrot.lane.b32.xlu0 %v7647, 80
      %v7732 = vpop.permute.xlu0 %7731
      %7733 = vrot.lane.b32.xlu0 %v7648, 80
      %v7734 = vpop.permute.xlu0 %7733
      %7735 = vrot.lane.b32.xlu0 %v7649, 80
      %v7736 = vpop.permute.xlu0 %7735
      %7737 = vrot.lane.b32.xlu0 %v7650, 80
      %v7738 = vpop.permute.xlu0 %7737
      %7739 = vrot.lane.b32.xlu0 %v7651, 80
      %v7740 = vpop.permute.xlu0 %7739
      %7741 = vrot.lane.b32.xlu0 %v7652, 80
      %v7742 = vpop.permute.xlu0 %7741
      %7743 = vrot.lane.b32.xlu0 %v7653, 80
      %v7744 = vpop.permute.xlu0 %7743
      %7745 = vrot.lane.b32.xlu0 %v7654, 80
      %v7746 = vpop.permute.xlu0 %7745
      %7747 = vrot.lane.b32.xlu0 %v7655, 80
      %v7748 = vpop.permute.xlu0 %7747
      %7749 = vrot.lane.b32.xlu0 %v7656, 80
      %v7750 = vpop.permute.xlu0 %7749
      %7751 = vrot.lane.b32.xlu0 %v7657, 80
      %v7752 = vpop.permute.xlu0 %7751
      %7753 = vrot.lane.b32.xlu0 %v7658, 80
      %v7754 = vpop.permute.xlu0 %7753
      %7787 = vst.msk [vmem:[#allocation3] sm:$0xff] %vm3828, %v7692
      %7788 = vst.msk [vmem:[#allocation3 + $0x10] sm:$0xff] %vm3828, %v7694
      %7789 = vst.msk [vmem:[#allocation3 + $0x20] sm:$0xff] %vm3828, %v7696
      %7790 = vst.msk [vmem:[#allocation3 + $0x30] sm:$0xff] %vm3828, %v7698
      %7791 = vst.msk [vmem:[#allocation3 + $0x40] sm:$0xff] %vm3828, %v7700
      %7792 = vst.msk [vmem:[#allocation3 + $0x50] sm:$0xff] %vm3828, %v7702
      %7793 = vst.msk [vmem:[#allocation3 + $0x60] sm:$0xff] %vm3828, %v7704
      %7794 = vst.msk [vmem:[#allocation3 + $0x70] sm:$0xff] %vm3828, %v7706
      %7795 = vst.msk [vmem:[#allocation3 + $0x80] sm:$0xff] %vm3828, %v7708
      %7796 = vst.msk [vmem:[#allocation3 + $0x90] sm:$0xff] %vm3828, %v7710
      %7797 = vst.msk [vmem:[#allocation3 + $0xa0] sm:$0xff] %vm3828, %v7712
      %7798 = vst.msk [vmem:[#allocation3 + $0xb0] sm:$0xff] %vm3828, %v7714
      %7799 = vst.msk [vmem:[#allocation3 + $0xc0] sm:$0xff] %vm3828, %v7716
      %7800 = vst.msk [vmem:[#allocation3 + $0xd0] sm:$0xff] %vm3828, %v7718
      %7801 = vst.msk [vmem:[#allocation3 + $0xe0] sm:$0xff] %vm3828, %v7720
      %7802 = vst.msk [vmem:[#allocation3 + $0xf0] sm:$0xff] %vm3828, %v7722
      %7803 = vst.msk [vmem:[#allocation3 + $0x100] sm:$0xff] %vm3828, %v7724
      %7804 = vst.msk [vmem:[#allocation3 + $0x110] sm:$0xff] %vm3828, %v7726
      %7805 = vst.msk [vmem:[#allocation3 + $0x120] sm:$0xff] %vm3828, %v7728
      %7806 = vst.msk [vmem:[#allocation3 + $0x130] sm:$0xff] %vm3828, %v7730
      %7807 = vst.msk [vmem:[#allocation3 + $0x140] sm:$0xff] %vm3828, %v7732
      %7808 = vst.msk [vmem:[#allocation3 + $0x150] sm:$0xff] %vm3828, %v7734
      %7809 = vst.msk [vmem:[#allocation3 + $0x160] sm:$0xff] %vm3828, %v7736
      %7810 = vst.msk [vmem:[#allocation3 + $0x170] sm:$0xff] %vm3828, %v7738
      %7811 = vst.msk [vmem:[#allocation3 + $0x180] sm:$0xff] %vm3828, %v7740
      %7812 = vst.msk [vmem:[#allocation3 + $0x190] sm:$0xff] %vm3828, %v7742
      %7813 = vst.msk [vmem:[#allocation3 + $0x1a0] sm:$0xff] %vm3828, %v7744
      %7814 = vst.msk [vmem:[#allocation3 + $0x1b0] sm:$0xff] %vm3828, %v7746
      %7815 = vst.msk [vmem:[#allocation3 + $0x1c0] sm:$0xff] %vm3828, %v7748
      %7816 = vst.msk [vmem:[#allocation3 + $0x1d0] sm:$0xff] %vm3828, %v7750
      %7817 = vst.msk [vmem:[#allocation3 + $0x1e0] sm:$0xff] %vm3828, %v7752
      %7818 = vst.msk [vmem:[#allocation3 + $0x1f0] sm:$0xff] %vm3828, %v7754
      %v7819 = vld [vmem:[%s1787] sm:$0xff]
      %v7820 = vld [vmem:[%s1787 + $0x8] sm:$0xff]
      %v7821 = vld [vmem:[%s1787 + $0x18] sm:$0xff]
      %v7822 = vld [vmem:[%s1787 + $0x20] sm:$0xff]
      %v7823 = vld [vmem:[%s1787 + $0x30] sm:$0xff]
      %v7824 = vld [vmem:[%s1787 + $0x38] sm:$0xff]
      %v7825 = vld [vmem:[%s1787 + $0x48] sm:$0xff]
      %v7826 = vld [vmem:[%s1787 + $0x50] sm:$0xff]
      %v7827 = vld [vmem:[%s1787 + $0x60] sm:$0xff]
      %v7828 = vld [vmem:[%s1787 + $0x68] sm:$0xff]
      %v7829 = vld [vmem:[%s1787 + $0x78] sm:$0xff]
      %v7830 = vld [vmem:[%s1787 + $0x80] sm:$0xff]
      %v7831 = vld [vmem:[%s1787 + $0x90] sm:$0xff]
      %v7832 = vld [vmem:[%s1787 + $0x98] sm:$0xff]
      %v7833 = vld [vmem:[%s1787 + $0xa8] sm:$0xff]
      %v7834 = vld [vmem:[%s1787 + $0xb0] sm:$0xff]
      %v7835 = vld [vmem:[%s1787 + $0xc0] sm:$0xff]
      %v7836 = vld [vmem:[%s1787 + $0xc8] sm:$0xff]
      %v7837 = vld [vmem:[%s1787 + $0xd8] sm:$0xff]
      %v7838 = vld [vmem:[%s1787 + $0xe0] sm:$0xff]
      %v7839 = vld [vmem:[%s1787 + $0xf0] sm:$0xff]
      %v7840 = vld [vmem:[%s1787 + $0xf8] sm:$0xff]
      %v7841 = vld [vmem:[%s1787 + $0x108] sm:$0xff]
      %v7842 = vld [vmem:[%s1787 + $0x110] sm:$0xff]
      %v7843 = vld [vmem:[%s1787 + $0x120] sm:$0xff]
      %v7844 = vld [vmem:[%s1787 + $0x128] sm:$0xff]
      %v7845 = vld [vmem:[%s1787 + $0x138] sm:$0xff]
      %v7846 = vld [vmem:[%s1787 + $0x140] sm:$0xff]
      %v7847 = vld [vmem:[%s1787 + $0x150] sm:$0xff]
      %v7848 = vld [vmem:[%s1787 + $0x158] sm:$0xff]
      %v7849 = vld [vmem:[%s1787 + $0x168] sm:$0xff]
      %v7850 = vld [vmem:[%s1787 + $0x170] sm:$0xff]
      %7883 = vrot.lane.b32.xlu0 %v7819, 96
      %v7884 = vpop.permute.xlu0 %7883
      %7885 = vrot.lane.b32.xlu0 %v7820, 96
      %v7886 = vpop.permute.xlu0 %7885
      %7887 = vrot.lane.b32.xlu0 %v7821, 96
      %v7888 = vpop.permute.xlu0 %7887
      %7889 = vrot.lane.b32.xlu0 %v7822, 96
      %v7890 = vpop.permute.xlu0 %7889
      %7891 = vrot.lane.b32.xlu0 %v7823, 96
      %v7892 = vpop.permute.xlu0 %7891
      %7893 = vrot.lane.b32.xlu0 %v7824, 96
      %v7894 = vpop.permute.xlu0 %7893
      %7895 = vrot.lane.b32.xlu0 %v7825, 96
      %v7896 = vpop.permute.xlu0 %7895
      %7897 = vrot.lane.b32.xlu0 %v7826, 96
      %v7898 = vpop.permute.xlu0 %7897
      %7899 = vrot.lane.b32.xlu0 %v7827, 96
      %v7900 = vpop.permute.xlu0 %7899
      %7901 = vrot.lane.b32.xlu0 %v7828, 96
      %v7902 = vpop.permute.xlu0 %7901
      %7903 = vrot.lane.b32.xlu0 %v7829, 96
      %v7904 = vpop.permute.xlu0 %7903
      %7905 = vrot.lane.b32.xlu0 %v7830, 96
      %v7906 = vpop.permute.xlu0 %7905
      %7907 = vrot.lane.b32.xlu0 %v7831, 96
      %v7908 = vpop.permute.xlu0 %7907
      %7909 = vrot.lane.b32.xlu0 %v7832, 96
      %v7910 = vpop.permute.xlu0 %7909
      %7911 = vrot.lane.b32.xlu0 %v7833, 96
      %v7912 = vpop.permute.xlu0 %7911
      %7913 = vrot.lane.b32.xlu0 %v7834, 96
      %v7914 = vpop.permute.xlu0 %7913
      %7915 = vrot.lane.b32.xlu0 %v7835, 96
      %v7916 = vpop.permute.xlu0 %7915
      %7917 = vrot.lane.b32.xlu0 %v7836, 96
      %v7918 = vpop.permute.xlu0 %7917
      %7919 = vrot.lane.b32.xlu0 %v7837, 96
      %v7920 = vpop.permute.xlu0 %7919
      %7921 = vrot.lane.b32.xlu0 %v7838, 96
      %v7922 = vpop.permute.xlu0 %7921
      %7923 = vrot.lane.b32.xlu0 %v7839, 96
      %v7924 = vpop.permute.xlu0 %7923
      %7925 = vrot.lane.b32.xlu0 %v7840, 96
      %v7926 = vpop.permute.xlu0 %7925
      %7927 = vrot.lane.b32.xlu0 %v7841, 96
      %v7928 = vpop.permute.xlu0 %7927
      %7929 = vrot.lane.b32.xlu0 %v7842, 96
      %v7930 = vpop.permute.xlu0 %7929
      %7931 = vrot.lane.b32.xlu0 %v7843, 96
      %v7932 = vpop.permute.xlu0 %7931
      %7933 = vrot.lane.b32.xlu0 %v7844, 96
      %v7934 = vpop.permute.xlu0 %7933
      %7935 = vrot.lane.b32.xlu0 %v7845, 96
      %v7936 = vpop.permute.xlu0 %7935
      %7937 = vrot.lane.b32.xlu0 %v7846, 96
      %v7938 = vpop.permute.xlu0 %7937
      %7939 = vrot.lane.b32.xlu0 %v7847, 96
      %v7940 = vpop.permute.xlu0 %7939
      %7941 = vrot.lane.b32.xlu0 %v7848, 96
      %v7942 = vpop.permute.xlu0 %7941
      %7943 = vrot.lane.b32.xlu0 %v7849, 96
      %v7944 = vpop.permute.xlu0 %7943
      %7945 = vrot.lane.b32.xlu0 %v7850, 96
      %v7946 = vpop.permute.xlu0 %7945
      %7979 = vst.msk [vmem:[#allocation3] sm:$0xff] %vm4021, %v7884
      %7980 = vst.msk [vmem:[#allocation3 + $0x10] sm:$0xff] %vm4021, %v7886
      %7981 = vst.msk [vmem:[#allocation3 + $0x20] sm:$0xff] %vm4021, %v7888
      %7982 = vst.msk [vmem:[#allocation3 + $0x30] sm:$0xff] %vm4021, %v7890
      %7983 = vst.msk [vmem:[#allocation3 + $0x40] sm:$0xff] %vm4021, %v7892
      %7984 = vst.msk [vmem:[#allocation3 + $0x50] sm:$0xff] %vm4021, %v7894
      %7985 = vst.msk [vmem:[#allocation3 + $0x60] sm:$0xff] %vm4021, %v7896
      %7986 = vst.msk [vmem:[#allocation3 + $0x70] sm:$0xff] %vm4021, %v7898
      %7987 = vst.msk [vmem:[#allocation3 + $0x80] sm:$0xff] %vm4021, %v7900
      %7988 = vst.msk [vmem:[#allocation3 + $0x90] sm:$0xff] %vm4021, %v7902
      %7989 = vst.msk [vmem:[#allocation3 + $0xa0] sm:$0xff] %vm4021, %v7904
      %7990 = vst.msk [vmem:[#allocation3 + $0xb0] sm:$0xff] %vm4021, %v7906
      %7991 = vst.msk [vmem:[#allocation3 + $0xc0] sm:$0xff] %vm4021, %v7908
      %7992 = vst.msk [vmem:[#allocation3 + $0xd0] sm:$0xff] %vm4021, %v7910
      %7993 = vst.msk [vmem:[#allocation3 + $0xe0] sm:$0xff] %vm4021, %v7912
      %7994 = vst.msk [vmem:[#allocation3 + $0xf0] sm:$0xff] %vm4021, %v7914
      %7995 = vst.msk [vmem:[#allocation3 + $0x100] sm:$0xff] %vm4021, %v7916
      %7996 = vst.msk [vmem:[#allocation3 + $0x110] sm:$0xff] %vm4021, %v7918
      %7997 = vst.msk [vmem:[#allocation3 + $0x120] sm:$0xff] %vm4021, %v7920
      %7998 = vst.msk [vmem:[#allocation3 + $0x130] sm:$0xff] %vm4021, %v7922
      %7999 = vst.msk [vmem:[#allocation3 + $0x140] sm:$0xff] %vm4021, %v7924
      %8000 = vst.msk [vmem:[#allocation3 + $0x150] sm:$0xff] %vm4021, %v7926
      %8001 = vst.msk [vmem:[#allocation3 + $0x160] sm:$0xff] %vm4021, %v7928
      %8002 = vst.msk [vmem:[#allocation3 + $0x170] sm:$0xff] %vm4021, %v7930
      %8003 = vst.msk [vmem:[#allocation3 + $0x180] sm:$0xff] %vm4021, %v7932
      %8004 = vst.msk [vmem:[#allocation3 + $0x190] sm:$0xff] %vm4021, %v7934
      %8005 = vst.msk [vmem:[#allocation3 + $0x1a0] sm:$0xff] %vm4021, %v7936
      %8006 = vst.msk [vmem:[#allocation3 + $0x1b0] sm:$0xff] %vm4021, %v7938
      %8007 = vst.msk [vmem:[#allocation3 + $0x1c0] sm:$0xff] %vm4021, %v7940
      %8008 = vst.msk [vmem:[#allocation3 + $0x1d0] sm:$0xff] %vm4021, %v7942
      %8009 = vst.msk [vmem:[#allocation3 + $0x1e0] sm:$0xff] %vm4021, %v7944
      %8010 = vst.msk [vmem:[#allocation3 + $0x1f0] sm:$0xff] %vm4021, %v7946
      %v8011 = vld [vmem:[%s1787 + $0x1] sm:$0xff]
      %v8012 = vld [vmem:[%s1787 + $0x9] sm:$0xff]
      %v8013 = vld [vmem:[%s1787 + $0x19] sm:$0xff]
      %v8014 = vld [vmem:[%s1787 + $0x21] sm:$0xff]
      %v8015 = vld [vmem:[%s1787 + $0x31] sm:$0xff]
      %v8016 = vld [vmem:[%s1787 + $0x39] sm:$0xff]
      %v8017 = vld [vmem:[%s1787 + $0x49] sm:$0xff]
      %v8018 = vld [vmem:[%s1787 + $0x51] sm:$0xff]
      %v8019 = vld [vmem:[%s1787 + $0x61] sm:$0xff]
      %v8020 = vld [vmem:[%s1787 + $0x69] sm:$0xff]
      %v8021 = vld [vmem:[%s1787 + $0x79] sm:$0xff]
      %v8022 = vld [vmem:[%s1787 + $0x81] sm:$0xff]
      %v8023 = vld [vmem:[%s1787 + $0x91] sm:$0xff]
      %v8024 = vld [vmem:[%s1787 + $0x99] sm:$0xff]
      %v8025 = vld [vmem:[%s1787 + $0xa9] sm:$0xff]
      %v8026 = vld [vmem:[%s1787 + $0xb1] sm:$0xff]
      %v8027 = vld [vmem:[%s1787 + $0xc1] sm:$0xff]
      %v8028 = vld [vmem:[%s1787 + $0xc9] sm:$0xff]
      %v8029 = vld [vmem:[%s1787 + $0xd9] sm:$0xff]
      %v8030 = vld [vmem:[%s1787 + $0xe1] sm:$0xff]
      %v8031 = vld [vmem:[%s1787 + $0xf1] sm:$0xff]
      %v8032 = vld [vmem:[%s1787 + $0xf9] sm:$0xff]
      %v8033 = vld [vmem:[%s1787 + $0x109] sm:$0xff]
      %v8034 = vld [vmem:[%s1787 + $0x111] sm:$0xff]
      %v8035 = vld [vmem:[%s1787 + $0x121] sm:$0xff]
      %v8036 = vld [vmem:[%s1787 + $0x129] sm:$0xff]
      %v8037 = vld [vmem:[%s1787 + $0x139] sm:$0xff]
      %v8038 = vld [vmem:[%s1787 + $0x141] sm:$0xff]
      %v8039 = vld [vmem:[%s1787 + $0x151] sm:$0xff]
      %v8040 = vld [vmem:[%s1787 + $0x159] sm:$0xff]
      %v8041 = vld [vmem:[%s1787 + $0x169] sm:$0xff]
      %v8042 = vld [vmem:[%s1787 + $0x171] sm:$0xff]
      %8075 = vrot.lane.b32.xlu0 %v8011, 112
      %v8076 = vpop.permute.xlu0 %8075
      %8077 = vrot.lane.b32.xlu0 %v8012, 112
      %v8078 = vpop.permute.xlu0 %8077
      %8079 = vrot.lane.b32.xlu0 %v8013, 112
      %v8080 = vpop.permute.xlu0 %8079
      %8081 = vrot.lane.b32.xlu0 %v8014, 112
      %v8082 = vpop.permute.xlu0 %8081
      %8083 = vrot.lane.b32.xlu0 %v8015, 112
      %v8084 = vpop.permute.xlu0 %8083
      %8085 = vrot.lane.b32.xlu0 %v8016, 112
      %v8086 = vpop.permute.xlu0 %8085
      %8087 = vrot.lane.b32.xlu0 %v8017, 112
      %v8088 = vpop.permute.xlu0 %8087
      %8089 = vrot.lane.b32.xlu0 %v8018, 112
      %v8090 = vpop.permute.xlu0 %8089
      %8091 = vrot.lane.b32.xlu0 %v8019, 112
      %v8092 = vpop.permute.xlu0 %8091
      %8093 = vrot.lane.b32.xlu0 %v8020, 112
      %v8094 = vpop.permute.xlu0 %8093
      %8095 = vrot.lane.b32.xlu0 %v8021, 112
      %v8096 = vpop.permute.xlu0 %8095
      %8097 = vrot.lane.b32.xlu0 %v8022, 112
      %v8098 = vpop.permute.xlu0 %8097
      %8099 = vrot.lane.b32.xlu0 %v8023, 112
      %v8100 = vpop.permute.xlu0 %8099
      %8101 = vrot.lane.b32.xlu0 %v8024, 112
      %v8102 = vpop.permute.xlu0 %8101
      %8103 = vrot.lane.b32.xlu0 %v8025, 112
      %v8104 = vpop.permute.xlu0 %8103
      %8105 = vrot.lane.b32.xlu0 %v8026, 112
      %v8106 = vpop.permute.xlu0 %8105
      %8107 = vrot.lane.b32.xlu0 %v8027, 112
      %v8108 = vpop.permute.xlu0 %8107
      %8109 = vrot.lane.b32.xlu0 %v8028, 112
      %v8110 = vpop.permute.xlu0 %8109
      %8111 = vrot.lane.b32.xlu0 %v8029, 112
      %v8112 = vpop.permute.xlu0 %8111
      %8113 = vrot.lane.b32.xlu0 %v8030, 112
      %v8114 = vpop.permute.xlu0 %8113
      %8115 = vrot.lane.b32.xlu0 %v8031, 112
      %v8116 = vpop.permute.xlu0 %8115
      %8117 = vrot.lane.b32.xlu0 %v8032, 112
      %v8118 = vpop.permute.xlu0 %8117
      %8119 = vrot.lane.b32.xlu0 %v8033, 112
      %v8120 = vpop.permute.xlu0 %8119
      %8121 = vrot.lane.b32.xlu0 %v8034, 112
      %v8122 = vpop.permute.xlu0 %8121
      %8123 = vrot.lane.b32.xlu0 %v8035, 112
      %v8124 = vpop.permute.xlu0 %8123
      %8125 = vrot.lane.b32.xlu0 %v8036, 112
      %v8126 = vpop.permute.xlu0 %8125
      %8127 = vrot.lane.b32.xlu0 %v8037, 112
      %v8128 = vpop.permute.xlu0 %8127
      %8129 = vrot.lane.b32.xlu0 %v8038, 112
      %v8130 = vpop.permute.xlu0 %8129
      %8131 = vrot.lane.b32.xlu0 %v8039, 112
      %v8132 = vpop.permute.xlu0 %8131
      %8133 = vrot.lane.b32.xlu0 %v8040, 112
      %v8134 = vpop.permute.xlu0 %8133
      %8135 = vrot.lane.b32.xlu0 %v8041, 112
      %v8136 = vpop.permute.xlu0 %8135
      %8137 = vrot.lane.b32.xlu0 %v8042, 112
      %v8138 = vpop.permute.xlu0 %8137
      %8171 = vst.msk [vmem:[#allocation3] sm:$0xff] %vm4214, %v8076
      %8172 = vst.msk [vmem:[#allocation3 + $0x10] sm:$0xff] %vm4214, %v8078
      %8173 = vst.msk [vmem:[#allocation3 + $0x20] sm:$0xff] %vm4214, %v8080
      %8174 = vst.msk [vmem:[#allocation3 + $0x30] sm:$0xff] %vm4214, %v8082
      %8175 = vst.msk [vmem:[#allocation3 + $0x40] sm:$0xff] %vm4214, %v8084
      %8176 = vst.msk [vmem:[#allocation3 + $0x50] sm:$0xff] %vm4214, %v8086
      %8177 = vst.msk [vmem:[#allocation3 + $0x60] sm:$0xff] %vm4214, %v8088
      %8178 = vst.msk [vmem:[#allocation3 + $0x70] sm:$0xff] %vm4214, %v8090
      %8179 = vst.msk [vmem:[#allocation3 + $0x80] sm:$0xff] %vm4214, %v8092
      %8180 = vst.msk [vmem:[#allocation3 + $0x90] sm:$0xff] %vm4214, %v8094
      %8181 = vst.msk [vmem:[#allocation3 + $0xa0] sm:$0xff] %vm4214, %v8096
      %8182 = vst.msk [vmem:[#allocation3 + $0xb0] sm:$0xff] %vm4214, %v8098
      %8183 = vst.msk [vmem:[#allocation3 + $0xc0] sm:$0xff] %vm4214, %v8100
      %8184 = vst.msk [vmem:[#allocation3 + $0xd0] sm:$0xff] %vm4214, %v8102
      %8185 = vst.msk [vmem:[#allocation3 + $0xe0] sm:$0xff] %vm4214, %v8104
      %8186 = vst.msk [vmem:[#allocation3 + $0xf0] sm:$0xff] %vm4214, %v8106
      %8187 = vst.msk [vmem:[#allocation3 + $0x100] sm:$0xff] %vm4214, %v8108
      %8188 = vst.msk [vmem:[#allocation3 + $0x110] sm:$0xff] %vm4214, %v8110
      %8189 = vst.msk [vmem:[#allocation3 + $0x120] sm:$0xff] %vm4214, %v8112
      %8190 = vst.msk [vmem:[#allocation3 + $0x130] sm:$0xff] %vm4214, %v8114
      %8191 = vst.msk [vmem:[#allocation3 + $0x140] sm:$0xff] %vm4214, %v8116
      %8192 = vst.msk [vmem:[#allocation3 + $0x150] sm:$0xff] %vm4214, %v8118
      %8193 = vst.msk [vmem:[#allocation3 + $0x160] sm:$0xff] %vm4214, %v8120
      %8194 = vst.msk [vmem:[#allocation3 + $0x170] sm:$0xff] %vm4214, %v8122
      %8195 = vst.msk [vmem:[#allocation3 + $0x180] sm:$0xff] %vm4214, %v8124
      %8196 = vst.msk [vmem:[#allocation3 + $0x190] sm:$0xff] %vm4214, %v8126
      %8197 = vst.msk [vmem:[#allocation3 + $0x1a0] sm:$0xff] %vm4214, %v8128
      %8198 = vst.msk [vmem:[#allocation3 + $0x1b0] sm:$0xff] %vm4214, %v8130
      %8199 = vst.msk [vmem:[#allocation3 + $0x1c0] sm:$0xff] %vm4214, %v8132
      %8200 = vst.msk [vmem:[#allocation3 + $0x1d0] sm:$0xff] %vm4214, %v8134
      %8201 = vst.msk [vmem:[#allocation3 + $0x1e0] sm:$0xff] %vm4214, %v8136
      %8202 = vst.msk [vmem:[#allocation3 + $0x1f0] sm:$0xff] %vm4214, %v8138
      %v8203 = vld [vmem:[%s1787 + $0x2] sm:$0xff]
      %v8204 = vld [vmem:[%s1787 + $0xa] sm:$0xff]
      %v8205 = vld [vmem:[%s1787 + $0x1a] sm:$0xff]
      %v8206 = vld [vmem:[%s1787 + $0x22] sm:$0xff]
      %v8207 = vld [vmem:[%s1787 + $0x32] sm:$0xff]
      %v8208 = vld [vmem:[%s1787 + $0x3a] sm:$0xff]
      %v8209 = vld [vmem:[%s1787 + $0x4a] sm:$0xff]
      %v8210 = vld [vmem:[%s1787 + $0x52] sm:$0xff]
      %v8211 = vld [vmem:[%s1787 + $0x62] sm:$0xff]
      %v8212 = vld [vmem:[%s1787 + $0x6a] sm:$0xff]
      %v8213 = vld [vmem:[%s1787 + $0x7a] sm:$0xff]
      %v8214 = vld [vmem:[%s1787 + $0x82] sm:$0xff]
      %v8215 = vld [vmem:[%s1787 + $0x92] sm:$0xff]
      %v8216 = vld [vmem:[%s1787 + $0x9a] sm:$0xff]
      %v8217 = vld [vmem:[%s1787 + $0xaa] sm:$0xff]
      %v8218 = vld [vmem:[%s1787 + $0xb2] sm:$0xff]
      %v8219 = vld [vmem:[%s1787 + $0xc2] sm:$0xff]
      %v8220 = vld [vmem:[%s1787 + $0xca] sm:$0xff]
      %v8221 = vld [vmem:[%s1787 + $0xda] sm:$0xff]
      %v8222 = vld [vmem:[%s1787 + $0xe2] sm:$0xff]
      %v8223 = vld [vmem:[%s1787 + $0xf2] sm:$0xff]
      %v8224 = vld [vmem:[%s1787 + $0xfa] sm:$0xff]
      %v8225 = vld [vmem:[%s1787 + $0x10a] sm:$0xff]
      %v8226 = vld [vmem:[%s1787 + $0x112] sm:$0xff]
      %v8227 = vld [vmem:[%s1787 + $0x122] sm:$0xff]
      %v8228 = vld [vmem:[%s1787 + $0x12a] sm:$0xff]
      %v8229 = vld [vmem:[%s1787 + $0x13a] sm:$0xff]
      %v8230 = vld [vmem:[%s1787 + $0x142] sm:$0xff]
      %v8231 = vld [vmem:[%s1787 + $0x152] sm:$0xff]
      %v8232 = vld [vmem:[%s1787 + $0x15a] sm:$0xff]
      %v8233 = vld [vmem:[%s1787 + $0x16a] sm:$0xff]
      %v8234 = vld [vmem:[%s1787 + $0x172] sm:$0xff]
      %8235 = vst.msk [vmem:[#allocation3 + $0x8] sm:$0xff] %vm380, %v8203
      %8236 = vst.msk [vmem:[#allocation3 + $0x18] sm:$0xff] %vm380, %v8204
      %8237 = vst.msk [vmem:[#allocation3 + $0x28] sm:$0xff] %vm380, %v8205
      %8238 = vst.msk [vmem:[#allocation3 + $0x38] sm:$0xff] %vm380, %v8206
      %8239 = vst.msk [vmem:[#allocation3 + $0x48] sm:$0xff] %vm380, %v8207
      %8240 = vst.msk [vmem:[#allocation3 + $0x58] sm:$0xff] %vm380, %v8208
      %8241 = vst.msk [vmem:[#allocation3 + $0x68] sm:$0xff] %vm380, %v8209
      %8242 = vst.msk [vmem:[#allocation3 + $0x78] sm:$0xff] %vm380, %v8210
      %8243 = vst.msk [vmem:[#allocation3 + $0x88] sm:$0xff] %vm380, %v8211
      %8244 = vst.msk [vmem:[#allocation3 + $0x98] sm:$0xff] %vm380, %v8212
      %8245 = vst.msk [vmem:[#allocation3 + $0xa8] sm:$0xff] %vm380, %v8213
      %8246 = vst.msk [vmem:[#allocation3 + $0xb8] sm:$0xff] %vm380, %v8214
      %8247 = vst.msk [vmem:[#allocation3 + $0xc8] sm:$0xff] %vm380, %v8215
      %8248 = vst.msk [vmem:[#allocation3 + $0xd8] sm:$0xff] %vm380, %v8216
      %8249 = vst.msk [vmem:[#allocation3 + $0xe8] sm:$0xff] %vm380, %v8217
      %8250 = vst.msk [vmem:[#allocation3 + $0xf8] sm:$0xff] %vm380, %v8218
      %8251 = vst.msk [vmem:[#allocation3 + $0x108] sm:$0xff] %vm380, %v8219
      %8252 = vst.msk [vmem:[#allocation3 + $0x118] sm:$0xff] %vm380, %v8220
      %8253 = vst.msk [vmem:[#allocation3 + $0x128] sm:$0xff] %vm380, %v8221
      %8254 = vst.msk [vmem:[#allocation3 + $0x138] sm:$0xff] %vm380, %v8222
      %8255 = vst.msk [vmem:[#allocation3 + $0x148] sm:$0xff] %vm380, %v8223
      %8256 = vst.msk [vmem:[#allocation3 + $0x158] sm:$0xff] %vm380, %v8224
      %8257 = vst.msk [vmem:[#allocation3 + $0x168] sm:$0xff] %vm380, %v8225
      %8258 = vst.msk [vmem:[#allocation3 + $0x178] sm:$0xff] %vm380, %v8226
      %8259 = vst.msk [vmem:[#allocation3 + $0x188] sm:$0xff] %vm380, %v8227
      %8260 = vst.msk [vmem:[#allocation3 + $0x198] sm:$0xff] %vm380, %v8228
      %8261 = vst.msk [vmem:[#allocation3 + $0x1a8] sm:$0xff] %vm380, %v8229
      %8262 = vst.msk [vmem:[#allocation3 + $0x1b8] sm:$0xff] %vm380, %v8230
      %8263 = vst.msk [vmem:[#allocation3 + $0x1c8] sm:$0xff] %vm380, %v8231
      %8264 = vst.msk [vmem:[#allocation3 + $0x1d8] sm:$0xff] %vm380, %v8232
      %8265 = vst.msk [vmem:[#allocation3 + $0x1e8] sm:$0xff] %vm380, %v8233
      %8266 = vst.msk [vmem:[#allocation3 + $0x1f8] sm:$0xff] %vm380, %v8234
      %v8267 = vld [vmem:[#allocation3] sm:$0xff]
      %v8268 = vld [vmem:[#allocation3 + $0x8] sm:$0xff]
      %v8269 = vld [vmem:[#allocation3 + $0x10] sm:$0xff]
      %v8270 = vld [vmem:[#allocation3 + $0x18] sm:$0xff]
      %v8271 = vld [vmem:[#allocation3 + $0x20] sm:$0xff]
      %v8272 = vld [vmem:[#allocation3 + $0x28] sm:$0xff]
      %v8273 = vld [vmem:[#allocation3 + $0x30] sm:$0xff]
      %v8274 = vld [vmem:[#allocation3 + $0x38] sm:$0xff]
      %v8275 = vld [vmem:[#allocation3 + $0x40] sm:$0xff]
      %v8276 = vld [vmem:[#allocation3 + $0x48] sm:$0xff]
      %v8277 = vld [vmem:[#allocation3 + $0x50] sm:$0xff]
      %v8278 = vld [vmem:[#allocation3 + $0x58] sm:$0xff]
      %v8279 = vld [vmem:[#allocation3 + $0x60] sm:$0xff]
      %v8280 = vld [vmem:[#allocation3 + $0x68] sm:$0xff]
      %v8281 = vld [vmem:[#allocation3 + $0x70] sm:$0xff]
      %v8282 = vld [vmem:[#allocation3 + $0x78] sm:$0xff]
      %v8283 = vld [vmem:[#allocation3 + $0x80] sm:$0xff]
      %v8284 = vld [vmem:[#allocation3 + $0x88] sm:$0xff]
      %v8285 = vld [vmem:[#allocation3 + $0x90] sm:$0xff]
      %v8286 = vld [vmem:[#allocation3 + $0x98] sm:$0xff]
      %v8287 = vld [vmem:[#allocation3 + $0xa0] sm:$0xff]
      %v8288 = vld [vmem:[#allocation3 + $0xa8] sm:$0xff]
      %v8289 = vld [vmem:[#allocation3 + $0xb0] sm:$0xff]
      %v8290 = vld [vmem:[#allocation3 + $0xb8] sm:$0xff]
      %v8291 = vld [vmem:[#allocation3 + $0xc0] sm:$0xff]
      %v8292 = vld [vmem:[#allocation3 + $0xc8] sm:$0xff]
      %v8293 = vld [vmem:[#allocation3 + $0xd0] sm:$0xff]
      %v8294 = vld [vmem:[#allocation3 + $0xd8] sm:$0xff]
      %v8295 = vld [vmem:[#allocation3 + $0xe0] sm:$0xff]
      %v8296 = vld [vmem:[#allocation3 + $0xe8] sm:$0xff]
      %v8297 = vld [vmem:[#allocation3 + $0xf0] sm:$0xff]
      %v8298 = vld [vmem:[#allocation3 + $0xf8] sm:$0xff]
      %v8299 = vld [vmem:[#allocation3 + $0x100] sm:$0xff]
      %v8300 = vld [vmem:[#allocation3 + $0x108] sm:$0xff]
      %v8301 = vld [vmem:[#allocation3 + $0x110] sm:$0xff]
      %v8302 = vld [vmem:[#allocation3 + $0x118] sm:$0xff]
      %v8303 = vld [vmem:[#allocation3 + $0x120] sm:$0xff]
      %v8304 = vld [vmem:[#allocation3 + $0x128] sm:$0xff]
      %v8305 = vld [vmem:[#allocation3 + $0x130] sm:$0xff]
      %v8306 = vld [vmem:[#allocation3 + $0x138] sm:$0xff]
      %v8307 = vld [vmem:[#allocation3 + $0x140] sm:$0xff]
      %v8308 = vld [vmem:[#allocation3 + $0x148] sm:$0xff]
      %v8309 = vld [vmem:[#allocation3 + $0x150] sm:$0xff]
      %v8310 = vld [vmem:[#allocation3 + $0x158] sm:$0xff]
      %v8311 = vld [vmem:[#allocation3 + $0x160] sm:$0xff]
      %v8312 = vld [vmem:[#allocation3 + $0x168] sm:$0xff]
      %v8313 = vld [vmem:[#allocation3 + $0x170] sm:$0xff]
      %v8314 = vld [vmem:[#allocation3 + $0x178] sm:$0xff]
      %v8315 = vld [vmem:[#allocation3 + $0x180] sm:$0xff]
      %v8316 = vld [vmem:[#allocation3 + $0x188] sm:$0xff]
      %v8317 = vld [vmem:[#allocation3 + $0x190] sm:$0xff]
      %v8318 = vld [vmem:[#allocation3 + $0x198] sm:$0xff]
      %v8319 = vld [vmem:[#allocation3 + $0x1a0] sm:$0xff]
      %v8320 = vld [vmem:[#allocation3 + $0x1a8] sm:$0xff]
      %v8321 = vld [vmem:[#allocation3 + $0x1b0] sm:$0xff]
      %v8322 = vld [vmem:[#allocation3 + $0x1b8] sm:$0xff]
      %v8323 = vld [vmem:[#allocation3 + $0x1c0] sm:$0xff]
      %v8324 = vld [vmem:[#allocation3 + $0x1c8] sm:$0xff]
      %v8325 = vld [vmem:[#allocation3 + $0x1d0] sm:$0xff]
      %v8326 = vld [vmem:[#allocation3 + $0x1d8] sm:$0xff]
      %v8327 = vld [vmem:[#allocation3 + $0x1e0] sm:$0xff]
      %v8328 = vld [vmem:[#allocation3 + $0x1e8] sm:$0xff]
      %v8329 = vld [vmem:[#allocation3 + $0x1f0] sm:$0xff]
      %v8330 = vld [vmem:[#allocation3 + $0x1f8] sm:$0xff]
      %v8331 = vld [vmem:[%s8] sm:$0x77]
      %v8332 = vld [vmem:[%s9] sm:$0x7]
      %8334 = vset.pattern.permute.xlu0 0
      %8335 = vperm.xlu0 %8334, %v8332
      %v8336 = vpop.permute.xlu0 %8335
      %v8339 = vcombine.high %v8331, %v8331
      %v8340 = vsel %vm380, %v8339, 0
      %v8343 = vsel %vm380, %v8268, 0
      %v8346 = vsel %vm380, %v8270, 0
      %v8349 = vsel %vm380, %v8272, 0
      %v8352 = vsel %vm380, %v8274, 0
      %v8355 = vsel %vm380, %v8276, 0
      %v8358 = vsel %vm380, %v8278, 0
      %v8361 = vsel %vm380, %v8280, 0
      %v8364 = vsel %vm380, %v8282, 0
      %v8367 = vsel %vm380, %v8284, 0
      %v8370 = vsel %vm380, %v8286, 0
      %v8373 = vsel %vm380, %v8288, 0
      %v8376 = vsel %vm380, %v8290, 0
      %v8379 = vsel %vm380, %v8292, 0
      %v8382 = vsel %vm380, %v8294, 0
      %v8385 = vsel %vm380, %v8296, 0
      %v8388 = vsel %vm380, %v8298, 0
      %v8391 = vsel %vm380, %v8300, 0
      %v8394 = vsel %vm380, %v8302, 0
      %v8397 = vsel %vm380, %v8304, 0
      %v8400 = vsel %vm380, %v8306, 0
      %v8403 = vsel %vm380, %v8308, 0
      %v8406 = vsel %vm380, %v8310, 0
      %v8409 = vsel %vm380, %v8312, 0
      %v8412 = vsel %vm380, %v8314, 0
      %v8415 = vsel %vm380, %v8316, 0
      %v8418 = vsel %vm380, %v8318, 0
      %v8421 = vsel %vm380, %v8320, 0
      %v8424 = vsel %vm380, %v8322, 0
      %v8427 = vsel %vm380, %v8324, 0
      %v8430 = vsel %vm380, %v8326, 0
      %v8433 = vsel %vm380, %v8328, 0
      %v8436 = vsel %vm380, %v8330, 0
      %8438 = vmatprep.subr.mxu0 %v8343
      %8439 = vmatpush1.xpose.msra.mxu0 %v8267
      %8440 = vmatprep.subr.mxu0 %v8346
      %8441 = vmatpush1.xpose.msra.mxu0 %v8269
      %8442 = vmatprep.subr.mxu0 %v8349
      %8443 = vmatpush1.xpose.msra.mxu0 %v8271
      %8444 = vmatprep.subr.mxu0 %v8352
      %8445 = vmatpush1.xpose.msra.mxu0 %v8273
      %8446 = vmatprep.subr.mxu0 %v8355
      %8447 = vmatpush1.xpose.msra.mxu0 %v8275
      %8448 = vmatprep.subr.mxu0 %v8358
      %8449 = vmatpush1.xpose.msra.mxu0 %v8277
      %8450 = vmatprep.subr.mxu0 %v8361
      %8451 = vmatpush1.xpose.msra.mxu0 %v8279
      %8452 = vmatprep.subr.mxu0 %v8364
      %8453 = vmatpush1.xpose.msra.mxu0 %v8281
      %8454 = vmatprep.subr.mxu0 %v8367
      %8455 = vmatpush1.xpose.msra.mxu0 %v8283
      %8456 = vmatprep.subr.mxu0 %v8370
      %8457 = vmatpush1.xpose.msra.mxu0 %v8285
      %8458 = vmatprep.subr.mxu0 %v8373
      %8459 = vmatpush1.xpose.msra.mxu0 %v8287
      %8460 = vmatprep.subr.mxu0 %v8376
      %8461 = vmatpush1.xpose.msra.mxu0 %v8289
      %8462 = vmatprep.subr.mxu0 %v8379
      %8463 = vmatpush1.xpose.msra.mxu0 %v8291
      %8464 = vmatprep.subr.mxu0 %v8382
      %8465 = vmatpush1.xpose.msra.mxu0 %v8293
      %8466 = vmatprep.subr.mxu0 %v8385
      %8467 = vmatpush1.xpose.msra.mxu0 %v8295
      %8468 = vmatprep.subr.mxu0 %v8388
      %8469 = vmatpush1.xpose.msra.mxu0 %v8297
      %8470 = vmatprep.subr.mxu0 %v8391
      %8471 = vmatpush1.xpose.msra.mxu0 %v8299
      %8472 = vmatprep.subr.mxu0 %v8394
      %8473 = vmatpush1.xpose.msra.mxu0 %v8301
      %8474 = vmatprep.subr.mxu0 %v8397
      %8475 = vmatpush1.xpose.msra.mxu0 %v8303
      %8476 = vmatprep.subr.mxu0 %v8400
      %8477 = vmatpush1.xpose.msra.mxu0 %v8305
      %8478 = vmatprep.subr.mxu0 %v8403
      %8479 = vmatpush1.xpose.msra.mxu0 %v8307
      %8480 = vmatprep.subr.mxu0 %v8406
      %8481 = vmatpush1.xpose.msra.mxu0 %v8309
      %8482 = vmatprep.subr.mxu0 %v8409
      %8483 = vmatpush1.xpose.msra.mxu0 %v8311
      %8484 = vmatprep.subr.mxu0 %v8412
      %8485 = vmatpush1.xpose.msra.mxu0 %v8313
      %8486 = vmatprep.subr.mxu0 %v8415
      %8487 = vmatpush1.xpose.msra.mxu0 %v8315
      %8488 = vmatprep.subr.mxu0 %v8418
      %8489 = vmatpush1.xpose.msra.mxu0 %v8317
      %8490 = vmatprep.subr.mxu0 %v8421
      %8491 = vmatpush1.xpose.msra.mxu0 %v8319
      %8492 = vmatprep.subr.mxu0 %v8424
      %8493 = vmatpush1.xpose.msra.mxu0 %v8321
      %8494 = vmatprep.subr.mxu0 %v8427
      %8495 = vmatpush1.xpose.msra.mxu0 %v8323
      %8496 = vmatprep.subr.mxu0 %v8430
      %8497 = vmatpush1.xpose.msra.mxu0 %v8325
      %8498 = vmatprep.subr.mxu0 %v8433
      %8499 = vmatpush1.xpose.msra.mxu0 %v8327
      %8500 = vmatprep.subr.mxu0 %v8436
      %8501 = vmatpush1.xpose.msra.mxu0 %v8329
      %8502 = vmatprep.mubr.f32.mxu0 %v8340
      %8503 = vmatmul.mubr.f32.gmra.mrb[0].mxu0 %v8331
      %v8504 = vpop.f32.mrb[0].mxu0
      %v8505 = vadd.f32 %v8336, %v8504
      %v8506 = vpop.f32.mrb[0].mxu0
      %v8507 = vadd.f32 %v8336, %v8506
      %8508 = vdwg.mxu0
      %v8511 = vcombine.low %v8505, %v8507
      %8513 = vst [vmem:[%s379] sm:$0x77] %v8511
      %p8514 = scmp.lt.s32.totalorder %s21, 1
      %s8515 = scalar_select %p8514, %s21, 1
      %s8516 = smul.addr %s8515, 2
      %s8517 = smul.addr %s8516, 4
      %s8518 = scalar_lea.vmem %s10, %s8517
      // Predicated region
      $region61: #{masked_sequential.1} parent=59 // pred_check
        %p8519 = pneg %p259
      $region62: #{masked_sequential.1} parent=59 // pred_check_branch
        %8521 = sbr.rel (%p8519) target = $region64
      $region63: #{masked_sequential.1} parent=59 // pred_region
        _
      $region64: #{masked_sequential.1} parent=59 // pred_fallthru
        _
    $region60: #{masked_sequential.1} parent=5 // pred_fallthru
      _
    %p8522 = scmp.le.s32.totalorder 2, %s16
    // Predicated region
    $region65: #{masked_sequential.1} parent=5 // pred_check
      %p8523 = pneg %p8522
    $region66: #{masked_sequential.1} parent=5 // pred_check_branch
      %8525 = sbr.rel (%p8523) target = $region68
    $region67: #{masked_sequential.1} parent=5 // pred_region
      %s8526 = ssub.s32 %s16, 2
      // Predicated region
      $region69: #{masked_sequential.1} parent=67 // pred_check
        %p8527 = pneg %p265
      $region70: #{masked_sequential.1} parent=67 // pred_check_branch
        %8529 = sbr.rel (%p8527) target = $region72
      $region71: #{masked_sequential.1} parent=67 // pred_region
        %p8530 = scmp.lt.s32.totalorder %s22, 1
        %s8531 = scalar_select %p8530, %s22, 1
        %s8532 = smul.addr %s8531, 2
        %s8533 = smul.addr %s8532, 4
        %s8534 = scalar_lea.vmem %s10, %s8533
      $region72: #{masked_sequential.1} parent=67 // pred_fallthru
        _
    $region68: #{masked_sequential.1} parent=5 // pred_fallthru
      _
  $region6: #{masked_sequential.1} parent=0 // loop_footer
    %s20 = sadd.s32 1, %s16
  $region7: #{masked_sequential.1} parent=0 // loop_footer_branch
    %15 = sbr.rel target = $region3
  $region8: #{masked_sequential.1} parent=0 // loop_exit
    _

</llo_original>
